<compile_context>
chip_gen: v7x
topology: tpu7x:2x2x1
jax: 0.10.0
libtpu: 0.0.40
codegen_flags: <defaults>
</compile_context>

<pallas_src>
import math
from functools import partial

import jax
import jax.numpy as jnp
from jax.experimental import pallas as pl
from jax.experimental.pallas import tpu as pltpu


_LN_EPS = 1e-5  # torch nn.LayerNorm default

_ENC_KEYS = ("wq", "wk", "wv", "wo", "ln1g", "ln1b",
             "w1", "b1", "w2", "b2", "ln2g", "ln2b")
_DEC_KEYS = ("a1_wq", "a1_wk", "a1_wv", "a1_wo",
             "a2_wq", "a2_wk", "a2_wv", "a2_wo",
             "w1", "b1", "w2", "b2",
             "ln1g", "ln1b", "ln2g", "ln2b", "ln3g", "ln3b")


# ----------------------------------------------------------------------------
# Single fused Pallas kernel: full encoder + decoder stack
# ----------------------------------------------------------------------------

def _layernorm(z, g, b):
    mu = jnp.mean(z, axis=-1, keepdims=True)
    d = z - mu
    var = jnp.mean(d * d, axis=-1, keepdims=True)
    return d * jax.lax.rsqrt(var + _LN_EPS) * g + b


def _elu(h):
    return jnp.where(h > 0, h, jnp.exp(jnp.minimum(h, 0.0)) - 1.0)


def _transformer_kernel(B, Se, Sd, n_heads, scale, *refs):
    """Whole encoder+decoder stack for the full (tiny) batch in one body."""
    ne, nd = len(_ENC_KEYS), len(_DEC_KEYS)
    e0_ref, y0_ref = refs[0], refs[1]
    enc = dict(zip(_ENC_KEYS, refs[2:2 + ne]))
    dec = dict(zip(_DEC_KEYS, refs[2 + ne:2 + ne + nd]))
    o_ref = refs[2 + ne + nd]

    n_enc_layers = enc["wq"].shape[0]
    n_dec_layers = dec["a1_wq"].shape[0]

    def mha(x, kv, wq_ref, wk_ref, wv_ref, wo_ref, l, Sq, Skv):
        # x: (B*Sq, D), kv: (B*Skv, D).  Per-head weights are stacked on a
        # leading (layer, head) axis -> no lane-dim slicing/concat of
        # activations; the output projection is accumulated per head.
        y = jnp.zeros_like(x)
        for h in range(n_heads):                       # static, n_heads is tiny
            q = jnp.dot(x, wq_ref[l, h], preferred_element_type=jnp.float32)
            k = jnp.dot(kv, wk_ref[l, h], preferred_element_type=jnp.float32)
            v = jnp.dot(kv, wv_ref[l, h], preferred_element_type=jnp.float32)
            rows = []
            for b in range(B):                         # static, sublane-aligned rows
                qb = q[b * Sq:(b + 1) * Sq]
                kb = k[b * Skv:(b + 1) * Skv]
                vb = v[b * Skv:(b + 1) * Skv]
                s = jax.lax.dot_general(
                    qb, kb, (((1,), (1,)), ((), ())),
                    preferred_element_type=jnp.float32) * scale
                s = s - jnp.max(s, axis=-1, keepdims=True)
                p = jnp.exp(s)
                p = p / jnp.sum(p, axis=-1, keepdims=True)  # exact divide (parity)
                rows.append(jnp.dot(p, vb, preferred_element_type=jnp.float32))
            head = jnp.concatenate(rows, axis=0)       # (B*Sq, D), sublane concat
            # wo rows were pre-permuted at init so sum-over-heads equals torch's
            # stack(dim=-1)+flatten interleave followed by the Linear.
            y = y + jnp.dot(head, wo_ref[l, h], preferred_element_type=jnp.float32)
        return y

    def ffn(x, w2, b2, w1, b1):
        h = jnp.dot(x, w2, preferred_element_type=jnp.float32) + b2
        h = _elu(h)
        return jnp.dot(h, w1, preferred_element_type=jnp.float32) + b1

    # ---------------- encoder stack (activations stay on-chip) ----------------
    e = e0_ref[...]                                    # (B*Se, D)
    for l in range(n_enc_layers):
        a = mha(e, e, enc["wq"], enc["wk"], enc["wv"], enc["wo"], l, Se, Se)
        e = _layernorm(e + a, enc["ln1g"][l], enc["ln1b"][l])
        a = ffn(e, enc["w2"][l], enc["b2"][l], enc["w1"][l], enc["b1"][l])
        e = _layernorm(e + a, enc["ln2g"][l], enc["ln2b"][l])

    # ---------------- decoder stack ----------------
    d = y0_ref[...]                                    # (B*Sd, D)
    for l in range(n_dec_layers):
        a = mha(d, d, dec["a1_wq"], dec["a1_wk"], dec["a1_wv"], dec["a1_wo"],
                l, Sd, Sd)
        d = _layernorm(a + d, dec["ln1g"][l], dec["ln1b"][l])
        a = mha(d, e, dec["a2_wq"], dec["a2_wk"], dec["a2_wv"], dec["a2_wo"],
                l, Sd, Se)
        d = _layernorm(a + d, dec["ln2g"][l], dec["ln2b"][l])
        a = ffn(d, dec["w2"][l], dec["b2"][l], dec["w1"][l], dec["b1"][l])
        d = _layernorm(d + a, dec["ln3g"][l], dec["ln3b"][l])

    o_ref[...] = d                                     # (B*Sd, D), single store


def _mha_flops(B, Sq, Skv, D, da, H):
    return H * (2 * B * Sq * D * da + 2 * B * Skv * D * da + 2 * B * Skv * D * D
                + 2 * B * Sq * Skv * da + 2 * B * Sq * Skv * D + 2 * B * Sq * D * D)


def fused_transformer_stack(params, e0, y0, *, B, Se, Sd, n_heads, dim_attn):
    """e0: (B*Se, D), y0: (B*Sd, D) -> decoder output (B*Sd, D)."""
    D = e0.shape[-1]
    scale = 1.0 / math.sqrt(dim_attn)

    enc_args = [params["enc"][k] for k in _ENC_KEYS]
    dec_args = [params["dec"][k] for k in _DEC_KEYS]
    args = [e0, y0] + enc_args + dec_args

    Le = int(params["enc"]["wq"].shape[0])
    Ld = int(params["dec"]["a1_wq"].shape[0])
    flops = (Le * (_mha_flops(B, Se, Se, D, dim_attn, n_heads) + 4 * B * Se * D * D)
             + Ld * (_mha_flops(B, Sd, Sd, D, dim_attn, n_heads)
                     + _mha_flops(B, Sd, Se, D, dim_attn, n_heads)
                     + 4 * B * Sd * D * D))
    transcendentals = (Le * (n_heads * B * Se * Se + B * Se * D)
                       + Ld * (n_heads * B * (Sd * Sd + Sd * Se) + B * Sd * D))
    bytes_accessed = sum(int(a.size) * 4 for a in args) + B * Sd * D * 4

    kernel = partial(_transformer_kernel, B, Se, Sd, n_heads, scale)
    # No grid and no BlockSpecs: every array is loaded whole into VMEM (the
    # entire model is a few tens of KB), the kernel body runs exactly once.
    return pl.pallas_call(
        kernel,
        out_shape=jax.ShapeDtypeStruct((B * Sd, D), jnp.float32),
        cost_estimate=pl.CostEstimate(flops=flops,
                                      transcendentals=transcendentals,
                                      bytes_accessed=bytes_accessed),
        compiler_params=pltpu.CompilerParams(vmem_limit_bytes=32 * 1024 * 1024),
    )(*args)


# ----------------------------------------------------------------------------
# Model glue (plain JAX only for the tiny MXU-hostile edge ops)
# ----------------------------------------------------------------------------

def transformer_forward(params, x, y):
    """x: (B, enc_seq, input_size), y: (B, dec_seq, dim_val) -> (B, out_seq_len)."""
    B, Se, In = x.shape
    _, Sd, D = y.shape
    n_heads = int(params["enc"]["wq"].shape[1])
    dim_attn = int(params["enc"]["wq"].shape[-1])

    # Tiny K=4 input projection + positional encoding: plain JAX (XLA fuses it).
    e0 = jnp.dot(x.reshape(-1, In), params["enc_in_w"]) + params["enc_in_b"]
    e0 = e0.reshape(B, Se, D) + params["pe"][:Se][None]
    e0 = e0.reshape(B * Se, D)
    y0 = y.reshape(B * Sd, D)            # decoder consumes y directly (as in torch)

    d = fused_transformer_stack(params, e0, y0, B=B, Se=Se, Sd=Sd,
                                n_heads=n_heads, dim_attn=dim_attn)

    flat = d.reshape(B, Sd * D)          # == torch flatten(start_dim=1)
    # N=1 output head: plain JAX (a Pallas store here would be fully masked).
    return jnp.dot(flat, params["out_w"]) + params["out_b"]


# ----------------------------------------------------------------------------
# Deterministic parameter init (torch nn.Linear-style uniform)
# ----------------------------------------------------------------------------

def positional_encoding(max_len, d_model):
    pos = jnp.arange(max_len, dtype=jnp.float32)[:, None]
    div = jnp.exp(
        jnp.arange(0, d_model, 2, dtype=jnp.float32) * (-math.log(10000.0) / d_model)
    )
    pe = jnp.zeros((max_len, d_model), jnp.float32)
    pe = pe.at[:, 0::2].set(jnp.sin(pos * div))
    pe = pe.at[:, 1::2].set(jnp.cos(pos * div))
    return pe


def init_params(key, dim_val, dim_attn, input_size, dec_seq_len, out_seq_len,
                n_encoder_layers, n_decoder_layers, n_heads, pe_max_len=256):
    keys = iter(jax.random.split(key, 256))

    def lin_w(fan_in, fan_out):
        bound = 1.0 / math.sqrt(fan_in)
        return jax.random.uniform(next(keys), (fan_in, fan_out), jnp.float32,
                                  -bound, bound)

    def lin(fan_in, fan_out):
        bound = 1.0 / math.sqrt(fan_in)
        w = jax.random.uniform(next(keys), (fan_in, fan_out), jnp.float32,
                               -bound, bound)
        b = jax.random.uniform(next(keys), (fan_out,), jnp.float32, -bound, bound)
        return w, b

    def mha():
        # Per-head weights (one Linear per head in torch), stacked on a leading
        # head axis so the kernel indexes them with free leading-axis loads.
        wq = jnp.stack([lin_w(dim_val, dim_attn) for _ in range(n_heads)])   # (H,D,da)
        wk = jnp.stack([lin_w(dim_val, dim_attn) for _ in range(n_heads)])   # (H,D,da)
        wv = jnp.stack([lin_w(dim_val, dim_val) for _ in range(n_heads)])    # (H,D,D)
        # torch fc rows are indexed d*n_heads + h (stack(dim=-1)+flatten).
        wo_torch = lin_w(n_heads * dim_val, dim_val)                         # (H*D, D)
        wo = jnp.transpose(wo_torch.reshape(dim_val, n_heads, dim_val),
                           (1, 0, 2))                                        # (H,D,D)
        return wq, wk, wv, wo

    def ln():
        return (jnp.ones((1, dim_val), jnp.float32),
                jnp.zeros((1, dim_val), jnp.float32))

    def enc_layer():
        wq, wk, wv, wo = mha()
        w1, b1 = lin(dim_val, dim_val)
        w2, b2 = lin(dim_val, dim_val)
        g1, be1 = ln()
        g2, be2 = ln()
        return {"wq": wq, "wk": wk, "wv": wv, "wo": wo,
                "ln1g": g1, "ln1b": be1,
                "w1": w1, "b1": b1.reshape(1, -1),
                "w2": w2, "b2": b2.reshape(1, -1),
                "ln2g": g2, "ln2b": be2}

    def dec_layer():
        a1 = mha()
        a2 = mha()
        w1, b1 = lin(dim_val, dim_val)
        w2, b2 = lin(dim_val, dim_val)
        g1, be1 = ln()
        g2, be2 = ln()
        g3, be3 = ln()
        return {"a1_wq": a1[0], "a1_wk": a1[1], "a1_wv": a1[2], "a1_wo": a1[3],
                "a2_wq": a2[0], "a2_wk": a2[1], "a2_wv": a2[2], "a2_wo": a2[3],
                "w1": w1, "b1": b1.reshape(1, -1),
                "w2": w2, "b2": b2.reshape(1, -1),
                "ln1g": g1, "ln1b": be1, "ln2g": g2, "ln2b": be2,
                "ln3g": g3, "ln3b": be3}

    encs = [enc_layer() for _ in range(n_encoder_layers)]
    decs = [dec_layer() for _ in range(n_decoder_layers)]
    enc_stacked = {k: jnp.stack([layer[k] for layer in encs]) for k in _ENC_KEYS}
    dec_stacked = {k: jnp.stack([layer[k] for layer in decs]) for k in _DEC_KEYS}

    enc_in_w, enc_in_b = lin(input_size, dim_val)
    dec_in_w, dec_in_b = lin(input_size, dim_val)   # allocated, unused (as in torch forward)
    out_w, out_b = lin(dec_seq_len * dim_val, out_seq_len)

    return {
        "enc_in_w": enc_in_w, "enc_in_b": enc_in_b,
        "dec_in_w": dec_in_w, "dec_in_b": dec_in_b,
        "out_w": out_w, "out_b": out_b,
        "pe": positional_encoding(pe_max_len, dim_val),
        "enc": enc_stacked, "dec": dec_stacked,
    }


# ----------------------------------------------------------------------------

if __name__ == "__main__":
    # Small, module-consistent shapes.
    dim_val, dim_attn, input_size = 32, 16, 4
    enc_seq_len, dec_seq_len, out_seq_len = 16, 8, 1
    n_encoder_layers, n_decoder_layers, n_heads = 2, 2, 2
    batch = 2

    root = jax.random.PRNGKey(0)
    k_params, k_x, k_y = jax.random.split(root, 3)

    params = init_params(k_params, dim_val, dim_attn, input_size, dec_seq_len,
                         out_seq_len, n_encoder_layers, n_decoder_layers, n_heads)

    x = jax.random.normal(k_x, (batch, enc_seq_len, input_size), jnp.float32)
    # Decoder input is consumed directly (no dec_input_fc in the torch forward),
    # so its last dim must already be dim_val.
    y = jax.random.normal(k_y, (batch, dec_seq_len, dim_val), jnp.float32)

    fwd = jax.jit(transformer_forward)
    out = jax.block_until_ready(fwd(params, x, y))

    assert out.shape == (batch, out_seq_len)
    assert bool(jnp.all(jnp.isfinite(out)))
    print("KERNEL_OK")
</pallas_src>

<mosaic_0001>
module attributes {stable_mosaic.version = 11 : i64} {
  func.func @_transformer_kernel(%arg0: memref<32x32xf32, #tpu.memory_space<vmem>>, %arg1: memref<16x32xf32, #tpu.memory_space<vmem>>, %arg2: memref<2x2x32x16xf32, #tpu.memory_space<vmem>>, %arg3: memref<2x2x32x16xf32, #tpu.memory_space<vmem>>, %arg4: memref<2x2x32x32xf32, #tpu.memory_space<vmem>>, %arg5: memref<2x2x32x32xf32, #tpu.memory_space<vmem>>, %arg6: memref<2x1x32xf32, #tpu.memory_space<vmem>>, %arg7: memref<2x1x32xf32, #tpu.memory_space<vmem>>, %arg8: memref<2x32x32xf32, #tpu.memory_space<vmem>>, %arg9: memref<2x1x32xf32, #tpu.memory_space<vmem>>, %arg10: memref<2x32x32xf32, #tpu.memory_space<vmem>>, %arg11: memref<2x1x32xf32, #tpu.memory_space<vmem>>, %arg12: memref<2x1x32xf32, #tpu.memory_space<vmem>>, %arg13: memref<2x1x32xf32, #tpu.memory_space<vmem>>, %arg14: memref<2x2x32x16xf32, #tpu.memory_space<vmem>>, %arg15: memref<2x2x32x16xf32, #tpu.memory_space<vmem>>, %arg16: memref<2x2x32x32xf32, #tpu.memory_space<vmem>>, %arg17: memref<2x2x32x32xf32, #tpu.memory_space<vmem>>, %arg18: memref<2x2x32x16xf32, #tpu.memory_space<vmem>>, %arg19: memref<2x2x32x16xf32, #tpu.memory_space<vmem>>, %arg20: memref<2x2x32x32xf32, #tpu.memory_space<vmem>>, %arg21: memref<2x2x32x32xf32, #tpu.memory_space<vmem>>, %arg22: memref<2x32x32xf32, #tpu.memory_space<vmem>>, %arg23: memref<2x1x32xf32, #tpu.memory_space<vmem>>, %arg24: memref<2x32x32xf32, #tpu.memory_space<vmem>>, %arg25: memref<2x1x32xf32, #tpu.memory_space<vmem>>, %arg26: memref<2x1x32xf32, #tpu.memory_space<vmem>>, %arg27: memref<2x1x32xf32, #tpu.memory_space<vmem>>, %arg28: memref<2x1x32xf32, #tpu.memory_space<vmem>>, %arg29: memref<2x1x32xf32, #tpu.memory_space<vmem>>, %arg30: memref<2x1x32xf32, #tpu.memory_space<vmem>>, %arg31: memref<2x1x32xf32, #tpu.memory_space<vmem>>, %arg32: memref<16x32xf32, #tpu.memory_space<vmem>>) attributes {dimension_semantics = [], scalar_prefetch = 0 : i64, scratch_operands = 0 : i64, tpu.core_type = #tpu.core_type<tc>} {
    %c0 = arith.constant 0 : index
    %c0_0 = arith.constant 0 : index
    %0 = vector.load %arg0[%c0, %c0_0] : memref<32x32xf32, #tpu.memory_space<vmem>>, vector<32x32xf32>
    %cst = arith.constant 0.000000e+00 : f32
    %1 = vector.broadcast %cst : f32 to vector<32x32xf32>
    %c0_1 = arith.constant 0 : index
    %c0_2 = arith.constant 0 : index
    %c0_3 = arith.constant 0 : index
    %c0_4 = arith.constant 0 : index
    %2 = vector.load %arg2[%c0_1, %c0_2, %c0_3, %c0_4] : memref<2x2x32x16xf32, #tpu.memory_space<vmem>>, vector<1x1x32x16xf32>
    %3 = vector.shape_cast %2 : vector<1x1x32x16xf32> to vector<32x16xf32>
    %cst_5 = arith.constant dense<0.000000e+00> : vector<32x16xf32>
    %4 = tpu.matmul %0, %3, %cst_5 {dimension_numbers = #tpu.dot_dimension_numbers<[1], [0], [0], [1], [0, 0, 1, 1], [], []>} : vector<32x32xf32>, vector<32x16xf32>, vector<32x16xf32> -> vector<32x16xf32>
    %c0_6 = arith.constant 0 : index
    %c0_7 = arith.constant 0 : index
    %c0_8 = arith.constant 0 : index
    %c0_9 = arith.constant 0 : index
    %5 = vector.load %arg3[%c0_6, %c0_7, %c0_8, %c0_9] : memref<2x2x32x16xf32, #tpu.memory_space<vmem>>, vector<1x1x32x16xf32>
    %6 = vector.shape_cast %5 : vector<1x1x32x16xf32> to vector<32x16xf32>
    %cst_10 = arith.constant dense<0.000000e+00> : vector<32x16xf32>
    %7 = tpu.matmul %0, %6, %cst_10 {dimension_numbers = #tpu.dot_dimension_numbers<[1], [0], [0], [1], [0, 0, 1, 1], [], []>} : vector<32x32xf32>, vector<32x16xf32>, vector<32x16xf32> -> vector<32x16xf32>
    %c0_11 = arith.constant 0 : index
    %c0_12 = arith.constant 0 : index
    %c0_13 = arith.constant 0 : index
    %c0_14 = arith.constant 0 : index
    %8 = vector.load %arg4[%c0_11, %c0_12, %c0_13, %c0_14] : memref<2x2x32x32xf32, #tpu.memory_space<vmem>>, vector<1x1x32x32xf32>
    %9 = vector.shape_cast %8 : vector<1x1x32x32xf32> to vector<32x32xf32>
    %cst_15 = arith.constant dense<0.000000e+00> : vector<32x32xf32>
    %10 = tpu.matmul %0, %9, %cst_15 {dimension_numbers = #tpu.dot_dimension_numbers<[1], [0], [0], [1], [0, 0, 1, 1], [], []>} : vector<32x32xf32>, vector<32x32xf32>, vector<32x32xf32> -> vector<32x32xf32>
    %11 = vector.extract_strided_slice %4 {offsets = [0, 0], sizes = [16, 16], strides = [1, 1]} : vector<32x16xf32> to vector<16x16xf32>
    %12 = vector.extract_strided_slice %7 {offsets = [0, 0], sizes = [16, 16], strides = [1, 1]} : vector<32x16xf32> to vector<16x16xf32>
    %13 = vector.extract_strided_slice %10 {offsets = [0, 0], sizes = [16, 32], strides = [1, 1]} : vector<32x32xf32> to vector<16x32xf32>
    %cst_16 = arith.constant dense<0.000000e+00> : vector<16x16xf32>
    %14 = tpu.matmul %11, %12, %cst_16 {dimension_numbers = #tpu.dot_dimension_numbers<[1], [1], [0], [0], [0, 0, 1, 0], [], []>} : vector<16x16xf32>, vector<16x16xf32>, vector<16x16xf32> -> vector<16x16xf32>
    %cst_17 = arith.constant 2.500000e-01 : f32
    %15 = vector.broadcast %cst_17 : f32 to vector<16x16xf32>
    %16 = arith.mulf %14, %15 : vector<16x16xf32>
    %cst_18 = arith.constant dense<0xFF800000> : vector<16xf32>
    %17 = vector.multi_reduction <maximumf>, %16, %cst_18 [1] : vector<16x16xf32> to vector<16xf32>
    %18 = vector.shape_cast %17 : vector<16xf32> to vector<16x1xf32>
    %19 = vector.broadcast %18 : vector<16x1xf32> to vector<16x16xf32>
    %20 = arith.subf %16, %19 : vector<16x16xf32>
    %21 = math.exp %20 : vector<16x16xf32>
    %cst_19 = arith.constant dense<0.000000e+00> : vector<16xf32>
    %22 = vector.multi_reduction <add>, %21, %cst_19 [1] : vector<16x16xf32> to vector<16xf32>
    %23 = vector.shape_cast %22 : vector<16xf32> to vector<16x1xf32>
    %24 = vector.broadcast %23 : vector<16x1xf32> to vector<16x16xf32>
    %25 = arith.divf %21, %24 : vector<16x16xf32>
    %cst_20 = arith.constant dense<0.000000e+00> : vector<16x32xf32>
    %26 = tpu.matmul %25, %13, %cst_20 {dimension_numbers = #tpu.dot_dimension_numbers<[1], [0], [0], [1], [0, 0, 1, 1], [], []>} : vector<16x16xf32>, vector<16x32xf32>, vector<16x32xf32> -> vector<16x32xf32>
    %27 = vector.extract_strided_slice %4 {offsets = [16, 0], sizes = [16, 16], strides = [1, 1]} : vector<32x16xf32> to vector<16x16xf32>
    %28 = vector.extract_strided_slice %7 {offsets = [16, 0], sizes = [16, 16], strides = [1, 1]} : vector<32x16xf32> to vector<16x16xf32>
    %29 = vector.extract_strided_slice %10 {offsets = [16, 0], sizes = [16, 32], strides = [1, 1]} : vector<32x32xf32> to vector<16x32xf32>
    %cst_21 = arith.constant dense<0.000000e+00> : vector<16x16xf32>
    %30 = tpu.matmul %27, %28, %cst_21 {dimension_numbers = #tpu.dot_dimension_numbers<[1], [1], [0], [0], [0, 0, 1, 0], [], []>} : vector<16x16xf32>, vector<16x16xf32>, vector<16x16xf32> -> vector<16x16xf32>
    %cst_22 = arith.constant 2.500000e-01 : f32
    %31 = vector.broadcast %cst_22 : f32 to vector<16x16xf32>
    %32 = arith.mulf %30, %31 : vector<16x16xf32>
    %cst_23 = arith.constant dense<0xFF800000> : vector<16xf32>
    %33 = vector.multi_reduction <maximumf>, %32, %cst_23 [1] : vector<16x16xf32> to vector<16xf32>
    %34 = vector.shape_cast %33 : vector<16xf32> to vector<16x1xf32>
    %35 = vector.broadcast %34 : vector<16x1xf32> to vector<16x16xf32>
    %36 = arith.subf %32, %35 : vector<16x16xf32>
    %37 = math.exp %36 : vector<16x16xf32>
    %cst_24 = arith.constant dense<0.000000e+00> : vector<16xf32>
    %38 = vector.multi_reduction <add>, %37, %cst_24 [1] : vector<16x16xf32> to vector<16xf32>
    %39 = vector.shape_cast %38 : vector<16xf32> to vector<16x1xf32>
    %40 = vector.broadcast %39 : vector<16x1xf32> to vector<16x16xf32>
    %41 = arith.divf %37, %40 : vector<16x16xf32>
    %cst_25 = arith.constant dense<0.000000e+00> : vector<16x32xf32>
    %42 = tpu.matmul %41, %29, %cst_25 {dimension_numbers = #tpu.dot_dimension_numbers<[1], [0], [0], [1], [0, 0, 1, 1], [], []>} : vector<16x16xf32>, vector<16x32xf32>, vector<16x32xf32> -> vector<16x32xf32>
    %43 = tpu.concatenate %26, %42 in 0 : vector<16x32xf32>, vector<16x32xf32> -> vector<32x32xf32>
    %c0_26 = arith.constant 0 : index
    %c0_27 = arith.constant 0 : index
    %c0_28 = arith.constant 0 : index
    %c0_29 = arith.constant 0 : index
    %44 = vector.load %arg5[%c0_26, %c0_27, %c0_28, %c0_29] : memref<2x2x32x32xf32, #tpu.memory_space<vmem>>, vector<1x1x32x32xf32>
    %45 = vector.shape_cast %44 : vector<1x1x32x32xf32> to vector<32x32xf32>
    %cst_30 = arith.constant dense<0.000000e+00> : vector<32x32xf32>
    %46 = tpu.matmul %43, %45, %cst_30 {dimension_numbers = #tpu.dot_dimension_numbers<[1], [0], [0], [1], [0, 0, 1, 1], [], []>} : vector<32x32xf32>, vector<32x32xf32>, vector<32x32xf32> -> vector<32x32xf32>
    %47 = arith.addf %1, %46 : vector<32x32xf32>
    %c0_31 = arith.constant 0 : index
    %c1 = arith.constant 1 : index
    %c0_32 = arith.constant 0 : index
    %c0_33 = arith.constant 0 : index
    %48 = vector.load %arg2[%c0_31, %c1, %c0_32, %c0_33] : memref<2x2x32x16xf32, #tpu.memory_space<vmem>>, vector<1x1x32x16xf32>
    %49 = vector.shape_cast %48 : vector<1x1x32x16xf32> to vector<32x16xf32>
    %cst_34 = arith.constant dense<0.000000e+00> : vector<32x16xf32>
    %50 = tpu.matmul %0, %49, %cst_34 {dimension_numbers = #tpu.dot_dimension_numbers<[1], [0], [0], [1], [0, 0, 1, 1], [], []>} : vector<32x32xf32>, vector<32x16xf32>, vector<32x16xf32> -> vector<32x16xf32>
    %c0_35 = arith.constant 0 : index
    %c1_36 = arith.constant 1 : index
    %c0_37 = arith.constant 0 : index
    %c0_38 = arith.constant 0 : index
    %51 = vector.load %arg3[%c0_35, %c1_36, %c0_37, %c0_38] : memref<2x2x32x16xf32, #tpu.memory_space<vmem>>, vector<1x1x32x16xf32>
    %52 = vector.shape_cast %51 : vector<1x1x32x16xf32> to vector<32x16xf32>
    %cst_39 = arith.constant dense<0.000000e+00> : vector<32x16xf32>
    %53 = tpu.matmul %0, %52, %cst_39 {dimension_numbers = #tpu.dot_dimension_numbers<[1], [0], [0], [1], [0, 0, 1, 1], [], []>} : vector<32x32xf32>, vector<32x16xf32>, vector<32x16xf32> -> vector<32x16xf32>
    %c0_40 = arith.constant 0 : index
    %c1_41 = arith.constant 1 : index
    %c0_42 = arith.constant 0 : index
    %c0_43 = arith.constant 0 : index
    %54 = vector.load %arg4[%c0_40, %c1_41, %c0_42, %c0_43] : memref<2x2x32x32xf32, #tpu.memory_space<vmem>>, vector<1x1x32x32xf32>
    %55 = vector.shape_cast %54 : vector<1x1x32x32xf32> to vector<32x32xf32>
    %cst_44 = arith.constant dense<0.000000e+00> : vector<32x32xf32>
    %56 = tpu.matmul %0, %55, %cst_44 {dimension_numbers = #tpu.dot_dimension_numbers<[1], [0], [0], [1], [0, 0, 1, 1], [], []>} : vector<32x32xf32>, vector<32x32xf32>, vector<32x32xf32> -> vector<32x32xf32>
    %57 = vector.extract_strided_slice %50 {offsets = [0, 0], sizes = [16, 16], strides = [1, 1]} : vector<32x16xf32> to vector<16x16xf32>
    %58 = vector.extract_strided_slice %53 {offsets = [0, 0], sizes = [16, 16], strides = [1, 1]} : vector<32x16xf32> to vector<16x16xf32>
    %59 = vector.extract_strided_slice %56 {offsets = [0, 0], sizes = [16, 32], strides = [1, 1]} : vector<32x32xf32> to vector<16x32xf32>
    %cst_45 = arith.constant dense<0.000000e+00> : vector<16x16xf32>
    %60 = tpu.matmul %57, %58, %cst_45 {dimension_numbers = #tpu.dot_dimension_numbers<[1], [1], [0], [0], [0, 0, 1, 0], [], []>} : vector<16x16xf32>, vector<16x16xf32>, vector<16x16xf32> -> vector<16x16xf32>
    %cst_46 = arith.constant 2.500000e-01 : f32
    %61 = vector.broadcast %cst_46 : f32 to vector<16x16xf32>
    %62 = arith.mulf %60, %61 : vector<16x16xf32>
    %cst_47 = arith.constant dense<0xFF800000> : vector<16xf32>
    %63 = vector.multi_reduction <maximumf>, %62, %cst_47 [1] : vector<16x16xf32> to vector<16xf32>
    %64 = vector.shape_cast %63 : vector<16xf32> to vector<16x1xf32>
    %65 = vector.broadcast %64 : vector<16x1xf32> to vector<16x16xf32>
    %66 = arith.subf %62, %65 : vector<16x16xf32>
    %67 = math.exp %66 : vector<16x16xf32>
    %cst_48 = arith.constant dense<0.000000e+00> : vector<16xf32>
    %68 = vector.multi_reduction <add>, %67, %cst_48 [1] : vector<16x16xf32> to vector<16xf32>
    %69 = vector.shape_cast %68 : vector<16xf32> to vector<16x1xf32>
    %70 = vector.broadcast %69 : vector<16x1xf32> to vector<16x16xf32>
    %71 = arith.divf %67, %70 : vector<16x16xf32>
    %cst_49 = arith.constant dense<0.000000e+00> : vector<16x32xf32>
    %72 = tpu.matmul %71, %59, %cst_49 {dimension_numbers = #tpu.dot_dimension_numbers<[1], [0], [0], [1], [0, 0, 1, 1], [], []>} : vector<16x16xf32>, vector<16x32xf32>, vector<16x32xf32> -> vector<16x32xf32>
    %73 = vector.extract_strided_slice %50 {offsets = [16, 0], sizes = [16, 16], strides = [1, 1]} : vector<32x16xf32> to vector<16x16xf32>
    %74 = vector.extract_strided_slice %53 {offsets = [16, 0], sizes = [16, 16], strides = [1, 1]} : vector<32x16xf32> to vector<16x16xf32>
    %75 = vector.extract_strided_slice %56 {offsets = [16, 0], sizes = [16, 32], strides = [1, 1]} : vector<32x32xf32> to vector<16x32xf32>
    %cst_50 = arith.constant dense<0.000000e+00> : vector<16x16xf32>
    %76 = tpu.matmul %73, %74, %cst_50 {dimension_numbers = #tpu.dot_dimension_numbers<[1], [1], [0], [0], [0, 0, 1, 0], [], []>} : vector<16x16xf32>, vector<16x16xf32>, vector<16x16xf32> -> vector<16x16xf32>
    %cst_51 = arith.constant 2.500000e-01 : f32
    %77 = vector.broadcast %cst_51 : f32 to vector<16x16xf32>
    %78 = arith.mulf %76, %77 : vector<16x16xf32>
    %cst_52 = arith.constant dense<0xFF800000> : vector<16xf32>
    %79 = vector.multi_reduction <maximumf>, %78, %cst_52 [1] : vector<16x16xf32> to vector<16xf32>
    %80 = vector.shape_cast %79 : vector<16xf32> to vector<16x1xf32>
    %81 = vector.broadcast %80 : vector<16x1xf32> to vector<16x16xf32>
    %82 = arith.subf %78, %81 : vector<16x16xf32>
    %83 = math.exp %82 : vector<16x16xf32>
    %cst_53 = arith.constant dense<0.000000e+00> : vector<16xf32>
    %84 = vector.multi_reduction <add>, %83, %cst_53 [1] : vector<16x16xf32> to vector<16xf32>
    %85 = vector.shape_cast %84 : vector<16xf32> to vector<16x1xf32>
    %86 = vector.broadcast %85 : vector<16x1xf32> to vector<16x16xf32>
    %87 = arith.divf %83, %86 : vector<16x16xf32>
    %cst_54 = arith.constant dense<0.000000e+00> : vector<16x32xf32>
    %88 = tpu.matmul %87, %75, %cst_54 {dimension_numbers = #tpu.dot_dimension_numbers<[1], [0], [0], [1], [0, 0, 1, 1], [], []>} : vector<16x16xf32>, vector<16x32xf32>, vector<16x32xf32> -> vector<16x32xf32>
    %89 = tpu.concatenate %72, %88 in 0 : vector<16x32xf32>, vector<16x32xf32> -> vector<32x32xf32>
    %c0_55 = arith.constant 0 : index
    %c1_56 = arith.constant 1 : index
    %c0_57 = arith.constant 0 : index
    %c0_58 = arith.constant 0 : index
    %90 = vector.load %arg5[%c0_55, %c1_56, %c0_57, %c0_58] : memref<2x2x32x32xf32, #tpu.memory_space<vmem>>, vector<1x1x32x32xf32>
    %91 = vector.shape_cast %90 : vector<1x1x32x32xf32> to vector<32x32xf32>
    %cst_59 = arith.constant dense<0.000000e+00> : vector<32x32xf32>
    %92 = tpu.matmul %89, %91, %cst_59 {dimension_numbers = #tpu.dot_dimension_numbers<[1], [0], [0], [1], [0, 0, 1, 1], [], []>} : vector<32x32xf32>, vector<32x32xf32>, vector<32x32xf32> -> vector<32x32xf32>
    %93 = arith.addf %47, %92 : vector<32x32xf32>
    %94 = arith.addf %0, %93 : vector<32x32xf32>
    %c0_60 = arith.constant 0 : index
    %c0_61 = arith.constant 0 : index
    %c0_62 = arith.constant 0 : index
    %95 = vector.load %arg6[%c0_60, %c0_61, %c0_62] : memref<2x1x32xf32, #tpu.memory_space<vmem>>, vector<1x1x32xf32>
    %96 = vector.shape_cast %95 : vector<1x1x32xf32> to vector<1x32xf32>
    %c0_63 = arith.constant 0 : index
    %c0_64 = arith.constant 0 : index
    %c0_65 = arith.constant 0 : index
    %97 = vector.load %arg7[%c0_63, %c0_64, %c0_65] : memref<2x1x32xf32, #tpu.memory_space<vmem>>, vector<1x1x32xf32>
    %98 = vector.shape_cast %97 : vector<1x1x32xf32> to vector<1x32xf32>
    %cst_66 = arith.constant dense<0.000000e+00> : vector<32xf32>
    %99 = vector.multi_reduction <add>, %94, %cst_66 [1] : vector<32x32xf32> to vector<32xf32>
    %100 = vector.shape_cast %99 : vector<32xf32> to vector<32x1xf32>
    %cst_67 = arith.constant 3.200000e+01 : f32
    %101 = vector.broadcast %cst_67 : f32 to vector<32x1xf32>
    %102 = arith.divf %100, %101 : vector<32x1xf32>
    %103 = vector.broadcast %102 : vector<32x1xf32> to vector<32x32xf32>
    %104 = arith.subf %94, %103 : vector<32x32xf32>
    %105 = arith.mulf %104, %104 : vector<32x32xf32>
    %cst_68 = arith.constant dense<0.000000e+00> : vector<32xf32>
    %106 = vector.multi_reduction <add>, %105, %cst_68 [1] : vector<32x32xf32> to vector<32xf32>
    %107 = vector.shape_cast %106 : vector<32xf32> to vector<32x1xf32>
    %cst_69 = arith.constant 3.200000e+01 : f32
    %108 = vector.broadcast %cst_69 : f32 to vector<32x1xf32>
    %109 = arith.divf %107, %108 : vector<32x1xf32>
    %cst_70 = arith.constant 9.99999974E-6 : f32
    %110 = vector.broadcast %cst_70 : f32 to vector<32x1xf32>
    %111 = arith.addf %109, %110 : vector<32x1xf32>
    %112 = math.rsqrt %111 : vector<32x1xf32>
    %113 = vector.broadcast %112 : vector<32x1xf32> to vector<32x32xf32>
    %114 = arith.mulf %104, %113 : vector<32x32xf32>
    %115 = vector.broadcast %96 : vector<1x32xf32> to vector<32x32xf32>
    %116 = arith.mulf %114, %115 : vector<32x32xf32>
    %117 = vector.broadcast %98 : vector<1x32xf32> to vector<32x32xf32>
    %118 = arith.addf %116, %117 : vector<32x32xf32>
    %c0_71 = arith.constant 0 : index
    %c0_72 = arith.constant 0 : index
    %c0_73 = arith.constant 0 : index
    %119 = vector.load %arg10[%c0_71, %c0_72, %c0_73] : memref<2x32x32xf32, #tpu.memory_space<vmem>>, vector<1x32x32xf32>
    %120 = vector.shape_cast %119 : vector<1x32x32xf32> to vector<32x32xf32>
    %c0_74 = arith.constant 0 : index
    %c0_75 = arith.constant 0 : index
    %c0_76 = arith.constant 0 : index
    %121 = vector.load %arg11[%c0_74, %c0_75, %c0_76] : memref<2x1x32xf32, #tpu.memory_space<vmem>>, vector<1x1x32xf32>
    %122 = vector.shape_cast %121 : vector<1x1x32xf32> to vector<1x32xf32>
    %c0_77 = arith.constant 0 : index
    %c0_78 = arith.constant 0 : index
    %c0_79 = arith.constant 0 : index
    %123 = vector.load %arg8[%c0_77, %c0_78, %c0_79] : memref<2x32x32xf32, #tpu.memory_space<vmem>>, vector<1x32x32xf32>
    %124 = vector.shape_cast %123 : vector<1x32x32xf32> to vector<32x32xf32>
    %c0_80 = arith.constant 0 : index
    %c0_81 = arith.constant 0 : index
    %c0_82 = arith.constant 0 : index
    %125 = vector.load %arg9[%c0_80, %c0_81, %c0_82] : memref<2x1x32xf32, #tpu.memory_space<vmem>>, vector<1x1x32xf32>
    %126 = vector.shape_cast %125 : vector<1x1x32xf32> to vector<1x32xf32>
    %cst_83 = arith.constant dense<0.000000e+00> : vector<32x32xf32>
    %127 = tpu.matmul %118, %120, %cst_83 {dimension_numbers = #tpu.dot_dimension_numbers<[1], [0], [0], [1], [0, 0, 1, 1], [], []>} : vector<32x32xf32>, vector<32x32xf32>, vector<32x32xf32> -> vector<32x32xf32>
    %128 = vector.broadcast %122 : vector<1x32xf32> to vector<32x32xf32>
    %129 = arith.addf %127, %128 : vector<32x32xf32>
    %cst_84 = arith.constant 0.000000e+00 : f32
    %130 = vector.broadcast %cst_84 : f32 to vector<32x32xf32>
    %131 = arith.cmpf ogt, %129, %130 : vector<32x32xf32>
    %cst_85 = arith.constant 0.000000e+00 : f32
    %132 = vector.broadcast %cst_85 : f32 to vector<32x32xf32>
    %133 = arith.minimumf %129, %132 : vector<32x32xf32>
    %134 = math.exp %133 : vector<32x32xf32>
    %cst_86 = arith.constant 1.000000e+00 : f32
    %135 = vector.broadcast %cst_86 : f32 to vector<32x32xf32>
    %136 = arith.subf %134, %135 : vector<32x32xf32>
    %137 = arith.select %131, %129, %136 : vector<32x32xi1>, vector<32x32xf32>
    %cst_87 = arith.constant dense<0.000000e+00> : vector<32x32xf32>
    %138 = tpu.matmul %137, %124, %cst_87 {dimension_numbers = #tpu.dot_dimension_numbers<[1], [0], [0], [1], [0, 0, 1, 1], [], []>} : vector<32x32xf32>, vector<32x32xf32>, vector<32x32xf32> -> vector<32x32xf32>
    %139 = vector.broadcast %126 : vector<1x32xf32> to vector<32x32xf32>
    %140 = arith.addf %138, %139 : vector<32x32xf32>
    %141 = arith.addf %118, %140 : vector<32x32xf32>
    %c0_88 = arith.constant 0 : index
    %c0_89 = arith.constant 0 : index
    %c0_90 = arith.constant 0 : index
    %142 = vector.load %arg12[%c0_88, %c0_89, %c0_90] : memref<2x1x32xf32, #tpu.memory_space<vmem>>, vector<1x1x32xf32>
    %143 = vector.shape_cast %142 : vector<1x1x32xf32> to vector<1x32xf32>
    %c0_91 = arith.constant 0 : index
    %c0_92 = arith.constant 0 : index
    %c0_93 = arith.constant 0 : index
    %144 = vector.load %arg13[%c0_91, %c0_92, %c0_93] : memref<2x1x32xf32, #tpu.memory_space<vmem>>, vector<1x1x32xf32>
    %145 = vector.shape_cast %144 : vector<1x1x32xf32> to vector<1x32xf32>
    %cst_94 = arith.constant dense<0.000000e+00> : vector<32xf32>
    %146 = vector.multi_reduction <add>, %141, %cst_94 [1] : vector<32x32xf32> to vector<32xf32>
    %147 = vector.shape_cast %146 : vector<32xf32> to vector<32x1xf32>
    %cst_95 = arith.constant 3.200000e+01 : f32
    %148 = vector.broadcast %cst_95 : f32 to vector<32x1xf32>
    %149 = arith.divf %147, %148 : vector<32x1xf32>
    %150 = vector.broadcast %149 : vector<32x1xf32> to vector<32x32xf32>
    %151 = arith.subf %141, %150 : vector<32x32xf32>
    %152 = arith.mulf %151, %151 : vector<32x32xf32>
    %cst_96 = arith.constant dense<0.000000e+00> : vector<32xf32>
    %153 = vector.multi_reduction <add>, %152, %cst_96 [1] : vector<32x32xf32> to vector<32xf32>
    %154 = vector.shape_cast %153 : vector<32xf32> to vector<32x1xf32>
    %cst_97 = arith.constant 3.200000e+01 : f32
    %155 = vector.broadcast %cst_97 : f32 to vector<32x1xf32>
    %156 = arith.divf %154, %155 : vector<32x1xf32>
    %cst_98 = arith.constant 9.99999974E-6 : f32
    %157 = vector.broadcast %cst_98 : f32 to vector<32x1xf32>
    %158 = arith.addf %156, %157 : vector<32x1xf32>
    %159 = math.rsqrt %158 : vector<32x1xf32>
    %160 = vector.broadcast %159 : vector<32x1xf32> to vector<32x32xf32>
    %161 = arith.mulf %151, %160 : vector<32x32xf32>
    %162 = vector.broadcast %143 : vector<1x32xf32> to vector<32x32xf32>
    %163 = arith.mulf %161, %162 : vector<32x32xf32>
    %164 = vector.broadcast %145 : vector<1x32xf32> to vector<32x32xf32>
    %165 = arith.addf %163, %164 : vector<32x32xf32>
    %cst_99 = arith.constant 0.000000e+00 : f32
    %166 = vector.broadcast %cst_99 : f32 to vector<32x32xf32>
    %c1_100 = arith.constant 1 : index
    %c0_101 = arith.constant 0 : index
    %c0_102 = arith.constant 0 : index
    %c0_103 = arith.constant 0 : index
    %167 = vector.load %arg2[%c1_100, %c0_101, %c0_102, %c0_103] : memref<2x2x32x16xf32, #tpu.memory_space<vmem>>, vector<1x1x32x16xf32>
    %168 = vector.shape_cast %167 : vector<1x1x32x16xf32> to vector<32x16xf32>
    %cst_104 = arith.constant dense<0.000000e+00> : vector<32x16xf32>
    %169 = tpu.matmul %165, %168, %cst_104 {dimension_numbers = #tpu.dot_dimension_numbers<[1], [0], [0], [1], [0, 0, 1, 1], [], []>} : vector<32x32xf32>, vector<32x16xf32>, vector<32x16xf32> -> vector<32x16xf32>
    %c1_105 = arith.constant 1 : index
    %c0_106 = arith.constant 0 : index
    %c0_107 = arith.constant 0 : index
    %c0_108 = arith.constant 0 : index
    %170 = vector.load %arg3[%c1_105, %c0_106, %c0_107, %c0_108] : memref<2x2x32x16xf32, #tpu.memory_space<vmem>>, vector<1x1x32x16xf32>
    %171 = vector.shape_cast %170 : vector<1x1x32x16xf32> to vector<32x16xf32>
    %cst_109 = arith.constant dense<0.000000e+00> : vector<32x16xf32>
    %172 = tpu.matmul %165, %171, %cst_109 {dimension_numbers = #tpu.dot_dimension_numbers<[1], [0], [0], [1], [0, 0, 1, 1], [], []>} : vector<32x32xf32>, vector<32x16xf32>, vector<32x16xf32> -> vector<32x16xf32>
    %c1_110 = arith.constant 1 : index
    %c0_111 = arith.constant 0 : index
    %c0_112 = arith.constant 0 : index
    %c0_113 = arith.constant 0 : index
    %173 = vector.load %arg4[%c1_110, %c0_111, %c0_112, %c0_113] : memref<2x2x32x32xf32, #tpu.memory_space<vmem>>, vector<1x1x32x32xf32>
    %174 = vector.shape_cast %173 : vector<1x1x32x32xf32> to vector<32x32xf32>
    %cst_114 = arith.constant dense<0.000000e+00> : vector<32x32xf32>
    %175 = tpu.matmul %165, %174, %cst_114 {dimension_numbers = #tpu.dot_dimension_numbers<[1], [0], [0], [1], [0, 0, 1, 1], [], []>} : vector<32x32xf32>, vector<32x32xf32>, vector<32x32xf32> -> vector<32x32xf32>
    %176 = vector.extract_strided_slice %169 {offsets = [0, 0], sizes = [16, 16], strides = [1, 1]} : vector<32x16xf32> to vector<16x16xf32>
    %177 = vector.extract_strided_slice %172 {offsets = [0, 0], sizes = [16, 16], strides = [1, 1]} : vector<32x16xf32> to vector<16x16xf32>
    %178 = vector.extract_strided_slice %175 {offsets = [0, 0], sizes = [16, 32], strides = [1, 1]} : vector<32x32xf32> to vector<16x32xf32>
    %cst_115 = arith.constant dense<0.000000e+00> : vector<16x16xf32>
    %179 = tpu.matmul %176, %177, %cst_115 {dimension_numbers = #tpu.dot_dimension_numbers<[1], [1], [0], [0], [0, 0, 1, 0], [], []>} : vector<16x16xf32>, vector<16x16xf32>, vector<16x16xf32> -> vector<16x16xf32>
    %cst_116 = arith.constant 2.500000e-01 : f32
    %180 = vector.broadcast %cst_116 : f32 to vector<16x16xf32>
    %181 = arith.mulf %179, %180 : vector<16x16xf32>
    %cst_117 = arith.constant dense<0xFF800000> : vector<16xf32>
    %182 = vector.multi_reduction <maximumf>, %181, %cst_117 [1] : vector<16x16xf32> to vector<16xf32>
    %183 = vector.shape_cast %182 : vector<16xf32> to vector<16x1xf32>
    %184 = vector.broadcast %183 : vector<16x1xf32> to vector<16x16xf32>
    %185 = arith.subf %181, %184 : vector<16x16xf32>
    %186 = math.exp %185 : vector<16x16xf32>
    %cst_118 = arith.constant dense<0.000000e+00> : vector<16xf32>
    %187 = vector.multi_reduction <add>, %186, %cst_118 [1] : vector<16x16xf32> to vector<16xf32>
    %188 = vector.shape_cast %187 : vector<16xf32> to vector<16x1xf32>
    %189 = vector.broadcast %188 : vector<16x1xf32> to vector<16x16xf32>
    %190 = arith.divf %186, %189 : vector<16x16xf32>
    %cst_119 = arith.constant dense<0.000000e+00> : vector<16x32xf32>
    %191 = tpu.matmul %190, %178, %cst_119 {dimension_numbers = #tpu.dot_dimension_numbers<[1], [0], [0], [1], [0, 0, 1, 1], [], []>} : vector<16x16xf32>, vector<16x32xf32>, vector<16x32xf32> -> vector<16x32xf32>
    %192 = vector.extract_strided_slice %169 {offsets = [16, 0], sizes = [16, 16], strides = [1, 1]} : vector<32x16xf32> to vector<16x16xf32>
    %193 = vector.extract_strided_slice %172 {offsets = [16, 0], sizes = [16, 16], strides = [1, 1]} : vector<32x16xf32> to vector<16x16xf32>
    %194 = vector.extract_strided_slice %175 {offsets = [16, 0], sizes = [16, 32], strides = [1, 1]} : vector<32x32xf32> to vector<16x32xf32>
    %cst_120 = arith.constant dense<0.000000e+00> : vector<16x16xf32>
    %195 = tpu.matmul %192, %193, %cst_120 {dimension_numbers = #tpu.dot_dimension_numbers<[1], [1], [0], [0], [0, 0, 1, 0], [], []>} : vector<16x16xf32>, vector<16x16xf32>, vector<16x16xf32> -> vector<16x16xf32>
    %cst_121 = arith.constant 2.500000e-01 : f32
    %196 = vector.broadcast %cst_121 : f32 to vector<16x16xf32>
    %197 = arith.mulf %195, %196 : vector<16x16xf32>
    %cst_122 = arith.constant dense<0xFF800000> : vector<16xf32>
    %198 = vector.multi_reduction <maximumf>, %197, %cst_122 [1] : vector<16x16xf32> to vector<16xf32>
    %199 = vector.shape_cast %198 : vector<16xf32> to vector<16x1xf32>
    %200 = vector.broadcast %199 : vector<16x1xf32> to vector<16x16xf32>
    %201 = arith.subf %197, %200 : vector<16x16xf32>
    %202 = math.exp %201 : vector<16x16xf32>
    %cst_123 = arith.constant dense<0.000000e+00> : vector<16xf32>
    %203 = vector.multi_reduction <add>, %202, %cst_123 [1] : vector<16x16xf32> to vector<16xf32>
    %204 = vector.shape_cast %203 : vector<16xf32> to vector<16x1xf32>
    %205 = vector.broadcast %204 : vector<16x1xf32> to vector<16x16xf32>
    %206 = arith.divf %202, %205 : vector<16x16xf32>
    %cst_124 = arith.constant dense<0.000000e+00> : vector<16x32xf32>
    %207 = tpu.matmul %206, %194, %cst_124 {dimension_numbers = #tpu.dot_dimension_numbers<[1], [0], [0], [1], [0, 0, 1, 1], [], []>} : vector<16x16xf32>, vector<16x32xf32>, vector<16x32xf32> -> vector<16x32xf32>
    %208 = tpu.concatenate %191, %207 in 0 : vector<16x32xf32>, vector<16x32xf32> -> vector<32x32xf32>
    %c1_125 = arith.constant 1 : index
    %c0_126 = arith.constant 0 : index
    %c0_127 = arith.constant 0 : index
    %c0_128 = arith.constant 0 : index
    %209 = vector.load %arg5[%c1_125, %c0_126, %c0_127, %c0_128] : memref<2x2x32x32xf32, #tpu.memory_space<vmem>>, vector<1x1x32x32xf32>
    %210 = vector.shape_cast %209 : vector<1x1x32x32xf32> to vector<32x32xf32>
    %cst_129 = arith.constant dense<0.000000e+00> : vector<32x32xf32>
    %211 = tpu.matmul %208, %210, %cst_129 {dimension_numbers = #tpu.dot_dimension_numbers<[1], [0], [0], [1], [0, 0, 1, 1], [], []>} : vector<32x32xf32>, vector<32x32xf32>, vector<32x32xf32> -> vector<32x32xf32>
    %212 = arith.addf %166, %211 : vector<32x32xf32>
    %c1_130 = arith.constant 1 : index
    %c1_131 = arith.constant 1 : index
    %c0_132 = arith.constant 0 : index
    %c0_133 = arith.constant 0 : index
    %213 = vector.load %arg2[%c1_130, %c1_131, %c0_132, %c0_133] : memref<2x2x32x16xf32, #tpu.memory_space<vmem>>, vector<1x1x32x16xf32>
    %214 = vector.shape_cast %213 : vector<1x1x32x16xf32> to vector<32x16xf32>
    %cst_134 = arith.constant dense<0.000000e+00> : vector<32x16xf32>
    %215 = tpu.matmul %165, %214, %cst_134 {dimension_numbers = #tpu.dot_dimension_numbers<[1], [0], [0], [1], [0, 0, 1, 1], [], []>} : vector<32x32xf32>, vector<32x16xf32>, vector<32x16xf32> -> vector<32x16xf32>
    %c1_135 = arith.constant 1 : index
    %c1_136 = arith.constant 1 : index
    %c0_137 = arith.constant 0 : index
    %c0_138 = arith.constant 0 : index
    %216 = vector.load %arg3[%c1_135, %c1_136, %c0_137, %c0_138] : memref<2x2x32x16xf32, #tpu.memory_space<vmem>>, vector<1x1x32x16xf32>
    %217 = vector.shape_cast %216 : vector<1x1x32x16xf32> to vector<32x16xf32>
    %cst_139 = arith.constant dense<0.000000e+00> : vector<32x16xf32>
    %218 = tpu.matmul %165, %217, %cst_139 {dimension_numbers = #tpu.dot_dimension_numbers<[1], [0], [0], [1], [0, 0, 1, 1], [], []>} : vector<32x32xf32>, vector<32x16xf32>, vector<32x16xf32> -> vector<32x16xf32>
    %c1_140 = arith.constant 1 : index
    %c1_141 = arith.constant 1 : index
    %c0_142 = arith.constant 0 : index
    %c0_143 = arith.constant 0 : index
    %219 = vector.load %arg4[%c1_140, %c1_141, %c0_142, %c0_143] : memref<2x2x32x32xf32, #tpu.memory_space<vmem>>, vector<1x1x32x32xf32>
    %220 = vector.shape_cast %219 : vector<1x1x32x32xf32> to vector<32x32xf32>
    %cst_144 = arith.constant dense<0.000000e+00> : vector<32x32xf32>
    %221 = tpu.matmul %165, %220, %cst_144 {dimension_numbers = #tpu.dot_dimension_numbers<[1], [0], [0], [1], [0, 0, 1, 1], [], []>} : vector<32x32xf32>, vector<32x32xf32>, vector<32x32xf32> -> vector<32x32xf32>
    %222 = vector.extract_strided_slice %215 {offsets = [0, 0], sizes = [16, 16], strides = [1, 1]} : vector<32x16xf32> to vector<16x16xf32>
    %223 = vector.extract_strided_slice %218 {offsets = [0, 0], sizes = [16, 16], strides = [1, 1]} : vector<32x16xf32> to vector<16x16xf32>
    %224 = vector.extract_strided_slice %221 {offsets = [0, 0], sizes = [16, 32], strides = [1, 1]} : vector<32x32xf32> to vector<16x32xf32>
    %cst_145 = arith.constant dense<0.000000e+00> : vector<16x16xf32>
    %225 = tpu.matmul %222, %223, %cst_145 {dimension_numbers = #tpu.dot_dimension_numbers<[1], [1], [0], [0], [0, 0, 1, 0], [], []>} : vector<16x16xf32>, vector<16x16xf32>, vector<16x16xf32> -> vector<16x16xf32>
    %cst_146 = arith.constant 2.500000e-01 : f32
    %226 = vector.broadcast %cst_146 : f32 to vector<16x16xf32>
    %227 = arith.mulf %225, %226 : vector<16x16xf32>
    %cst_147 = arith.constant dense<0xFF800000> : vector<16xf32>
    %228 = vector.multi_reduction <maximumf>, %227, %cst_147 [1] : vector<16x16xf32> to vector<16xf32>
    %229 = vector.shape_cast %228 : vector<16xf32> to vector<16x1xf32>
    %230 = vector.broadcast %229 : vector<16x1xf32> to vector<16x16xf32>
    %231 = arith.subf %227, %230 : vector<16x16xf32>
    %232 = math.exp %231 : vector<16x16xf32>
    %cst_148 = arith.constant dense<0.000000e+00> : vector<16xf32>
    %233 = vector.multi_reduction <add>, %232, %cst_148 [1] : vector<16x16xf32> to vector<16xf32>
    %234 = vector.shape_cast %233 : vector<16xf32> to vector<16x1xf32>
    %235 = vector.broadcast %234 : vector<16x1xf32> to vector<16x16xf32>
    %236 = arith.divf %232, %235 : vector<16x16xf32>
    %cst_149 = arith.constant dense<0.000000e+00> : vector<16x32xf32>
    %237 = tpu.matmul %236, %224, %cst_149 {dimension_numbers = #tpu.dot_dimension_numbers<[1], [0], [0], [1], [0, 0, 1, 1], [], []>} : vector<16x16xf32>, vector<16x32xf32>, vector<16x32xf32> -> vector<16x32xf32>
    %238 = vector.extract_strided_slice %215 {offsets = [16, 0], sizes = [16, 16], strides = [1, 1]} : vector<32x16xf32> to vector<16x16xf32>
    %239 = vector.extract_strided_slice %218 {offsets = [16, 0], sizes = [16, 16], strides = [1, 1]} : vector<32x16xf32> to vector<16x16xf32>
    %240 = vector.extract_strided_slice %221 {offsets = [16, 0], sizes = [16, 32], strides = [1, 1]} : vector<32x32xf32> to vector<16x32xf32>
    %cst_150 = arith.constant dense<0.000000e+00> : vector<16x16xf32>
    %241 = tpu.matmul %238, %239, %cst_150 {dimension_numbers = #tpu.dot_dimension_numbers<[1], [1], [0], [0], [0, 0, 1, 0], [], []>} : vector<16x16xf32>, vector<16x16xf32>, vector<16x16xf32> -> vector<16x16xf32>
    %cst_151 = arith.constant 2.500000e-01 : f32
    %242 = vector.broadcast %cst_151 : f32 to vector<16x16xf32>
    %243 = arith.mulf %241, %242 : vector<16x16xf32>
    %cst_152 = arith.constant dense<0xFF800000> : vector<16xf32>
    %244 = vector.multi_reduction <maximumf>, %243, %cst_152 [1] : vector<16x16xf32> to vector<16xf32>
    %245 = vector.shape_cast %244 : vector<16xf32> to vector<16x1xf32>
    %246 = vector.broadcast %245 : vector<16x1xf32> to vector<16x16xf32>
    %247 = arith.subf %243, %246 : vector<16x16xf32>
    %248 = math.exp %247 : vector<16x16xf32>
    %cst_153 = arith.constant dense<0.000000e+00> : vector<16xf32>
    %249 = vector.multi_reduction <add>, %248, %cst_153 [1] : vector<16x16xf32> to vector<16xf32>
    %250 = vector.shape_cast %249 : vector<16xf32> to vector<16x1xf32>
    %251 = vector.broadcast %250 : vector<16x1xf32> to vector<16x16xf32>
    %252 = arith.divf %248, %251 : vector<16x16xf32>
    %cst_154 = arith.constant dense<0.000000e+00> : vector<16x32xf32>
    %253 = tpu.matmul %252, %240, %cst_154 {dimension_numbers = #tpu.dot_dimension_numbers<[1], [0], [0], [1], [0, 0, 1, 1], [], []>} : vector<16x16xf32>, vector<16x32xf32>, vector<16x32xf32> -> vector<16x32xf32>
    %254 = tpu.concatenate %237, %253 in 0 : vector<16x32xf32>, vector<16x32xf32> -> vector<32x32xf32>
    %c1_155 = arith.constant 1 : index
    %c1_156 = arith.constant 1 : index
    %c0_157 = arith.constant 0 : index
    %c0_158 = arith.constant 0 : index
    %255 = vector.load %arg5[%c1_155, %c1_156, %c0_157, %c0_158] : memref<2x2x32x32xf32, #tpu.memory_space<vmem>>, vector<1x1x32x32xf32>
    %256 = vector.shape_cast %255 : vector<1x1x32x32xf32> to vector<32x32xf32>
    %cst_159 = arith.constant dense<0.000000e+00> : vector<32x32xf32>
    %257 = tpu.matmul %254, %256, %cst_159 {dimension_numbers = #tpu.dot_dimension_numbers<[1], [0], [0], [1], [0, 0, 1, 1], [], []>} : vector<32x32xf32>, vector<32x32xf32>, vector<32x32xf32> -> vector<32x32xf32>
    %258 = arith.addf %212, %257 : vector<32x32xf32>
    %259 = arith.addf %165, %258 : vector<32x32xf32>
    %c1_160 = arith.constant 1 : index
    %c0_161 = arith.constant 0 : index
    %c0_162 = arith.constant 0 : index
    %260 = vector.load %arg6[%c1_160, %c0_161, %c0_162] : memref<2x1x32xf32, #tpu.memory_space<vmem>>, vector<1x1x32xf32>
    %261 = vector.shape_cast %260 : vector<1x1x32xf32> to vector<1x32xf32>
    %c1_163 = arith.constant 1 : index
    %c0_164 = arith.constant 0 : index
    %c0_165 = arith.constant 0 : index
    %262 = vector.load %arg7[%c1_163, %c0_164, %c0_165] : memref<2x1x32xf32, #tpu.memory_space<vmem>>, vector<1x1x32xf32>
    %263 = vector.shape_cast %262 : vector<1x1x32xf32> to vector<1x32xf32>
    %cst_166 = arith.constant dense<0.000000e+00> : vector<32xf32>
    %264 = vector.multi_reduction <add>, %259, %cst_166 [1] : vector<32x32xf32> to vector<32xf32>
    %265 = vector.shape_cast %264 : vector<32xf32> to vector<32x1xf32>
    %cst_167 = arith.constant 3.200000e+01 : f32
    %266 = vector.broadcast %cst_167 : f32 to vector<32x1xf32>
    %267 = arith.divf %265, %266 : vector<32x1xf32>
    %268 = vector.broadcast %267 : vector<32x1xf32> to vector<32x32xf32>
    %269 = arith.subf %259, %268 : vector<32x32xf32>
    %270 = arith.mulf %269, %269 : vector<32x32xf32>
    %cst_168 = arith.constant dense<0.000000e+00> : vector<32xf32>
    %271 = vector.multi_reduction <add>, %270, %cst_168 [1] : vector<32x32xf32> to vector<32xf32>
    %272 = vector.shape_cast %271 : vector<32xf32> to vector<32x1xf32>
    %cst_169 = arith.constant 3.200000e+01 : f32
    %273 = vector.broadcast %cst_169 : f32 to vector<32x1xf32>
    %274 = arith.divf %272, %273 : vector<32x1xf32>
    %cst_170 = arith.constant 9.99999974E-6 : f32
    %275 = vector.broadcast %cst_170 : f32 to vector<32x1xf32>
    %276 = arith.addf %274, %275 : vector<32x1xf32>
    %277 = math.rsqrt %276 : vector<32x1xf32>
    %278 = vector.broadcast %277 : vector<32x1xf32> to vector<32x32xf32>
    %279 = arith.mulf %269, %278 : vector<32x32xf32>
    %280 = vector.broadcast %261 : vector<1x32xf32> to vector<32x32xf32>
    %281 = arith.mulf %279, %280 : vector<32x32xf32>
    %282 = vector.broadcast %263 : vector<1x32xf32> to vector<32x32xf32>
    %283 = arith.addf %281, %282 : vector<32x32xf32>
    %c1_171 = arith.constant 1 : index
    %c0_172 = arith.constant 0 : index
    %c0_173 = arith.constant 0 : index
    %284 = vector.load %arg10[%c1_171, %c0_172, %c0_173] : memref<2x32x32xf32, #tpu.memory_space<vmem>>, vector<1x32x32xf32>
    %285 = vector.shape_cast %284 : vector<1x32x32xf32> to vector<32x32xf32>
    %c1_174 = arith.constant 1 : index
    %c0_175 = arith.constant 0 : index
    %c0_176 = arith.constant 0 : index
    %286 = vector.load %arg11[%c1_174, %c0_175, %c0_176] : memref<2x1x32xf32, #tpu.memory_space<vmem>>, vector<1x1x32xf32>
    %287 = vector.shape_cast %286 : vector<1x1x32xf32> to vector<1x32xf32>
    %c1_177 = arith.constant 1 : index
    %c0_178 = arith.constant 0 : index
    %c0_179 = arith.constant 0 : index
    %288 = vector.load %arg8[%c1_177, %c0_178, %c0_179] : memref<2x32x32xf32, #tpu.memory_space<vmem>>, vector<1x32x32xf32>
    %289 = vector.shape_cast %288 : vector<1x32x32xf32> to vector<32x32xf32>
    %c1_180 = arith.constant 1 : index
    %c0_181 = arith.constant 0 : index
    %c0_182 = arith.constant 0 : index
    %290 = vector.load %arg9[%c1_180, %c0_181, %c0_182] : memref<2x1x32xf32, #tpu.memory_space<vmem>>, vector<1x1x32xf32>
    %291 = vector.shape_cast %290 : vector<1x1x32xf32> to vector<1x32xf32>
    %cst_183 = arith.constant dense<0.000000e+00> : vector<32x32xf32>
    %292 = tpu.matmul %283, %285, %cst_183 {dimension_numbers = #tpu.dot_dimension_numbers<[1], [0], [0], [1], [0, 0, 1, 1], [], []>} : vector<32x32xf32>, vector<32x32xf32>, vector<32x32xf32> -> vector<32x32xf32>
    %293 = vector.broadcast %287 : vector<1x32xf32> to vector<32x32xf32>
    %294 = arith.addf %292, %293 : vector<32x32xf32>
    %cst_184 = arith.constant 0.000000e+00 : f32
    %295 = vector.broadcast %cst_184 : f32 to vector<32x32xf32>
    %296 = arith.cmpf ogt, %294, %295 : vector<32x32xf32>
    %cst_185 = arith.constant 0.000000e+00 : f32
    %297 = vector.broadcast %cst_185 : f32 to vector<32x32xf32>
    %298 = arith.minimumf %294, %297 : vector<32x32xf32>
    %299 = math.exp %298 : vector<32x32xf32>
    %cst_186 = arith.constant 1.000000e+00 : f32
    %300 = vector.broadcast %cst_186 : f32 to vector<32x32xf32>
    %301 = arith.subf %299, %300 : vector<32x32xf32>
    %302 = arith.select %296, %294, %301 : vector<32x32xi1>, vector<32x32xf32>
    %cst_187 = arith.constant dense<0.000000e+00> : vector<32x32xf32>
    %303 = tpu.matmul %302, %289, %cst_187 {dimension_numbers = #tpu.dot_dimension_numbers<[1], [0], [0], [1], [0, 0, 1, 1], [], []>} : vector<32x32xf32>, vector<32x32xf32>, vector<32x32xf32> -> vector<32x32xf32>
    %304 = vector.broadcast %291 : vector<1x32xf32> to vector<32x32xf32>
    %305 = arith.addf %303, %304 : vector<32x32xf32>
    %306 = arith.addf %283, %305 : vector<32x32xf32>
    %c1_188 = arith.constant 1 : index
    %c0_189 = arith.constant 0 : index
    %c0_190 = arith.constant 0 : index
    %307 = vector.load %arg12[%c1_188, %c0_189, %c0_190] : memref<2x1x32xf32, #tpu.memory_space<vmem>>, vector<1x1x32xf32>
    %308 = vector.shape_cast %307 : vector<1x1x32xf32> to vector<1x32xf32>
    %c1_191 = arith.constant 1 : index
    %c0_192 = arith.constant 0 : index
    %c0_193 = arith.constant 0 : index
    %309 = vector.load %arg13[%c1_191, %c0_192, %c0_193] : memref<2x1x32xf32, #tpu.memory_space<vmem>>, vector<1x1x32xf32>
    %310 = vector.shape_cast %309 : vector<1x1x32xf32> to vector<1x32xf32>
    %cst_194 = arith.constant dense<0.000000e+00> : vector<32xf32>
    %311 = vector.multi_reduction <add>, %306, %cst_194 [1] : vector<32x32xf32> to vector<32xf32>
    %312 = vector.shape_cast %311 : vector<32xf32> to vector<32x1xf32>
    %cst_195 = arith.constant 3.200000e+01 : f32
    %313 = vector.broadcast %cst_195 : f32 to vector<32x1xf32>
    %314 = arith.divf %312, %313 : vector<32x1xf32>
    %315 = vector.broadcast %314 : vector<32x1xf32> to vector<32x32xf32>
    %316 = arith.subf %306, %315 : vector<32x32xf32>
    %317 = arith.mulf %316, %316 : vector<32x32xf32>
    %cst_196 = arith.constant dense<0.000000e+00> : vector<32xf32>
    %318 = vector.multi_reduction <add>, %317, %cst_196 [1] : vector<32x32xf32> to vector<32xf32>
    %319 = vector.shape_cast %318 : vector<32xf32> to vector<32x1xf32>
    %cst_197 = arith.constant 3.200000e+01 : f32
    %320 = vector.broadcast %cst_197 : f32 to vector<32x1xf32>
    %321 = arith.divf %319, %320 : vector<32x1xf32>
    %cst_198 = arith.constant 9.99999974E-6 : f32
    %322 = vector.broadcast %cst_198 : f32 to vector<32x1xf32>
    %323 = arith.addf %321, %322 : vector<32x1xf32>
    %324 = math.rsqrt %323 : vector<32x1xf32>
    %325 = vector.broadcast %324 : vector<32x1xf32> to vector<32x32xf32>
    %326 = arith.mulf %316, %325 : vector<32x32xf32>
    %327 = vector.broadcast %308 : vector<1x32xf32> to vector<32x32xf32>
    %328 = arith.mulf %326, %327 : vector<32x32xf32>
    %329 = vector.broadcast %310 : vector<1x32xf32> to vector<32x32xf32>
    %330 = arith.addf %328, %329 : vector<32x32xf32>
    %c0_199 = arith.constant 0 : index
    %c0_200 = arith.constant 0 : index
    %331 = vector.load %arg1[%c0_199, %c0_200] : memref<16x32xf32, #tpu.memory_space<vmem>>, vector<16x32xf32>
    %cst_201 = arith.constant 0.000000e+00 : f32
    %332 = vector.broadcast %cst_201 : f32 to vector<16x32xf32>
    %c0_202 = arith.constant 0 : index
    %c0_203 = arith.constant 0 : index
    %c0_204 = arith.constant 0 : index
    %c0_205 = arith.constant 0 : index
    %333 = vector.load %arg14[%c0_202, %c0_203, %c0_204, %c0_205] : memref<2x2x32x16xf32, #tpu.memory_space<vmem>>, vector<1x1x32x16xf32>
    %334 = vector.shape_cast %333 : vector<1x1x32x16xf32> to vector<32x16xf32>
    %cst_206 = arith.constant dense<0.000000e+00> : vector<16x16xf32>
    %335 = tpu.matmul %331, %334, %cst_206 {dimension_numbers = #tpu.dot_dimension_numbers<[1], [0], [0], [1], [0, 0, 1, 1], [], []>} : vector<16x32xf32>, vector<32x16xf32>, vector<16x16xf32> -> vector<16x16xf32>
    %c0_207 = arith.constant 0 : index
    %c0_208 = arith.constant 0 : index
    %c0_209 = arith.constant 0 : index
    %c0_210 = arith.constant 0 : index
    %336 = vector.load %arg15[%c0_207, %c0_208, %c0_209, %c0_210] : memref<2x2x32x16xf32, #tpu.memory_space<vmem>>, vector<1x1x32x16xf32>
    %337 = vector.shape_cast %336 : vector<1x1x32x16xf32> to vector<32x16xf32>
    %cst_211 = arith.constant dense<0.000000e+00> : vector<16x16xf32>
    %338 = tpu.matmul %331, %337, %cst_211 {dimension_numbers = #tpu.dot_dimension_numbers<[1], [0], [0], [1], [0, 0, 1, 1], [], []>} : vector<16x32xf32>, vector<32x16xf32>, vector<16x16xf32> -> vector<16x16xf32>
    %c0_212 = arith.constant 0 : index
    %c0_213 = arith.constant 0 : index
    %c0_214 = arith.constant 0 : index
    %c0_215 = arith.constant 0 : index
    %339 = vector.load %arg16[%c0_212, %c0_213, %c0_214, %c0_215] : memref<2x2x32x32xf32, #tpu.memory_space<vmem>>, vector<1x1x32x32xf32>
    %340 = vector.shape_cast %339 : vector<1x1x32x32xf32> to vector<32x32xf32>
    %cst_216 = arith.constant dense<0.000000e+00> : vector<16x32xf32>
    %341 = tpu.matmul %331, %340, %cst_216 {dimension_numbers = #tpu.dot_dimension_numbers<[1], [0], [0], [1], [0, 0, 1, 1], [], []>} : vector<16x32xf32>, vector<32x32xf32>, vector<16x32xf32> -> vector<16x32xf32>
    %342 = vector.extract_strided_slice %335 {offsets = [0, 0], sizes = [8, 16], strides = [1, 1]} : vector<16x16xf32> to vector<8x16xf32>
    %343 = vector.extract_strided_slice %338 {offsets = [0, 0], sizes = [8, 16], strides = [1, 1]} : vector<16x16xf32> to vector<8x16xf32>
    %344 = vector.extract_strided_slice %341 {offsets = [0, 0], sizes = [8, 32], strides = [1, 1]} : vector<16x32xf32> to vector<8x32xf32>
    %cst_217 = arith.constant dense<0.000000e+00> : vector<8x8xf32>
    %345 = tpu.matmul %342, %343, %cst_217 {dimension_numbers = #tpu.dot_dimension_numbers<[1], [1], [0], [0], [0, 0, 1, 0], [], []>} : vector<8x16xf32>, vector<8x16xf32>, vector<8x8xf32> -> vector<8x8xf32>
    %cst_218 = arith.constant 2.500000e-01 : f32
    %346 = vector.broadcast %cst_218 : f32 to vector<8x8xf32>
    %347 = arith.mulf %345, %346 : vector<8x8xf32>
    %cst_219 = arith.constant dense<0xFF800000> : vector<8xf32>
    %348 = vector.multi_reduction <maximumf>, %347, %cst_219 [1] : vector<8x8xf32> to vector<8xf32>
    %349 = vector.shape_cast %348 : vector<8xf32> to vector<8x1xf32>
    %350 = vector.broadcast %349 : vector<8x1xf32> to vector<8x8xf32>
    %351 = arith.subf %347, %350 : vector<8x8xf32>
    %352 = math.exp %351 : vector<8x8xf32>
    %cst_220 = arith.constant dense<0.000000e+00> : vector<8xf32>
    %353 = vector.multi_reduction <add>, %352, %cst_220 [1] : vector<8x8xf32> to vector<8xf32>
    %354 = vector.shape_cast %353 : vector<8xf32> to vector<8x1xf32>
    %355 = vector.broadcast %354 : vector<8x1xf32> to vector<8x8xf32>
    %356 = arith.divf %352, %355 : vector<8x8xf32>
    %cst_221 = arith.constant dense<0.000000e+00> : vector<8x32xf32>
    %357 = tpu.matmul %356, %344, %cst_221 {dimension_numbers = #tpu.dot_dimension_numbers<[1], [0], [0], [1], [0, 0, 1, 1], [], []>} : vector<8x8xf32>, vector<8x32xf32>, vector<8x32xf32> -> vector<8x32xf32>
    %358 = vector.extract_strided_slice %335 {offsets = [8, 0], sizes = [8, 16], strides = [1, 1]} : vector<16x16xf32> to vector<8x16xf32>
    %359 = vector.extract_strided_slice %338 {offsets = [8, 0], sizes = [8, 16], strides = [1, 1]} : vector<16x16xf32> to vector<8x16xf32>
    %360 = vector.extract_strided_slice %341 {offsets = [8, 0], sizes = [8, 32], strides = [1, 1]} : vector<16x32xf32> to vector<8x32xf32>
    %cst_222 = arith.constant dense<0.000000e+00> : vector<8x8xf32>
    %361 = tpu.matmul %358, %359, %cst_222 {dimension_numbers = #tpu.dot_dimension_numbers<[1], [1], [0], [0], [0, 0, 1, 0], [], []>} : vector<8x16xf32>, vector<8x16xf32>, vector<8x8xf32> -> vector<8x8xf32>
    %cst_223 = arith.constant 2.500000e-01 : f32
    %362 = vector.broadcast %cst_223 : f32 to vector<8x8xf32>
    %363 = arith.mulf %361, %362 : vector<8x8xf32>
    %cst_224 = arith.constant dense<0xFF800000> : vector<8xf32>
    %364 = vector.multi_reduction <maximumf>, %363, %cst_224 [1] : vector<8x8xf32> to vector<8xf32>
    %365 = vector.shape_cast %364 : vector<8xf32> to vector<8x1xf32>
    %366 = vector.broadcast %365 : vector<8x1xf32> to vector<8x8xf32>
    %367 = arith.subf %363, %366 : vector<8x8xf32>
    %368 = math.exp %367 : vector<8x8xf32>
    %cst_225 = arith.constant dense<0.000000e+00> : vector<8xf32>
    %369 = vector.multi_reduction <add>, %368, %cst_225 [1] : vector<8x8xf32> to vector<8xf32>
    %370 = vector.shape_cast %369 : vector<8xf32> to vector<8x1xf32>
    %371 = vector.broadcast %370 : vector<8x1xf32> to vector<8x8xf32>
    %372 = arith.divf %368, %371 : vector<8x8xf32>
    %cst_226 = arith.constant dense<0.000000e+00> : vector<8x32xf32>
    %373 = tpu.matmul %372, %360, %cst_226 {dimension_numbers = #tpu.dot_dimension_numbers<[1], [0], [0], [1], [0, 0, 1, 1], [], []>} : vector<8x8xf32>, vector<8x32xf32>, vector<8x32xf32> -> vector<8x32xf32>
    %374 = tpu.concatenate %357, %373 in 0 : vector<8x32xf32>, vector<8x32xf32> -> vector<16x32xf32>
    %c0_227 = arith.constant 0 : index
    %c0_228 = arith.constant 0 : index
    %c0_229 = arith.constant 0 : index
    %c0_230 = arith.constant 0 : index
    %375 = vector.load %arg17[%c0_227, %c0_228, %c0_229, %c0_230] : memref<2x2x32x32xf32, #tpu.memory_space<vmem>>, vector<1x1x32x32xf32>
    %376 = vector.shape_cast %375 : vector<1x1x32x32xf32> to vector<32x32xf32>
    %cst_231 = arith.constant dense<0.000000e+00> : vector<16x32xf32>
    %377 = tpu.matmul %374, %376, %cst_231 {dimension_numbers = #tpu.dot_dimension_numbers<[1], [0], [0], [1], [0, 0, 1, 1], [], []>} : vector<16x32xf32>, vector<32x32xf32>, vector<16x32xf32> -> vector<16x32xf32>
    %378 = arith.addf %332, %377 : vector<16x32xf32>
    %c0_232 = arith.constant 0 : index
    %c1_233 = arith.constant 1 : index
    %c0_234 = arith.constant 0 : index
    %c0_235 = arith.constant 0 : index
    %379 = vector.load %arg14[%c0_232, %c1_233, %c0_234, %c0_235] : memref<2x2x32x16xf32, #tpu.memory_space<vmem>>, vector<1x1x32x16xf32>
    %380 = vector.shape_cast %379 : vector<1x1x32x16xf32> to vector<32x16xf32>
    %cst_236 = arith.constant dense<0.000000e+00> : vector<16x16xf32>
    %381 = tpu.matmul %331, %380, %cst_236 {dimension_numbers = #tpu.dot_dimension_numbers<[1], [0], [0], [1], [0, 0, 1, 1], [], []>} : vector<16x32xf32>, vector<32x16xf32>, vector<16x16xf32> -> vector<16x16xf32>
    %c0_237 = arith.constant 0 : index
    %c1_238 = arith.constant 1 : index
    %c0_239 = arith.constant 0 : index
    %c0_240 = arith.constant 0 : index
    %382 = vector.load %arg15[%c0_237, %c1_238, %c0_239, %c0_240] : memref<2x2x32x16xf32, #tpu.memory_space<vmem>>, vector<1x1x32x16xf32>
    %383 = vector.shape_cast %382 : vector<1x1x32x16xf32> to vector<32x16xf32>
    %cst_241 = arith.constant dense<0.000000e+00> : vector<16x16xf32>
    %384 = tpu.matmul %331, %383, %cst_241 {dimension_numbers = #tpu.dot_dimension_numbers<[1], [0], [0], [1], [0, 0, 1, 1], [], []>} : vector<16x32xf32>, vector<32x16xf32>, vector<16x16xf32> -> vector<16x16xf32>
    %c0_242 = arith.constant 0 : index
    %c1_243 = arith.constant 1 : index
    %c0_244 = arith.constant 0 : index
    %c0_245 = arith.constant 0 : index
    %385 = vector.load %arg16[%c0_242, %c1_243, %c0_244, %c0_245] : memref<2x2x32x32xf32, #tpu.memory_space<vmem>>, vector<1x1x32x32xf32>
    %386 = vector.shape_cast %385 : vector<1x1x32x32xf32> to vector<32x32xf32>
    %cst_246 = arith.constant dense<0.000000e+00> : vector<16x32xf32>
    %387 = tpu.matmul %331, %386, %cst_246 {dimension_numbers = #tpu.dot_dimension_numbers<[1], [0], [0], [1], [0, 0, 1, 1], [], []>} : vector<16x32xf32>, vector<32x32xf32>, vector<16x32xf32> -> vector<16x32xf32>
    %388 = vector.extract_strided_slice %381 {offsets = [0, 0], sizes = [8, 16], strides = [1, 1]} : vector<16x16xf32> to vector<8x16xf32>
    %389 = vector.extract_strided_slice %384 {offsets = [0, 0], sizes = [8, 16], strides = [1, 1]} : vector<16x16xf32> to vector<8x16xf32>
    %390 = vector.extract_strided_slice %387 {offsets = [0, 0], sizes = [8, 32], strides = [1, 1]} : vector<16x32xf32> to vector<8x32xf32>
    %cst_247 = arith.constant dense<0.000000e+00> : vector<8x8xf32>
    %391 = tpu.matmul %388, %389, %cst_247 {dimension_numbers = #tpu.dot_dimension_numbers<[1], [1], [0], [0], [0, 0, 1, 0], [], []>} : vector<8x16xf32>, vector<8x16xf32>, vector<8x8xf32> -> vector<8x8xf32>
    %cst_248 = arith.constant 2.500000e-01 : f32
    %392 = vector.broadcast %cst_248 : f32 to vector<8x8xf32>
    %393 = arith.mulf %391, %392 : vector<8x8xf32>
    %cst_249 = arith.constant dense<0xFF800000> : vector<8xf32>
    %394 = vector.multi_reduction <maximumf>, %393, %cst_249 [1] : vector<8x8xf32> to vector<8xf32>
    %395 = vector.shape_cast %394 : vector<8xf32> to vector<8x1xf32>
    %396 = vector.broadcast %395 : vector<8x1xf32> to vector<8x8xf32>
    %397 = arith.subf %393, %396 : vector<8x8xf32>
    %398 = math.exp %397 : vector<8x8xf32>
    %cst_250 = arith.constant dense<0.000000e+00> : vector<8xf32>
    %399 = vector.multi_reduction <add>, %398, %cst_250 [1] : vector<8x8xf32> to vector<8xf32>
    %400 = vector.shape_cast %399 : vector<8xf32> to vector<8x1xf32>
    %401 = vector.broadcast %400 : vector<8x1xf32> to vector<8x8xf32>
    %402 = arith.divf %398, %401 : vector<8x8xf32>
    %cst_251 = arith.constant dense<0.000000e+00> : vector<8x32xf32>
    %403 = tpu.matmul %402, %390, %cst_251 {dimension_numbers = #tpu.dot_dimension_numbers<[1], [0], [0], [1], [0, 0, 1, 1], [], []>} : vector<8x8xf32>, vector<8x32xf32>, vector<8x32xf32> -> vector<8x32xf32>
    %404 = vector.extract_strided_slice %381 {offsets = [8, 0], sizes = [8, 16], strides = [1, 1]} : vector<16x16xf32> to vector<8x16xf32>
    %405 = vector.extract_strided_slice %384 {offsets = [8, 0], sizes = [8, 16], strides = [1, 1]} : vector<16x16xf32> to vector<8x16xf32>
    %406 = vector.extract_strided_slice %387 {offsets = [8, 0], sizes = [8, 32], strides = [1, 1]} : vector<16x32xf32> to vector<8x32xf32>
    %cst_252 = arith.constant dense<0.000000e+00> : vector<8x8xf32>
    %407 = tpu.matmul %404, %405, %cst_252 {dimension_numbers = #tpu.dot_dimension_numbers<[1], [1], [0], [0], [0, 0, 1, 0], [], []>} : vector<8x16xf32>, vector<8x16xf32>, vector<8x8xf32> -> vector<8x8xf32>
    %cst_253 = arith.constant 2.500000e-01 : f32
    %408 = vector.broadcast %cst_253 : f32 to vector<8x8xf32>
    %409 = arith.mulf %407, %408 : vector<8x8xf32>
    %cst_254 = arith.constant dense<0xFF800000> : vector<8xf32>
    %410 = vector.multi_reduction <maximumf>, %409, %cst_254 [1] : vector<8x8xf32> to vector<8xf32>
    %411 = vector.shape_cast %410 : vector<8xf32> to vector<8x1xf32>
    %412 = vector.broadcast %411 : vector<8x1xf32> to vector<8x8xf32>
    %413 = arith.subf %409, %412 : vector<8x8xf32>
    %414 = math.exp %413 : vector<8x8xf32>
    %cst_255 = arith.constant dense<0.000000e+00> : vector<8xf32>
    %415 = vector.multi_reduction <add>, %414, %cst_255 [1] : vector<8x8xf32> to vector<8xf32>
    %416 = vector.shape_cast %415 : vector<8xf32> to vector<8x1xf32>
    %417 = vector.broadcast %416 : vector<8x1xf32> to vector<8x8xf32>
    %418 = arith.divf %414, %417 : vector<8x8xf32>
    %cst_256 = arith.constant dense<0.000000e+00> : vector<8x32xf32>
    %419 = tpu.matmul %418, %406, %cst_256 {dimension_numbers = #tpu.dot_dimension_numbers<[1], [0], [0], [1], [0, 0, 1, 1], [], []>} : vector<8x8xf32>, vector<8x32xf32>, vector<8x32xf32> -> vector<8x32xf32>
    %420 = tpu.concatenate %403, %419 in 0 : vector<8x32xf32>, vector<8x32xf32> -> vector<16x32xf32>
    %c0_257 = arith.constant 0 : index
    %c1_258 = arith.constant 1 : index
    %c0_259 = arith.constant 0 : index
    %c0_260 = arith.constant 0 : index
    %421 = vector.load %arg17[%c0_257, %c1_258, %c0_259, %c0_260] : memref<2x2x32x32xf32, #tpu.memory_space<vmem>>, vector<1x1x32x32xf32>
    %422 = vector.shape_cast %421 : vector<1x1x32x32xf32> to vector<32x32xf32>
    %cst_261 = arith.constant dense<0.000000e+00> : vector<16x32xf32>
    %423 = tpu.matmul %420, %422, %cst_261 {dimension_numbers = #tpu.dot_dimension_numbers<[1], [0], [0], [1], [0, 0, 1, 1], [], []>} : vector<16x32xf32>, vector<32x32xf32>, vector<16x32xf32> -> vector<16x32xf32>
    %424 = arith.addf %378, %423 : vector<16x32xf32>
    %425 = arith.addf %424, %331 : vector<16x32xf32>
    %c0_262 = arith.constant 0 : index
    %c0_263 = arith.constant 0 : index
    %c0_264 = arith.constant 0 : index
    %426 = vector.load %arg26[%c0_262, %c0_263, %c0_264] : memref<2x1x32xf32, #tpu.memory_space<vmem>>, vector<1x1x32xf32>
    %427 = vector.shape_cast %426 : vector<1x1x32xf32> to vector<1x32xf32>
    %c0_265 = arith.constant 0 : index
    %c0_266 = arith.constant 0 : index
    %c0_267 = arith.constant 0 : index
    %428 = vector.load %arg27[%c0_265, %c0_266, %c0_267] : memref<2x1x32xf32, #tpu.memory_space<vmem>>, vector<1x1x32xf32>
    %429 = vector.shape_cast %428 : vector<1x1x32xf32> to vector<1x32xf32>
    %cst_268 = arith.constant dense<0.000000e+00> : vector<16xf32>
    %430 = vector.multi_reduction <add>, %425, %cst_268 [1] : vector<16x32xf32> to vector<16xf32>
    %431 = vector.shape_cast %430 : vector<16xf32> to vector<16x1xf32>
    %cst_269 = arith.constant 3.200000e+01 : f32
    %432 = vector.broadcast %cst_269 : f32 to vector<16x1xf32>
    %433 = arith.divf %431, %432 : vector<16x1xf32>
    %434 = vector.broadcast %433 : vector<16x1xf32> to vector<16x32xf32>
    %435 = arith.subf %425, %434 : vector<16x32xf32>
    %436 = arith.mulf %435, %435 : vector<16x32xf32>
    %cst_270 = arith.constant dense<0.000000e+00> : vector<16xf32>
    %437 = vector.multi_reduction <add>, %436, %cst_270 [1] : vector<16x32xf32> to vector<16xf32>
    %438 = vector.shape_cast %437 : vector<16xf32> to vector<16x1xf32>
    %cst_271 = arith.constant 3.200000e+01 : f32
    %439 = vector.broadcast %cst_271 : f32 to vector<16x1xf32>
    %440 = arith.divf %438, %439 : vector<16x1xf32>
    %cst_272 = arith.constant 9.99999974E-6 : f32
    %441 = vector.broadcast %cst_272 : f32 to vector<16x1xf32>
    %442 = arith.addf %440, %441 : vector<16x1xf32>
    %443 = math.rsqrt %442 : vector<16x1xf32>
    %444 = vector.broadcast %443 : vector<16x1xf32> to vector<16x32xf32>
    %445 = arith.mulf %435, %444 : vector<16x32xf32>
    %446 = vector.broadcast %427 : vector<1x32xf32> to vector<16x32xf32>
    %447 = arith.mulf %445, %446 : vector<16x32xf32>
    %448 = vector.broadcast %429 : vector<1x32xf32> to vector<16x32xf32>
    %449 = arith.addf %447, %448 : vector<16x32xf32>
    %cst_273 = arith.constant 0.000000e+00 : f32
    %450 = vector.broadcast %cst_273 : f32 to vector<16x32xf32>
    %c0_274 = arith.constant 0 : index
    %c0_275 = arith.constant 0 : index
    %c0_276 = arith.constant 0 : index
    %c0_277 = arith.constant 0 : index
    %451 = vector.load %arg18[%c0_274, %c0_275, %c0_276, %c0_277] : memref<2x2x32x16xf32, #tpu.memory_space<vmem>>, vector<1x1x32x16xf32>
    %452 = vector.shape_cast %451 : vector<1x1x32x16xf32> to vector<32x16xf32>
    %cst_278 = arith.constant dense<0.000000e+00> : vector<16x16xf32>
    %453 = tpu.matmul %449, %452, %cst_278 {dimension_numbers = #tpu.dot_dimension_numbers<[1], [0], [0], [1], [0, 0, 1, 1], [], []>} : vector<16x32xf32>, vector<32x16xf32>, vector<16x16xf32> -> vector<16x16xf32>
    %c0_279 = arith.constant 0 : index
    %c0_280 = arith.constant 0 : index
    %c0_281 = arith.constant 0 : index
    %c0_282 = arith.constant 0 : index
    %454 = vector.load %arg19[%c0_279, %c0_280, %c0_281, %c0_282] : memref<2x2x32x16xf32, #tpu.memory_space<vmem>>, vector<1x1x32x16xf32>
    %455 = vector.shape_cast %454 : vector<1x1x32x16xf32> to vector<32x16xf32>
    %cst_283 = arith.constant dense<0.000000e+00> : vector<32x16xf32>
    %456 = tpu.matmul %330, %455, %cst_283 {dimension_numbers = #tpu.dot_dimension_numbers<[1], [0], [0], [1], [0, 0, 1, 1], [], []>} : vector<32x32xf32>, vector<32x16xf32>, vector<32x16xf32> -> vector<32x16xf32>
    %c0_284 = arith.constant 0 : index
    %c0_285 = arith.constant 0 : index
    %c0_286 = arith.constant 0 : index
    %c0_287 = arith.constant 0 : index
    %457 = vector.load %arg20[%c0_284, %c0_285, %c0_286, %c0_287] : memref<2x2x32x32xf32, #tpu.memory_space<vmem>>, vector<1x1x32x32xf32>
    %458 = vector.shape_cast %457 : vector<1x1x32x32xf32> to vector<32x32xf32>
    %cst_288 = arith.constant dense<0.000000e+00> : vector<32x32xf32>
    %459 = tpu.matmul %330, %458, %cst_288 {dimension_numbers = #tpu.dot_dimension_numbers<[1], [0], [0], [1], [0, 0, 1, 1], [], []>} : vector<32x32xf32>, vector<32x32xf32>, vector<32x32xf32> -> vector<32x32xf32>
    %460 = vector.extract_strided_slice %453 {offsets = [0, 0], sizes = [8, 16], strides = [1, 1]} : vector<16x16xf32> to vector<8x16xf32>
    %461 = vector.extract_strided_slice %456 {offsets = [0, 0], sizes = [16, 16], strides = [1, 1]} : vector<32x16xf32> to vector<16x16xf32>
    %462 = vector.extract_strided_slice %459 {offsets = [0, 0], sizes = [16, 32], strides = [1, 1]} : vector<32x32xf32> to vector<16x32xf32>
    %cst_289 = arith.constant dense<0.000000e+00> : vector<8x16xf32>
    %463 = tpu.matmul %460, %461, %cst_289 {dimension_numbers = #tpu.dot_dimension_numbers<[1], [1], [0], [0], [0, 0, 1, 0], [], []>} : vector<8x16xf32>, vector<16x16xf32>, vector<8x16xf32> -> vector<8x16xf32>
    %cst_290 = arith.constant 2.500000e-01 : f32
    %464 = vector.broadcast %cst_290 : f32 to vector<8x16xf32>
    %465 = arith.mulf %463, %464 : vector<8x16xf32>
    %cst_291 = arith.constant dense<0xFF800000> : vector<8xf32>
    %466 = vector.multi_reduction <maximumf>, %465, %cst_291 [1] : vector<8x16xf32> to vector<8xf32>
    %467 = vector.shape_cast %466 : vector<8xf32> to vector<8x1xf32>
    %468 = vector.broadcast %467 : vector<8x1xf32> to vector<8x16xf32>
    %469 = arith.subf %465, %468 : vector<8x16xf32>
    %470 = math.exp %469 : vector<8x16xf32>
    %cst_292 = arith.constant dense<0.000000e+00> : vector<8xf32>
    %471 = vector.multi_reduction <add>, %470, %cst_292 [1] : vector<8x16xf32> to vector<8xf32>
    %472 = vector.shape_cast %471 : vector<8xf32> to vector<8x1xf32>
    %473 = vector.broadcast %472 : vector<8x1xf32> to vector<8x16xf32>
    %474 = arith.divf %470, %473 : vector<8x16xf32>
    %cst_293 = arith.constant dense<0.000000e+00> : vector<8x32xf32>
    %475 = tpu.matmul %474, %462, %cst_293 {dimension_numbers = #tpu.dot_dimension_numbers<[1], [0], [0], [1], [0, 0, 1, 1], [], []>} : vector<8x16xf32>, vector<16x32xf32>, vector<8x32xf32> -> vector<8x32xf32>
    %476 = vector.extract_strided_slice %453 {offsets = [8, 0], sizes = [8, 16], strides = [1, 1]} : vector<16x16xf32> to vector<8x16xf32>
    %477 = vector.extract_strided_slice %456 {offsets = [16, 0], sizes = [16, 16], strides = [1, 1]} : vector<32x16xf32> to vector<16x16xf32>
    %478 = vector.extract_strided_slice %459 {offsets = [16, 0], sizes = [16, 32], strides = [1, 1]} : vector<32x32xf32> to vector<16x32xf32>
    %cst_294 = arith.constant dense<0.000000e+00> : vector<8x16xf32>
    %479 = tpu.matmul %476, %477, %cst_294 {dimension_numbers = #tpu.dot_dimension_numbers<[1], [1], [0], [0], [0, 0, 1, 0], [], []>} : vector<8x16xf32>, vector<16x16xf32>, vector<8x16xf32> -> vector<8x16xf32>
    %cst_295 = arith.constant 2.500000e-01 : f32
    %480 = vector.broadcast %cst_295 : f32 to vector<8x16xf32>
    %481 = arith.mulf %479, %480 : vector<8x16xf32>
    %cst_296 = arith.constant dense<0xFF800000> : vector<8xf32>
    %482 = vector.multi_reduction <maximumf>, %481, %cst_296 [1] : vector<8x16xf32> to vector<8xf32>
    %483 = vector.shape_cast %482 : vector<8xf32> to vector<8x1xf32>
    %484 = vector.broadcast %483 : vector<8x1xf32> to vector<8x16xf32>
    %485 = arith.subf %481, %484 : vector<8x16xf32>
    %486 = math.exp %485 : vector<8x16xf32>
    %cst_297 = arith.constant dense<0.000000e+00> : vector<8xf32>
    %487 = vector.multi_reduction <add>, %486, %cst_297 [1] : vector<8x16xf32> to vector<8xf32>
    %488 = vector.shape_cast %487 : vector<8xf32> to vector<8x1xf32>
    %489 = vector.broadcast %488 : vector<8x1xf32> to vector<8x16xf32>
    %490 = arith.divf %486, %489 : vector<8x16xf32>
    %cst_298 = arith.constant dense<0.000000e+00> : vector<8x32xf32>
    %491 = tpu.matmul %490, %478, %cst_298 {dimension_numbers = #tpu.dot_dimension_numbers<[1], [0], [0], [1], [0, 0, 1, 1], [], []>} : vector<8x16xf32>, vector<16x32xf32>, vector<8x32xf32> -> vector<8x32xf32>
    %492 = tpu.concatenate %475, %491 in 0 : vector<8x32xf32>, vector<8x32xf32> -> vector<16x32xf32>
    %c0_299 = arith.constant 0 : index
    %c0_300 = arith.constant 0 : index
    %c0_301 = arith.constant 0 : index
    %c0_302 = arith.constant 0 : index
    %493 = vector.load %arg21[%c0_299, %c0_300, %c0_301, %c0_302] : memref<2x2x32x32xf32, #tpu.memory_space<vmem>>, vector<1x1x32x32xf32>
    %494 = vector.shape_cast %493 : vector<1x1x32x32xf32> to vector<32x32xf32>
    %cst_303 = arith.constant dense<0.000000e+00> : vector<16x32xf32>
    %495 = tpu.matmul %492, %494, %cst_303 {dimension_numbers = #tpu.dot_dimension_numbers<[1], [0], [0], [1], [0, 0, 1, 1], [], []>} : vector<16x32xf32>, vector<32x32xf32>, vector<16x32xf32> -> vector<16x32xf32>
    %496 = arith.addf %450, %495 : vector<16x32xf32>
    %c0_304 = arith.constant 0 : index
    %c1_305 = arith.constant 1 : index
    %c0_306 = arith.constant 0 : index
    %c0_307 = arith.constant 0 : index
    %497 = vector.load %arg18[%c0_304, %c1_305, %c0_306, %c0_307] : memref<2x2x32x16xf32, #tpu.memory_space<vmem>>, vector<1x1x32x16xf32>
    %498 = vector.shape_cast %497 : vector<1x1x32x16xf32> to vector<32x16xf32>
    %cst_308 = arith.constant dense<0.000000e+00> : vector<16x16xf32>
    %499 = tpu.matmul %449, %498, %cst_308 {dimension_numbers = #tpu.dot_dimension_numbers<[1], [0], [0], [1], [0, 0, 1, 1], [], []>} : vector<16x32xf32>, vector<32x16xf32>, vector<16x16xf32> -> vector<16x16xf32>
    %c0_309 = arith.constant 0 : index
    %c1_310 = arith.constant 1 : index
    %c0_311 = arith.constant 0 : index
    %c0_312 = arith.constant 0 : index
    %500 = vector.load %arg19[%c0_309, %c1_310, %c0_311, %c0_312] : memref<2x2x32x16xf32, #tpu.memory_space<vmem>>, vector<1x1x32x16xf32>
    %501 = vector.shape_cast %500 : vector<1x1x32x16xf32> to vector<32x16xf32>
    %cst_313 = arith.constant dense<0.000000e+00> : vector<32x16xf32>
    %502 = tpu.matmul %330, %501, %cst_313 {dimension_numbers = #tpu.dot_dimension_numbers<[1], [0], [0], [1], [0, 0, 1, 1], [], []>} : vector<32x32xf32>, vector<32x16xf32>, vector<32x16xf32> -> vector<32x16xf32>
    %c0_314 = arith.constant 0 : index
    %c1_315 = arith.constant 1 : index
    %c0_316 = arith.constant 0 : index
    %c0_317 = arith.constant 0 : index
    %503 = vector.load %arg20[%c0_314, %c1_315, %c0_316, %c0_317] : memref<2x2x32x32xf32, #tpu.memory_space<vmem>>, vector<1x1x32x32xf32>
    %504 = vector.shape_cast %503 : vector<1x1x32x32xf32> to vector<32x32xf32>
    %cst_318 = arith.constant dense<0.000000e+00> : vector<32x32xf32>
    %505 = tpu.matmul %330, %504, %cst_318 {dimension_numbers = #tpu.dot_dimension_numbers<[1], [0], [0], [1], [0, 0, 1, 1], [], []>} : vector<32x32xf32>, vector<32x32xf32>, vector<32x32xf32> -> vector<32x32xf32>
    %506 = vector.extract_strided_slice %499 {offsets = [0, 0], sizes = [8, 16], strides = [1, 1]} : vector<16x16xf32> to vector<8x16xf32>
    %507 = vector.extract_strided_slice %502 {offsets = [0, 0], sizes = [16, 16], strides = [1, 1]} : vector<32x16xf32> to vector<16x16xf32>
    %508 = vector.extract_strided_slice %505 {offsets = [0, 0], sizes = [16, 32], strides = [1, 1]} : vector<32x32xf32> to vector<16x32xf32>
    %cst_319 = arith.constant dense<0.000000e+00> : vector<8x16xf32>
    %509 = tpu.matmul %506, %507, %cst_319 {dimension_numbers = #tpu.dot_dimension_numbers<[1], [1], [0], [0], [0, 0, 1, 0], [], []>} : vector<8x16xf32>, vector<16x16xf32>, vector<8x16xf32> -> vector<8x16xf32>
    %cst_320 = arith.constant 2.500000e-01 : f32
    %510 = vector.broadcast %cst_320 : f32 to vector<8x16xf32>
    %511 = arith.mulf %509, %510 : vector<8x16xf32>
    %cst_321 = arith.constant dense<0xFF800000> : vector<8xf32>
    %512 = vector.multi_reduction <maximumf>, %511, %cst_321 [1] : vector<8x16xf32> to vector<8xf32>
    %513 = vector.shape_cast %512 : vector<8xf32> to vector<8x1xf32>
    %514 = vector.broadcast %513 : vector<8x1xf32> to vector<8x16xf32>
    %515 = arith.subf %511, %514 : vector<8x16xf32>
    %516 = math.exp %515 : vector<8x16xf32>
    %cst_322 = arith.constant dense<0.000000e+00> : vector<8xf32>
    %517 = vector.multi_reduction <add>, %516, %cst_322 [1] : vector<8x16xf32> to vector<8xf32>
    %518 = vector.shape_cast %517 : vector<8xf32> to vector<8x1xf32>
    %519 = vector.broadcast %518 : vector<8x1xf32> to vector<8x16xf32>
    %520 = arith.divf %516, %519 : vector<8x16xf32>
    %cst_323 = arith.constant dense<0.000000e+00> : vector<8x32xf32>
    %521 = tpu.matmul %520, %508, %cst_323 {dimension_numbers = #tpu.dot_dimension_numbers<[1], [0], [0], [1], [0, 0, 1, 1], [], []>} : vector<8x16xf32>, vector<16x32xf32>, vector<8x32xf32> -> vector<8x32xf32>
    %522 = vector.extract_strided_slice %499 {offsets = [8, 0], sizes = [8, 16], strides = [1, 1]} : vector<16x16xf32> to vector<8x16xf32>
    %523 = vector.extract_strided_slice %502 {offsets = [16, 0], sizes = [16, 16], strides = [1, 1]} : vector<32x16xf32> to vector<16x16xf32>
    %524 = vector.extract_strided_slice %505 {offsets = [16, 0], sizes = [16, 32], strides = [1, 1]} : vector<32x32xf32> to vector<16x32xf32>
    %cst_324 = arith.constant dense<0.000000e+00> : vector<8x16xf32>
    %525 = tpu.matmul %522, %523, %cst_324 {dimension_numbers = #tpu.dot_dimension_numbers<[1], [1], [0], [0], [0, 0, 1, 0], [], []>} : vector<8x16xf32>, vector<16x16xf32>, vector<8x16xf32> -> vector<8x16xf32>
    %cst_325 = arith.constant 2.500000e-01 : f32
    %526 = vector.broadcast %cst_325 : f32 to vector<8x16xf32>
    %527 = arith.mulf %525, %526 : vector<8x16xf32>
    %cst_326 = arith.constant dense<0xFF800000> : vector<8xf32>
    %528 = vector.multi_reduction <maximumf>, %527, %cst_326 [1] : vector<8x16xf32> to vector<8xf32>
    %529 = vector.shape_cast %528 : vector<8xf32> to vector<8x1xf32>
    %530 = vector.broadcast %529 : vector<8x1xf32> to vector<8x16xf32>
    %531 = arith.subf %527, %530 : vector<8x16xf32>
    %532 = math.exp %531 : vector<8x16xf32>
    %cst_327 = arith.constant dense<0.000000e+00> : vector<8xf32>
    %533 = vector.multi_reduction <add>, %532, %cst_327 [1] : vector<8x16xf32> to vector<8xf32>
    %534 = vector.shape_cast %533 : vector<8xf32> to vector<8x1xf32>
    %535 = vector.broadcast %534 : vector<8x1xf32> to vector<8x16xf32>
    %536 = arith.divf %532, %535 : vector<8x16xf32>
    %cst_328 = arith.constant dense<0.000000e+00> : vector<8x32xf32>
    %537 = tpu.matmul %536, %524, %cst_328 {dimension_numbers = #tpu.dot_dimension_numbers<[1], [0], [0], [1], [0, 0, 1, 1], [], []>} : vector<8x16xf32>, vector<16x32xf32>, vector<8x32xf32> -> vector<8x32xf32>
    %538 = tpu.concatenate %521, %537 in 0 : vector<8x32xf32>, vector<8x32xf32> -> vector<16x32xf32>
    %c0_329 = arith.constant 0 : index
    %c1_330 = arith.constant 1 : index
    %c0_331 = arith.constant 0 : index
    %c0_332 = arith.constant 0 : index
    %539 = vector.load %arg21[%c0_329, %c1_330, %c0_331, %c0_332] : memref<2x2x32x32xf32, #tpu.memory_space<vmem>>, vector<1x1x32x32xf32>
    %540 = vector.shape_cast %539 : vector<1x1x32x32xf32> to vector<32x32xf32>
    %cst_333 = arith.constant dense<0.000000e+00> : vector<16x32xf32>
    %541 = tpu.matmul %538, %540, %cst_333 {dimension_numbers = #tpu.dot_dimension_numbers<[1], [0], [0], [1], [0, 0, 1, 1], [], []>} : vector<16x32xf32>, vector<32x32xf32>, vector<16x32xf32> -> vector<16x32xf32>
    %542 = arith.addf %496, %541 : vector<16x32xf32>
    %543 = arith.addf %542, %449 : vector<16x32xf32>
    %c0_334 = arith.constant 0 : index
    %c0_335 = arith.constant 0 : index
    %c0_336 = arith.constant 0 : index
    %544 = vector.load %arg28[%c0_334, %c0_335, %c0_336] : memref<2x1x32xf32, #tpu.memory_space<vmem>>, vector<1x1x32xf32>
    %545 = vector.shape_cast %544 : vector<1x1x32xf32> to vector<1x32xf32>
    %c0_337 = arith.constant 0 : index
    %c0_338 = arith.constant 0 : index
    %c0_339 = arith.constant 0 : index
    %546 = vector.load %arg29[%c0_337, %c0_338, %c0_339] : memref<2x1x32xf32, #tpu.memory_space<vmem>>, vector<1x1x32xf32>
    %547 = vector.shape_cast %546 : vector<1x1x32xf32> to vector<1x32xf32>
    %cst_340 = arith.constant dense<0.000000e+00> : vector<16xf32>
    %548 = vector.multi_reduction <add>, %543, %cst_340 [1] : vector<16x32xf32> to vector<16xf32>
    %549 = vector.shape_cast %548 : vector<16xf32> to vector<16x1xf32>
    %cst_341 = arith.constant 3.200000e+01 : f32
    %550 = vector.broadcast %cst_341 : f32 to vector<16x1xf32>
    %551 = arith.divf %549, %550 : vector<16x1xf32>
    %552 = vector.broadcast %551 : vector<16x1xf32> to vector<16x32xf32>
    %553 = arith.subf %543, %552 : vector<16x32xf32>
    %554 = arith.mulf %553, %553 : vector<16x32xf32>
    %cst_342 = arith.constant dense<0.000000e+00> : vector<16xf32>
    %555 = vector.multi_reduction <add>, %554, %cst_342 [1] : vector<16x32xf32> to vector<16xf32>
    %556 = vector.shape_cast %555 : vector<16xf32> to vector<16x1xf32>
    %cst_343 = arith.constant 3.200000e+01 : f32
    %557 = vector.broadcast %cst_343 : f32 to vector<16x1xf32>
    %558 = arith.divf %556, %557 : vector<16x1xf32>
    %cst_344 = arith.constant 9.99999974E-6 : f32
    %559 = vector.broadcast %cst_344 : f32 to vector<16x1xf32>
    %560 = arith.addf %558, %559 : vector<16x1xf32>
    %561 = math.rsqrt %560 : vector<16x1xf32>
    %562 = vector.broadcast %561 : vector<16x1xf32> to vector<16x32xf32>
    %563 = arith.mulf %553, %562 : vector<16x32xf32>
    %564 = vector.broadcast %545 : vector<1x32xf32> to vector<16x32xf32>
    %565 = arith.mulf %563, %564 : vector<16x32xf32>
    %566 = vector.broadcast %547 : vector<1x32xf32> to vector<16x32xf32>
    %567 = arith.addf %565, %566 : vector<16x32xf32>
    %c0_345 = arith.constant 0 : index
    %c0_346 = arith.constant 0 : index
    %c0_347 = arith.constant 0 : index
    %568 = vector.load %arg24[%c0_345, %c0_346, %c0_347] : memref<2x32x32xf32, #tpu.memory_space<vmem>>, vector<1x32x32xf32>
    %569 = vector.shape_cast %568 : vector<1x32x32xf32> to vector<32x32xf32>
    %c0_348 = arith.constant 0 : index
    %c0_349 = arith.constant 0 : index
    %c0_350 = arith.constant 0 : index
    %570 = vector.load %arg25[%c0_348, %c0_349, %c0_350] : memref<2x1x32xf32, #tpu.memory_space<vmem>>, vector<1x1x32xf32>
    %571 = vector.shape_cast %570 : vector<1x1x32xf32> to vector<1x32xf32>
    %c0_351 = arith.constant 0 : index
    %c0_352 = arith.constant 0 : index
    %c0_353 = arith.constant 0 : index
    %572 = vector.load %arg22[%c0_351, %c0_352, %c0_353] : memref<2x32x32xf32, #tpu.memory_space<vmem>>, vector<1x32x32xf32>
    %573 = vector.shape_cast %572 : vector<1x32x32xf32> to vector<32x32xf32>
    %c0_354 = arith.constant 0 : index
    %c0_355 = arith.constant 0 : index
    %c0_356 = arith.constant 0 : index
    %574 = vector.load %arg23[%c0_354, %c0_355, %c0_356] : memref<2x1x32xf32, #tpu.memory_space<vmem>>, vector<1x1x32xf32>
    %575 = vector.shape_cast %574 : vector<1x1x32xf32> to vector<1x32xf32>
    %cst_357 = arith.constant dense<0.000000e+00> : vector<16x32xf32>
    %576 = tpu.matmul %567, %569, %cst_357 {dimension_numbers = #tpu.dot_dimension_numbers<[1], [0], [0], [1], [0, 0, 1, 1], [], []>} : vector<16x32xf32>, vector<32x32xf32>, vector<16x32xf32> -> vector<16x32xf32>
    %577 = vector.broadcast %571 : vector<1x32xf32> to vector<16x32xf32>
    %578 = arith.addf %576, %577 : vector<16x32xf32>
    %cst_358 = arith.constant 0.000000e+00 : f32
    %579 = vector.broadcast %cst_358 : f32 to vector<16x32xf32>
    %580 = arith.cmpf ogt, %578, %579 : vector<16x32xf32>
    %cst_359 = arith.constant 0.000000e+00 : f32
    %581 = vector.broadcast %cst_359 : f32 to vector<16x32xf32>
    %582 = arith.minimumf %578, %581 : vector<16x32xf32>
    %583 = math.exp %582 : vector<16x32xf32>
    %cst_360 = arith.constant 1.000000e+00 : f32
    %584 = vector.broadcast %cst_360 : f32 to vector<16x32xf32>
    %585 = arith.subf %583, %584 : vector<16x32xf32>
    %586 = arith.select %580, %578, %585 : vector<16x32xi1>, vector<16x32xf32>
    %cst_361 = arith.constant dense<0.000000e+00> : vector<16x32xf32>
    %587 = tpu.matmul %586, %573, %cst_361 {dimension_numbers = #tpu.dot_dimension_numbers<[1], [0], [0], [1], [0, 0, 1, 1], [], []>} : vector<16x32xf32>, vector<32x32xf32>, vector<16x32xf32> -> vector<16x32xf32>
    %588 = vector.broadcast %575 : vector<1x32xf32> to vector<16x32xf32>
    %589 = arith.addf %587, %588 : vector<16x32xf32>
    %590 = arith.addf %567, %589 : vector<16x32xf32>
    %c0_362 = arith.constant 0 : index
    %c0_363 = arith.constant 0 : index
    %c0_364 = arith.constant 0 : index
    %591 = vector.load %arg30[%c0_362, %c0_363, %c0_364] : memref<2x1x32xf32, #tpu.memory_space<vmem>>, vector<1x1x32xf32>
    %592 = vector.shape_cast %591 : vector<1x1x32xf32> to vector<1x32xf32>
    %c0_365 = arith.constant 0 : index
    %c0_366 = arith.constant 0 : index
    %c0_367 = arith.constant 0 : index
    %593 = vector.load %arg31[%c0_365, %c0_366, %c0_367] : memref<2x1x32xf32, #tpu.memory_space<vmem>>, vector<1x1x32xf32>
    %594 = vector.shape_cast %593 : vector<1x1x32xf32> to vector<1x32xf32>
    %cst_368 = arith.constant dense<0.000000e+00> : vector<16xf32>
    %595 = vector.multi_reduction <add>, %590, %cst_368 [1] : vector<16x32xf32> to vector<16xf32>
    %596 = vector.shape_cast %595 : vector<16xf32> to vector<16x1xf32>
    %cst_369 = arith.constant 3.200000e+01 : f32
    %597 = vector.broadcast %cst_369 : f32 to vector<16x1xf32>
    %598 = arith.divf %596, %597 : vector<16x1xf32>
    %599 = vector.broadcast %598 : vector<16x1xf32> to vector<16x32xf32>
    %600 = arith.subf %590, %599 : vector<16x32xf32>
    %601 = arith.mulf %600, %600 : vector<16x32xf32>
    %cst_370 = arith.constant dense<0.000000e+00> : vector<16xf32>
    %602 = vector.multi_reduction <add>, %601, %cst_370 [1] : vector<16x32xf32> to vector<16xf32>
    %603 = vector.shape_cast %602 : vector<16xf32> to vector<16x1xf32>
    %cst_371 = arith.constant 3.200000e+01 : f32
    %604 = vector.broadcast %cst_371 : f32 to vector<16x1xf32>
    %605 = arith.divf %603, %604 : vector<16x1xf32>
    %cst_372 = arith.constant 9.99999974E-6 : f32
    %606 = vector.broadcast %cst_372 : f32 to vector<16x1xf32>
    %607 = arith.addf %605, %606 : vector<16x1xf32>
    %608 = math.rsqrt %607 : vector<16x1xf32>
    %609 = vector.broadcast %608 : vector<16x1xf32> to vector<16x32xf32>
    %610 = arith.mulf %600, %609 : vector<16x32xf32>
    %611 = vector.broadcast %592 : vector<1x32xf32> to vector<16x32xf32>
    %612 = arith.mulf %610, %611 : vector<16x32xf32>
    %613 = vector.broadcast %594 : vector<1x32xf32> to vector<16x32xf32>
    %614 = arith.addf %612, %613 : vector<16x32xf32>
    %cst_373 = arith.constant 0.000000e+00 : f32
    %615 = vector.broadcast %cst_373 : f32 to vector<16x32xf32>
    %c1_374 = arith.constant 1 : index
    %c0_375 = arith.constant 0 : index
    %c0_376 = arith.constant 0 : index
    %c0_377 = arith.constant 0 : index
    %616 = vector.load %arg14[%c1_374, %c0_375, %c0_376, %c0_377] : memref<2x2x32x16xf32, #tpu.memory_space<vmem>>, vector<1x1x32x16xf32>
    %617 = vector.shape_cast %616 : vector<1x1x32x16xf32> to vector<32x16xf32>
    %cst_378 = arith.constant dense<0.000000e+00> : vector<16x16xf32>
    %618 = tpu.matmul %614, %617, %cst_378 {dimension_numbers = #tpu.dot_dimension_numbers<[1], [0], [0], [1], [0, 0, 1, 1], [], []>} : vector<16x32xf32>, vector<32x16xf32>, vector<16x16xf32> -> vector<16x16xf32>
    %c1_379 = arith.constant 1 : index
    %c0_380 = arith.constant 0 : index
    %c0_381 = arith.constant 0 : index
    %c0_382 = arith.constant 0 : index
    %619 = vector.load %arg15[%c1_379, %c0_380, %c0_381, %c0_382] : memref<2x2x32x16xf32, #tpu.memory_space<vmem>>, vector<1x1x32x16xf32>
    %620 = vector.shape_cast %619 : vector<1x1x32x16xf32> to vector<32x16xf32>
    %cst_383 = arith.constant dense<0.000000e+00> : vector<16x16xf32>
    %621 = tpu.matmul %614, %620, %cst_383 {dimension_numbers = #tpu.dot_dimension_numbers<[1], [0], [0], [1], [0, 0, 1, 1], [], []>} : vector<16x32xf32>, vector<32x16xf32>, vector<16x16xf32> -> vector<16x16xf32>
    %c1_384 = arith.constant 1 : index
    %c0_385 = arith.constant 0 : index
    %c0_386 = arith.constant 0 : index
    %c0_387 = arith.constant 0 : index
    %622 = vector.load %arg16[%c1_384, %c0_385, %c0_386, %c0_387] : memref<2x2x32x32xf32, #tpu.memory_space<vmem>>, vector<1x1x32x32xf32>
    %623 = vector.shape_cast %622 : vector<1x1x32x32xf32> to vector<32x32xf32>
    %cst_388 = arith.constant dense<0.000000e+00> : vector<16x32xf32>
    %624 = tpu.matmul %614, %623, %cst_388 {dimension_numbers = #tpu.dot_dimension_numbers<[1], [0], [0], [1], [0, 0, 1, 1], [], []>} : vector<16x32xf32>, vector<32x32xf32>, vector<16x32xf32> -> vector<16x32xf32>
    %625 = vector.extract_strided_slice %618 {offsets = [0, 0], sizes = [8, 16], strides = [1, 1]} : vector<16x16xf32> to vector<8x16xf32>
    %626 = vector.extract_strided_slice %621 {offsets = [0, 0], sizes = [8, 16], strides = [1, 1]} : vector<16x16xf32> to vector<8x16xf32>
    %627 = vector.extract_strided_slice %624 {offsets = [0, 0], sizes = [8, 32], strides = [1, 1]} : vector<16x32xf32> to vector<8x32xf32>
    %cst_389 = arith.constant dense<0.000000e+00> : vector<8x8xf32>
    %628 = tpu.matmul %625, %626, %cst_389 {dimension_numbers = #tpu.dot_dimension_numbers<[1], [1], [0], [0], [0, 0, 1, 0], [], []>} : vector<8x16xf32>, vector<8x16xf32>, vector<8x8xf32> -> vector<8x8xf32>
    %cst_390 = arith.constant 2.500000e-01 : f32
    %629 = vector.broadcast %cst_390 : f32 to vector<8x8xf32>
    %630 = arith.mulf %628, %629 : vector<8x8xf32>
    %cst_391 = arith.constant dense<0xFF800000> : vector<8xf32>
    %631 = vector.multi_reduction <maximumf>, %630, %cst_391 [1] : vector<8x8xf32> to vector<8xf32>
    %632 = vector.shape_cast %631 : vector<8xf32> to vector<8x1xf32>
    %633 = vector.broadcast %632 : vector<8x1xf32> to vector<8x8xf32>
    %634 = arith.subf %630, %633 : vector<8x8xf32>
    %635 = math.exp %634 : vector<8x8xf32>
    %cst_392 = arith.constant dense<0.000000e+00> : vector<8xf32>
    %636 = vector.multi_reduction <add>, %635, %cst_392 [1] : vector<8x8xf32> to vector<8xf32>
    %637 = vector.shape_cast %636 : vector<8xf32> to vector<8x1xf32>
    %638 = vector.broadcast %637 : vector<8x1xf32> to vector<8x8xf32>
    %639 = arith.divf %635, %638 : vector<8x8xf32>
    %cst_393 = arith.constant dense<0.000000e+00> : vector<8x32xf32>
    %640 = tpu.matmul %639, %627, %cst_393 {dimension_numbers = #tpu.dot_dimension_numbers<[1], [0], [0], [1], [0, 0, 1, 1], [], []>} : vector<8x8xf32>, vector<8x32xf32>, vector<8x32xf32> -> vector<8x32xf32>
    %641 = vector.extract_strided_slice %618 {offsets = [8, 0], sizes = [8, 16], strides = [1, 1]} : vector<16x16xf32> to vector<8x16xf32>
    %642 = vector.extract_strided_slice %621 {offsets = [8, 0], sizes = [8, 16], strides = [1, 1]} : vector<16x16xf32> to vector<8x16xf32>
    %643 = vector.extract_strided_slice %624 {offsets = [8, 0], sizes = [8, 32], strides = [1, 1]} : vector<16x32xf32> to vector<8x32xf32>
    %cst_394 = arith.constant dense<0.000000e+00> : vector<8x8xf32>
    %644 = tpu.matmul %641, %642, %cst_394 {dimension_numbers = #tpu.dot_dimension_numbers<[1], [1], [0], [0], [0, 0, 1, 0], [], []>} : vector<8x16xf32>, vector<8x16xf32>, vector<8x8xf32> -> vector<8x8xf32>
    %cst_395 = arith.constant 2.500000e-01 : f32
    %645 = vector.broadcast %cst_395 : f32 to vector<8x8xf32>
    %646 = arith.mulf %644, %645 : vector<8x8xf32>
    %cst_396 = arith.constant dense<0xFF800000> : vector<8xf32>
    %647 = vector.multi_reduction <maximumf>, %646, %cst_396 [1] : vector<8x8xf32> to vector<8xf32>
    %648 = vector.shape_cast %647 : vector<8xf32> to vector<8x1xf32>
    %649 = vector.broadcast %648 : vector<8x1xf32> to vector<8x8xf32>
    %650 = arith.subf %646, %649 : vector<8x8xf32>
    %651 = math.exp %650 : vector<8x8xf32>
    %cst_397 = arith.constant dense<0.000000e+00> : vector<8xf32>
    %652 = vector.multi_reduction <add>, %651, %cst_397 [1] : vector<8x8xf32> to vector<8xf32>
    %653 = vector.shape_cast %652 : vector<8xf32> to vector<8x1xf32>
    %654 = vector.broadcast %653 : vector<8x1xf32> to vector<8x8xf32>
    %655 = arith.divf %651, %654 : vector<8x8xf32>
    %cst_398 = arith.constant dense<0.000000e+00> : vector<8x32xf32>
    %656 = tpu.matmul %655, %643, %cst_398 {dimension_numbers = #tpu.dot_dimension_numbers<[1], [0], [0], [1], [0, 0, 1, 1], [], []>} : vector<8x8xf32>, vector<8x32xf32>, vector<8x32xf32> -> vector<8x32xf32>
    %657 = tpu.concatenate %640, %656 in 0 : vector<8x32xf32>, vector<8x32xf32> -> vector<16x32xf32>
    %c1_399 = arith.constant 1 : index
    %c0_400 = arith.constant 0 : index
    %c0_401 = arith.constant 0 : index
    %c0_402 = arith.constant 0 : index
    %658 = vector.load %arg17[%c1_399, %c0_400, %c0_401, %c0_402] : memref<2x2x32x32xf32, #tpu.memory_space<vmem>>, vector<1x1x32x32xf32>
    %659 = vector.shape_cast %658 : vector<1x1x32x32xf32> to vector<32x32xf32>
    %cst_403 = arith.constant dense<0.000000e+00> : vector<16x32xf32>
    %660 = tpu.matmul %657, %659, %cst_403 {dimension_numbers = #tpu.dot_dimension_numbers<[1], [0], [0], [1], [0, 0, 1, 1], [], []>} : vector<16x32xf32>, vector<32x32xf32>, vector<16x32xf32> -> vector<16x32xf32>
    %661 = arith.addf %615, %660 : vector<16x32xf32>
    %c1_404 = arith.constant 1 : index
    %c1_405 = arith.constant 1 : index
    %c0_406 = arith.constant 0 : index
    %c0_407 = arith.constant 0 : index
    %662 = vector.load %arg14[%c1_404, %c1_405, %c0_406, %c0_407] : memref<2x2x32x16xf32, #tpu.memory_space<vmem>>, vector<1x1x32x16xf32>
    %663 = vector.shape_cast %662 : vector<1x1x32x16xf32> to vector<32x16xf32>
    %cst_408 = arith.constant dense<0.000000e+00> : vector<16x16xf32>
    %664 = tpu.matmul %614, %663, %cst_408 {dimension_numbers = #tpu.dot_dimension_numbers<[1], [0], [0], [1], [0, 0, 1, 1], [], []>} : vector<16x32xf32>, vector<32x16xf32>, vector<16x16xf32> -> vector<16x16xf32>
    %c1_409 = arith.constant 1 : index
    %c1_410 = arith.constant 1 : index
    %c0_411 = arith.constant 0 : index
    %c0_412 = arith.constant 0 : index
    %665 = vector.load %arg15[%c1_409, %c1_410, %c0_411, %c0_412] : memref<2x2x32x16xf32, #tpu.memory_space<vmem>>, vector<1x1x32x16xf32>
    %666 = vector.shape_cast %665 : vector<1x1x32x16xf32> to vector<32x16xf32>
    %cst_413 = arith.constant dense<0.000000e+00> : vector<16x16xf32>
    %667 = tpu.matmul %614, %666, %cst_413 {dimension_numbers = #tpu.dot_dimension_numbers<[1], [0], [0], [1], [0, 0, 1, 1], [], []>} : vector<16x32xf32>, vector<32x16xf32>, vector<16x16xf32> -> vector<16x16xf32>
    %c1_414 = arith.constant 1 : index
    %c1_415 = arith.constant 1 : index
    %c0_416 = arith.constant 0 : index
    %c0_417 = arith.constant 0 : index
    %668 = vector.load %arg16[%c1_414, %c1_415, %c0_416, %c0_417] : memref<2x2x32x32xf32, #tpu.memory_space<vmem>>, vector<1x1x32x32xf32>
    %669 = vector.shape_cast %668 : vector<1x1x32x32xf32> to vector<32x32xf32>
    %cst_418 = arith.constant dense<0.000000e+00> : vector<16x32xf32>
    %670 = tpu.matmul %614, %669, %cst_418 {dimension_numbers = #tpu.dot_dimension_numbers<[1], [0], [0], [1], [0, 0, 1, 1], [], []>} : vector<16x32xf32>, vector<32x32xf32>, vector<16x32xf32> -> vector<16x32xf32>
    %671 = vector.extract_strided_slice %664 {offsets = [0, 0], sizes = [8, 16], strides = [1, 1]} : vector<16x16xf32> to vector<8x16xf32>
    %672 = vector.extract_strided_slice %667 {offsets = [0, 0], sizes = [8, 16], strides = [1, 1]} : vector<16x16xf32> to vector<8x16xf32>
    %673 = vector.extract_strided_slice %670 {offsets = [0, 0], sizes = [8, 32], strides = [1, 1]} : vector<16x32xf32> to vector<8x32xf32>
    %cst_419 = arith.constant dense<0.000000e+00> : vector<8x8xf32>
    %674 = tpu.matmul %671, %672, %cst_419 {dimension_numbers = #tpu.dot_dimension_numbers<[1], [1], [0], [0], [0, 0, 1, 0], [], []>} : vector<8x16xf32>, vector<8x16xf32>, vector<8x8xf32> -> vector<8x8xf32>
    %cst_420 = arith.constant 2.500000e-01 : f32
    %675 = vector.broadcast %cst_420 : f32 to vector<8x8xf32>
    %676 = arith.mulf %674, %675 : vector<8x8xf32>
    %cst_421 = arith.constant dense<0xFF800000> : vector<8xf32>
    %677 = vector.multi_reduction <maximumf>, %676, %cst_421 [1] : vector<8x8xf32> to vector<8xf32>
    %678 = vector.shape_cast %677 : vector<8xf32> to vector<8x1xf32>
    %679 = vector.broadcast %678 : vector<8x1xf32> to vector<8x8xf32>
    %680 = arith.subf %676, %679 : vector<8x8xf32>
    %681 = math.exp %680 : vector<8x8xf32>
    %cst_422 = arith.constant dense<0.000000e+00> : vector<8xf32>
    %682 = vector.multi_reduction <add>, %681, %cst_422 [1] : vector<8x8xf32> to vector<8xf32>
    %683 = vector.shape_cast %682 : vector<8xf32> to vector<8x1xf32>
    %684 = vector.broadcast %683 : vector<8x1xf32> to vector<8x8xf32>
    %685 = arith.divf %681, %684 : vector<8x8xf32>
    %cst_423 = arith.constant dense<0.000000e+00> : vector<8x32xf32>
    %686 = tpu.matmul %685, %673, %cst_423 {dimension_numbers = #tpu.dot_dimension_numbers<[1], [0], [0], [1], [0, 0, 1, 1], [], []>} : vector<8x8xf32>, vector<8x32xf32>, vector<8x32xf32> -> vector<8x32xf32>
    %687 = vector.extract_strided_slice %664 {offsets = [8, 0], sizes = [8, 16], strides = [1, 1]} : vector<16x16xf32> to vector<8x16xf32>
    %688 = vector.extract_strided_slice %667 {offsets = [8, 0], sizes = [8, 16], strides = [1, 1]} : vector<16x16xf32> to vector<8x16xf32>
    %689 = vector.extract_strided_slice %670 {offsets = [8, 0], sizes = [8, 32], strides = [1, 1]} : vector<16x32xf32> to vector<8x32xf32>
    %cst_424 = arith.constant dense<0.000000e+00> : vector<8x8xf32>
    %690 = tpu.matmul %687, %688, %cst_424 {dimension_numbers = #tpu.dot_dimension_numbers<[1], [1], [0], [0], [0, 0, 1, 0], [], []>} : vector<8x16xf32>, vector<8x16xf32>, vector<8x8xf32> -> vector<8x8xf32>
    %cst_425 = arith.constant 2.500000e-01 : f32
    %691 = vector.broadcast %cst_425 : f32 to vector<8x8xf32>
    %692 = arith.mulf %690, %691 : vector<8x8xf32>
    %cst_426 = arith.constant dense<0xFF800000> : vector<8xf32>
    %693 = vector.multi_reduction <maximumf>, %692, %cst_426 [1] : vector<8x8xf32> to vector<8xf32>
    %694 = vector.shape_cast %693 : vector<8xf32> to vector<8x1xf32>
    %695 = vector.broadcast %694 : vector<8x1xf32> to vector<8x8xf32>
    %696 = arith.subf %692, %695 : vector<8x8xf32>
    %697 = math.exp %696 : vector<8x8xf32>
    %cst_427 = arith.constant dense<0.000000e+00> : vector<8xf32>
    %698 = vector.multi_reduction <add>, %697, %cst_427 [1] : vector<8x8xf32> to vector<8xf32>
    %699 = vector.shape_cast %698 : vector<8xf32> to vector<8x1xf32>
    %700 = vector.broadcast %699 : vector<8x1xf32> to vector<8x8xf32>
    %701 = arith.divf %697, %700 : vector<8x8xf32>
    %cst_428 = arith.constant dense<0.000000e+00> : vector<8x32xf32>
    %702 = tpu.matmul %701, %689, %cst_428 {dimension_numbers = #tpu.dot_dimension_numbers<[1], [0], [0], [1], [0, 0, 1, 1], [], []>} : vector<8x8xf32>, vector<8x32xf32>, vector<8x32xf32> -> vector<8x32xf32>
    %703 = tpu.concatenate %686, %702 in 0 : vector<8x32xf32>, vector<8x32xf32> -> vector<16x32xf32>
    %c1_429 = arith.constant 1 : index
    %c1_430 = arith.constant 1 : index
    %c0_431 = arith.constant 0 : index
    %c0_432 = arith.constant 0 : index
    %704 = vector.load %arg17[%c1_429, %c1_430, %c0_431, %c0_432] : memref<2x2x32x32xf32, #tpu.memory_space<vmem>>, vector<1x1x32x32xf32>
    %705 = vector.shape_cast %704 : vector<1x1x32x32xf32> to vector<32x32xf32>
    %cst_433 = arith.constant dense<0.000000e+00> : vector<16x32xf32>
    %706 = tpu.matmul %703, %705, %cst_433 {dimension_numbers = #tpu.dot_dimension_numbers<[1], [0], [0], [1], [0, 0, 1, 1], [], []>} : vector<16x32xf32>, vector<32x32xf32>, vector<16x32xf32> -> vector<16x32xf32>
    %707 = arith.addf %661, %706 : vector<16x32xf32>
    %708 = arith.addf %707, %614 : vector<16x32xf32>
    %c1_434 = arith.constant 1 : index
    %c0_435 = arith.constant 0 : index
    %c0_436 = arith.constant 0 : index
    %709 = vector.load %arg26[%c1_434, %c0_435, %c0_436] : memref<2x1x32xf32, #tpu.memory_space<vmem>>, vector<1x1x32xf32>
    %710 = vector.shape_cast %709 : vector<1x1x32xf32> to vector<1x32xf32>
    %c1_437 = arith.constant 1 : index
    %c0_438 = arith.constant 0 : index
    %c0_439 = arith.constant 0 : index
    %711 = vector.load %arg27[%c1_437, %c0_438, %c0_439] : memref<2x1x32xf32, #tpu.memory_space<vmem>>, vector<1x1x32xf32>
    %712 = vector.shape_cast %711 : vector<1x1x32xf32> to vector<1x32xf32>
    %cst_440 = arith.constant dense<0.000000e+00> : vector<16xf32>
    %713 = vector.multi_reduction <add>, %708, %cst_440 [1] : vector<16x32xf32> to vector<16xf32>
    %714 = vector.shape_cast %713 : vector<16xf32> to vector<16x1xf32>
    %cst_441 = arith.constant 3.200000e+01 : f32
    %715 = vector.broadcast %cst_441 : f32 to vector<16x1xf32>
    %716 = arith.divf %714, %715 : vector<16x1xf32>
    %717 = vector.broadcast %716 : vector<16x1xf32> to vector<16x32xf32>
    %718 = arith.subf %708, %717 : vector<16x32xf32>
    %719 = arith.mulf %718, %718 : vector<16x32xf32>
    %cst_442 = arith.constant dense<0.000000e+00> : vector<16xf32>
    %720 = vector.multi_reduction <add>, %719, %cst_442 [1] : vector<16x32xf32> to vector<16xf32>
    %721 = vector.shape_cast %720 : vector<16xf32> to vector<16x1xf32>
    %cst_443 = arith.constant 3.200000e+01 : f32
    %722 = vector.broadcast %cst_443 : f32 to vector<16x1xf32>
    %723 = arith.divf %721, %722 : vector<16x1xf32>
    %cst_444 = arith.constant 9.99999974E-6 : f32
    %724 = vector.broadcast %cst_444 : f32 to vector<16x1xf32>
    %725 = arith.addf %723, %724 : vector<16x1xf32>
    %726 = math.rsqrt %725 : vector<16x1xf32>
    %727 = vector.broadcast %726 : vector<16x1xf32> to vector<16x32xf32>
    %728 = arith.mulf %718, %727 : vector<16x32xf32>
    %729 = vector.broadcast %710 : vector<1x32xf32> to vector<16x32xf32>
    %730 = arith.mulf %728, %729 : vector<16x32xf32>
    %731 = vector.broadcast %712 : vector<1x32xf32> to vector<16x32xf32>
    %732 = arith.addf %730, %731 : vector<16x32xf32>
    %cst_445 = arith.constant 0.000000e+00 : f32
    %733 = vector.broadcast %cst_445 : f32 to vector<16x32xf32>
    %c1_446 = arith.constant 1 : index
    %c0_447 = arith.constant 0 : index
    %c0_448 = arith.constant 0 : index
    %c0_449 = arith.constant 0 : index
    %734 = vector.load %arg18[%c1_446, %c0_447, %c0_448, %c0_449] : memref<2x2x32x16xf32, #tpu.memory_space<vmem>>, vector<1x1x32x16xf32>
    %735 = vector.shape_cast %734 : vector<1x1x32x16xf32> to vector<32x16xf32>
    %cst_450 = arith.constant dense<0.000000e+00> : vector<16x16xf32>
    %736 = tpu.matmul %732, %735, %cst_450 {dimension_numbers = #tpu.dot_dimension_numbers<[1], [0], [0], [1], [0, 0, 1, 1], [], []>} : vector<16x32xf32>, vector<32x16xf32>, vector<16x16xf32> -> vector<16x16xf32>
    %c1_451 = arith.constant 1 : index
    %c0_452 = arith.constant 0 : index
    %c0_453 = arith.constant 0 : index
    %c0_454 = arith.constant 0 : index
    %737 = vector.load %arg19[%c1_451, %c0_452, %c0_453, %c0_454] : memref<2x2x32x16xf32, #tpu.memory_space<vmem>>, vector<1x1x32x16xf32>
    %738 = vector.shape_cast %737 : vector<1x1x32x16xf32> to vector<32x16xf32>
    %cst_455 = arith.constant dense<0.000000e+00> : vector<32x16xf32>
    %739 = tpu.matmul %330, %738, %cst_455 {dimension_numbers = #tpu.dot_dimension_numbers<[1], [0], [0], [1], [0, 0, 1, 1], [], []>} : vector<32x32xf32>, vector<32x16xf32>, vector<32x16xf32> -> vector<32x16xf32>
    %c1_456 = arith.constant 1 : index
    %c0_457 = arith.constant 0 : index
    %c0_458 = arith.constant 0 : index
    %c0_459 = arith.constant 0 : index
    %740 = vector.load %arg20[%c1_456, %c0_457, %c0_458, %c0_459] : memref<2x2x32x32xf32, #tpu.memory_space<vmem>>, vector<1x1x32x32xf32>
    %741 = vector.shape_cast %740 : vector<1x1x32x32xf32> to vector<32x32xf32>
    %cst_460 = arith.constant dense<0.000000e+00> : vector<32x32xf32>
    %742 = tpu.matmul %330, %741, %cst_460 {dimension_numbers = #tpu.dot_dimension_numbers<[1], [0], [0], [1], [0, 0, 1, 1], [], []>} : vector<32x32xf32>, vector<32x32xf32>, vector<32x32xf32> -> vector<32x32xf32>
    %743 = vector.extract_strided_slice %736 {offsets = [0, 0], sizes = [8, 16], strides = [1, 1]} : vector<16x16xf32> to vector<8x16xf32>
    %744 = vector.extract_strided_slice %739 {offsets = [0, 0], sizes = [16, 16], strides = [1, 1]} : vector<32x16xf32> to vector<16x16xf32>
    %745 = vector.extract_strided_slice %742 {offsets = [0, 0], sizes = [16, 32], strides = [1, 1]} : vector<32x32xf32> to vector<16x32xf32>
    %cst_461 = arith.constant dense<0.000000e+00> : vector<8x16xf32>
    %746 = tpu.matmul %743, %744, %cst_461 {dimension_numbers = #tpu.dot_dimension_numbers<[1], [1], [0], [0], [0, 0, 1, 0], [], []>} : vector<8x16xf32>, vector<16x16xf32>, vector<8x16xf32> -> vector<8x16xf32>
    %cst_462 = arith.constant 2.500000e-01 : f32
    %747 = vector.broadcast %cst_462 : f32 to vector<8x16xf32>
    %748 = arith.mulf %746, %747 : vector<8x16xf32>
    %cst_463 = arith.constant dense<0xFF800000> : vector<8xf32>
    %749 = vector.multi_reduction <maximumf>, %748, %cst_463 [1] : vector<8x16xf32> to vector<8xf32>
    %750 = vector.shape_cast %749 : vector<8xf32> to vector<8x1xf32>
    %751 = vector.broadcast %750 : vector<8x1xf32> to vector<8x16xf32>
    %752 = arith.subf %748, %751 : vector<8x16xf32>
    %753 = math.exp %752 : vector<8x16xf32>
    %cst_464 = arith.constant dense<0.000000e+00> : vector<8xf32>
    %754 = vector.multi_reduction <add>, %753, %cst_464 [1] : vector<8x16xf32> to vector<8xf32>
    %755 = vector.shape_cast %754 : vector<8xf32> to vector<8x1xf32>
    %756 = vector.broadcast %755 : vector<8x1xf32> to vector<8x16xf32>
    %757 = arith.divf %753, %756 : vector<8x16xf32>
    %cst_465 = arith.constant dense<0.000000e+00> : vector<8x32xf32>
    %758 = tpu.matmul %757, %745, %cst_465 {dimension_numbers = #tpu.dot_dimension_numbers<[1], [0], [0], [1], [0, 0, 1, 1], [], []>} : vector<8x16xf32>, vector<16x32xf32>, vector<8x32xf32> -> vector<8x32xf32>
    %759 = vector.extract_strided_slice %736 {offsets = [8, 0], sizes = [8, 16], strides = [1, 1]} : vector<16x16xf32> to vector<8x16xf32>
    %760 = vector.extract_strided_slice %739 {offsets = [16, 0], sizes = [16, 16], strides = [1, 1]} : vector<32x16xf32> to vector<16x16xf32>
    %761 = vector.extract_strided_slice %742 {offsets = [16, 0], sizes = [16, 32], strides = [1, 1]} : vector<32x32xf32> to vector<16x32xf32>
    %cst_466 = arith.constant dense<0.000000e+00> : vector<8x16xf32>
    %762 = tpu.matmul %759, %760, %cst_466 {dimension_numbers = #tpu.dot_dimension_numbers<[1], [1], [0], [0], [0, 0, 1, 0], [], []>} : vector<8x16xf32>, vector<16x16xf32>, vector<8x16xf32> -> vector<8x16xf32>
    %cst_467 = arith.constant 2.500000e-01 : f32
    %763 = vector.broadcast %cst_467 : f32 to vector<8x16xf32>
    %764 = arith.mulf %762, %763 : vector<8x16xf32>
    %cst_468 = arith.constant dense<0xFF800000> : vector<8xf32>
    %765 = vector.multi_reduction <maximumf>, %764, %cst_468 [1] : vector<8x16xf32> to vector<8xf32>
    %766 = vector.shape_cast %765 : vector<8xf32> to vector<8x1xf32>
    %767 = vector.broadcast %766 : vector<8x1xf32> to vector<8x16xf32>
    %768 = arith.subf %764, %767 : vector<8x16xf32>
    %769 = math.exp %768 : vector<8x16xf32>
    %cst_469 = arith.constant dense<0.000000e+00> : vector<8xf32>
    %770 = vector.multi_reduction <add>, %769, %cst_469 [1] : vector<8x16xf32> to vector<8xf32>
    %771 = vector.shape_cast %770 : vector<8xf32> to vector<8x1xf32>
    %772 = vector.broadcast %771 : vector<8x1xf32> to vector<8x16xf32>
    %773 = arith.divf %769, %772 : vector<8x16xf32>
    %cst_470 = arith.constant dense<0.000000e+00> : vector<8x32xf32>
    %774 = tpu.matmul %773, %761, %cst_470 {dimension_numbers = #tpu.dot_dimension_numbers<[1], [0], [0], [1], [0, 0, 1, 1], [], []>} : vector<8x16xf32>, vector<16x32xf32>, vector<8x32xf32> -> vector<8x32xf32>
    %775 = tpu.concatenate %758, %774 in 0 : vector<8x32xf32>, vector<8x32xf32> -> vector<16x32xf32>
    %c1_471 = arith.constant 1 : index
    %c0_472 = arith.constant 0 : index
    %c0_473 = arith.constant 0 : index
    %c0_474 = arith.constant 0 : index
    %776 = vector.load %arg21[%c1_471, %c0_472, %c0_473, %c0_474] : memref<2x2x32x32xf32, #tpu.memory_space<vmem>>, vector<1x1x32x32xf32>
    %777 = vector.shape_cast %776 : vector<1x1x32x32xf32> to vector<32x32xf32>
    %cst_475 = arith.constant dense<0.000000e+00> : vector<16x32xf32>
    %778 = tpu.matmul %775, %777, %cst_475 {dimension_numbers = #tpu.dot_dimension_numbers<[1], [0], [0], [1], [0, 0, 1, 1], [], []>} : vector<16x32xf32>, vector<32x32xf32>, vector<16x32xf32> -> vector<16x32xf32>
    %779 = arith.addf %733, %778 : vector<16x32xf32>
    %c1_476 = arith.constant 1 : index
    %c1_477 = arith.constant 1 : index
    %c0_478 = arith.constant 0 : index
    %c0_479 = arith.constant 0 : index
    %780 = vector.load %arg18[%c1_476, %c1_477, %c0_478, %c0_479] : memref<2x2x32x16xf32, #tpu.memory_space<vmem>>, vector<1x1x32x16xf32>
    %781 = vector.shape_cast %780 : vector<1x1x32x16xf32> to vector<32x16xf32>
    %cst_480 = arith.constant dense<0.000000e+00> : vector<16x16xf32>
    %782 = tpu.matmul %732, %781, %cst_480 {dimension_numbers = #tpu.dot_dimension_numbers<[1], [0], [0], [1], [0, 0, 1, 1], [], []>} : vector<16x32xf32>, vector<32x16xf32>, vector<16x16xf32> -> vector<16x16xf32>
    %c1_481 = arith.constant 1 : index
    %c1_482 = arith.constant 1 : index
    %c0_483 = arith.constant 0 : index
    %c0_484 = arith.constant 0 : index
    %783 = vector.load %arg19[%c1_481, %c1_482, %c0_483, %c0_484] : memref<2x2x32x16xf32, #tpu.memory_space<vmem>>, vector<1x1x32x16xf32>
    %784 = vector.shape_cast %783 : vector<1x1x32x16xf32> to vector<32x16xf32>
    %cst_485 = arith.constant dense<0.000000e+00> : vector<32x16xf32>
    %785 = tpu.matmul %330, %784, %cst_485 {dimension_numbers = #tpu.dot_dimension_numbers<[1], [0], [0], [1], [0, 0, 1, 1], [], []>} : vector<32x32xf32>, vector<32x16xf32>, vector<32x16xf32> -> vector<32x16xf32>
    %c1_486 = arith.constant 1 : index
    %c1_487 = arith.constant 1 : index
    %c0_488 = arith.constant 0 : index
    %c0_489 = arith.constant 0 : index
    %786 = vector.load %arg20[%c1_486, %c1_487, %c0_488, %c0_489] : memref<2x2x32x32xf32, #tpu.memory_space<vmem>>, vector<1x1x32x32xf32>
    %787 = vector.shape_cast %786 : vector<1x1x32x32xf32> to vector<32x32xf32>
    %cst_490 = arith.constant dense<0.000000e+00> : vector<32x32xf32>
    %788 = tpu.matmul %330, %787, %cst_490 {dimension_numbers = #tpu.dot_dimension_numbers<[1], [0], [0], [1], [0, 0, 1, 1], [], []>} : vector<32x32xf32>, vector<32x32xf32>, vector<32x32xf32> -> vector<32x32xf32>
    %789 = vector.extract_strided_slice %782 {offsets = [0, 0], sizes = [8, 16], strides = [1, 1]} : vector<16x16xf32> to vector<8x16xf32>
    %790 = vector.extract_strided_slice %785 {offsets = [0, 0], sizes = [16, 16], strides = [1, 1]} : vector<32x16xf32> to vector<16x16xf32>
    %791 = vector.extract_strided_slice %788 {offsets = [0, 0], sizes = [16, 32], strides = [1, 1]} : vector<32x32xf32> to vector<16x32xf32>
    %cst_491 = arith.constant dense<0.000000e+00> : vector<8x16xf32>
    %792 = tpu.matmul %789, %790, %cst_491 {dimension_numbers = #tpu.dot_dimension_numbers<[1], [1], [0], [0], [0, 0, 1, 0], [], []>} : vector<8x16xf32>, vector<16x16xf32>, vector<8x16xf32> -> vector<8x16xf32>
    %cst_492 = arith.constant 2.500000e-01 : f32
    %793 = vector.broadcast %cst_492 : f32 to vector<8x16xf32>
    %794 = arith.mulf %792, %793 : vector<8x16xf32>
    %cst_493 = arith.constant dense<0xFF800000> : vector<8xf32>
    %795 = vector.multi_reduction <maximumf>, %794, %cst_493 [1] : vector<8x16xf32> to vector<8xf32>
    %796 = vector.shape_cast %795 : vector<8xf32> to vector<8x1xf32>
    %797 = vector.broadcast %796 : vector<8x1xf32> to vector<8x16xf32>
    %798 = arith.subf %794, %797 : vector<8x16xf32>
    %799 = math.exp %798 : vector<8x16xf32>
    %cst_494 = arith.constant dense<0.000000e+00> : vector<8xf32>
    %800 = vector.multi_reduction <add>, %799, %cst_494 [1] : vector<8x16xf32> to vector<8xf32>
    %801 = vector.shape_cast %800 : vector<8xf32> to vector<8x1xf32>
    %802 = vector.broadcast %801 : vector<8x1xf32> to vector<8x16xf32>
    %803 = arith.divf %799, %802 : vector<8x16xf32>
    %cst_495 = arith.constant dense<0.000000e+00> : vector<8x32xf32>
    %804 = tpu.matmul %803, %791, %cst_495 {dimension_numbers = #tpu.dot_dimension_numbers<[1], [0], [0], [1], [0, 0, 1, 1], [], []>} : vector<8x16xf32>, vector<16x32xf32>, vector<8x32xf32> -> vector<8x32xf32>
    %805 = vector.extract_strided_slice %782 {offsets = [8, 0], sizes = [8, 16], strides = [1, 1]} : vector<16x16xf32> to vector<8x16xf32>
    %806 = vector.extract_strided_slice %785 {offsets = [16, 0], sizes = [16, 16], strides = [1, 1]} : vector<32x16xf32> to vector<16x16xf32>
    %807 = vector.extract_strided_slice %788 {offsets = [16, 0], sizes = [16, 32], strides = [1, 1]} : vector<32x32xf32> to vector<16x32xf32>
    %cst_496 = arith.constant dense<0.000000e+00> : vector<8x16xf32>
    %808 = tpu.matmul %805, %806, %cst_496 {dimension_numbers = #tpu.dot_dimension_numbers<[1], [1], [0], [0], [0, 0, 1, 0], [], []>} : vector<8x16xf32>, vector<16x16xf32>, vector<8x16xf32> -> vector<8x16xf32>
    %cst_497 = arith.constant 2.500000e-01 : f32
    %809 = vector.broadcast %cst_497 : f32 to vector<8x16xf32>
    %810 = arith.mulf %808, %809 : vector<8x16xf32>
    %cst_498 = arith.constant dense<0xFF800000> : vector<8xf32>
    %811 = vector.multi_reduction <maximumf>, %810, %cst_498 [1] : vector<8x16xf32> to vector<8xf32>
    %812 = vector.shape_cast %811 : vector<8xf32> to vector<8x1xf32>
    %813 = vector.broadcast %812 : vector<8x1xf32> to vector<8x16xf32>
    %814 = arith.subf %810, %813 : vector<8x16xf32>
    %815 = math.exp %814 : vector<8x16xf32>
    %cst_499 = arith.constant dense<0.000000e+00> : vector<8xf32>
    %816 = vector.multi_reduction <add>, %815, %cst_499 [1] : vector<8x16xf32> to vector<8xf32>
    %817 = vector.shape_cast %816 : vector<8xf32> to vector<8x1xf32>
    %818 = vector.broadcast %817 : vector<8x1xf32> to vector<8x16xf32>
    %819 = arith.divf %815, %818 : vector<8x16xf32>
    %cst_500 = arith.constant dense<0.000000e+00> : vector<8x32xf32>
    %820 = tpu.matmul %819, %807, %cst_500 {dimension_numbers = #tpu.dot_dimension_numbers<[1], [0], [0], [1], [0, 0, 1, 1], [], []>} : vector<8x16xf32>, vector<16x32xf32>, vector<8x32xf32> -> vector<8x32xf32>
    %821 = tpu.concatenate %804, %820 in 0 : vector<8x32xf32>, vector<8x32xf32> -> vector<16x32xf32>
    %c1_501 = arith.constant 1 : index
    %c1_502 = arith.constant 1 : index
    %c0_503 = arith.constant 0 : index
    %c0_504 = arith.constant 0 : index
    %822 = vector.load %arg21[%c1_501, %c1_502, %c0_503, %c0_504] : memref<2x2x32x32xf32, #tpu.memory_space<vmem>>, vector<1x1x32x32xf32>
    %823 = vector.shape_cast %822 : vector<1x1x32x32xf32> to vector<32x32xf32>
    %cst_505 = arith.constant dense<0.000000e+00> : vector<16x32xf32>
    %824 = tpu.matmul %821, %823, %cst_505 {dimension_numbers = #tpu.dot_dimension_numbers<[1], [0], [0], [1], [0, 0, 1, 1], [], []>} : vector<16x32xf32>, vector<32x32xf32>, vector<16x32xf32> -> vector<16x32xf32>
    %825 = arith.addf %779, %824 : vector<16x32xf32>
    %826 = arith.addf %825, %732 : vector<16x32xf32>
    %c1_506 = arith.constant 1 : index
    %c0_507 = arith.constant 0 : index
    %c0_508 = arith.constant 0 : index
    %827 = vector.load %arg28[%c1_506, %c0_507, %c0_508] : memref<2x1x32xf32, #tpu.memory_space<vmem>>, vector<1x1x32xf32>
    %828 = vector.shape_cast %827 : vector<1x1x32xf32> to vector<1x32xf32>
    %c1_509 = arith.constant 1 : index
    %c0_510 = arith.constant 0 : index
    %c0_511 = arith.constant 0 : index
    %829 = vector.load %arg29[%c1_509, %c0_510, %c0_511] : memref<2x1x32xf32, #tpu.memory_space<vmem>>, vector<1x1x32xf32>
    %830 = vector.shape_cast %829 : vector<1x1x32xf32> to vector<1x32xf32>
    %cst_512 = arith.constant dense<0.000000e+00> : vector<16xf32>
    %831 = vector.multi_reduction <add>, %826, %cst_512 [1] : vector<16x32xf32> to vector<16xf32>
    %832 = vector.shape_cast %831 : vector<16xf32> to vector<16x1xf32>
    %cst_513 = arith.constant 3.200000e+01 : f32
    %833 = vector.broadcast %cst_513 : f32 to vector<16x1xf32>
    %834 = arith.divf %832, %833 : vector<16x1xf32>
    %835 = vector.broadcast %834 : vector<16x1xf32> to vector<16x32xf32>
    %836 = arith.subf %826, %835 : vector<16x32xf32>
    %837 = arith.mulf %836, %836 : vector<16x32xf32>
    %cst_514 = arith.constant dense<0.000000e+00> : vector<16xf32>
    %838 = vector.multi_reduction <add>, %837, %cst_514 [1] : vector<16x32xf32> to vector<16xf32>
    %839 = vector.shape_cast %838 : vector<16xf32> to vector<16x1xf32>
    %cst_515 = arith.constant 3.200000e+01 : f32
    %840 = vector.broadcast %cst_515 : f32 to vector<16x1xf32>
    %841 = arith.divf %839, %840 : vector<16x1xf32>
    %cst_516 = arith.constant 9.99999974E-6 : f32
    %842 = vector.broadcast %cst_516 : f32 to vector<16x1xf32>
    %843 = arith.addf %841, %842 : vector<16x1xf32>
    %844 = math.rsqrt %843 : vector<16x1xf32>
    %845 = vector.broadcast %844 : vector<16x1xf32> to vector<16x32xf32>
    %846 = arith.mulf %836, %845 : vector<16x32xf32>
    %847 = vector.broadcast %828 : vector<1x32xf32> to vector<16x32xf32>
    %848 = arith.mulf %846, %847 : vector<16x32xf32>
    %849 = vector.broadcast %830 : vector<1x32xf32> to vector<16x32xf32>
    %850 = arith.addf %848, %849 : vector<16x32xf32>
    %c1_517 = arith.constant 1 : index
    %c0_518 = arith.constant 0 : index
    %c0_519 = arith.constant 0 : index
    %851 = vector.load %arg24[%c1_517, %c0_518, %c0_519] : memref<2x32x32xf32, #tpu.memory_space<vmem>>, vector<1x32x32xf32>
    %852 = vector.shape_cast %851 : vector<1x32x32xf32> to vector<32x32xf32>
    %c1_520 = arith.constant 1 : index
    %c0_521 = arith.constant 0 : index
    %c0_522 = arith.constant 0 : index
    %853 = vector.load %arg25[%c1_520, %c0_521, %c0_522] : memref<2x1x32xf32, #tpu.memory_space<vmem>>, vector<1x1x32xf32>
    %854 = vector.shape_cast %853 : vector<1x1x32xf32> to vector<1x32xf32>
    %c1_523 = arith.constant 1 : index
    %c0_524 = arith.constant 0 : index
    %c0_525 = arith.constant 0 : index
    %855 = vector.load %arg22[%c1_523, %c0_524, %c0_525] : memref<2x32x32xf32, #tpu.memory_space<vmem>>, vector<1x32x32xf32>
    %856 = vector.shape_cast %855 : vector<1x32x32xf32> to vector<32x32xf32>
    %c1_526 = arith.constant 1 : index
    %c0_527 = arith.constant 0 : index
    %c0_528 = arith.constant 0 : index
    %857 = vector.load %arg23[%c1_526, %c0_527, %c0_528] : memref<2x1x32xf32, #tpu.memory_space<vmem>>, vector<1x1x32xf32>
    %858 = vector.shape_cast %857 : vector<1x1x32xf32> to vector<1x32xf32>
    %cst_529 = arith.constant dense<0.000000e+00> : vector<16x32xf32>
    %859 = tpu.matmul %850, %852, %cst_529 {dimension_numbers = #tpu.dot_dimension_numbers<[1], [0], [0], [1], [0, 0, 1, 1], [], []>} : vector<16x32xf32>, vector<32x32xf32>, vector<16x32xf32> -> vector<16x32xf32>
    %860 = vector.broadcast %854 : vector<1x32xf32> to vector<16x32xf32>
    %861 = arith.addf %859, %860 : vector<16x32xf32>
    %cst_530 = arith.constant 0.000000e+00 : f32
    %862 = vector.broadcast %cst_530 : f32 to vector<16x32xf32>
    %863 = arith.cmpf ogt, %861, %862 : vector<16x32xf32>
    %cst_531 = arith.constant 0.000000e+00 : f32
    %864 = vector.broadcast %cst_531 : f32 to vector<16x32xf32>
    %865 = arith.minimumf %861, %864 : vector<16x32xf32>
    %866 = math.exp %865 : vector<16x32xf32>
    %cst_532 = arith.constant 1.000000e+00 : f32
    %867 = vector.broadcast %cst_532 : f32 to vector<16x32xf32>
    %868 = arith.subf %866, %867 : vector<16x32xf32>
    %869 = arith.select %863, %861, %868 : vector<16x32xi1>, vector<16x32xf32>
    %cst_533 = arith.constant dense<0.000000e+00> : vector<16x32xf32>
    %870 = tpu.matmul %869, %856, %cst_533 {dimension_numbers = #tpu.dot_dimension_numbers<[1], [0], [0], [1], [0, 0, 1, 1], [], []>} : vector<16x32xf32>, vector<32x32xf32>, vector<16x32xf32> -> vector<16x32xf32>
    %871 = vector.broadcast %858 : vector<1x32xf32> to vector<16x32xf32>
    %872 = arith.addf %870, %871 : vector<16x32xf32>
    %873 = arith.addf %850, %872 : vector<16x32xf32>
    %c1_534 = arith.constant 1 : index
    %c0_535 = arith.constant 0 : index
    %c0_536 = arith.constant 0 : index
    %874 = vector.load %arg30[%c1_534, %c0_535, %c0_536] : memref<2x1x32xf32, #tpu.memory_space<vmem>>, vector<1x1x32xf32>
    %875 = vector.shape_cast %874 : vector<1x1x32xf32> to vector<1x32xf32>
    %c1_537 = arith.constant 1 : index
    %c0_538 = arith.constant 0 : index
    %c0_539 = arith.constant 0 : index
    %876 = vector.load %arg31[%c1_537, %c0_538, %c0_539] : memref<2x1x32xf32, #tpu.memory_space<vmem>>, vector<1x1x32xf32>
    %877 = vector.shape_cast %876 : vector<1x1x32xf32> to vector<1x32xf32>
    %cst_540 = arith.constant dense<0.000000e+00> : vector<16xf32>
    %878 = vector.multi_reduction <add>, %873, %cst_540 [1] : vector<16x32xf32> to vector<16xf32>
    %879 = vector.shape_cast %878 : vector<16xf32> to vector<16x1xf32>
    %cst_541 = arith.constant 3.200000e+01 : f32
    %880 = vector.broadcast %cst_541 : f32 to vector<16x1xf32>
    %881 = arith.divf %879, %880 : vector<16x1xf32>
    %882 = vector.broadcast %881 : vector<16x1xf32> to vector<16x32xf32>
    %883 = arith.subf %873, %882 : vector<16x32xf32>
    %884 = arith.mulf %883, %883 : vector<16x32xf32>
    %cst_542 = arith.constant dense<0.000000e+00> : vector<16xf32>
    %885 = vector.multi_reduction <add>, %884, %cst_542 [1] : vector<16x32xf32> to vector<16xf32>
    %886 = vector.shape_cast %885 : vector<16xf32> to vector<16x1xf32>
    %cst_543 = arith.constant 3.200000e+01 : f32
    %887 = vector.broadcast %cst_543 : f32 to vector<16x1xf32>
    %888 = arith.divf %886, %887 : vector<16x1xf32>
    %cst_544 = arith.constant 9.99999974E-6 : f32
    %889 = vector.broadcast %cst_544 : f32 to vector<16x1xf32>
    %890 = arith.addf %888, %889 : vector<16x1xf32>
    %891 = math.rsqrt %890 : vector<16x1xf32>
    %892 = vector.broadcast %891 : vector<16x1xf32> to vector<16x32xf32>
    %893 = arith.mulf %883, %892 : vector<16x32xf32>
    %894 = vector.broadcast %875 : vector<1x32xf32> to vector<16x32xf32>
    %895 = arith.mulf %893, %894 : vector<16x32xf32>
    %896 = vector.broadcast %877 : vector<1x32xf32> to vector<16x32xf32>
    %897 = arith.addf %895, %896 : vector<16x32xf32>
    %c0_545 = arith.constant 0 : index
    %c0_546 = arith.constant 0 : index
    %898 = vector.load %arg32[%c0_545, %c0_546] : memref<16x32xf32, #tpu.memory_space<vmem>>, vector<16x32xf32>
    tpu.vector_store %arg32[%c0_545, %c0_546], %897 {strides = array<i32>} : memref<16x32xf32, #tpu.memory_space<vmem>>, vector<16x32xf32>,
    return
  }
}

</mosaic_0001>

<llo_original>
// kernel: transformer_forward.1
$region0: #{transformer_forward.1}
  #allocation0 [shape = 'u32[]', space=smem, size = 0x4, offset = 0x4, fixed_abs, tag = 'smem constant byte address 0x4 - core index']
  #allocation1 [shape = 'u32[144,128]{1,0:T(1,128)}', space=vmem, size = 0x12000, scoped, tag = 'internal scratch']
  %s0 = inlined_call_operand.smem [shape: u32[33], index: -1, kind: input, shape index: {}]
  %s1 = sld [smem:[%s0]]
  %s2 = scalar_lea.smem %s0, 1
  %s3 = sld [smem:[%s2]]
  %s4 = scalar_lea.smem %s0, 2
  %s5 = sld [smem:[%s4]]
  %s6 = scalar_lea.smem %s0, 3
  %s7 = sld [smem:[%s6]]
  %s8 = scalar_lea.smem %s0, 4
  %s9 = sld [smem:[%s8]]
  %s10 = scalar_lea.smem %s0, 5
  %s11 = sld [smem:[%s10]]
  %s12 = scalar_lea.smem %s0, 6
  %s13 = sld [smem:[%s12]]
  %s14 = scalar_lea.smem %s0, 7
  %s15 = sld [smem:[%s14]]
  %s16 = scalar_lea.smem %s0, 8
  %s17 = sld [smem:[%s16]]
  %s18 = scalar_lea.smem %s0, 9
  %s19 = sld [smem:[%s18]]
  %s20 = scalar_lea.smem %s0, 10
  %s21 = sld [smem:[%s20]]
  %s22 = scalar_lea.smem %s0, 11
  %s23 = sld [smem:[%s22]]
  %s24 = scalar_lea.smem %s0, 12
  %s25 = sld [smem:[%s24]]
  %s26 = scalar_lea.smem %s0, 13
  %s27 = sld [smem:[%s26]]
  %s28 = scalar_lea.smem %s0, 14
  %s29 = sld [smem:[%s28]]
  %s30 = scalar_lea.smem %s0, 15
  %s31 = sld [smem:[%s30]]
  %s32 = scalar_lea.smem %s0, 16
  %s33 = sld [smem:[%s32]]
  %s34 = scalar_lea.smem %s0, 17
  %s35 = sld [smem:[%s34]]
  %s36 = scalar_lea.smem %s0, 18
  %s37 = sld [smem:[%s36]]
  %s38 = scalar_lea.smem %s0, 19
  %s39 = sld [smem:[%s38]]
  %s40 = scalar_lea.smem %s0, 20
  %s41 = sld [smem:[%s40]]
  %s42 = scalar_lea.smem %s0, 21
  %s43 = sld [smem:[%s42]]
  %s44 = scalar_lea.smem %s0, 22
  %s45 = sld [smem:[%s44]]
  %s46 = scalar_lea.smem %s0, 23
  %s47 = sld [smem:[%s46]]
  %s48 = scalar_lea.smem %s0, 24
  %s49 = sld [smem:[%s48]]
  %s50 = scalar_lea.smem %s0, 25
  %s51 = sld [smem:[%s50]]
  %s52 = scalar_lea.smem %s0, 26
  %s53 = sld [smem:[%s52]]
  %s54 = scalar_lea.smem %s0, 27
  %s55 = sld [smem:[%s54]]
  %s56 = scalar_lea.smem %s0, 28
  %s57 = sld [smem:[%s56]]
  %s58 = scalar_lea.smem %s0, 29
  %s59 = sld [smem:[%s58]]
  %s60 = scalar_lea.smem %s0, 30
  %s61 = sld [smem:[%s60]]
  %s62 = scalar_lea.smem %s0, 31
  %s63 = sld [smem:[%s62]]
  %s64 = scalar_lea.smem %s0, 32
  %s65 = sld [smem:[%s64]]
  %s66 = sld [smem:[#allocation0]]
  $region154: #{transformer_forward.1} parent=0
    _
  %s68 = ssub.s32 1, %s66
  %s69 = scalar_select 0, %s68, %s66
  $region1: #{transformer_forward.1} parent=0
    #allocation2 [shape = 'u8[32768]{0}', space=vmem, size = 0x8000, scoped, tag = 'input window, operand 24, single buffered']
    #allocation3 [shape = 's32[1]{0}', space=sflag, size = 0x4, scoped, tag = 'scoped memory for transformer_forward.1']
    #allocation4 [shape = 'u8[1024]{0}', space=vmem, size = 0x400, scoped, tag = 'input window, operand 29, single buffered']
    #allocation5 [shape = 's32[1]{0}', space=sflag, size = 0x4, scoped, tag = 'scoped memory for transformer_forward.1']
    #allocation6 [shape = 'u8[1024]{0}', space=vmem, size = 0x400, scoped, tag = 'input window, operand 30, single buffered']
    #allocation7 [shape = 'u8[1024]{0}', space=vmem, size = 0x400, scoped, tag = 'input window, operand 31, single buffered']
    #allocation8 [shape = 's32[1]{0}', space=sflag, size = 0x4, scoped, tag = 'scoped memory for transformer_forward.1']
    %70 = vsyncpa [#allocation3], 0
    %71 = vsyncpa [#allocation5], 0
    %72 = vsyncpa [#allocation8], 0
    // Predicated region
    $region2: #{transformer_forward.1} parent=1 // pred_check
      _
    $region3: #{transformer_forward.1} parent=1 // pred_check_branch
      %74 = sbr.rel (0) target = $region5
    $region4: #{transformer_forward.1} parent=1 // pred_region
      _
    $region5: #{transformer_forward.1} parent=1 // pred_fallthru
      _
    // Predicated region
    $region6: #{transformer_forward.1} parent=1 // pred_check
      _
    $region7: #{transformer_forward.1} parent=1 // pred_check_branch
      %76 = sbr.rel (0) target = $region9
    $region8: #{transformer_forward.1} parent=1 // pred_region
      _
    $region9: #{transformer_forward.1} parent=1 // pred_fallthru
      _
    // Predicated region
    $region10: #{transformer_forward.1} parent=1 // pred_check
      _
    $region11: #{transformer_forward.1} parent=1 // pred_check_branch
      %78 = sbr.rel (0) target = $region13
    $region12: #{transformer_forward.1} parent=1 // pred_region
      _
    $region13: #{transformer_forward.1} parent=1 // pred_fallthru
      _
    // Predicated region
    $region14: #{transformer_forward.1} parent=1 // pred_check
      _
    $region15: #{transformer_forward.1} parent=1 // pred_check_branch
      %80 = sbr.rel (0) target = $region17
    $region16: #{transformer_forward.1} parent=1 // pred_region
      _
    $region17: #{transformer_forward.1} parent=1 // pred_fallthru
      _
    // Predicated region
    $region18: #{transformer_forward.1} parent=1 // pred_check
      _
    $region19: #{transformer_forward.1} parent=1 // pred_check_branch
      %82 = sbr.rel (0) target = $region21
    $region20: #{transformer_forward.1} parent=1 // pred_region
      _
    $region21: #{transformer_forward.1} parent=1 // pred_fallthru
      _
    // Predicated region
    $region22: #{transformer_forward.1} parent=1 // pred_check
      _
    $region23: #{transformer_forward.1} parent=1 // pred_check_branch
      %84 = sbr.rel (0) target = $region25
    $region24: #{transformer_forward.1} parent=1 // pred_region
      _
    $region25: #{transformer_forward.1} parent=1 // pred_fallthru
      _
    // Predicated region
    $region26: #{transformer_forward.1} parent=1 // pred_check
      _
    $region27: #{transformer_forward.1} parent=1 // pred_check_branch
      %86 = sbr.rel (0) target = $region29
    $region28: #{transformer_forward.1} parent=1 // pred_region
      _
    $region29: #{transformer_forward.1} parent=1 // pred_fallthru
      _
    // Predicated region
    $region30: #{transformer_forward.1} parent=1 // pred_check
      _
    $region31: #{transformer_forward.1} parent=1 // pred_check_branch
      %88 = sbr.rel (0) target = $region33
    $region32: #{transformer_forward.1} parent=1 // pred_region
      _
    $region33: #{transformer_forward.1} parent=1 // pred_fallthru
      _
    // Predicated region
    $region34: #{transformer_forward.1} parent=1 // pred_check
      _
    $region35: #{transformer_forward.1} parent=1 // pred_check_branch
      %90 = sbr.rel (0) target = $region37
    $region36: #{transformer_forward.1} parent=1 // pred_region
      _
    $region37: #{transformer_forward.1} parent=1 // pred_fallthru
      _
    // Predicated region
    $region38: #{transformer_forward.1} parent=1 // pred_check
      _
    $region39: #{transformer_forward.1} parent=1 // pred_check_branch
      %92 = sbr.rel (0) target = $region41
    $region40: #{transformer_forward.1} parent=1 // pred_region
      _
    $region41: #{transformer_forward.1} parent=1 // pred_fallthru
      _
    // Predicated region
    $region42: #{transformer_forward.1} parent=1 // pred_check
      _
    $region43: #{transformer_forward.1} parent=1 // pred_check_branch
      %94 = sbr.rel (0) target = $region45
    $region44: #{transformer_forward.1} parent=1 // pred_region
      _
    $region45: #{transformer_forward.1} parent=1 // pred_fallthru
      _
    // Predicated region
    $region46: #{transformer_forward.1} parent=1 // pred_check
      _
    $region47: #{transformer_forward.1} parent=1 // pred_check_branch
      %96 = sbr.rel (0) target = $region49
    $region48: #{transformer_forward.1} parent=1 // pred_region
      _
    $region49: #{transformer_forward.1} parent=1 // pred_fallthru
      _
    // Predicated region
    $region50: #{transformer_forward.1} parent=1 // pred_check
      _
    $region51: #{transformer_forward.1} parent=1 // pred_check_branch
      %98 = sbr.rel (0) target = $region53
    $region52: #{transformer_forward.1} parent=1 // pred_region
      _
    $region53: #{transformer_forward.1} parent=1 // pred_fallthru
      _
    // Predicated region
    $region54: #{transformer_forward.1} parent=1 // pred_check
      _
    $region55: #{transformer_forward.1} parent=1 // pred_check_branch
      %100 = sbr.rel (0) target = $region57
    $region56: #{transformer_forward.1} parent=1 // pred_region
      _
    $region57: #{transformer_forward.1} parent=1 // pred_fallthru
      _
    // Predicated region
    $region58: #{transformer_forward.1} parent=1 // pred_check
      _
    $region59: #{transformer_forward.1} parent=1 // pred_check_branch
      %102 = sbr.rel (0) target = $region61
    $region60: #{transformer_forward.1} parent=1 // pred_region
      _
    $region61: #{transformer_forward.1} parent=1 // pred_fallthru
      _
    // Predicated region
    $region62: #{transformer_forward.1} parent=1 // pred_check
      _
    $region63: #{transformer_forward.1} parent=1 // pred_check_branch
      %104 = sbr.rel (0) target = $region65
    $region64: #{transformer_forward.1} parent=1 // pred_region
      _
    $region65: #{transformer_forward.1} parent=1 // pred_fallthru
      _
    // Predicated region
    $region66: #{transformer_forward.1} parent=1 // pred_check
      _
    $region67: #{transformer_forward.1} parent=1 // pred_check_branch
      %106 = sbr.rel (0) target = $region69
    $region68: #{transformer_forward.1} parent=1 // pred_region
      _
    $region69: #{transformer_forward.1} parent=1 // pred_fallthru
      _
    // Predicated region
    $region70: #{transformer_forward.1} parent=1 // pred_check
      _
    $region71: #{transformer_forward.1} parent=1 // pred_check_branch
      %108 = sbr.rel (0) target = $region73
    $region72: #{transformer_forward.1} parent=1 // pred_region
      _
    $region73: #{transformer_forward.1} parent=1 // pred_fallthru
      _
    // Predicated region
    $region74: #{transformer_forward.1} parent=1 // pred_check
      _
    $region75: #{transformer_forward.1} parent=1 // pred_check_branch
      %110 = sbr.rel (0) target = $region77
    $region76: #{transformer_forward.1} parent=1 // pred_region
      _
    $region77: #{transformer_forward.1} parent=1 // pred_fallthru
      _
    // Predicated region
    $region78: #{transformer_forward.1} parent=1 // pred_check
      _
    $region79: #{transformer_forward.1} parent=1 // pred_check_branch
      %112 = sbr.rel (0) target = $region81
    $region80: #{transformer_forward.1} parent=1 // pred_region
      _
    $region81: #{transformer_forward.1} parent=1 // pred_fallthru
      _
    // Predicated region
    $region82: #{transformer_forward.1} parent=1 // pred_check
      _
    $region83: #{transformer_forward.1} parent=1 // pred_check_branch
      %114 = sbr.rel (0) target = $region85
    $region84: #{transformer_forward.1} parent=1 // pred_region
      _
    $region85: #{transformer_forward.1} parent=1 // pred_fallthru
      _
    // Predicated region
    $region86: #{transformer_forward.1} parent=1 // pred_check
      _
    $region87: #{transformer_forward.1} parent=1 // pred_check_branch
      %116 = sbr.rel (0) target = $region89
    $region88: #{transformer_forward.1} parent=1 // pred_region
      _
    $region89: #{transformer_forward.1} parent=1 // pred_fallthru
      _
    // Predicated region
    $region90: #{transformer_forward.1} parent=1 // pred_check
      _
    $region91: #{transformer_forward.1} parent=1 // pred_check_branch
      %118 = sbr.rel (0) target = $region93
    $region92: #{transformer_forward.1} parent=1 // pred_region
      _
    $region93: #{transformer_forward.1} parent=1 // pred_fallthru
      _
    // Predicated region
    $region94: #{transformer_forward.1} parent=1 // pred_check
      _
    $region95: #{transformer_forward.1} parent=1 // pred_check_branch
      %120 = sbr.rel (0) target = $region97
    $region96: #{transformer_forward.1} parent=1 // pred_region
      _
    $region97: #{transformer_forward.1} parent=1 // pred_fallthru
      _
    // Predicated region
    $region98: #{transformer_forward.1} parent=1 // pred_check
      _
    $region99: #{transformer_forward.1} parent=1 // pred_check_branch
      %122 = sbr.rel (0) target = $region101
    $region100: #{transformer_forward.1} parent=1 // pred_region
      %s124 = ssub.s32 1024, 1024
      %125 = vsyncadd [#allocation3], %s124
      %s126 = sshll.u32 [#allocation2], 4
      %s127 = int_to_ptr.vmem [resolvable:$true] %s126
      %132 = dma.hbm_to_vmem [thread:$0]  %s49, 1024, %s127, [#allocation3], 128, 128, 8
    $region101: #{transformer_forward.1} parent=1 // pred_fallthru
      _
    // Predicated region
    $region102: #{transformer_forward.1} parent=1 // pred_check
      _
    $region103: #{transformer_forward.1} parent=1 // pred_check_branch
      %134 = sbr.rel (0) target = $region105
    $region104: #{transformer_forward.1} parent=1 // pred_region
      _
    $region105: #{transformer_forward.1} parent=1 // pred_fallthru
      _
    // Predicated region
    $region106: #{transformer_forward.1} parent=1 // pred_check
      _
    $region107: #{transformer_forward.1} parent=1 // pred_check_branch
      %136 = sbr.rel (0) target = $region109
    $region108: #{transformer_forward.1} parent=1 // pred_region
      _
    $region109: #{transformer_forward.1} parent=1 // pred_fallthru
      _
    // Predicated region
    $region110: #{transformer_forward.1} parent=1 // pred_check
      _
    $region111: #{transformer_forward.1} parent=1 // pred_check_branch
      %138 = sbr.rel (0) target = $region113
    $region112: #{transformer_forward.1} parent=1 // pred_region
      _
    $region113: #{transformer_forward.1} parent=1 // pred_fallthru
      _
    // Predicated region
    $region114: #{transformer_forward.1} parent=1 // pred_check
      _
    $region115: #{transformer_forward.1} parent=1 // pred_check_branch
      %140 = sbr.rel (0) target = $region117
    $region116: #{transformer_forward.1} parent=1 // pred_region
      _
    $region117: #{transformer_forward.1} parent=1 // pred_fallthru
      _
    // Predicated region
    $region118: #{transformer_forward.1} parent=1 // pred_check
      _
    $region119: #{transformer_forward.1} parent=1 // pred_check_branch
      %142 = sbr.rel (0) target = $region121
    $region120: #{transformer_forward.1} parent=1 // pred_region
      %s144 = ssub.s32 32, 32
      %145 = vsyncadd [#allocation5], %s144
      %s146 = sshll.u32 [#allocation4], 4
      %s147 = int_to_ptr.vmem [resolvable:$true] %s146
      %152 = dma.hbm_to_vmem [thread:$0]  %s59, 32, %s147, [#allocation5], 16, 16, 1
    $region121: #{transformer_forward.1} parent=1 // pred_fallthru
      _
    // Predicated region
    $region122: #{transformer_forward.1} parent=1 // pred_check
      _
    $region123: #{transformer_forward.1} parent=1 // pred_check_branch
      %154 = sbr.rel (0) target = $region125
    $region124: #{transformer_forward.1} parent=1 // pred_region
      %s156 = ssub.s32 32, 32
      %157 = vsyncadd [#allocation5], %s156
      %s158 = sshll.u32 [#allocation6], 4
      %s159 = int_to_ptr.vmem [resolvable:$true] %s158
      %164 = dma.hbm_to_vmem [thread:$0]  %s61, 32, %s159, [#allocation5], 16, 16, 1
    $region125: #{transformer_forward.1} parent=1 // pred_fallthru
      _
    // Predicated region
    $region126: #{transformer_forward.1} parent=1 // pred_check
      _
    $region127: #{transformer_forward.1} parent=1 // pred_check_branch
      %166 = sbr.rel (0) target = $region129
    $region128: #{transformer_forward.1} parent=1 // pred_region
      %s168 = ssub.s32 32, 32
      %169 = vsyncadd [#allocation8], %s168
      %s170 = sshll.u32 [#allocation7], 4
      %s171 = int_to_ptr.vmem [resolvable:$true] %s170
      %176 = dma.hbm_to_vmem [thread:$0]  %s63, 32, %s171, [#allocation8], 16, 16, 1
    $region129: #{transformer_forward.1} parent=1 // pred_fallthru
      _
    // Predicated region
    $region130: #{transformer_forward.1} parent=1 // pred_check
      _
    $region131: #{transformer_forward.1} parent=1 // pred_check_branch
      %178 = sbr.rel (0) target = $region133
    $region132: #{transformer_forward.1} parent=1 // pred_region
      %179 = dma.done [#allocation3], 1024
    $region133: #{transformer_forward.1} parent=1 // pred_fallthru
      _
    // Predicated region
    $region134: #{transformer_forward.1} parent=1 // pred_check
      _
    $region135: #{transformer_forward.1} parent=1 // pred_check_branch
      %181 = sbr.rel (0) target = $region137
    $region136: #{transformer_forward.1} parent=1 // pred_region
      %182 = dma.done [#allocation5], 32
    $region137: #{transformer_forward.1} parent=1 // pred_fallthru
      _
    // Predicated region
    $region138: #{transformer_forward.1} parent=1 // pred_check
      _
    $region139: #{transformer_forward.1} parent=1 // pred_check_branch
      %184 = sbr.rel (0) target = $region141
    $region140: #{transformer_forward.1} parent=1 // pred_region
      %185 = dma.done [#allocation5], 32
    $region141: #{transformer_forward.1} parent=1 // pred_fallthru
      _
    // Predicated region
    $region142: #{transformer_forward.1} parent=1 // pred_check
      _
    $region143: #{transformer_forward.1} parent=1 // pred_check_branch
      %187 = sbr.rel (0) target = $region145
    $region144: #{transformer_forward.1} parent=1 // pred_region
      %188 = dma.done [#allocation8], 32
    $region145: #{transformer_forward.1} parent=1 // pred_fallthru
      _
    %v189 = vld [vmem:[%s1] sm:$0xff]
    %v190 = vld [vmem:[%s1 + $0x8] sm:$0xff]
    %v191 = vld [vmem:[%s1 + $0x10] sm:$0xff]
    %v192 = vld [vmem:[%s1 + $0x18] sm:$0xff]
    %v193 = vld [vmem:[%s5] sm:$0xff]
    %v194 = vld [vmem:[%s5 + $0x8] sm:$0xff]
    %v195 = vld [vmem:[%s5 + $0x10] sm:$0xff]
    %v196 = vld [vmem:[%s5 + $0x18] sm:$0xff]
    %vm197 = vcmask 261120
    %v199 = vsel %vm197, %v189, 0
    %v202 = vsel %vm197, %v190, 0
    %v205 = vsel %vm197, %v191, 0
    %v208 = vsel %vm197, %v192, 0
    %210 = vmatprep.subr.mxu0 0.0
    %211 = vmatpush1.msra.mxu0 %v193
    %212 = vmatprep.subr.mxu0 0.0
    %213 = vmatpush1.msra.mxu0 %v194
    %214 = vmatprep.subr.mxu0 0.0
    %215 = vmatpush1.msra.mxu0 %v195
    %216 = vmatprep.subr.mxu0 0.0
    %217 = vmatpush1.msra.mxu0 %v196
    %218 = vmatprep.subr.mxu0 0.0
    %219 = vmatpush1.msra.mxu0 0.0
    %220 = vmatprep.subr.mxu0 0.0
    %221 = vmatpush1.msra.mxu0 0.0
    %222 = vmatprep.subr.mxu0 0.0
    %223 = vmatpush1.msra.mxu0 0.0
    %224 = vmatprep.subr.mxu0 0.0
    %225 = vmatpush1.msra.mxu0 0.0
    %226 = vmatprep.subr.mxu0 0.0
    %227 = vmatpush1.msra.mxu0 0.0
    %228 = vmatprep.subr.mxu0 0.0
    %229 = vmatpush1.msra.mxu0 0.0
    %230 = vmatprep.subr.mxu0 0.0
    %231 = vmatpush1.msra.mxu0 0.0
    %232 = vmatprep.subr.mxu0 0.0
    %233 = vmatpush1.msra.mxu0 0.0
    %234 = vmatprep.subr.mxu0 0.0
    %235 = vmatpush1.msra.mxu0 0.0
    %236 = vmatprep.subr.mxu0 0.0
    %237 = vmatpush1.msra.mxu0 0.0
    %238 = vmatprep.subr.mxu0 0.0
    %239 = vmatpush1.msra.mxu0 0.0
    %240 = vmatprep.subr.mxu0 0.0
    %241 = vmatpush1.msra.mxu0 0.0
    %242 = vmatprep.subr.mxu0 0.0
    %243 = vmatpush1.msra.mxu0 0.0
    %244 = vmatprep.subr.mxu0 0.0
    %245 = vmatpush1.msra.mxu0 0.0
    %246 = vmatprep.subr.mxu0 0.0
    %247 = vmatpush1.msra.mxu0 0.0
    %248 = vmatprep.subr.mxu0 0.0
    %249 = vmatpush1.msra.mxu0 0.0
    %250 = vmatprep.subr.mxu0 0.0
    %251 = vmatpush1.msra.mxu0 0.0
    %252 = vmatprep.subr.mxu0 0.0
    %253 = vmatpush1.msra.mxu0 0.0
    %254 = vmatprep.subr.mxu0 0.0
    %255 = vmatpush1.msra.mxu0 0.0
    %256 = vmatprep.subr.mxu0 0.0
    %257 = vmatpush1.msra.mxu0 0.0
    %258 = vmatprep.subr.mxu0 0.0
    %259 = vmatpush1.msra.mxu0 0.0
    %260 = vmatprep.subr.mxu0 0.0
    %261 = vmatpush1.msra.mxu0 0.0
    %262 = vmatprep.subr.mxu0 0.0
    %263 = vmatpush1.msra.mxu0 0.0
    %264 = vmatprep.subr.mxu0 0.0
    %265 = vmatpush1.msra.mxu0 0.0
    %266 = vmatprep.subr.mxu0 0.0
    %267 = vmatpush1.msra.mxu0 0.0
    %268 = vmatprep.subr.mxu0 0.0
    %269 = vmatpush1.msra.mxu0 0.0
    %270 = vmatprep.subr.mxu0 0.0
    %271 = vmatpush1.msra.mxu0 0.0
    %272 = vmatprep.subr.mxu0 0.0
    %273 = vmatpush1.msra.mxu0 0.0
    %274 = vmatprep.mubr.f32.mxu0 0.0
    %275 = vmatmul.mubr.f32.gmra.mrb[0].mxu0 %v199
    %v276 = vpop.f32.mrb[0].mxu0
    %v277 = vadd.f32 0.0, %v276
    %v278 = vpop.f32.mrb[0].mxu0
    %279 = vmatprep.mubr.f32.mxu0 0.0
    %280 = vmatmul.mubr.f32.gmra.mrb[0].mxu0 %v202
    %v281 = vpop.f32.mrb[0].mxu0
    %v282 = vadd.f32 0.0, %v281
    %v283 = vpop.f32.mrb[0].mxu0
    %284 = vmatprep.mubr.f32.mxu0 0.0
    %285 = vmatmul.mubr.f32.gmra.mrb[0].mxu0 %v205
    %v286 = vpop.f32.mrb[0].mxu0
    %v287 = vadd.f32 0.0, %v286
    %v288 = vpop.f32.mrb[0].mxu0
    %289 = vmatprep.mubr.f32.mxu0 0.0
    %290 = vmatmul.mubr.f32.gmra.mrb[0].mxu0 %v208
    %v291 = vpop.f32.mrb[0].mxu0
    %v292 = vadd.f32 0.0, %v291
    %v293 = vpop.f32.mrb[0].mxu0
    %294 = vdwg.mxu0
    %v295 = vld [vmem:[%s7] sm:$0xff]
    %v296 = vld [vmem:[%s7 + $0x8] sm:$0xff]
    %v297 = vld [vmem:[%s7 + $0x10] sm:$0xff]
    %v298 = vld [vmem:[%s7 + $0x18] sm:$0xff]
    %299 = vmatprep.subr.mxu0 0.0
    %300 = vmatpush1.msra.mxu0 %v295
    %301 = vmatprep.subr.mxu0 0.0
    %302 = vmatpush1.msra.mxu0 %v296
    %303 = vmatprep.subr.mxu0 0.0
    %304 = vmatpush1.msra.mxu0 %v297
    %305 = vmatprep.subr.mxu0 0.0
    %306 = vmatpush1.msra.mxu0 %v298
    %307 = vmatprep.subr.mxu0 0.0
    %308 = vmatpush1.msra.mxu0 0.0
    %309 = vmatprep.subr.mxu0 0.0
    %310 = vmatpush1.msra.mxu0 0.0
    %311 = vmatprep.subr.mxu0 0.0
    %312 = vmatpush1.msra.mxu0 0.0
    %313 = vmatprep.subr.mxu0 0.0
    %314 = vmatpush1.msra.mxu0 0.0
    %315 = vmatprep.subr.mxu0 0.0
    %316 = vmatpush1.msra.mxu0 0.0
    %317 = vmatprep.subr.mxu0 0.0
    %318 = vmatpush1.msra.mxu0 0.0
    %319 = vmatprep.subr.mxu0 0.0
    %320 = vmatpush1.msra.mxu0 0.0
    %321 = vmatprep.subr.mxu0 0.0
    %322 = vmatpush1.msra.mxu0 0.0
    %323 = vmatprep.subr.mxu0 0.0
    %324 = vmatpush1.msra.mxu0 0.0
    %325 = vmatprep.subr.mxu0 0.0
    %326 = vmatpush1.msra.mxu0 0.0
    %327 = vmatprep.subr.mxu0 0.0
    %328 = vmatpush1.msra.mxu0 0.0
    %329 = vmatprep.subr.mxu0 0.0
    %330 = vmatpush1.msra.mxu0 0.0
    %331 = vmatprep.subr.mxu0 0.0
    %332 = vmatpush1.msra.mxu0 0.0
    %333 = vmatprep.subr.mxu0 0.0
    %334 = vmatpush1.msra.mxu0 0.0
    %335 = vmatprep.subr.mxu0 0.0
    %336 = vmatpush1.msra.mxu0 0.0
    %337 = vmatprep.subr.mxu0 0.0
    %338 = vmatpush1.msra.mxu0 0.0
    %339 = vmatprep.subr.mxu0 0.0
    %340 = vmatpush1.msra.mxu0 0.0
    %341 = vmatprep.subr.mxu0 0.0
    %342 = vmatpush1.msra.mxu0 0.0
    %343 = vmatprep.subr.mxu0 0.0
    %344 = vmatpush1.msra.mxu0 0.0
    %345 = vmatprep.subr.mxu0 0.0
    %346 = vmatpush1.msra.mxu0 0.0
    %347 = vmatprep.subr.mxu0 0.0
    %348 = vmatpush1.msra.mxu0 0.0
    %349 = vmatprep.subr.mxu0 0.0
    %350 = vmatpush1.msra.mxu0 0.0
    %351 = vmatprep.subr.mxu0 0.0
    %352 = vmatpush1.msra.mxu0 0.0
    %353 = vmatprep.subr.mxu0 0.0
    %354 = vmatpush1.msra.mxu0 0.0
    %355 = vmatprep.subr.mxu0 0.0
    %356 = vmatpush1.msra.mxu0 0.0
    %357 = vmatprep.subr.mxu0 0.0
    %358 = vmatpush1.msra.mxu0 0.0
    %359 = vmatprep.subr.mxu0 0.0
    %360 = vmatpush1.msra.mxu0 0.0
    %361 = vmatprep.subr.mxu0 0.0
    %362 = vmatpush1.msra.mxu0 0.0
    %363 = vmatprep.mubr.f32.mxu0 0.0
    %364 = vmatmul.mubr.f32.gmra.mrb[0].mxu0 %v199
    %v365 = vpop.f32.mrb[0].mxu0
    %v366 = vadd.f32 0.0, %v365
    %v367 = vpop.f32.mrb[0].mxu0
    %368 = vmatprep.mubr.f32.mxu0 0.0
    %369 = vmatmul.mubr.f32.gmra.mrb[0].mxu0 %v202
    %v370 = vpop.f32.mrb[0].mxu0
    %v371 = vadd.f32 0.0, %v370
    %v372 = vpop.f32.mrb[0].mxu0
    %373 = vmatprep.mubr.f32.mxu0 0.0
    %374 = vmatmul.mubr.f32.gmra.mrb[0].mxu0 %v205
    %v375 = vpop.f32.mrb[0].mxu0
    %v376 = vadd.f32 0.0, %v375
    %v377 = vpop.f32.mrb[0].mxu0
    %378 = vmatprep.mubr.f32.mxu0 0.0
    %379 = vmatmul.mubr.f32.gmra.mrb[0].mxu0 %v208
    %v380 = vpop.f32.mrb[0].mxu0
    %v381 = vadd.f32 0.0, %v380
    %v382 = vpop.f32.mrb[0].mxu0
    %383 = vdwg.mxu0
    %v384 = vld [vmem:[%s9] sm:$0xff]
    %v385 = vld [vmem:[%s9 + $0x8] sm:$0xff]
    %v386 = vld [vmem:[%s9 + $0x10] sm:$0xff]
    %v387 = vld [vmem:[%s9 + $0x18] sm:$0xff]
    %388 = vmatprep.subr.mxu0 0.0
    %389 = vmatpush1.msra.mxu0 %v384
    %390 = vmatprep.subr.mxu0 0.0
    %391 = vmatpush1.msra.mxu0 %v385
    %392 = vmatprep.subr.mxu0 0.0
    %393 = vmatpush1.msra.mxu0 %v386
    %394 = vmatprep.subr.mxu0 0.0
    %395 = vmatpush1.msra.mxu0 %v387
    %396 = vmatprep.subr.mxu0 0.0
    %397 = vmatpush1.msra.mxu0 0.0
    %398 = vmatprep.subr.mxu0 0.0
    %399 = vmatpush1.msra.mxu0 0.0
    %400 = vmatprep.subr.mxu0 0.0
    %401 = vmatpush1.msra.mxu0 0.0
    %402 = vmatprep.subr.mxu0 0.0
    %403 = vmatpush1.msra.mxu0 0.0
    %404 = vmatprep.subr.mxu0 0.0
    %405 = vmatpush1.msra.mxu0 0.0
    %406 = vmatprep.subr.mxu0 0.0
    %407 = vmatpush1.msra.mxu0 0.0
    %408 = vmatprep.subr.mxu0 0.0
    %409 = vmatpush1.msra.mxu0 0.0
    %410 = vmatprep.subr.mxu0 0.0
    %411 = vmatpush1.msra.mxu0 0.0
    %412 = vmatprep.subr.mxu0 0.0
    %413 = vmatpush1.msra.mxu0 0.0
    %414 = vmatprep.subr.mxu0 0.0
    %415 = vmatpush1.msra.mxu0 0.0
    %416 = vmatprep.subr.mxu0 0.0
    %417 = vmatpush1.msra.mxu0 0.0
    %418 = vmatprep.subr.mxu0 0.0
    %419 = vmatpush1.msra.mxu0 0.0
    %420 = vmatprep.subr.mxu0 0.0
    %421 = vmatpush1.msra.mxu0 0.0
    %422 = vmatprep.subr.mxu0 0.0
    %423 = vmatpush1.msra.mxu0 0.0
    %424 = vmatprep.subr.mxu0 0.0
    %425 = vmatpush1.msra.mxu0 0.0
    %426 = vmatprep.subr.mxu0 0.0
    %427 = vmatpush1.msra.mxu0 0.0
    %428 = vmatprep.subr.mxu0 0.0
    %429 = vmatpush1.msra.mxu0 0.0
    %430 = vmatprep.subr.mxu0 0.0
    %431 = vmatpush1.msra.mxu0 0.0
    %432 = vmatprep.subr.mxu0 0.0
    %433 = vmatpush1.msra.mxu0 0.0
    %434 = vmatprep.subr.mxu0 0.0
    %435 = vmatpush1.msra.mxu0 0.0
    %436 = vmatprep.subr.mxu0 0.0
    %437 = vmatpush1.msra.mxu0 0.0
    %438 = vmatprep.subr.mxu0 0.0
    %439 = vmatpush1.msra.mxu0 0.0
    %440 = vmatprep.subr.mxu0 0.0
    %441 = vmatpush1.msra.mxu0 0.0
    %442 = vmatprep.subr.mxu0 0.0
    %443 = vmatpush1.msra.mxu0 0.0
    %444 = vmatprep.subr.mxu0 0.0
    %445 = vmatpush1.msra.mxu0 0.0
    %446 = vmatprep.subr.mxu0 0.0
    %447 = vmatpush1.msra.mxu0 0.0
    %448 = vmatprep.subr.mxu0 0.0
    %449 = vmatpush1.msra.mxu0 0.0
    %450 = vmatprep.subr.mxu0 0.0
    %451 = vmatpush1.msra.mxu0 0.0
    %452 = vmatprep.mubr.f32.mxu0 0.0
    %453 = vmatmul.mubr.f32.gmra.mrb[0].mxu0 %v199
    %v454 = vpop.f32.mrb[0].mxu0
    %v455 = vadd.f32 0.0, %v454
    %v456 = vpop.f32.mrb[0].mxu0
    %457 = vmatprep.mubr.f32.mxu0 0.0
    %458 = vmatmul.mubr.f32.gmra.mrb[0].mxu0 %v202
    %v459 = vpop.f32.mrb[0].mxu0
    %v460 = vadd.f32 0.0, %v459
    %v461 = vpop.f32.mrb[0].mxu0
    %462 = vmatprep.mubr.f32.mxu0 0.0
    %463 = vmatmul.mubr.f32.gmra.mrb[0].mxu0 %v205
    %v464 = vpop.f32.mrb[0].mxu0
    %v465 = vadd.f32 0.0, %v464
    %v466 = vpop.f32.mrb[0].mxu0
    %467 = vmatprep.mubr.f32.mxu0 0.0
    %468 = vmatmul.mubr.f32.gmra.mrb[0].mxu0 %v208
    %v469 = vpop.f32.mrb[0].mxu0
    %v470 = vadd.f32 0.0, %v469
    %v471 = vpop.f32.mrb[0].mxu0
    %472 = vdwg.mxu0
    %vm473 = vcmask 130048
    %v475 = vsel %vm473, %v277, 0
    %v478 = vsel %vm473, %v282, 0
    %v481 = vsel %vm473, %v366, 0
    %v484 = vsel %vm473, %v371, 0
    %486 = vmatprep.subr.mxu0 0.0
    %487 = vmatpush1.xpose.msra.mxu0 %v481
    %488 = vmatprep.subr.mxu0 0.0
    %489 = vmatpush1.xpose.msra.mxu0 %v484
    %490 = vmatprep.subr.mxu0 0.0
    %491 = vmatpush1.xpose.msra.mxu0 0.0
    %492 = vmatprep.subr.mxu0 0.0
    %493 = vmatpush1.xpose.msra.mxu0 0.0
    %494 = vmatprep.subr.mxu0 0.0
    %495 = vmatpush1.xpose.msra.mxu0 0.0
    %496 = vmatprep.subr.mxu0 0.0
    %497 = vmatpush1.xpose.msra.mxu0 0.0
    %498 = vmatprep.subr.mxu0 0.0
    %499 = vmatpush1.xpose.msra.mxu0 0.0
    %500 = vmatprep.subr.mxu0 0.0
    %501 = vmatpush1.xpose.msra.mxu0 0.0
    %502 = vmatprep.subr.mxu0 0.0
    %503 = vmatpush1.xpose.msra.mxu0 0.0
    %504 = vmatprep.subr.mxu0 0.0
    %505 = vmatpush1.xpose.msra.mxu0 0.0
    %506 = vmatprep.subr.mxu0 0.0
    %507 = vmatpush1.xpose.msra.mxu0 0.0
    %508 = vmatprep.subr.mxu0 0.0
    %509 = vmatpush1.xpose.msra.mxu0 0.0
    %510 = vmatprep.subr.mxu0 0.0
    %511 = vmatpush1.xpose.msra.mxu0 0.0
    %512 = vmatprep.subr.mxu0 0.0
    %513 = vmatpush1.xpose.msra.mxu0 0.0
    %514 = vmatprep.subr.mxu0 0.0
    %515 = vmatpush1.xpose.msra.mxu0 0.0
    %516 = vmatprep.subr.mxu0 0.0
    %517 = vmatpush1.xpose.msra.mxu0 0.0
    %518 = vmatprep.subr.mxu0 0.0
    %519 = vmatpush1.xpose.msra.mxu0 0.0
    %520 = vmatprep.subr.mxu0 0.0
    %521 = vmatpush1.xpose.msra.mxu0 0.0
    %522 = vmatprep.subr.mxu0 0.0
    %523 = vmatpush1.xpose.msra.mxu0 0.0
    %524 = vmatprep.subr.mxu0 0.0
    %525 = vmatpush1.xpose.msra.mxu0 0.0
    %526 = vmatprep.subr.mxu0 0.0
    %527 = vmatpush1.xpose.msra.mxu0 0.0
    %528 = vmatprep.subr.mxu0 0.0
    %529 = vmatpush1.xpose.msra.mxu0 0.0
    %530 = vmatprep.subr.mxu0 0.0
    %531 = vmatpush1.xpose.msra.mxu0 0.0
    %532 = vmatprep.subr.mxu0 0.0
    %533 = vmatpush1.xpose.msra.mxu0 0.0
    %534 = vmatprep.subr.mxu0 0.0
    %535 = vmatpush1.xpose.msra.mxu0 0.0
    %536 = vmatprep.subr.mxu0 0.0
    %537 = vmatpush1.xpose.msra.mxu0 0.0
    %538 = vmatprep.subr.mxu0 0.0
    %539 = vmatpush1.xpose.msra.mxu0 0.0
    %540 = vmatprep.subr.mxu0 0.0
    %541 = vmatpush1.xpose.msra.mxu0 0.0
    %542 = vmatprep.subr.mxu0 0.0
    %543 = vmatpush1.xpose.msra.mxu0 0.0
    %544 = vmatprep.subr.mxu0 0.0
    %545 = vmatpush1.xpose.msra.mxu0 0.0
    %546 = vmatprep.subr.mxu0 0.0
    %547 = vmatpush1.xpose.msra.mxu0 0.0
    %548 = vmatprep.subr.mxu0 0.0
    %549 = vmatpush1.xpose.msra.mxu0 0.0
    %550 = vmatprep.mubr.f32.mxu0 0.0
    %551 = vmatmul.mubr.f32.gmra.mrb[0].mxu0 %v475
    %v552 = vpop.f32.mrb[0].mxu0
    %v553 = vadd.f32 0.0, %v552
    %v554 = vpop.f32.mrb[0].mxu0
    %555 = vmatprep.mubr.f32.mxu0 0.0
    %556 = vmatmul.mubr.f32.gmra.mrb[0].mxu0 %v478
    %v557 = vpop.f32.mrb[0].mxu0
    %v558 = vadd.f32 0.0, %v557
    %v559 = vpop.f32.mrb[0].mxu0
    %560 = vdwg.mxu0
    %v561 = vmul.f32 %v553, 0.25
    %v562 = vmul.f32 %v558, 0.25
    %v563 = vsel %vm473, %v561, -inf
    %564 = vmax.xlane.f32.xlu0 %v563
    %v565 = vpop.xlane.xlu0 %564
    %v566 = vsel %vm473, %v562, -inf
    %567 = vmax.xlane.f32.xlu0 %v566
    %v568 = vpop.xlane.xlu0 %567
    %v569 = vsub.f32 %v561, %v565
    %v570 = vsub.f32 %v562, %v568
    %v571 = vmul.f32 %v569, 1.442695
    %v572 = vpow.pop %v571
    %v573 = vmul.f32 %v570, 1.442695
    %v574 = vpow.pop %v573
    %v575 = vsel %vm473, %v572, 0.0
    %576 = vadd.xlane.f32.xlu0 %v575
    %v577 = vpop.xlane.xlu0 %576
    %v578 = vsel %vm473, %v574, 0.0
    %579 = vadd.xlane.f32.xlu0 %v578
    %v580 = vpop.xlane.xlu0 %579
    %v581 = vrcp.pop %v577
    %v582 = vmul.f32 %v572, %v581
    %v583 = vrcp.pop %v580
    %v584 = vmul.f32 %v574, %v583
    %v586 = vsel %vm473, %v582, 0
    %v589 = vsel %vm473, %v584, 0
    %591 = vmatprep.subr.mxu0 0.0
    %592 = vmatpush1.msra.mxu0 %v455
    %593 = vmatprep.subr.mxu0 0.0
    %594 = vmatpush1.msra.mxu0 %v460
    %595 = vmatprep.subr.mxu0 0.0
    %596 = vmatpush1.msra.mxu0 0.0
    %597 = vmatprep.subr.mxu0 0.0
    %598 = vmatpush1.msra.mxu0 0.0
    %599 = vmatprep.subr.mxu0 0.0
    %600 = vmatpush1.msra.mxu0 0.0
    %601 = vmatprep.subr.mxu0 0.0
    %602 = vmatpush1.msra.mxu0 0.0
    %603 = vmatprep.subr.mxu0 0.0
    %604 = vmatpush1.msra.mxu0 0.0
    %605 = vmatprep.subr.mxu0 0.0
    %606 = vmatpush1.msra.mxu0 0.0
    %607 = vmatprep.subr.mxu0 0.0
    %608 = vmatpush1.msra.mxu0 0.0
    %609 = vmatprep.subr.mxu0 0.0
    %610 = vmatpush1.msra.mxu0 0.0
    %611 = vmatprep.subr.mxu0 0.0
    %612 = vmatpush1.msra.mxu0 0.0
    %613 = vmatprep.subr.mxu0 0.0
    %614 = vmatpush1.msra.mxu0 0.0
    %615 = vmatprep.subr.mxu0 0.0
    %616 = vmatpush1.msra.mxu0 0.0
    %617 = vmatprep.subr.mxu0 0.0
    %618 = vmatpush1.msra.mxu0 0.0
    %619 = vmatprep.subr.mxu0 0.0
    %620 = vmatpush1.msra.mxu0 0.0
    %621 = vmatprep.subr.mxu0 0.0
    %622 = vmatpush1.msra.mxu0 0.0
    %623 = vmatprep.subr.mxu0 0.0
    %624 = vmatpush1.msra.mxu0 0.0
    %625 = vmatprep.subr.mxu0 0.0
    %626 = vmatpush1.msra.mxu0 0.0
    %627 = vmatprep.subr.mxu0 0.0
    %628 = vmatpush1.msra.mxu0 0.0
    %629 = vmatprep.subr.mxu0 0.0
    %630 = vmatpush1.msra.mxu0 0.0
    %631 = vmatprep.subr.mxu0 0.0
    %632 = vmatpush1.msra.mxu0 0.0
    %633 = vmatprep.subr.mxu0 0.0
    %634 = vmatpush1.msra.mxu0 0.0
    %635 = vmatprep.subr.mxu0 0.0
    %636 = vmatpush1.msra.mxu0 0.0
    %637 = vmatprep.subr.mxu0 0.0
    %638 = vmatpush1.msra.mxu0 0.0
    %639 = vmatprep.subr.mxu0 0.0
    %640 = vmatpush1.msra.mxu0 0.0
    %641 = vmatprep.subr.mxu0 0.0
    %642 = vmatpush1.msra.mxu0 0.0
    %643 = vmatprep.subr.mxu0 0.0
    %644 = vmatpush1.msra.mxu0 0.0
    %645 = vmatprep.subr.mxu0 0.0
    %646 = vmatpush1.msra.mxu0 0.0
    %647 = vmatprep.subr.mxu0 0.0
    %648 = vmatpush1.msra.mxu0 0.0
    %649 = vmatprep.subr.mxu0 0.0
    %650 = vmatpush1.msra.mxu0 0.0
    %651 = vmatprep.subr.mxu0 0.0
    %652 = vmatpush1.msra.mxu0 0.0
    %653 = vmatprep.subr.mxu0 0.0
    %654 = vmatpush1.msra.mxu0 0.0
    %655 = vmatprep.mubr.f32.mxu0 0.0
    %656 = vmatmul.mubr.f32.gmra.mrb[0].mxu0 %v586
    %v657 = vpop.f32.mrb[0].mxu0
    %v658 = vadd.f32 0.0, %v657
    %v659 = vpop.f32.mrb[0].mxu0
    %660 = vmatprep.mubr.f32.mxu0 0.0
    %661 = vmatmul.mubr.f32.gmra.mrb[0].mxu0 %v589
    %v662 = vpop.f32.mrb[0].mxu0
    %v663 = vadd.f32 0.0, %v662
    %v664 = vpop.f32.mrb[0].mxu0
    %665 = vdwg.mxu0
    %v667 = vsel %vm473, %v287, 0
    %v670 = vsel %vm473, %v292, 0
    %v673 = vsel %vm473, %v376, 0
    %v676 = vsel %vm473, %v381, 0
    %678 = vmatprep.subr.mxu0 0.0
    %679 = vmatpush1.xpose.msra.mxu0 %v673
    %680 = vmatprep.subr.mxu0 0.0
    %681 = vmatpush1.xpose.msra.mxu0 %v676
    %682 = vmatprep.subr.mxu0 0.0
    %683 = vmatpush1.xpose.msra.mxu0 0.0
    %684 = vmatprep.subr.mxu0 0.0
    %685 = vmatpush1.xpose.msra.mxu0 0.0
    %686 = vmatprep.subr.mxu0 0.0
    %687 = vmatpush1.xpose.msra.mxu0 0.0
    %688 = vmatprep.subr.mxu0 0.0
    %689 = vmatpush1.xpose.msra.mxu0 0.0
    %690 = vmatprep.subr.mxu0 0.0
    %691 = vmatpush1.xpose.msra.mxu0 0.0
    %692 = vmatprep.subr.mxu0 0.0
    %693 = vmatpush1.xpose.msra.mxu0 0.0
    %694 = vmatprep.subr.mxu0 0.0
    %695 = vmatpush1.xpose.msra.mxu0 0.0
    %696 = vmatprep.subr.mxu0 0.0
    %697 = vmatpush1.xpose.msra.mxu0 0.0
    %698 = vmatprep.subr.mxu0 0.0
    %699 = vmatpush1.xpose.msra.mxu0 0.0
    %700 = vmatprep.subr.mxu0 0.0
    %701 = vmatpush1.xpose.msra.mxu0 0.0
    %702 = vmatprep.subr.mxu0 0.0
    %703 = vmatpush1.xpose.msra.mxu0 0.0
    %704 = vmatprep.subr.mxu0 0.0
    %705 = vmatpush1.xpose.msra.mxu0 0.0
    %706 = vmatprep.subr.mxu0 0.0
    %707 = vmatpush1.xpose.msra.mxu0 0.0
    %708 = vmatprep.subr.mxu0 0.0
    %709 = vmatpush1.xpose.msra.mxu0 0.0
    %710 = vmatprep.subr.mxu0 0.0
    %711 = vmatpush1.xpose.msra.mxu0 0.0
    %712 = vmatprep.subr.mxu0 0.0
    %713 = vmatpush1.xpose.msra.mxu0 0.0
    %714 = vmatprep.subr.mxu0 0.0
    %715 = vmatpush1.xpose.msra.mxu0 0.0
    %716 = vmatprep.subr.mxu0 0.0
    %717 = vmatpush1.xpose.msra.mxu0 0.0
    %718 = vmatprep.subr.mxu0 0.0
    %719 = vmatpush1.xpose.msra.mxu0 0.0
    %720 = vmatprep.subr.mxu0 0.0
    %721 = vmatpush1.xpose.msra.mxu0 0.0
    %722 = vmatprep.subr.mxu0 0.0
    %723 = vmatpush1.xpose.msra.mxu0 0.0
    %724 = vmatprep.subr.mxu0 0.0
    %725 = vmatpush1.xpose.msra.mxu0 0.0
    %726 = vmatprep.subr.mxu0 0.0
    %727 = vmatpush1.xpose.msra.mxu0 0.0
    %728 = vmatprep.subr.mxu0 0.0
    %729 = vmatpush1.xpose.msra.mxu0 0.0
    %730 = vmatprep.subr.mxu0 0.0
    %731 = vmatpush1.xpose.msra.mxu0 0.0
    %732 = vmatprep.subr.mxu0 0.0
    %733 = vmatpush1.xpose.msra.mxu0 0.0
    %734 = vmatprep.subr.mxu0 0.0
    %735 = vmatpush1.xpose.msra.mxu0 0.0
    %736 = vmatprep.subr.mxu0 0.0
    %737 = vmatpush1.xpose.msra.mxu0 0.0
    %738 = vmatprep.subr.mxu0 0.0
    %739 = vmatpush1.xpose.msra.mxu0 0.0
    %740 = vmatprep.subr.mxu0 0.0
    %741 = vmatpush1.xpose.msra.mxu0 0.0
    %742 = vmatprep.mubr.f32.mxu0 0.0
    %743 = vmatmul.mubr.f32.gmra.mrb[0].mxu0 %v667
    %v744 = vpop.f32.mrb[0].mxu0
    %v745 = vadd.f32 0.0, %v744
    %v746 = vpop.f32.mrb[0].mxu0
    %747 = vmatprep.mubr.f32.mxu0 0.0
    %748 = vmatmul.mubr.f32.gmra.mrb[0].mxu0 %v670
    %v749 = vpop.f32.mrb[0].mxu0
    %v750 = vadd.f32 0.0, %v749
    %v751 = vpop.f32.mrb[0].mxu0
    %752 = vdwg.mxu0
    %v753 = vmul.f32 %v745, 0.25
    %v754 = vmul.f32 %v750, 0.25
    %v755 = vsel %vm473, %v753, -inf
    %756 = vmax.xlane.f32.xlu0 %v755
    %v757 = vpop.xlane.xlu0 %756
    %v758 = vsel %vm473, %v754, -inf
    %759 = vmax.xlane.f32.xlu0 %v758
    %v760 = vpop.xlane.xlu0 %759
    %v761 = vsub.f32 %v753, %v757
    %v762 = vsub.f32 %v754, %v760
    %v763 = vmul.f32 %v761, 1.442695
    %v764 = vpow.pop %v763
    %v765 = vmul.f32 %v762, 1.442695
    %v766 = vpow.pop %v765
    %v767 = vsel %vm473, %v764, 0.0
    %768 = vadd.xlane.f32.xlu0 %v767
    %v769 = vpop.xlane.xlu0 %768
    %v770 = vsel %vm473, %v766, 0.0
    %771 = vadd.xlane.f32.xlu0 %v770
    %v772 = vpop.xlane.xlu0 %771
    %v773 = vrcp.pop %v769
    %v774 = vmul.f32 %v764, %v773
    %v775 = vrcp.pop %v772
    %v776 = vmul.f32 %v766, %v775
    %v778 = vsel %vm473, %v774, 0
    %v781 = vsel %vm473, %v776, 0
    %783 = vmatprep.subr.mxu0 0.0
    %784 = vmatpush1.msra.mxu0 %v465
    %785 = vmatprep.subr.mxu0 0.0
    %786 = vmatpush1.msra.mxu0 %v470
    %787 = vmatprep.subr.mxu0 0.0
    %788 = vmatpush1.msra.mxu0 0.0
    %789 = vmatprep.subr.mxu0 0.0
    %790 = vmatpush1.msra.mxu0 0.0
    %791 = vmatprep.subr.mxu0 0.0
    %792 = vmatpush1.msra.mxu0 0.0
    %793 = vmatprep.subr.mxu0 0.0
    %794 = vmatpush1.msra.mxu0 0.0
    %795 = vmatprep.subr.mxu0 0.0
    %796 = vmatpush1.msra.mxu0 0.0
    %797 = vmatprep.subr.mxu0 0.0
    %798 = vmatpush1.msra.mxu0 0.0
    %799 = vmatprep.subr.mxu0 0.0
    %800 = vmatpush1.msra.mxu0 0.0
    %801 = vmatprep.subr.mxu0 0.0
    %802 = vmatpush1.msra.mxu0 0.0
    %803 = vmatprep.subr.mxu0 0.0
    %804 = vmatpush1.msra.mxu0 0.0
    %805 = vmatprep.subr.mxu0 0.0
    %806 = vmatpush1.msra.mxu0 0.0
    %807 = vmatprep.subr.mxu0 0.0
    %808 = vmatpush1.msra.mxu0 0.0
    %809 = vmatprep.subr.mxu0 0.0
    %810 = vmatpush1.msra.mxu0 0.0
    %811 = vmatprep.subr.mxu0 0.0
    %812 = vmatpush1.msra.mxu0 0.0
    %813 = vmatprep.subr.mxu0 0.0
    %814 = vmatpush1.msra.mxu0 0.0
    %815 = vmatprep.subr.mxu0 0.0
    %816 = vmatpush1.msra.mxu0 0.0
    %817 = vmatprep.subr.mxu0 0.0
    %818 = vmatpush1.msra.mxu0 0.0
    %819 = vmatprep.subr.mxu0 0.0
    %820 = vmatpush1.msra.mxu0 0.0
    %821 = vmatprep.subr.mxu0 0.0
    %822 = vmatpush1.msra.mxu0 0.0
    %823 = vmatprep.subr.mxu0 0.0
    %824 = vmatpush1.msra.mxu0 0.0
    %825 = vmatprep.subr.mxu0 0.0
    %826 = vmatpush1.msra.mxu0 0.0
    %827 = vmatprep.subr.mxu0 0.0
    %828 = vmatpush1.msra.mxu0 0.0
    %829 = vmatprep.subr.mxu0 0.0
    %830 = vmatpush1.msra.mxu0 0.0
    %831 = vmatprep.subr.mxu0 0.0
    %832 = vmatpush1.msra.mxu0 0.0
    %833 = vmatprep.subr.mxu0 0.0
    %834 = vmatpush1.msra.mxu0 0.0
    %835 = vmatprep.subr.mxu0 0.0
    %836 = vmatpush1.msra.mxu0 0.0
    %837 = vmatprep.subr.mxu0 0.0
    %838 = vmatpush1.msra.mxu0 0.0
    %839 = vmatprep.subr.mxu0 0.0
    %840 = vmatpush1.msra.mxu0 0.0
    %841 = vmatprep.subr.mxu0 0.0
    %842 = vmatpush1.msra.mxu0 0.0
    %843 = vmatprep.subr.mxu0 0.0
    %844 = vmatpush1.msra.mxu0 0.0
    %845 = vmatprep.subr.mxu0 0.0
    %846 = vmatpush1.msra.mxu0 0.0
    %847 = vmatprep.mubr.f32.mxu0 0.0
    %848 = vmatmul.mubr.f32.gmra.mrb[0].mxu0 %v778
    %v849 = vpop.f32.mrb[0].mxu0
    %v850 = vadd.f32 0.0, %v849
    %v851 = vpop.f32.mrb[0].mxu0
    %852 = vmatprep.mubr.f32.mxu0 0.0
    %853 = vmatmul.mubr.f32.gmra.mrb[0].mxu0 %v781
    %v854 = vpop.f32.mrb[0].mxu0
    %v855 = vadd.f32 0.0, %v854
    %v856 = vpop.f32.mrb[0].mxu0
    %857 = vdwg.mxu0
    %v858 = vld [vmem:[%s11] sm:$0xff]
    %v859 = vld [vmem:[%s11 + $0x8] sm:$0xff]
    %v860 = vld [vmem:[%s11 + $0x10] sm:$0xff]
    %v861 = vld [vmem:[%s11 + $0x18] sm:$0xff]
    %s862 = scalar_lea.vmem %s5, 32
    %v863 = vld [vmem:[%s862] sm:$0xff]
    %v864 = vld [vmem:[%s862 + $0x8] sm:$0xff]
    %v865 = vld [vmem:[%s862 + $0x10] sm:$0xff]
    %v866 = vld [vmem:[%s862 + $0x18] sm:$0xff]
    %867 = vmatprep.subr.mxu0 0.0
    %868 = vmatpush1.msra.mxu0 %v863
    %869 = vmatprep.subr.mxu0 0.0
    %870 = vmatpush1.msra.mxu0 %v864
    %871 = vmatprep.subr.mxu0 0.0
    %872 = vmatpush1.msra.mxu0 %v865
    %873 = vmatprep.subr.mxu0 0.0
    %874 = vmatpush1.msra.mxu0 %v866
    %875 = vmatprep.subr.mxu0 0.0
    %876 = vmatpush1.msra.mxu0 0.0
    %877 = vmatprep.subr.mxu0 0.0
    %878 = vmatpush1.msra.mxu0 0.0
    %879 = vmatprep.subr.mxu0 0.0
    %880 = vmatpush1.msra.mxu0 0.0
    %881 = vmatprep.subr.mxu0 0.0
    %882 = vmatpush1.msra.mxu0 0.0
    %883 = vmatprep.subr.mxu0 0.0
    %884 = vmatpush1.msra.mxu0 0.0
    %885 = vmatprep.subr.mxu0 0.0
    %886 = vmatpush1.msra.mxu0 0.0
    %887 = vmatprep.subr.mxu0 0.0
    %888 = vmatpush1.msra.mxu0 0.0
    %889 = vmatprep.subr.mxu0 0.0
    %890 = vmatpush1.msra.mxu0 0.0
    %891 = vmatprep.subr.mxu0 0.0
    %892 = vmatpush1.msra.mxu0 0.0
    %893 = vmatprep.subr.mxu0 0.0
    %894 = vmatpush1.msra.mxu0 0.0
    %895 = vmatprep.subr.mxu0 0.0
    %896 = vmatpush1.msra.mxu0 0.0
    %897 = vmatprep.subr.mxu0 0.0
    %898 = vmatpush1.msra.mxu0 0.0
    %899 = vmatprep.subr.mxu0 0.0
    %900 = vmatpush1.msra.mxu0 0.0
    %901 = vmatprep.subr.mxu0 0.0
    %902 = vmatpush1.msra.mxu0 0.0
    %903 = vmatprep.subr.mxu0 0.0
    %904 = vmatpush1.msra.mxu0 0.0
    %905 = vmatprep.subr.mxu0 0.0
    %906 = vmatpush1.msra.mxu0 0.0
    %907 = vmatprep.subr.mxu0 0.0
    %908 = vmatpush1.msra.mxu0 0.0
    %909 = vmatprep.subr.mxu0 0.0
    %910 = vmatpush1.msra.mxu0 0.0
    %911 = vmatprep.subr.mxu0 0.0
    %912 = vmatpush1.msra.mxu0 0.0
    %913 = vmatprep.subr.mxu0 0.0
    %914 = vmatpush1.msra.mxu0 0.0
    %915 = vmatprep.subr.mxu0 0.0
    %916 = vmatpush1.msra.mxu0 0.0
    %917 = vmatprep.subr.mxu0 0.0
    %918 = vmatpush1.msra.mxu0 0.0
    %919 = vmatprep.subr.mxu0 0.0
    %920 = vmatpush1.msra.mxu0 0.0
    %921 = vmatprep.subr.mxu0 0.0
    %922 = vmatpush1.msra.mxu0 0.0
    %923 = vmatprep.subr.mxu0 0.0
    %924 = vmatpush1.msra.mxu0 0.0
    %925 = vmatprep.subr.mxu0 0.0
    %926 = vmatpush1.msra.mxu0 0.0
    %927 = vmatprep.subr.mxu0 0.0
    %928 = vmatpush1.msra.mxu0 0.0
    %929 = vmatprep.subr.mxu0 0.0
    %930 = vmatpush1.msra.mxu0 0.0
    %931 = vmatprep.mubr.f32.mxu0 0.0
    %932 = vmatmul.mubr.f32.gmra.mrb[0].mxu0 %v199
    %v933 = vpop.f32.mrb[0].mxu0
    %v934 = vadd.f32 0.0, %v933
    %v935 = vpop.f32.mrb[0].mxu0
    %936 = vmatprep.mubr.f32.mxu0 0.0
    %937 = vmatmul.mubr.f32.gmra.mrb[0].mxu0 %v202
    %v938 = vpop.f32.mrb[0].mxu0
    %v939 = vadd.f32 0.0, %v938
    %v940 = vpop.f32.mrb[0].mxu0
    %941 = vmatprep.mubr.f32.mxu0 0.0
    %942 = vmatmul.mubr.f32.gmra.mrb[0].mxu0 %v205
    %v943 = vpop.f32.mrb[0].mxu0
    %v944 = vadd.f32 0.0, %v943
    %v945 = vpop.f32.mrb[0].mxu0
    %946 = vmatprep.mubr.f32.mxu0 0.0
    %947 = vmatmul.mubr.f32.gmra.mrb[0].mxu0 %v208
    %v948 = vpop.f32.mrb[0].mxu0
    %v949 = vadd.f32 0.0, %v948
    %v950 = vpop.f32.mrb[0].mxu0
    %951 = vdwg.mxu0
    %s952 = scalar_lea.vmem %s7, 32
    %v953 = vld [vmem:[%s952] sm:$0xff]
    %v954 = vld [vmem:[%s952 + $0x8] sm:$0xff]
    %v955 = vld [vmem:[%s952 + $0x10] sm:$0xff]
    %v956 = vld [vmem:[%s952 + $0x18] sm:$0xff]
    %957 = vmatprep.subr.mxu0 0.0
    %958 = vmatpush1.msra.mxu0 %v953
    %959 = vmatprep.subr.mxu0 0.0
    %960 = vmatpush1.msra.mxu0 %v954
    %961 = vmatprep.subr.mxu0 0.0
    %962 = vmatpush1.msra.mxu0 %v955
    %963 = vmatprep.subr.mxu0 0.0
    %964 = vmatpush1.msra.mxu0 %v956
    %965 = vmatprep.subr.mxu0 0.0
    %966 = vmatpush1.msra.mxu0 0.0
    %967 = vmatprep.subr.mxu0 0.0
    %968 = vmatpush1.msra.mxu0 0.0
    %969 = vmatprep.subr.mxu0 0.0
    %970 = vmatpush1.msra.mxu0 0.0
    %971 = vmatprep.subr.mxu0 0.0
    %972 = vmatpush1.msra.mxu0 0.0
    %973 = vmatprep.subr.mxu0 0.0
    %974 = vmatpush1.msra.mxu0 0.0
    %975 = vmatprep.subr.mxu0 0.0
    %976 = vmatpush1.msra.mxu0 0.0
    %977 = vmatprep.subr.mxu0 0.0
    %978 = vmatpush1.msra.mxu0 0.0
    %979 = vmatprep.subr.mxu0 0.0
    %980 = vmatpush1.msra.mxu0 0.0
    %981 = vmatprep.subr.mxu0 0.0
    %982 = vmatpush1.msra.mxu0 0.0
    %983 = vmatprep.subr.mxu0 0.0
    %984 = vmatpush1.msra.mxu0 0.0
    %985 = vmatprep.subr.mxu0 0.0
    %986 = vmatpush1.msra.mxu0 0.0
    %987 = vmatprep.subr.mxu0 0.0
    %988 = vmatpush1.msra.mxu0 0.0
    %989 = vmatprep.subr.mxu0 0.0
    %990 = vmatpush1.msra.mxu0 0.0
    %991 = vmatprep.subr.mxu0 0.0
    %992 = vmatpush1.msra.mxu0 0.0
    %993 = vmatprep.subr.mxu0 0.0
    %994 = vmatpush1.msra.mxu0 0.0
    %995 = vmatprep.subr.mxu0 0.0
    %996 = vmatpush1.msra.mxu0 0.0
    %997 = vmatprep.subr.mxu0 0.0
    %998 = vmatpush1.msra.mxu0 0.0
    %999 = vmatprep.subr.mxu0 0.0
    %1000 = vmatpush1.msra.mxu0 0.0
    %1001 = vmatprep.subr.mxu0 0.0
    %1002 = vmatpush1.msra.mxu0 0.0
    %1003 = vmatprep.subr.mxu0 0.0
    %1004 = vmatpush1.msra.mxu0 0.0
    %1005 = vmatprep.subr.mxu0 0.0
    %1006 = vmatpush1.msra.mxu0 0.0
    %1007 = vmatprep.subr.mxu0 0.0
    %1008 = vmatpush1.msra.mxu0 0.0
    %1009 = vmatprep.subr.mxu0 0.0
    %1010 = vmatpush1.msra.mxu0 0.0
    %1011 = vmatprep.subr.mxu0 0.0
    %1012 = vmatpush1.msra.mxu0 0.0
    %1013 = vmatprep.subr.mxu0 0.0
    %1014 = vmatpush1.msra.mxu0 0.0
    %1015 = vmatprep.subr.mxu0 0.0
    %1016 = vmatpush1.msra.mxu0 0.0
    %1017 = vmatprep.subr.mxu0 0.0
    %1018 = vmatpush1.msra.mxu0 0.0
    %1019 = vmatprep.subr.mxu0 0.0
    %1020 = vmatpush1.msra.mxu0 0.0
    %1021 = vmatprep.mubr.f32.mxu0 0.0
    %1022 = vmatmul.mubr.f32.gmra.mrb[0].mxu0 %v199
    %v1023 = vpop.f32.mrb[0].mxu0
    %v1024 = vadd.f32 0.0, %v1023
    %v1025 = vpop.f32.mrb[0].mxu0
    %1026 = vmatprep.mubr.f32.mxu0 0.0
    %1027 = vmatmul.mubr.f32.gmra.mrb[0].mxu0 %v202
    %v1028 = vpop.f32.mrb[0].mxu0
    %v1029 = vadd.f32 0.0, %v1028
    %v1030 = vpop.f32.mrb[0].mxu0
    %1031 = vmatprep.mubr.f32.mxu0 0.0
    %1032 = vmatmul.mubr.f32.gmra.mrb[0].mxu0 %v205
    %v1033 = vpop.f32.mrb[0].mxu0
    %v1034 = vadd.f32 0.0, %v1033
    %v1035 = vpop.f32.mrb[0].mxu0
    %1036 = vmatprep.mubr.f32.mxu0 0.0
    %1037 = vmatmul.mubr.f32.gmra.mrb[0].mxu0 %v208
    %v1038 = vpop.f32.mrb[0].mxu0
    %v1039 = vadd.f32 0.0, %v1038
    %v1040 = vpop.f32.mrb[0].mxu0
    %1041 = vdwg.mxu0
    %s1042 = scalar_lea.vmem %s9, 32
    %v1043 = vld [vmem:[%s1042] sm:$0xff]
    %v1044 = vld [vmem:[%s1042 + $0x8] sm:$0xff]
    %v1045 = vld [vmem:[%s1042 + $0x10] sm:$0xff]
    %v1046 = vld [vmem:[%s1042 + $0x18] sm:$0xff]
    %1047 = vmatprep.subr.mxu0 0.0
    %1048 = vmatpush1.msra.mxu0 %v1043
    %1049 = vmatprep.subr.mxu0 0.0
    %1050 = vmatpush1.msra.mxu0 %v1044
    %1051 = vmatprep.subr.mxu0 0.0
    %1052 = vmatpush1.msra.mxu0 %v1045
    %1053 = vmatprep.subr.mxu0 0.0
    %1054 = vmatpush1.msra.mxu0 %v1046
    %1055 = vmatprep.subr.mxu0 0.0
    %1056 = vmatpush1.msra.mxu0 0.0
    %1057 = vmatprep.subr.mxu0 0.0
    %1058 = vmatpush1.msra.mxu0 0.0
    %1059 = vmatprep.subr.mxu0 0.0
    %1060 = vmatpush1.msra.mxu0 0.0
    %1061 = vmatprep.subr.mxu0 0.0
    %1062 = vmatpush1.msra.mxu0 0.0
    %1063 = vmatprep.subr.mxu0 0.0
    %1064 = vmatpush1.msra.mxu0 0.0
    %1065 = vmatprep.subr.mxu0 0.0
    %1066 = vmatpush1.msra.mxu0 0.0
    %1067 = vmatprep.subr.mxu0 0.0
    %1068 = vmatpush1.msra.mxu0 0.0
    %1069 = vmatprep.subr.mxu0 0.0
    %1070 = vmatpush1.msra.mxu0 0.0
    %1071 = vmatprep.subr.mxu0 0.0
    %1072 = vmatpush1.msra.mxu0 0.0
    %1073 = vmatprep.subr.mxu0 0.0
    %1074 = vmatpush1.msra.mxu0 0.0
    %1075 = vmatprep.subr.mxu0 0.0
    %1076 = vmatpush1.msra.mxu0 0.0
    %1077 = vmatprep.subr.mxu0 0.0
    %1078 = vmatpush1.msra.mxu0 0.0
    %1079 = vmatprep.subr.mxu0 0.0
    %1080 = vmatpush1.msra.mxu0 0.0
    %1081 = vmatprep.subr.mxu0 0.0
    %1082 = vmatpush1.msra.mxu0 0.0
    %1083 = vmatprep.subr.mxu0 0.0
    %1084 = vmatpush1.msra.mxu0 0.0
    %1085 = vmatprep.subr.mxu0 0.0
    %1086 = vmatpush1.msra.mxu0 0.0
    %1087 = vmatprep.subr.mxu0 0.0
    %1088 = vmatpush1.msra.mxu0 0.0
    %1089 = vmatprep.subr.mxu0 0.0
    %1090 = vmatpush1.msra.mxu0 0.0
    %1091 = vmatprep.subr.mxu0 0.0
    %1092 = vmatpush1.msra.mxu0 0.0
    %1093 = vmatprep.subr.mxu0 0.0
    %1094 = vmatpush1.msra.mxu0 0.0
    %1095 = vmatprep.subr.mxu0 0.0
    %1096 = vmatpush1.msra.mxu0 0.0
    %1097 = vmatprep.subr.mxu0 0.0
    %1098 = vmatpush1.msra.mxu0 0.0
    %1099 = vmatprep.subr.mxu0 0.0
    %1100 = vmatpush1.msra.mxu0 0.0
    %1101 = vmatprep.subr.mxu0 0.0
    %1102 = vmatpush1.msra.mxu0 0.0
    %1103 = vmatprep.subr.mxu0 0.0
    %1104 = vmatpush1.msra.mxu0 0.0
    %1105 = vmatprep.subr.mxu0 0.0
    %1106 = vmatpush1.msra.mxu0 0.0
    %1107 = vmatprep.subr.mxu0 0.0
    %1108 = vmatpush1.msra.mxu0 0.0
    %1109 = vmatprep.subr.mxu0 0.0
    %1110 = vmatpush1.msra.mxu0 0.0
    %1111 = vmatprep.mubr.f32.mxu0 0.0
    %1112 = vmatmul.mubr.f32.gmra.mrb[0].mxu0 %v199
    %v1113 = vpop.f32.mrb[0].mxu0
    %v1114 = vadd.f32 0.0, %v1113
    %v1115 = vpop.f32.mrb[0].mxu0
    %1116 = vmatprep.mubr.f32.mxu0 0.0
    %1117 = vmatmul.mubr.f32.gmra.mrb[0].mxu0 %v202
    %v1118 = vpop.f32.mrb[0].mxu0
    %v1119 = vadd.f32 0.0, %v1118
    %v1120 = vpop.f32.mrb[0].mxu0
    %1121 = vmatprep.mubr.f32.mxu0 0.0
    %1122 = vmatmul.mubr.f32.gmra.mrb[0].mxu0 %v205
    %v1123 = vpop.f32.mrb[0].mxu0
    %v1124 = vadd.f32 0.0, %v1123
    %v1125 = vpop.f32.mrb[0].mxu0
    %1126 = vmatprep.mubr.f32.mxu0 0.0
    %1127 = vmatmul.mubr.f32.gmra.mrb[0].mxu0 %v208
    %v1128 = vpop.f32.mrb[0].mxu0
    %v1129 = vadd.f32 0.0, %v1128
    %v1130 = vpop.f32.mrb[0].mxu0
    %1131 = vdwg.mxu0
    %v1133 = vsel %vm473, %v934, 0
    %v1136 = vsel %vm473, %v939, 0
    %v1139 = vsel %vm473, %v1024, 0
    %v1142 = vsel %vm473, %v1029, 0
    %1144 = vmatprep.subr.mxu0 0.0
    %1145 = vmatpush1.xpose.msra.mxu0 %v1139
    %1146 = vmatprep.subr.mxu0 0.0
    %1147 = vmatpush1.xpose.msra.mxu0 %v1142
    %1148 = vmatprep.subr.mxu0 0.0
    %1149 = vmatpush1.xpose.msra.mxu0 0.0
    %1150 = vmatprep.subr.mxu0 0.0
    %1151 = vmatpush1.xpose.msra.mxu0 0.0
    %1152 = vmatprep.subr.mxu0 0.0
    %1153 = vmatpush1.xpose.msra.mxu0 0.0
    %1154 = vmatprep.subr.mxu0 0.0
    %1155 = vmatpush1.xpose.msra.mxu0 0.0
    %1156 = vmatprep.subr.mxu0 0.0
    %1157 = vmatpush1.xpose.msra.mxu0 0.0
    %1158 = vmatprep.subr.mxu0 0.0
    %1159 = vmatpush1.xpose.msra.mxu0 0.0
    %1160 = vmatprep.subr.mxu0 0.0
    %1161 = vmatpush1.xpose.msra.mxu0 0.0
    %1162 = vmatprep.subr.mxu0 0.0
    %1163 = vmatpush1.xpose.msra.mxu0 0.0
    %1164 = vmatprep.subr.mxu0 0.0
    %1165 = vmatpush1.xpose.msra.mxu0 0.0
    %1166 = vmatprep.subr.mxu0 0.0
    %1167 = vmatpush1.xpose.msra.mxu0 0.0
    %1168 = vmatprep.subr.mxu0 0.0
    %1169 = vmatpush1.xpose.msra.mxu0 0.0
    %1170 = vmatprep.subr.mxu0 0.0
    %1171 = vmatpush1.xpose.msra.mxu0 0.0
    %1172 = vmatprep.subr.mxu0 0.0
    %1173 = vmatpush1.xpose.msra.mxu0 0.0
    %1174 = vmatprep.subr.mxu0 0.0
    %1175 = vmatpush1.xpose.msra.mxu0 0.0
    %1176 = vmatprep.subr.mxu0 0.0
    %1177 = vmatpush1.xpose.msra.mxu0 0.0
    %1178 = vmatprep.subr.mxu0 0.0
    %1179 = vmatpush1.xpose.msra.mxu0 0.0
    %1180 = vmatprep.subr.mxu0 0.0
    %1181 = vmatpush1.xpose.msra.mxu0 0.0
    %1182 = vmatprep.subr.mxu0 0.0
    %1183 = vmatpush1.xpose.msra.mxu0 0.0
    %1184 = vmatprep.subr.mxu0 0.0
    %1185 = vmatpush1.xpose.msra.mxu0 0.0
    %1186 = vmatprep.subr.mxu0 0.0
    %1187 = vmatpush1.xpose.msra.mxu0 0.0
    %1188 = vmatprep.subr.mxu0 0.0
    %1189 = vmatpush1.xpose.msra.mxu0 0.0
    %1190 = vmatprep.subr.mxu0 0.0
    %1191 = vmatpush1.xpose.msra.mxu0 0.0
    %1192 = vmatprep.subr.mxu0 0.0
    %1193 = vmatpush1.xpose.msra.mxu0 0.0
    %1194 = vmatprep.subr.mxu0 0.0
    %1195 = vmatpush1.xpose.msra.mxu0 0.0
    %1196 = vmatprep.subr.mxu0 0.0
    %1197 = vmatpush1.xpose.msra.mxu0 0.0
    %1198 = vmatprep.subr.mxu0 0.0
    %1199 = vmatpush1.xpose.msra.mxu0 0.0
    %1200 = vmatprep.subr.mxu0 0.0
    %1201 = vmatpush1.xpose.msra.mxu0 0.0
    %1202 = vmatprep.subr.mxu0 0.0
    %1203 = vmatpush1.xpose.msra.mxu0 0.0
    %1204 = vmatprep.subr.mxu0 0.0
    %1205 = vmatpush1.xpose.msra.mxu0 0.0
    %1206 = vmatprep.subr.mxu0 0.0
    %1207 = vmatpush1.xpose.msra.mxu0 0.0
    %1208 = vmatprep.mubr.f32.mxu0 0.0
    %1209 = vmatmul.mubr.f32.gmra.mrb[0].mxu0 %v1133
    %v1210 = vpop.f32.mrb[0].mxu0
    %v1211 = vadd.f32 0.0, %v1210
    %v1212 = vpop.f32.mrb[0].mxu0
    %1213 = vmatprep.mubr.f32.mxu0 0.0
    %1214 = vmatmul.mubr.f32.gmra.mrb[0].mxu0 %v1136
    %v1215 = vpop.f32.mrb[0].mxu0
    %v1216 = vadd.f32 0.0, %v1215
    %v1217 = vpop.f32.mrb[0].mxu0
    %1218 = vdwg.mxu0
    %v1219 = vmul.f32 %v1211, 0.25
    %v1220 = vmul.f32 %v1216, 0.25
    %v1221 = vsel %vm473, %v1219, -inf
    %1222 = vmax.xlane.f32.xlu0 %v1221
    %v1223 = vpop.xlane.xlu0 %1222
    %v1224 = vsel %vm473, %v1220, -inf
    %1225 = vmax.xlane.f32.xlu0 %v1224
    %v1226 = vpop.xlane.xlu0 %1225
    %v1227 = vsub.f32 %v1219, %v1223
    %v1228 = vsub.f32 %v1220, %v1226
    %v1229 = vmul.f32 %v1227, 1.442695
    %v1230 = vpow.pop %v1229
    %v1231 = vmul.f32 %v1228, 1.442695
    %v1232 = vpow.pop %v1231
    %v1233 = vsel %vm473, %v1230, 0.0
    %1234 = vadd.xlane.f32.xlu0 %v1233
    %v1235 = vpop.xlane.xlu0 %1234
    %v1236 = vsel %vm473, %v1232, 0.0
    %1237 = vadd.xlane.f32.xlu0 %v1236
    %v1238 = vpop.xlane.xlu0 %1237
    %v1239 = vrcp.pop %v1235
    %v1240 = vmul.f32 %v1230, %v1239
    %v1241 = vrcp.pop %v1238
    %v1242 = vmul.f32 %v1232, %v1241
    %v1244 = vsel %vm473, %v1240, 0
    %v1247 = vsel %vm473, %v1242, 0
    %1249 = vmatprep.subr.mxu0 0.0
    %1250 = vmatpush1.msra.mxu0 %v1114
    %1251 = vmatprep.subr.mxu0 0.0
    %1252 = vmatpush1.msra.mxu0 %v1119
    %1253 = vmatprep.subr.mxu0 0.0
    %1254 = vmatpush1.msra.mxu0 0.0
    %1255 = vmatprep.subr.mxu0 0.0
    %1256 = vmatpush1.msra.mxu0 0.0
    %1257 = vmatprep.subr.mxu0 0.0
    %1258 = vmatpush1.msra.mxu0 0.0
    %1259 = vmatprep.subr.mxu0 0.0
    %1260 = vmatpush1.msra.mxu0 0.0
    %1261 = vmatprep.subr.mxu0 0.0
    %1262 = vmatpush1.msra.mxu0 0.0
    %1263 = vmatprep.subr.mxu0 0.0
    %1264 = vmatpush1.msra.mxu0 0.0
    %1265 = vmatprep.subr.mxu0 0.0
    %1266 = vmatpush1.msra.mxu0 0.0
    %1267 = vmatprep.subr.mxu0 0.0
    %1268 = vmatpush1.msra.mxu0 0.0
    %1269 = vmatprep.subr.mxu0 0.0
    %1270 = vmatpush1.msra.mxu0 0.0
    %1271 = vmatprep.subr.mxu0 0.0
    %1272 = vmatpush1.msra.mxu0 0.0
    %1273 = vmatprep.subr.mxu0 0.0
    %1274 = vmatpush1.msra.mxu0 0.0
    %1275 = vmatprep.subr.mxu0 0.0
    %1276 = vmatpush1.msra.mxu0 0.0
    %1277 = vmatprep.subr.mxu0 0.0
    %1278 = vmatpush1.msra.mxu0 0.0
    %1279 = vmatprep.subr.mxu0 0.0
    %1280 = vmatpush1.msra.mxu0 0.0
    %1281 = vmatprep.subr.mxu0 0.0
    %1282 = vmatpush1.msra.mxu0 0.0
    %1283 = vmatprep.subr.mxu0 0.0
    %1284 = vmatpush1.msra.mxu0 0.0
    %1285 = vmatprep.subr.mxu0 0.0
    %1286 = vmatpush1.msra.mxu0 0.0
    %1287 = vmatprep.subr.mxu0 0.0
    %1288 = vmatpush1.msra.mxu0 0.0
    %1289 = vmatprep.subr.mxu0 0.0
    %1290 = vmatpush1.msra.mxu0 0.0
    %1291 = vmatprep.subr.mxu0 0.0
    %1292 = vmatpush1.msra.mxu0 0.0
    %1293 = vmatprep.subr.mxu0 0.0
    %1294 = vmatpush1.msra.mxu0 0.0
    %1295 = vmatprep.subr.mxu0 0.0
    %1296 = vmatpush1.msra.mxu0 0.0
    %1297 = vmatprep.subr.mxu0 0.0
    %1298 = vmatpush1.msra.mxu0 0.0
    %1299 = vmatprep.subr.mxu0 0.0
    %1300 = vmatpush1.msra.mxu0 0.0
    %1301 = vmatprep.subr.mxu0 0.0
    %1302 = vmatpush1.msra.mxu0 0.0
    %1303 = vmatprep.subr.mxu0 0.0
    %1304 = vmatpush1.msra.mxu0 0.0
    %1305 = vmatprep.subr.mxu0 0.0
    %1306 = vmatpush1.msra.mxu0 0.0
    %1307 = vmatprep.subr.mxu0 0.0
    %1308 = vmatpush1.msra.mxu0 0.0
    %1309 = vmatprep.subr.mxu0 0.0
    %1310 = vmatpush1.msra.mxu0 0.0
    %1311 = vmatprep.subr.mxu0 0.0
    %1312 = vmatpush1.msra.mxu0 0.0
    %1313 = vmatprep.mubr.f32.mxu0 0.0
    %1314 = vmatmul.mubr.f32.gmra.mrb[0].mxu0 %v1244
    %v1315 = vpop.f32.mrb[0].mxu0
    %v1316 = vadd.f32 0.0, %v1315
    %v1317 = vpop.f32.mrb[0].mxu0
    %1318 = vmatprep.mubr.f32.mxu0 0.0
    %1319 = vmatmul.mubr.f32.gmra.mrb[0].mxu0 %v1247
    %v1320 = vpop.f32.mrb[0].mxu0
    %v1321 = vadd.f32 0.0, %v1320
    %v1322 = vpop.f32.mrb[0].mxu0
    %1323 = vdwg.mxu0
    %v1325 = vsel %vm473, %v944, 0
    %v1328 = vsel %vm473, %v949, 0
    %v1331 = vsel %vm473, %v1034, 0
    %v1334 = vsel %vm473, %v1039, 0
    %1336 = vmatprep.subr.mxu0 0.0
    %1337 = vmatpush1.xpose.msra.mxu0 %v1331
    %1338 = vmatprep.subr.mxu0 0.0
    %1339 = vmatpush1.xpose.msra.mxu0 %v1334
    %1340 = vmatprep.subr.mxu0 0.0
    %1341 = vmatpush1.xpose.msra.mxu0 0.0
    %1342 = vmatprep.subr.mxu0 0.0
    %1343 = vmatpush1.xpose.msra.mxu0 0.0
    %1344 = vmatprep.subr.mxu0 0.0
    %1345 = vmatpush1.xpose.msra.mxu0 0.0
    %1346 = vmatprep.subr.mxu0 0.0
    %1347 = vmatpush1.xpose.msra.mxu0 0.0
    %1348 = vmatprep.subr.mxu0 0.0
    %1349 = vmatpush1.xpose.msra.mxu0 0.0
    %1350 = vmatprep.subr.mxu0 0.0
    %1351 = vmatpush1.xpose.msra.mxu0 0.0
    %1352 = vmatprep.subr.mxu0 0.0
    %1353 = vmatpush1.xpose.msra.mxu0 0.0
    %1354 = vmatprep.subr.mxu0 0.0
    %1355 = vmatpush1.xpose.msra.mxu0 0.0
    %1356 = vmatprep.subr.mxu0 0.0
    %1357 = vmatpush1.xpose.msra.mxu0 0.0
    %1358 = vmatprep.subr.mxu0 0.0
    %1359 = vmatpush1.xpose.msra.mxu0 0.0
    %1360 = vmatprep.subr.mxu0 0.0
    %1361 = vmatpush1.xpose.msra.mxu0 0.0
    %1362 = vmatprep.subr.mxu0 0.0
    %1363 = vmatpush1.xpose.msra.mxu0 0.0
    %1364 = vmatprep.subr.mxu0 0.0
    %1365 = vmatpush1.xpose.msra.mxu0 0.0
    %1366 = vmatprep.subr.mxu0 0.0
    %1367 = vmatpush1.xpose.msra.mxu0 0.0
    %1368 = vmatprep.subr.mxu0 0.0
    %1369 = vmatpush1.xpose.msra.mxu0 0.0
    %1370 = vmatprep.subr.mxu0 0.0
    %1371 = vmatpush1.xpose.msra.mxu0 0.0
    %1372 = vmatprep.subr.mxu0 0.0
    %1373 = vmatpush1.xpose.msra.mxu0 0.0
    %1374 = vmatprep.subr.mxu0 0.0
    %1375 = vmatpush1.xpose.msra.mxu0 0.0
    %1376 = vmatprep.subr.mxu0 0.0
    %1377 = vmatpush1.xpose.msra.mxu0 0.0
    %1378 = vmatprep.subr.mxu0 0.0
    %1379 = vmatpush1.xpose.msra.mxu0 0.0
    %1380 = vmatprep.subr.mxu0 0.0
    %1381 = vmatpush1.xpose.msra.mxu0 0.0
    %1382 = vmatprep.subr.mxu0 0.0
    %1383 = vmatpush1.xpose.msra.mxu0 0.0
    %1384 = vmatprep.subr.mxu0 0.0
    %1385 = vmatpush1.xpose.msra.mxu0 0.0
    %1386 = vmatprep.subr.mxu0 0.0
    %1387 = vmatpush1.xpose.msra.mxu0 0.0
    %1388 = vmatprep.subr.mxu0 0.0
    %1389 = vmatpush1.xpose.msra.mxu0 0.0
    %1390 = vmatprep.subr.mxu0 0.0
    %1391 = vmatpush1.xpose.msra.mxu0 0.0
    %1392 = vmatprep.subr.mxu0 0.0
    %1393 = vmatpush1.xpose.msra.mxu0 0.0
    %1394 = vmatprep.subr.mxu0 0.0
    %1395 = vmatpush1.xpose.msra.mxu0 0.0
    %1396 = vmatprep.subr.mxu0 0.0
    %1397 = vmatpush1.xpose.msra.mxu0 0.0
    %1398 = vmatprep.subr.mxu0 0.0
    %1399 = vmatpush1.xpose.msra.mxu0 0.0
    %1400 = vmatprep.mubr.f32.mxu0 0.0
    %1401 = vmatmul.mubr.f32.gmra.mrb[0].mxu0 %v1325
    %v1402 = vpop.f32.mrb[0].mxu0
    %v1403 = vadd.f32 0.0, %v1402
    %v1404 = vpop.f32.mrb[0].mxu0
    %1405 = vmatprep.mubr.f32.mxu0 0.0
    %1406 = vmatmul.mubr.f32.gmra.mrb[0].mxu0 %v1328
    %v1407 = vpop.f32.mrb[0].mxu0
    %v1408 = vadd.f32 0.0, %v1407
    %v1409 = vpop.f32.mrb[0].mxu0
    %1410 = vdwg.mxu0
    %v1411 = vmul.f32 %v1403, 0.25
    %v1412 = vmul.f32 %v1408, 0.25
    %v1413 = vsel %vm473, %v1411, -inf
    %1414 = vmax.xlane.f32.xlu0 %v1413
    %v1415 = vpop.xlane.xlu0 %1414
    %v1416 = vsel %vm473, %v1412, -inf
    %1417 = vmax.xlane.f32.xlu0 %v1416
    %v1418 = vpop.xlane.xlu0 %1417
    %v1419 = vsub.f32 %v1411, %v1415
    %v1420 = vsub.f32 %v1412, %v1418
    %v1421 = vmul.f32 %v1419, 1.442695
    %v1422 = vpow.pop %v1421
    %v1423 = vmul.f32 %v1420, 1.442695
    %v1424 = vpow.pop %v1423
    %v1425 = vsel %vm473, %v1422, 0.0
    %1426 = vadd.xlane.f32.xlu0 %v1425
    %v1427 = vpop.xlane.xlu0 %1426
    %v1428 = vsel %vm473, %v1424, 0.0
    %1429 = vadd.xlane.f32.xlu0 %v1428
    %v1430 = vpop.xlane.xlu0 %1429
    %v1431 = vrcp.pop %v1427
    %v1432 = vmul.f32 %v1422, %v1431
    %v1433 = vrcp.pop %v1430
    %v1434 = vmul.f32 %v1424, %v1433
    %v1436 = vsel %vm473, %v1432, 0
    %v1439 = vsel %vm473, %v1434, 0
    %1441 = vmatprep.subr.mxu0 0.0
    %1442 = vmatpush1.msra.mxu0 %v1124
    %1443 = vmatprep.subr.mxu0 0.0
    %1444 = vmatpush1.msra.mxu0 %v1129
    %1445 = vmatprep.subr.mxu0 0.0
    %1446 = vmatpush1.msra.mxu0 0.0
    %1447 = vmatprep.subr.mxu0 0.0
    %1448 = vmatpush1.msra.mxu0 0.0
    %1449 = vmatprep.subr.mxu0 0.0
    %1450 = vmatpush1.msra.mxu0 0.0
    %1451 = vmatprep.subr.mxu0 0.0
    %1452 = vmatpush1.msra.mxu0 0.0
    %1453 = vmatprep.subr.mxu0 0.0
    %1454 = vmatpush1.msra.mxu0 0.0
    %1455 = vmatprep.subr.mxu0 0.0
    %1456 = vmatpush1.msra.mxu0 0.0
    %1457 = vmatprep.subr.mxu0 0.0
    %1458 = vmatpush1.msra.mxu0 0.0
    %1459 = vmatprep.subr.mxu0 0.0
    %1460 = vmatpush1.msra.mxu0 0.0
    %1461 = vmatprep.subr.mxu0 0.0
    %1462 = vmatpush1.msra.mxu0 0.0
    %1463 = vmatprep.subr.mxu0 0.0
    %1464 = vmatpush1.msra.mxu0 0.0
    %1465 = vmatprep.subr.mxu0 0.0
    %1466 = vmatpush1.msra.mxu0 0.0
    %1467 = vmatprep.subr.mxu0 0.0
    %1468 = vmatpush1.msra.mxu0 0.0
    %1469 = vmatprep.subr.mxu0 0.0
    %1470 = vmatpush1.msra.mxu0 0.0
    %1471 = vmatprep.subr.mxu0 0.0
    %1472 = vmatpush1.msra.mxu0 0.0
    %1473 = vmatprep.subr.mxu0 0.0
    %1474 = vmatpush1.msra.mxu0 0.0
    %1475 = vmatprep.subr.mxu0 0.0
    %1476 = vmatpush1.msra.mxu0 0.0
    %1477 = vmatprep.subr.mxu0 0.0
    %1478 = vmatpush1.msra.mxu0 0.0
    %1479 = vmatprep.subr.mxu0 0.0
    %1480 = vmatpush1.msra.mxu0 0.0
    %1481 = vmatprep.subr.mxu0 0.0
    %1482 = vmatpush1.msra.mxu0 0.0
    %1483 = vmatprep.subr.mxu0 0.0
    %1484 = vmatpush1.msra.mxu0 0.0
    %1485 = vmatprep.subr.mxu0 0.0
    %1486 = vmatpush1.msra.mxu0 0.0
    %1487 = vmatprep.subr.mxu0 0.0
    %1488 = vmatpush1.msra.mxu0 0.0
    %1489 = vmatprep.subr.mxu0 0.0
    %1490 = vmatpush1.msra.mxu0 0.0
    %1491 = vmatprep.subr.mxu0 0.0
    %1492 = vmatpush1.msra.mxu0 0.0
    %1493 = vmatprep.subr.mxu0 0.0
    %1494 = vmatpush1.msra.mxu0 0.0
    %1495 = vmatprep.subr.mxu0 0.0
    %1496 = vmatpush1.msra.mxu0 0.0
    %1497 = vmatprep.subr.mxu0 0.0
    %1498 = vmatpush1.msra.mxu0 0.0
    %1499 = vmatprep.subr.mxu0 0.0
    %1500 = vmatpush1.msra.mxu0 0.0
    %1501 = vmatprep.subr.mxu0 0.0
    %1502 = vmatpush1.msra.mxu0 0.0
    %1503 = vmatprep.subr.mxu0 0.0
    %1504 = vmatpush1.msra.mxu0 0.0
    %1505 = vmatprep.mubr.f32.mxu0 0.0
    %1506 = vmatmul.mubr.f32.gmra.mrb[0].mxu0 %v1436
    %v1507 = vpop.f32.mrb[0].mxu0
    %v1508 = vadd.f32 0.0, %v1507
    %v1509 = vpop.f32.mrb[0].mxu0
    %1510 = vmatprep.mubr.f32.mxu0 0.0
    %1511 = vmatmul.mubr.f32.gmra.mrb[0].mxu0 %v1439
    %v1512 = vpop.f32.mrb[0].mxu0
    %v1513 = vadd.f32 0.0, %v1512
    %v1514 = vpop.f32.mrb[0].mxu0
    %1515 = vdwg.mxu0
    %s1516 = scalar_lea.vmem %s11, 32
    %v1517 = vld [vmem:[%s1516] sm:$0xff]
    %v1518 = vld [vmem:[%s1516 + $0x8] sm:$0xff]
    %v1519 = vld [vmem:[%s1516 + $0x10] sm:$0xff]
    %v1520 = vld [vmem:[%s1516 + $0x18] sm:$0xff]
    %v1522 = vsel %vm197, %v1316, 0
    %v1525 = vsel %vm197, %v1321, 0
    %v1528 = vsel %vm197, %v1508, 0
    %v1531 = vsel %vm197, %v1513, 0
    %1533 = vmatprep.subr.mxu0 0.0
    %1534 = vmatpush1.msra.mxu0 %v1517
    %1535 = vmatprep.subr.mxu0 0.0
    %1536 = vmatpush1.msra.mxu0 %v1518
    %1537 = vmatprep.subr.mxu0 0.0
    %1538 = vmatpush1.msra.mxu0 %v1519
    %1539 = vmatprep.subr.mxu0 0.0
    %1540 = vmatpush1.msra.mxu0 %v1520
    %1541 = vmatprep.subr.mxu0 0.0
    %1542 = vmatpush1.msra.mxu0 0.0
    %1543 = vmatprep.subr.mxu0 0.0
    %1544 = vmatpush1.msra.mxu0 0.0
    %1545 = vmatprep.subr.mxu0 0.0
    %1546 = vmatpush1.msra.mxu0 0.0
    %1547 = vmatprep.subr.mxu0 0.0
    %1548 = vmatpush1.msra.mxu0 0.0
    %1549 = vmatprep.subr.mxu0 0.0
    %1550 = vmatpush1.msra.mxu0 0.0
    %1551 = vmatprep.subr.mxu0 0.0
    %1552 = vmatpush1.msra.mxu0 0.0
    %1553 = vmatprep.subr.mxu0 0.0
    %1554 = vmatpush1.msra.mxu0 0.0
    %1555 = vmatprep.subr.mxu0 0.0
    %1556 = vmatpush1.msra.mxu0 0.0
    %1557 = vmatprep.subr.mxu0 0.0
    %1558 = vmatpush1.msra.mxu0 0.0
    %1559 = vmatprep.subr.mxu0 0.0
    %1560 = vmatpush1.msra.mxu0 0.0
    %1561 = vmatprep.subr.mxu0 0.0
    %1562 = vmatpush1.msra.mxu0 0.0
    %1563 = vmatprep.subr.mxu0 0.0
    %1564 = vmatpush1.msra.mxu0 0.0
    %1565 = vmatprep.subr.mxu0 0.0
    %1566 = vmatpush1.msra.mxu0 0.0
    %1567 = vmatprep.subr.mxu0 0.0
    %1568 = vmatpush1.msra.mxu0 0.0
    %1569 = vmatprep.subr.mxu0 0.0
    %1570 = vmatpush1.msra.mxu0 0.0
    %1571 = vmatprep.subr.mxu0 0.0
    %1572 = vmatpush1.msra.mxu0 0.0
    %1573 = vmatprep.subr.mxu0 0.0
    %1574 = vmatpush1.msra.mxu0 0.0
    %1575 = vmatprep.subr.mxu0 0.0
    %1576 = vmatpush1.msra.mxu0 0.0
    %1577 = vmatprep.subr.mxu0 0.0
    %1578 = vmatpush1.msra.mxu0 0.0
    %1579 = vmatprep.subr.mxu0 0.0
    %1580 = vmatpush1.msra.mxu0 0.0
    %1581 = vmatprep.subr.mxu0 0.0
    %1582 = vmatpush1.msra.mxu0 0.0
    %1583 = vmatprep.subr.mxu0 0.0
    %1584 = vmatpush1.msra.mxu0 0.0
    %1585 = vmatprep.subr.mxu0 0.0
    %1586 = vmatpush1.msra.mxu0 0.0
    %1587 = vmatprep.subr.mxu0 0.0
    %1588 = vmatpush1.msra.mxu0 0.0
    %1589 = vmatprep.subr.mxu0 0.0
    %1590 = vmatpush1.msra.mxu0 0.0
    %1591 = vmatprep.subr.mxu0 0.0
    %1592 = vmatpush1.msra.mxu0 0.0
    %1593 = vmatprep.subr.mxu0 0.0
    %1594 = vmatpush1.msra.mxu0 0.0
    %1595 = vmatprep.subr.mxu0 0.0
    %1596 = vmatpush1.msra.mxu0 0.0
    %1597 = vmatprep.mubr.f32.mxu0 0.0
    %1598 = vmatmul.mubr.f32.gmra.mrb[0].mxu0 %v1522
    %v1599 = vpop.f32.mrb[0].mxu0
    %v1600 = vadd.f32 0.0, %v1599
    %v1601 = vpop.f32.mrb[0].mxu0
    %1602 = vmatprep.mubr.f32.mxu0 0.0
    %1603 = vmatmul.mubr.f32.gmra.mrb[0].mxu0 %v1525
    %v1604 = vpop.f32.mrb[0].mxu0
    %v1605 = vadd.f32 0.0, %v1604
    %v1606 = vpop.f32.mrb[0].mxu0
    %1607 = vmatprep.mubr.f32.mxu0 0.0
    %1608 = vmatmul.mubr.f32.gmra.mrb[0].mxu0 %v1528
    %v1609 = vpop.f32.mrb[0].mxu0
    %v1610 = vadd.f32 0.0, %v1609
    %v1611 = vpop.f32.mrb[0].mxu0
    %1612 = vmatprep.mubr.f32.mxu0 0.0
    %1613 = vmatmul.mubr.f32.gmra.mrb[0].mxu0 %v1531
    %v1614 = vpop.f32.mrb[0].mxu0
    %v1615 = vadd.f32 0.0, %v1614
    %v1616 = vpop.f32.mrb[0].mxu0
    %1617 = vdwg.mxu0
    %v1619 = vsel %vm197, %v658, 0
    %v1622 = vsel %vm197, %v663, 0
    %v1625 = vsel %vm197, %v850, 0
    %v1628 = vsel %vm197, %v855, 0
    %1630 = vmatprep.subr.mxu0 0.0
    %1631 = vmatpush1.msra.mxu0 %v858
    %1632 = vmatprep.subr.mxu0 0.0
    %1633 = vmatpush1.msra.mxu0 %v859
    %1634 = vmatprep.subr.mxu0 0.0
    %1635 = vmatpush1.msra.mxu0 %v860
    %1636 = vmatprep.subr.mxu0 0.0
    %1637 = vmatpush1.msra.mxu0 %v861
    %1638 = vmatprep.subr.mxu0 0.0
    %1639 = vmatpush1.msra.mxu0 0.0
    %1640 = vmatprep.subr.mxu0 0.0
    %1641 = vmatpush1.msra.mxu0 0.0
    %1642 = vmatprep.subr.mxu0 0.0
    %1643 = vmatpush1.msra.mxu0 0.0
    %1644 = vmatprep.subr.mxu0 0.0
    %1645 = vmatpush1.msra.mxu0 0.0
    %1646 = vmatprep.subr.mxu0 0.0
    %1647 = vmatpush1.msra.mxu0 0.0
    %1648 = vmatprep.subr.mxu0 0.0
    %1649 = vmatpush1.msra.mxu0 0.0
    %1650 = vmatprep.subr.mxu0 0.0
    %1651 = vmatpush1.msra.mxu0 0.0
    %1652 = vmatprep.subr.mxu0 0.0
    %1653 = vmatpush1.msra.mxu0 0.0
    %1654 = vmatprep.subr.mxu0 0.0
    %1655 = vmatpush1.msra.mxu0 0.0
    %1656 = vmatprep.subr.mxu0 0.0
    %1657 = vmatpush1.msra.mxu0 0.0
    %1658 = vmatprep.subr.mxu0 0.0
    %1659 = vmatpush1.msra.mxu0 0.0
    %1660 = vmatprep.subr.mxu0 0.0
    %1661 = vmatpush1.msra.mxu0 0.0
    %1662 = vmatprep.subr.mxu0 0.0
    %1663 = vmatpush1.msra.mxu0 0.0
    %1664 = vmatprep.subr.mxu0 0.0
    %1665 = vmatpush1.msra.mxu0 0.0
    %1666 = vmatprep.subr.mxu0 0.0
    %1667 = vmatpush1.msra.mxu0 0.0
    %1668 = vmatprep.subr.mxu0 0.0
    %1669 = vmatpush1.msra.mxu0 0.0
    %1670 = vmatprep.subr.mxu0 0.0
    %1671 = vmatpush1.msra.mxu0 0.0
    %1672 = vmatprep.subr.mxu0 0.0
    %1673 = vmatpush1.msra.mxu0 0.0
    %1674 = vmatprep.subr.mxu0 0.0
    %1675 = vmatpush1.msra.mxu0 0.0
    %1676 = vmatprep.subr.mxu0 0.0
    %1677 = vmatpush1.msra.mxu0 0.0
    %1678 = vmatprep.subr.mxu0 0.0
    %1679 = vmatpush1.msra.mxu0 0.0
    %1680 = vmatprep.subr.mxu0 0.0
    %1681 = vmatpush1.msra.mxu0 0.0
    %1682 = vmatprep.subr.mxu0 0.0
    %1683 = vmatpush1.msra.mxu0 0.0
    %1684 = vmatprep.subr.mxu0 0.0
    %1685 = vmatpush1.msra.mxu0 0.0
    %1686 = vmatprep.subr.mxu0 0.0
    %1687 = vmatpush1.msra.mxu0 0.0
    %1688 = vmatprep.subr.mxu0 0.0
    %1689 = vmatpush1.msra.mxu0 0.0
    %1690 = vmatprep.subr.mxu0 0.0
    %1691 = vmatpush1.msra.mxu0 0.0
    %1692 = vmatprep.subr.mxu0 0.0
    %1693 = vmatpush1.msra.mxu0 0.0
    %1694 = vmatprep.mubr.f32.mxu0 0.0
    %1695 = vmatmul.mubr.f32.gmra.mrb[0].mxu0 %v1619
    %v1696 = vpop.f32.mrb[0].mxu0
    %v1697 = vadd.f32 %v1600, %v1696
    %v1698 = vpop.f32.mrb[0].mxu0
    %1699 = vmatprep.mubr.f32.mxu0 0.0
    %1700 = vmatmul.mubr.f32.gmra.mrb[0].mxu0 %v1622
    %v1701 = vpop.f32.mrb[0].mxu0
    %v1702 = vadd.f32 %v1605, %v1701
    %v1703 = vpop.f32.mrb[0].mxu0
    %1704 = vmatprep.mubr.f32.mxu0 0.0
    %1705 = vmatmul.mubr.f32.gmra.mrb[0].mxu0 %v1625
    %v1706 = vpop.f32.mrb[0].mxu0
    %v1707 = vadd.f32 %v1610, %v1706
    %v1708 = vpop.f32.mrb[0].mxu0
    %1709 = vmatprep.mubr.f32.mxu0 0.0
    %1710 = vmatmul.mubr.f32.gmra.mrb[0].mxu0 %v1628
    %v1711 = vpop.f32.mrb[0].mxu0
    %v1712 = vadd.f32 %v1615, %v1711
    %v1713 = vpop.f32.mrb[0].mxu0
    %1714 = vdwg.mxu0
    %v1715 = vadd.f32 %v189, %v1697
    %v1716 = vadd.f32 %v190, %v1702
    %v1717 = vadd.f32 %v191, %v1707
    %v1718 = vadd.f32 %v192, %v1712
    %v1719 = vld [vmem:[%s13] sm:$0x1]
    %v1720 = vld [vmem:[%s15] sm:$0x1]
    %v1721 = vsel %vm197, %v1715, 0.0
    %1722 = vadd.xlane.f32.xlu0 %v1721
    %v1723 = vpop.xlane.xlu0 %1722
    %v1724 = vsel %vm197, %v1716, 0.0
    %1725 = vadd.xlane.f32.xlu0 %v1724
    %v1726 = vpop.xlane.xlu0 %1725
    %v1727 = vsel %vm197, %v1717, 0.0
    %1728 = vadd.xlane.f32.xlu0 %v1727
    %v1729 = vpop.xlane.xlu0 %1728
    %v1730 = vsel %vm197, %v1718, 0.0
    %1731 = vadd.xlane.f32.xlu0 %v1730
    %v1732 = vpop.xlane.xlu0 %1731
    %v1733 = vrcp.pop 32.0
    %v1734 = vmul.f32 %v1723, %v1733
    %v1735 = vmul.f32 %v1726, %v1733
    %v1736 = vmul.f32 %v1729, %v1733
    %v1737 = vmul.f32 %v1732, %v1733
    %v1738 = vsub.f32 %v1715, %v1734
    %v1739 = vsub.f32 %v1716, %v1735
    %v1740 = vsub.f32 %v1717, %v1736
    %v1741 = vsub.f32 %v1718, %v1737
    %v1742 = vmul.f32 %v1738, %v1738
    %v1743 = vmul.f32 %v1739, %v1739
    %v1744 = vmul.f32 %v1740, %v1740
    %v1745 = vmul.f32 %v1741, %v1741
    %v1746 = vsel %vm197, %v1742, 0.0
    %1747 = vadd.xlane.f32.xlu0 %v1746
    %v1748 = vpop.xlane.xlu0 %1747
    %v1749 = vsel %vm197, %v1743, 0.0
    %1750 = vadd.xlane.f32.xlu0 %v1749
    %v1751 = vpop.xlane.xlu0 %1750
    %v1752 = vsel %vm197, %v1744, 0.0
    %1753 = vadd.xlane.f32.xlu0 %v1752
    %v1754 = vpop.xlane.xlu0 %1753
    %v1755 = vsel %vm197, %v1745, 0.0
    %1756 = vadd.xlane.f32.xlu0 %v1755
    %v1757 = vpop.xlane.xlu0 %1756
    %v1758 = vmul.f32 %v1748, %v1733
    %v1759 = vmul.f32 %v1751, %v1733
    %v1760 = vmul.f32 %v1754, %v1733
    %v1761 = vmul.f32 %v1757, %v1733
    %v1762 = vadd.f32 %v1758, 1e-05
    %v1763 = vadd.f32 %v1759, 1e-05
    %v1764 = vadd.f32 %v1760, 1e-05
    %v1765 = vadd.f32 %v1761, 1e-05
    %v1766 = vrsqrt.pop %v1762
    %v1767 = vrsqrt.pop %v1763
    %v1768 = vrsqrt.pop %v1764
    %v1769 = vrsqrt.pop %v1765
    %v1770 = vmul.f32 %v1738, %v1766
    %v1771 = vmul.f32 %v1739, %v1767
    %v1772 = vmul.f32 %v1740, %v1768
    %v1773 = vmul.f32 %v1741, %v1769
    %v1775 = vlaneseq
    %v1776 = vshrl.u32 %v1775, 7
    %v1777 = vsub.s32 0, %v1776
    %v1778 = vrot.slane %v1719, %v1777
    %v1780 = vmul.f32 %v1770, %v1778
    %v1781 = vmul.f32 %v1771, %v1778
    %v1782 = vmul.f32 %v1772, %v1778
    %v1783 = vmul.f32 %v1773, %v1778
    %v1785 = vlaneseq
    %v1786 = vshrl.u32 %v1785, 7
    %v1787 = vsub.s32 0, %v1786
    %v1788 = vrot.slane %v1720, %v1787
    %v1790 = vadd.f32 %v1780, %v1788
    %v1791 = vadd.f32 %v1781, %v1788
    %v1792 = vadd.f32 %v1782, %v1788
    %v1793 = vadd.f32 %v1783, %v1788
    %v1794 = vld [vmem:[%s21] sm:$0xff]
    %v1795 = vld [vmem:[%s21 + $0x8] sm:$0xff]
    %v1796 = vld [vmem:[%s21 + $0x10] sm:$0xff]
    %v1797 = vld [vmem:[%s21 + $0x18] sm:$0xff]
    %v1798 = vld [vmem:[%s23] sm:$0x1]
    %v1799 = vld [vmem:[%s17] sm:$0xff]
    %v1800 = vld [vmem:[%s17 + $0x8] sm:$0xff]
    %v1801 = vld [vmem:[%s17 + $0x10] sm:$0xff]
    %v1802 = vld [vmem:[%s17 + $0x18] sm:$0xff]
    %v1803 = vld [vmem:[%s19] sm:$0x1]
    %v1805 = vlaneseq
    %v1806 = vshrl.u32 %v1805, 7
    %v1807 = vsub.s32 0, %v1806
    %v1808 = vrot.slane %v1798, %v1807
    %v1811 = vsel %vm197, %v1790, 0
    %v1814 = vsel %vm197, %v1791, 0
    %v1817 = vsel %vm197, %v1792, 0
    %v1820 = vsel %vm197, %v1793, 0
    %1822 = vmatprep.subr.mxu0 0.0
    %1823 = vmatpush1.msra.mxu0 %v1794
    %1824 = vmatprep.subr.mxu0 0.0
    %1825 = vmatpush1.msra.mxu0 %v1795
    %1826 = vmatprep.subr.mxu0 0.0
    %1827 = vmatpush1.msra.mxu0 %v1796
    %1828 = vmatprep.subr.mxu0 0.0
    %1829 = vmatpush1.msra.mxu0 %v1797
    %1830 = vmatprep.subr.mxu0 0.0
    %1831 = vmatpush1.msra.mxu0 0.0
    %1832 = vmatprep.subr.mxu0 0.0
    %1833 = vmatpush1.msra.mxu0 0.0
    %1834 = vmatprep.subr.mxu0 0.0
    %1835 = vmatpush1.msra.mxu0 0.0
    %1836 = vmatprep.subr.mxu0 0.0
    %1837 = vmatpush1.msra.mxu0 0.0
    %1838 = vmatprep.subr.mxu0 0.0
    %1839 = vmatpush1.msra.mxu0 0.0
    %1840 = vmatprep.subr.mxu0 0.0
    %1841 = vmatpush1.msra.mxu0 0.0
    %1842 = vmatprep.subr.mxu0 0.0
    %1843 = vmatpush1.msra.mxu0 0.0
    %1844 = vmatprep.subr.mxu0 0.0
    %1845 = vmatpush1.msra.mxu0 0.0
    %1846 = vmatprep.subr.mxu0 0.0
    %1847 = vmatpush1.msra.mxu0 0.0
    %1848 = vmatprep.subr.mxu0 0.0
    %1849 = vmatpush1.msra.mxu0 0.0
    %1850 = vmatprep.subr.mxu0 0.0
    %1851 = vmatpush1.msra.mxu0 0.0
    %1852 = vmatprep.subr.mxu0 0.0
    %1853 = vmatpush1.msra.mxu0 0.0
    %1854 = vmatprep.subr.mxu0 0.0
    %1855 = vmatpush1.msra.mxu0 0.0
    %1856 = vmatprep.subr.mxu0 0.0
    %1857 = vmatpush1.msra.mxu0 0.0
    %1858 = vmatprep.subr.mxu0 0.0
    %1859 = vmatpush1.msra.mxu0 0.0
    %1860 = vmatprep.subr.mxu0 0.0
    %1861 = vmatpush1.msra.mxu0 0.0
    %1862 = vmatprep.subr.mxu0 0.0
    %1863 = vmatpush1.msra.mxu0 0.0
    %1864 = vmatprep.subr.mxu0 0.0
    %1865 = vmatpush1.msra.mxu0 0.0
    %1866 = vmatprep.subr.mxu0 0.0
    %1867 = vmatpush1.msra.mxu0 0.0
    %1868 = vmatprep.subr.mxu0 0.0
    %1869 = vmatpush1.msra.mxu0 0.0
    %1870 = vmatprep.subr.mxu0 0.0
    %1871 = vmatpush1.msra.mxu0 0.0
    %1872 = vmatprep.subr.mxu0 0.0
    %1873 = vmatpush1.msra.mxu0 0.0
    %1874 = vmatprep.subr.mxu0 0.0
    %1875 = vmatpush1.msra.mxu0 0.0
    %1876 = vmatprep.subr.mxu0 0.0
    %1877 = vmatpush1.msra.mxu0 0.0
    %1878 = vmatprep.subr.mxu0 0.0
    %1879 = vmatpush1.msra.mxu0 0.0
    %1880 = vmatprep.subr.mxu0 0.0
    %1881 = vmatpush1.msra.mxu0 0.0
    %1882 = vmatprep.subr.mxu0 0.0
    %1883 = vmatpush1.msra.mxu0 0.0
    %1884 = vmatprep.subr.mxu0 0.0
    %1885 = vmatpush1.msra.mxu0 0.0
    %1886 = vmatprep.mubr.f32.mxu0 0.0
    %1887 = vmatmul.mubr.f32.gmra.mrb[0].mxu0 %v1811
    %v1888 = vpop.f32.mrb[0].mxu0
    %v1889 = vadd.f32 %v1808, %v1888
    %v1890 = vpop.f32.mrb[0].mxu0
    %1891 = vmatprep.mubr.f32.mxu0 0.0
    %1892 = vmatmul.mubr.f32.gmra.mrb[0].mxu0 %v1814
    %v1893 = vpop.f32.mrb[0].mxu0
    %v1894 = vadd.f32 %v1808, %v1893
    %v1895 = vpop.f32.mrb[0].mxu0
    %1896 = vmatprep.mubr.f32.mxu0 0.0
    %1897 = vmatmul.mubr.f32.gmra.mrb[0].mxu0 %v1817
    %v1898 = vpop.f32.mrb[0].mxu0
    %v1899 = vadd.f32 %v1808, %v1898
    %v1900 = vpop.f32.mrb[0].mxu0
    %1901 = vmatprep.mubr.f32.mxu0 0.0
    %1902 = vmatmul.mubr.f32.gmra.mrb[0].mxu0 %v1820
    %v1903 = vpop.f32.mrb[0].mxu0
    %v1904 = vadd.f32 %v1808, %v1903
    %v1905 = vpop.f32.mrb[0].mxu0
    %1906 = vdwg.mxu0
    %vm1907 = vcmp.gt.f32.partialorder %v1889, 0.0
    %vm1908 = vcmp.gt.f32.partialorder %v1894, 0.0
    %vm1909 = vcmp.gt.f32.partialorder %v1899, 0.0
    %vm1910 = vcmp.gt.f32.partialorder %v1904, 0.0
    %v1911 = vmin.f32 %v1889, 0.0
    %v1912 = vmin.f32 %v1894, 0.0
    %v1913 = vmin.f32 %v1899, 0.0
    %v1914 = vmin.f32 %v1904, 0.0
    %v1915 = vmul.f32 %v1911, 1.442695
    %v1916 = vpow.pop %v1915
    %v1917 = vmul.f32 %v1912, 1.442695
    %v1918 = vpow.pop %v1917
    %v1919 = vmul.f32 %v1913, 1.442695
    %v1920 = vpow.pop %v1919
    %v1921 = vmul.f32 %v1914, 1.442695
    %v1922 = vpow.pop %v1921
    %v1923 = vsub.f32 %v1916, 1.0
    %v1924 = vsub.f32 %v1918, 1.0
    %v1925 = vsub.f32 %v1920, 1.0
    %v1926 = vsub.f32 %v1922, 1.0
    %v1927 = vsel %vm1907, %v1889, %v1923
    %v1928 = vsel %vm1908, %v1894, %v1924
    %v1929 = vsel %vm1909, %v1899, %v1925
    %v1930 = vsel %vm1910, %v1904, %v1926
    %v1932 = vlaneseq
    %v1933 = vshrl.u32 %v1932, 7
    %v1934 = vsub.s32 0, %v1933
    %v1935 = vrot.slane %v1803, %v1934
    %v1938 = vsel %vm197, %v1927, 0
    %v1941 = vsel %vm197, %v1928, 0
    %v1944 = vsel %vm197, %v1929, 0
    %v1947 = vsel %vm197, %v1930, 0
    %1949 = vmatprep.subr.mxu0 0.0
    %1950 = vmatpush1.msra.mxu0 %v1799
    %1951 = vmatprep.subr.mxu0 0.0
    %1952 = vmatpush1.msra.mxu0 %v1800
    %1953 = vmatprep.subr.mxu0 0.0
    %1954 = vmatpush1.msra.mxu0 %v1801
    %1955 = vmatprep.subr.mxu0 0.0
    %1956 = vmatpush1.msra.mxu0 %v1802
    %1957 = vmatprep.subr.mxu0 0.0
    %1958 = vmatpush1.msra.mxu0 0.0
    %1959 = vmatprep.subr.mxu0 0.0
    %1960 = vmatpush1.msra.mxu0 0.0
    %1961 = vmatprep.subr.mxu0 0.0
    %1962 = vmatpush1.msra.mxu0 0.0
    %1963 = vmatprep.subr.mxu0 0.0
    %1964 = vmatpush1.msra.mxu0 0.0
    %1965 = vmatprep.subr.mxu0 0.0
    %1966 = vmatpush1.msra.mxu0 0.0
    %1967 = vmatprep.subr.mxu0 0.0
    %1968 = vmatpush1.msra.mxu0 0.0
    %1969 = vmatprep.subr.mxu0 0.0
    %1970 = vmatpush1.msra.mxu0 0.0
    %1971 = vmatprep.subr.mxu0 0.0
    %1972 = vmatpush1.msra.mxu0 0.0
    %1973 = vmatprep.subr.mxu0 0.0
    %1974 = vmatpush1.msra.mxu0 0.0
    %1975 = vmatprep.subr.mxu0 0.0
    %1976 = vmatpush1.msra.mxu0 0.0
    %1977 = vmatprep.subr.mxu0 0.0
    %1978 = vmatpush1.msra.mxu0 0.0
    %1979 = vmatprep.subr.mxu0 0.0
    %1980 = vmatpush1.msra.mxu0 0.0
    %1981 = vmatprep.subr.mxu0 0.0
    %1982 = vmatpush1.msra.mxu0 0.0
    %1983 = vmatprep.subr.mxu0 0.0
    %1984 = vmatpush1.msra.mxu0 0.0
    %1985 = vmatprep.subr.mxu0 0.0
    %1986 = vmatpush1.msra.mxu0 0.0
    %1987 = vmatprep.subr.mxu0 0.0
    %1988 = vmatpush1.msra.mxu0 0.0
    %1989 = vmatprep.subr.mxu0 0.0
    %1990 = vmatpush1.msra.mxu0 0.0
    %1991 = vmatprep.subr.mxu0 0.0
    %1992 = vmatpush1.msra.mxu0 0.0
    %1993 = vmatprep.subr.mxu0 0.0
    %1994 = vmatpush1.msra.mxu0 0.0
    %1995 = vmatprep.subr.mxu0 0.0
    %1996 = vmatpush1.msra.mxu0 0.0
    %1997 = vmatprep.subr.mxu0 0.0
    %1998 = vmatpush1.msra.mxu0 0.0
    %1999 = vmatprep.subr.mxu0 0.0
    %2000 = vmatpush1.msra.mxu0 0.0
    %2001 = vmatprep.subr.mxu0 0.0
    %2002 = vmatpush1.msra.mxu0 0.0
    %2003 = vmatprep.subr.mxu0 0.0
    %2004 = vmatpush1.msra.mxu0 0.0
    %2005 = vmatprep.subr.mxu0 0.0
    %2006 = vmatpush1.msra.mxu0 0.0
    %2007 = vmatprep.subr.mxu0 0.0
    %2008 = vmatpush1.msra.mxu0 0.0
    %2009 = vmatprep.subr.mxu0 0.0
    %2010 = vmatpush1.msra.mxu0 0.0
    %2011 = vmatprep.subr.mxu0 0.0
    %2012 = vmatpush1.msra.mxu0 0.0
    %2013 = vmatprep.mubr.f32.mxu0 0.0
    %2014 = vmatmul.mubr.f32.gmra.mrb[0].mxu0 %v1938
    %v2015 = vpop.f32.mrb[0].mxu0
    %v2016 = vadd.f32 %v1935, %v2015
    %v2017 = vpop.f32.mrb[0].mxu0
    %2018 = vmatprep.mubr.f32.mxu0 0.0
    %2019 = vmatmul.mubr.f32.gmra.mrb[0].mxu0 %v1941
    %v2020 = vpop.f32.mrb[0].mxu0
    %v2021 = vadd.f32 %v1935, %v2020
    %v2022 = vpop.f32.mrb[0].mxu0
    %2023 = vmatprep.mubr.f32.mxu0 0.0
    %2024 = vmatmul.mubr.f32.gmra.mrb[0].mxu0 %v1944
    %v2025 = vpop.f32.mrb[0].mxu0
    %v2026 = vadd.f32 %v1935, %v2025
    %v2027 = vpop.f32.mrb[0].mxu0
    %2028 = vmatprep.mubr.f32.mxu0 0.0
    %2029 = vmatmul.mubr.f32.gmra.mrb[0].mxu0 %v1947
    %v2030 = vpop.f32.mrb[0].mxu0
    %v2031 = vadd.f32 %v1935, %v2030
    %v2032 = vpop.f32.mrb[0].mxu0
    %2033 = vdwg.mxu0
    %v2034 = vadd.f32 %v1790, %v2016
    %v2035 = vadd.f32 %v1791, %v2021
    %v2036 = vadd.f32 %v1792, %v2026
    %v2037 = vadd.f32 %v1793, %v2031
    %v2038 = vld [vmem:[%s25] sm:$0x1]
    %v2039 = vld [vmem:[%s27] sm:$0x1]
    %v2040 = vsel %vm197, %v2034, 0.0
    %2041 = vadd.xlane.f32.xlu0 %v2040
    %v2042 = vpop.xlane.xlu0 %2041
    %v2043 = vsel %vm197, %v2035, 0.0
    %2044 = vadd.xlane.f32.xlu0 %v2043
    %v2045 = vpop.xlane.xlu0 %2044
    %v2046 = vsel %vm197, %v2036, 0.0
    %2047 = vadd.xlane.f32.xlu0 %v2046
    %v2048 = vpop.xlane.xlu0 %2047
    %v2049 = vsel %vm197, %v2037, 0.0
    %2050 = vadd.xlane.f32.xlu0 %v2049
    %v2051 = vpop.xlane.xlu0 %2050
    %v2052 = vmul.f32 %v2042, %v1733
    %v2053 = vmul.f32 %v2045, %v1733
    %v2054 = vmul.f32 %v2048, %v1733
    %v2055 = vmul.f32 %v2051, %v1733
    %v2056 = vsub.f32 %v2034, %v2052
    %v2057 = vsub.f32 %v2035, %v2053
    %v2058 = vsub.f32 %v2036, %v2054
    %v2059 = vsub.f32 %v2037, %v2055
    %v2060 = vmul.f32 %v2056, %v2056
    %v2061 = vmul.f32 %v2057, %v2057
    %v2062 = vmul.f32 %v2058, %v2058
    %v2063 = vmul.f32 %v2059, %v2059
    %v2064 = vsel %vm197, %v2060, 0.0
    %2065 = vadd.xlane.f32.xlu0 %v2064
    %v2066 = vpop.xlane.xlu0 %2065
    %v2067 = vsel %vm197, %v2061, 0.0
    %2068 = vadd.xlane.f32.xlu0 %v2067
    %v2069 = vpop.xlane.xlu0 %2068
    %v2070 = vsel %vm197, %v2062, 0.0
    %2071 = vadd.xlane.f32.xlu0 %v2070
    %v2072 = vpop.xlane.xlu0 %2071
    %v2073 = vsel %vm197, %v2063, 0.0
    %2074 = vadd.xlane.f32.xlu0 %v2073
    %v2075 = vpop.xlane.xlu0 %2074
    %v2076 = vmul.f32 %v2066, %v1733
    %v2077 = vmul.f32 %v2069, %v1733
    %v2078 = vmul.f32 %v2072, %v1733
    %v2079 = vmul.f32 %v2075, %v1733
    %v2080 = vadd.f32 %v2076, 1e-05
    %v2081 = vadd.f32 %v2077, 1e-05
    %v2082 = vadd.f32 %v2078, 1e-05
    %v2083 = vadd.f32 %v2079, 1e-05
    %v2084 = vrsqrt.pop %v2080
    %v2085 = vrsqrt.pop %v2081
    %v2086 = vrsqrt.pop %v2082
    %v2087 = vrsqrt.pop %v2083
    %v2088 = vmul.f32 %v2056, %v2084
    %v2089 = vmul.f32 %v2057, %v2085
    %v2090 = vmul.f32 %v2058, %v2086
    %v2091 = vmul.f32 %v2059, %v2087
    %v2093 = vlaneseq
    %v2094 = vshrl.u32 %v2093, 7
    %v2095 = vsub.s32 0, %v2094
    %v2096 = vrot.slane %v2038, %v2095
    %v2098 = vmul.f32 %v2088, %v2096
    %v2099 = vmul.f32 %v2089, %v2096
    %v2100 = vmul.f32 %v2090, %v2096
    %v2101 = vmul.f32 %v2091, %v2096
    %v2103 = vlaneseq
    %v2104 = vshrl.u32 %v2103, 7
    %v2105 = vsub.s32 0, %v2104
    %v2106 = vrot.slane %v2039, %v2105
    %v2108 = vadd.f32 %v2098, %v2106
    %v2109 = vadd.f32 %v2099, %v2106
    %v2110 = vadd.f32 %v2100, %v2106
    %v2111 = vadd.f32 %v2101, %v2106
    %s2112 = scalar_lea.vmem %s5, 64
    %v2113 = vld [vmem:[%s2112] sm:$0xff]
    %v2114 = vld [vmem:[%s2112 + $0x8] sm:$0xff]
    %v2115 = vld [vmem:[%s2112 + $0x10] sm:$0xff]
    %v2116 = vld [vmem:[%s2112 + $0x18] sm:$0xff]
    %v2118 = vsel %vm197, %v2108, 0
    %v2121 = vsel %vm197, %v2109, 0
    %v2124 = vsel %vm197, %v2110, 0
    %v2127 = vsel %vm197, %v2111, 0
    %2129 = vmatprep.subr.mxu0 0.0
    %2130 = vmatpush1.msra.mxu0 %v2113
    %2131 = vmatprep.subr.mxu0 0.0
    %2132 = vmatpush1.msra.mxu0 %v2114
    %2133 = vmatprep.subr.mxu0 0.0
    %2134 = vmatpush1.msra.mxu0 %v2115
    %2135 = vmatprep.subr.mxu0 0.0
    %2136 = vmatpush1.msra.mxu0 %v2116
    %2137 = vmatprep.subr.mxu0 0.0
    %2138 = vmatpush1.msra.mxu0 0.0
    %2139 = vmatprep.subr.mxu0 0.0
    %2140 = vmatpush1.msra.mxu0 0.0
    %2141 = vmatprep.subr.mxu0 0.0
    %2142 = vmatpush1.msra.mxu0 0.0
    %2143 = vmatprep.subr.mxu0 0.0
    %2144 = vmatpush1.msra.mxu0 0.0
    %2145 = vmatprep.subr.mxu0 0.0
    %2146 = vmatpush1.msra.mxu0 0.0
    %2147 = vmatprep.subr.mxu0 0.0
    %2148 = vmatpush1.msra.mxu0 0.0
    %2149 = vmatprep.subr.mxu0 0.0
    %2150 = vmatpush1.msra.mxu0 0.0
    %2151 = vmatprep.subr.mxu0 0.0
    %2152 = vmatpush1.msra.mxu0 0.0
    %2153 = vmatprep.subr.mxu0 0.0
    %2154 = vmatpush1.msra.mxu0 0.0
    %2155 = vmatprep.subr.mxu0 0.0
    %2156 = vmatpush1.msra.mxu0 0.0
    %2157 = vmatprep.subr.mxu0 0.0
    %2158 = vmatpush1.msra.mxu0 0.0
    %2159 = vmatprep.subr.mxu0 0.0
    %2160 = vmatpush1.msra.mxu0 0.0
    %2161 = vmatprep.subr.mxu0 0.0
    %2162 = vmatpush1.msra.mxu0 0.0
    %2163 = vmatprep.subr.mxu0 0.0
    %2164 = vmatpush1.msra.mxu0 0.0
    %2165 = vmatprep.subr.mxu0 0.0
    %2166 = vmatpush1.msra.mxu0 0.0
    %2167 = vmatprep.subr.mxu0 0.0
    %2168 = vmatpush1.msra.mxu0 0.0
    %2169 = vmatprep.subr.mxu0 0.0
    %2170 = vmatpush1.msra.mxu0 0.0
    %2171 = vmatprep.subr.mxu0 0.0
    %2172 = vmatpush1.msra.mxu0 0.0
    %2173 = vmatprep.subr.mxu0 0.0
    %2174 = vmatpush1.msra.mxu0 0.0
    %2175 = vmatprep.subr.mxu0 0.0
    %2176 = vmatpush1.msra.mxu0 0.0
    %2177 = vmatprep.subr.mxu0 0.0
    %2178 = vmatpush1.msra.mxu0 0.0
    %2179 = vmatprep.subr.mxu0 0.0
    %2180 = vmatpush1.msra.mxu0 0.0
    %2181 = vmatprep.subr.mxu0 0.0
    %2182 = vmatpush1.msra.mxu0 0.0
    %2183 = vmatprep.subr.mxu0 0.0
    %2184 = vmatpush1.msra.mxu0 0.0
    %2185 = vmatprep.subr.mxu0 0.0
    %2186 = vmatpush1.msra.mxu0 0.0
    %2187 = vmatprep.subr.mxu0 0.0
    %2188 = vmatpush1.msra.mxu0 0.0
    %2189 = vmatprep.subr.mxu0 0.0
    %2190 = vmatpush1.msra.mxu0 0.0
    %2191 = vmatprep.subr.mxu0 0.0
    %2192 = vmatpush1.msra.mxu0 0.0
    %2193 = vmatprep.mubr.f32.mxu0 0.0
    %2194 = vmatmul.mubr.f32.gmra.mrb[0].mxu0 %v2118
    %v2195 = vpop.f32.mrb[0].mxu0
    %v2196 = vadd.f32 0.0, %v2195
    %v2197 = vpop.f32.mrb[0].mxu0
    %2198 = vmatprep.mubr.f32.mxu0 0.0
    %2199 = vmatmul.mubr.f32.gmra.mrb[0].mxu0 %v2121
    %v2200 = vpop.f32.mrb[0].mxu0
    %v2201 = vadd.f32 0.0, %v2200
    %v2202 = vpop.f32.mrb[0].mxu0
    %2203 = vmatprep.mubr.f32.mxu0 0.0
    %2204 = vmatmul.mubr.f32.gmra.mrb[0].mxu0 %v2124
    %v2205 = vpop.f32.mrb[0].mxu0
    %v2206 = vadd.f32 0.0, %v2205
    %v2207 = vpop.f32.mrb[0].mxu0
    %2208 = vmatprep.mubr.f32.mxu0 0.0
    %2209 = vmatmul.mubr.f32.gmra.mrb[0].mxu0 %v2127
    %v2210 = vpop.f32.mrb[0].mxu0
    %v2211 = vadd.f32 0.0, %v2210
    %v2212 = vpop.f32.mrb[0].mxu0
    %2213 = vdwg.mxu0
    %s2214 = scalar_lea.vmem %s7, 64
    %v2215 = vld [vmem:[%s2214] sm:$0xff]
    %v2216 = vld [vmem:[%s2214 + $0x8] sm:$0xff]
    %v2217 = vld [vmem:[%s2214 + $0x10] sm:$0xff]
    %v2218 = vld [vmem:[%s2214 + $0x18] sm:$0xff]
    %2219 = vmatprep.subr.mxu0 0.0
    %2220 = vmatpush1.msra.mxu0 %v2215
    %2221 = vmatprep.subr.mxu0 0.0
    %2222 = vmatpush1.msra.mxu0 %v2216
    %2223 = vmatprep.subr.mxu0 0.0
    %2224 = vmatpush1.msra.mxu0 %v2217
    %2225 = vmatprep.subr.mxu0 0.0
    %2226 = vmatpush1.msra.mxu0 %v2218
    %2227 = vmatprep.subr.mxu0 0.0
    %2228 = vmatpush1.msra.mxu0 0.0
    %2229 = vmatprep.subr.mxu0 0.0
    %2230 = vmatpush1.msra.mxu0 0.0
    %2231 = vmatprep.subr.mxu0 0.0
    %2232 = vmatpush1.msra.mxu0 0.0
    %2233 = vmatprep.subr.mxu0 0.0
    %2234 = vmatpush1.msra.mxu0 0.0
    %2235 = vmatprep.subr.mxu0 0.0
    %2236 = vmatpush1.msra.mxu0 0.0
    %2237 = vmatprep.subr.mxu0 0.0
    %2238 = vmatpush1.msra.mxu0 0.0
    %2239 = vmatprep.subr.mxu0 0.0
    %2240 = vmatpush1.msra.mxu0 0.0
    %2241 = vmatprep.subr.mxu0 0.0
    %2242 = vmatpush1.msra.mxu0 0.0
    %2243 = vmatprep.subr.mxu0 0.0
    %2244 = vmatpush1.msra.mxu0 0.0
    %2245 = vmatprep.subr.mxu0 0.0
    %2246 = vmatpush1.msra.mxu0 0.0
    %2247 = vmatprep.subr.mxu0 0.0
    %2248 = vmatpush1.msra.mxu0 0.0
    %2249 = vmatprep.subr.mxu0 0.0
    %2250 = vmatpush1.msra.mxu0 0.0
    %2251 = vmatprep.subr.mxu0 0.0
    %2252 = vmatpush1.msra.mxu0 0.0
    %2253 = vmatprep.subr.mxu0 0.0
    %2254 = vmatpush1.msra.mxu0 0.0
    %2255 = vmatprep.subr.mxu0 0.0
    %2256 = vmatpush1.msra.mxu0 0.0
    %2257 = vmatprep.subr.mxu0 0.0
    %2258 = vmatpush1.msra.mxu0 0.0
    %2259 = vmatprep.subr.mxu0 0.0
    %2260 = vmatpush1.msra.mxu0 0.0
    %2261 = vmatprep.subr.mxu0 0.0
    %2262 = vmatpush1.msra.mxu0 0.0
    %2263 = vmatprep.subr.mxu0 0.0
    %2264 = vmatpush1.msra.mxu0 0.0
    %2265 = vmatprep.subr.mxu0 0.0
    %2266 = vmatpush1.msra.mxu0 0.0
    %2267 = vmatprep.subr.mxu0 0.0
    %2268 = vmatpush1.msra.mxu0 0.0
    %2269 = vmatprep.subr.mxu0 0.0
    %2270 = vmatpush1.msra.mxu0 0.0
    %2271 = vmatprep.subr.mxu0 0.0
    %2272 = vmatpush1.msra.mxu0 0.0
    %2273 = vmatprep.subr.mxu0 0.0
    %2274 = vmatpush1.msra.mxu0 0.0
    %2275 = vmatprep.subr.mxu0 0.0
    %2276 = vmatpush1.msra.mxu0 0.0
    %2277 = vmatprep.subr.mxu0 0.0
    %2278 = vmatpush1.msra.mxu0 0.0
    %2279 = vmatprep.subr.mxu0 0.0
    %2280 = vmatpush1.msra.mxu0 0.0
    %2281 = vmatprep.subr.mxu0 0.0
    %2282 = vmatpush1.msra.mxu0 0.0
    %2283 = vmatprep.mubr.f32.mxu0 0.0
    %2284 = vmatmul.mubr.f32.gmra.mrb[0].mxu0 %v2118
    %v2285 = vpop.f32.mrb[0].mxu0
    %v2286 = vadd.f32 0.0, %v2285
    %v2287 = vpop.f32.mrb[0].mxu0
    %2288 = vmatprep.mubr.f32.mxu0 0.0
    %2289 = vmatmul.mubr.f32.gmra.mrb[0].mxu0 %v2121
    %v2290 = vpop.f32.mrb[0].mxu0
    %v2291 = vadd.f32 0.0, %v2290
    %v2292 = vpop.f32.mrb[0].mxu0
    %2293 = vmatprep.mubr.f32.mxu0 0.0
    %2294 = vmatmul.mubr.f32.gmra.mrb[0].mxu0 %v2124
    %v2295 = vpop.f32.mrb[0].mxu0
    %v2296 = vadd.f32 0.0, %v2295
    %v2297 = vpop.f32.mrb[0].mxu0
    %2298 = vmatprep.mubr.f32.mxu0 0.0
    %2299 = vmatmul.mubr.f32.gmra.mrb[0].mxu0 %v2127
    %v2300 = vpop.f32.mrb[0].mxu0
    %v2301 = vadd.f32 0.0, %v2300
    %v2302 = vpop.f32.mrb[0].mxu0
    %2303 = vdwg.mxu0
    %s2304 = scalar_lea.vmem %s9, 64
    %v2305 = vld [vmem:[%s2304] sm:$0xff]
    %v2306 = vld [vmem:[%s2304 + $0x8] sm:$0xff]
    %v2307 = vld [vmem:[%s2304 + $0x10] sm:$0xff]
    %v2308 = vld [vmem:[%s2304 + $0x18] sm:$0xff]
    %2309 = vmatprep.subr.mxu0 0.0
    %2310 = vmatpush1.msra.mxu0 %v2305
    %2311 = vmatprep.subr.mxu0 0.0
    %2312 = vmatpush1.msra.mxu0 %v2306
    %2313 = vmatprep.subr.mxu0 0.0
    %2314 = vmatpush1.msra.mxu0 %v2307
    %2315 = vmatprep.subr.mxu0 0.0
    %2316 = vmatpush1.msra.mxu0 %v2308
    %2317 = vmatprep.subr.mxu0 0.0
    %2318 = vmatpush1.msra.mxu0 0.0
    %2319 = vmatprep.subr.mxu0 0.0
    %2320 = vmatpush1.msra.mxu0 0.0
    %2321 = vmatprep.subr.mxu0 0.0
    %2322 = vmatpush1.msra.mxu0 0.0
    %2323 = vmatprep.subr.mxu0 0.0
    %2324 = vmatpush1.msra.mxu0 0.0
    %2325 = vmatprep.subr.mxu0 0.0
    %2326 = vmatpush1.msra.mxu0 0.0
    %2327 = vmatprep.subr.mxu0 0.0
    %2328 = vmatpush1.msra.mxu0 0.0
    %2329 = vmatprep.subr.mxu0 0.0
    %2330 = vmatpush1.msra.mxu0 0.0
    %2331 = vmatprep.subr.mxu0 0.0
    %2332 = vmatpush1.msra.mxu0 0.0
    %2333 = vmatprep.subr.mxu0 0.0
    %2334 = vmatpush1.msra.mxu0 0.0
    %2335 = vmatprep.subr.mxu0 0.0
    %2336 = vmatpush1.msra.mxu0 0.0
    %2337 = vmatprep.subr.mxu0 0.0
    %2338 = vmatpush1.msra.mxu0 0.0
    %2339 = vmatprep.subr.mxu0 0.0
    %2340 = vmatpush1.msra.mxu0 0.0
    %2341 = vmatprep.subr.mxu0 0.0
    %2342 = vmatpush1.msra.mxu0 0.0
    %2343 = vmatprep.subr.mxu0 0.0
    %2344 = vmatpush1.msra.mxu0 0.0
    %2345 = vmatprep.subr.mxu0 0.0
    %2346 = vmatpush1.msra.mxu0 0.0
    %2347 = vmatprep.subr.mxu0 0.0
    %2348 = vmatpush1.msra.mxu0 0.0
    %2349 = vmatprep.subr.mxu0 0.0
    %2350 = vmatpush1.msra.mxu0 0.0
    %2351 = vmatprep.subr.mxu0 0.0
    %2352 = vmatpush1.msra.mxu0 0.0
    %2353 = vmatprep.subr.mxu0 0.0
    %2354 = vmatpush1.msra.mxu0 0.0
    %2355 = vmatprep.subr.mxu0 0.0
    %2356 = vmatpush1.msra.mxu0 0.0
    %2357 = vmatprep.subr.mxu0 0.0
    %2358 = vmatpush1.msra.mxu0 0.0
    %2359 = vmatprep.subr.mxu0 0.0
    %2360 = vmatpush1.msra.mxu0 0.0
    %2361 = vmatprep.subr.mxu0 0.0
    %2362 = vmatpush1.msra.mxu0 0.0
    %2363 = vmatprep.subr.mxu0 0.0
    %2364 = vmatpush1.msra.mxu0 0.0
    %2365 = vmatprep.subr.mxu0 0.0
    %2366 = vmatpush1.msra.mxu0 0.0
    %2367 = vmatprep.subr.mxu0 0.0
    %2368 = vmatpush1.msra.mxu0 0.0
    %2369 = vmatprep.subr.mxu0 0.0
    %2370 = vmatpush1.msra.mxu0 0.0
    %2371 = vmatprep.subr.mxu0 0.0
    %2372 = vmatpush1.msra.mxu0 0.0
    %2373 = vmatprep.mubr.f32.mxu0 0.0
    %2374 = vmatmul.mubr.f32.gmra.mrb[0].mxu0 %v2118
    %v2375 = vpop.f32.mrb[0].mxu0
    %v2376 = vadd.f32 0.0, %v2375
    %v2377 = vpop.f32.mrb[0].mxu0
    %2378 = vmatprep.mubr.f32.mxu0 0.0
    %2379 = vmatmul.mubr.f32.gmra.mrb[0].mxu0 %v2121
    %v2380 = vpop.f32.mrb[0].mxu0
    %v2381 = vadd.f32 0.0, %v2380
    %v2382 = vpop.f32.mrb[0].mxu0
    %2383 = vmatprep.mubr.f32.mxu0 0.0
    %2384 = vmatmul.mubr.f32.gmra.mrb[0].mxu0 %v2124
    %v2385 = vpop.f32.mrb[0].mxu0
    %v2386 = vadd.f32 0.0, %v2385
    %v2387 = vpop.f32.mrb[0].mxu0
    %2388 = vmatprep.mubr.f32.mxu0 0.0
    %2389 = vmatmul.mubr.f32.gmra.mrb[0].mxu0 %v2127
    %v2390 = vpop.f32.mrb[0].mxu0
    %v2391 = vadd.f32 0.0, %v2390
    %v2392 = vpop.f32.mrb[0].mxu0
    %2393 = vdwg.mxu0
    %v2395 = vsel %vm473, %v2196, 0
    %v2398 = vsel %vm473, %v2201, 0
    %v2401 = vsel %vm473, %v2286, 0
    %v2404 = vsel %vm473, %v2291, 0
    %2406 = vmatprep.subr.mxu0 0.0
    %2407 = vmatpush1.xpose.msra.mxu0 %v2401
    %2408 = vmatprep.subr.mxu0 0.0
    %2409 = vmatpush1.xpose.msra.mxu0 %v2404
    %2410 = vmatprep.subr.mxu0 0.0
    %2411 = vmatpush1.xpose.msra.mxu0 0.0
    %2412 = vmatprep.subr.mxu0 0.0
    %2413 = vmatpush1.xpose.msra.mxu0 0.0
    %2414 = vmatprep.subr.mxu0 0.0
    %2415 = vmatpush1.xpose.msra.mxu0 0.0
    %2416 = vmatprep.subr.mxu0 0.0
    %2417 = vmatpush1.xpose.msra.mxu0 0.0
    %2418 = vmatprep.subr.mxu0 0.0
    %2419 = vmatpush1.xpose.msra.mxu0 0.0
    %2420 = vmatprep.subr.mxu0 0.0
    %2421 = vmatpush1.xpose.msra.mxu0 0.0
    %2422 = vmatprep.subr.mxu0 0.0
    %2423 = vmatpush1.xpose.msra.mxu0 0.0
    %2424 = vmatprep.subr.mxu0 0.0
    %2425 = vmatpush1.xpose.msra.mxu0 0.0
    %2426 = vmatprep.subr.mxu0 0.0
    %2427 = vmatpush1.xpose.msra.mxu0 0.0
    %2428 = vmatprep.subr.mxu0 0.0
    %2429 = vmatpush1.xpose.msra.mxu0 0.0
    %2430 = vmatprep.subr.mxu0 0.0
    %2431 = vmatpush1.xpose.msra.mxu0 0.0
    %2432 = vmatprep.subr.mxu0 0.0
    %2433 = vmatpush1.xpose.msra.mxu0 0.0
    %2434 = vmatprep.subr.mxu0 0.0
    %2435 = vmatpush1.xpose.msra.mxu0 0.0
    %2436 = vmatprep.subr.mxu0 0.0
    %2437 = vmatpush1.xpose.msra.mxu0 0.0
    %2438 = vmatprep.subr.mxu0 0.0
    %2439 = vmatpush1.xpose.msra.mxu0 0.0
    %2440 = vmatprep.subr.mxu0 0.0
    %2441 = vmatpush1.xpose.msra.mxu0 0.0
    %2442 = vmatprep.subr.mxu0 0.0
    %2443 = vmatpush1.xpose.msra.mxu0 0.0
    %2444 = vmatprep.subr.mxu0 0.0
    %2445 = vmatpush1.xpose.msra.mxu0 0.0
    %2446 = vmatprep.subr.mxu0 0.0
    %2447 = vmatpush1.xpose.msra.mxu0 0.0
    %2448 = vmatprep.subr.mxu0 0.0
    %2449 = vmatpush1.xpose.msra.mxu0 0.0
    %2450 = vmatprep.subr.mxu0 0.0
    %2451 = vmatpush1.xpose.msra.mxu0 0.0
    %2452 = vmatprep.subr.mxu0 0.0
    %2453 = vmatpush1.xpose.msra.mxu0 0.0
    %2454 = vmatprep.subr.mxu0 0.0
    %2455 = vmatpush1.xpose.msra.mxu0 0.0
    %2456 = vmatprep.subr.mxu0 0.0
    %2457 = vmatpush1.xpose.msra.mxu0 0.0
    %2458 = vmatprep.subr.mxu0 0.0
    %2459 = vmatpush1.xpose.msra.mxu0 0.0
    %2460 = vmatprep.subr.mxu0 0.0
    %2461 = vmatpush1.xpose.msra.mxu0 0.0
    %2462 = vmatprep.subr.mxu0 0.0
    %2463 = vmatpush1.xpose.msra.mxu0 0.0
    %2464 = vmatprep.subr.mxu0 0.0
    %2465 = vmatpush1.xpose.msra.mxu0 0.0
    %2466 = vmatprep.subr.mxu0 0.0
    %2467 = vmatpush1.xpose.msra.mxu0 0.0
    %2468 = vmatprep.subr.mxu0 0.0
    %2469 = vmatpush1.xpose.msra.mxu0 0.0
    %2470 = vmatprep.mubr.f32.mxu0 0.0
    %2471 = vmatmul.mubr.f32.gmra.mrb[0].mxu0 %v2395
    %v2472 = vpop.f32.mrb[0].mxu0
    %v2473 = vadd.f32 0.0, %v2472
    %v2474 = vpop.f32.mrb[0].mxu0
    %2475 = vmatprep.mubr.f32.mxu0 0.0
    %2476 = vmatmul.mubr.f32.gmra.mrb[0].mxu0 %v2398
    %v2477 = vpop.f32.mrb[0].mxu0
    %v2478 = vadd.f32 0.0, %v2477
    %v2479 = vpop.f32.mrb[0].mxu0
    %2480 = vdwg.mxu0
    %v2481 = vmul.f32 %v2473, 0.25
    %v2482 = vmul.f32 %v2478, 0.25
    %v2483 = vsel %vm473, %v2481, -inf
    %2484 = vmax.xlane.f32.xlu0 %v2483
    %v2485 = vpop.xlane.xlu0 %2484
    %v2486 = vsel %vm473, %v2482, -inf
    %2487 = vmax.xlane.f32.xlu0 %v2486
    %v2488 = vpop.xlane.xlu0 %2487
    %v2489 = vsub.f32 %v2481, %v2485
    %v2490 = vsub.f32 %v2482, %v2488
    %v2491 = vmul.f32 %v2489, 1.442695
    %v2492 = vpow.pop %v2491
    %v2493 = vmul.f32 %v2490, 1.442695
    %v2494 = vpow.pop %v2493
    %v2495 = vsel %vm473, %v2492, 0.0
    %2496 = vadd.xlane.f32.xlu0 %v2495
    %v2497 = vpop.xlane.xlu0 %2496
    %v2498 = vsel %vm473, %v2494, 0.0
    %2499 = vadd.xlane.f32.xlu0 %v2498
    %v2500 = vpop.xlane.xlu0 %2499
    %v2501 = vrcp.pop %v2497
    %v2502 = vmul.f32 %v2492, %v2501
    %v2503 = vrcp.pop %v2500
    %v2504 = vmul.f32 %v2494, %v2503
    %v2506 = vsel %vm473, %v2502, 0
    %v2509 = vsel %vm473, %v2504, 0
    %2511 = vmatprep.subr.mxu0 0.0
    %2512 = vmatpush1.msra.mxu0 %v2376
    %2513 = vmatprep.subr.mxu0 0.0
    %2514 = vmatpush1.msra.mxu0 %v2381
    %2515 = vmatprep.subr.mxu0 0.0
    %2516 = vmatpush1.msra.mxu0 0.0
    %2517 = vmatprep.subr.mxu0 0.0
    %2518 = vmatpush1.msra.mxu0 0.0
    %2519 = vmatprep.subr.mxu0 0.0
    %2520 = vmatpush1.msra.mxu0 0.0
    %2521 = vmatprep.subr.mxu0 0.0
    %2522 = vmatpush1.msra.mxu0 0.0
    %2523 = vmatprep.subr.mxu0 0.0
    %2524 = vmatpush1.msra.mxu0 0.0
    %2525 = vmatprep.subr.mxu0 0.0
    %2526 = vmatpush1.msra.mxu0 0.0
    %2527 = vmatprep.subr.mxu0 0.0
    %2528 = vmatpush1.msra.mxu0 0.0
    %2529 = vmatprep.subr.mxu0 0.0
    %2530 = vmatpush1.msra.mxu0 0.0
    %2531 = vmatprep.subr.mxu0 0.0
    %2532 = vmatpush1.msra.mxu0 0.0
    %2533 = vmatprep.subr.mxu0 0.0
    %2534 = vmatpush1.msra.mxu0 0.0
    %2535 = vmatprep.subr.mxu0 0.0
    %2536 = vmatpush1.msra.mxu0 0.0
    %2537 = vmatprep.subr.mxu0 0.0
    %2538 = vmatpush1.msra.mxu0 0.0
    %2539 = vmatprep.subr.mxu0 0.0
    %2540 = vmatpush1.msra.mxu0 0.0
    %2541 = vmatprep.subr.mxu0 0.0
    %2542 = vmatpush1.msra.mxu0 0.0
    %2543 = vmatprep.subr.mxu0 0.0
    %2544 = vmatpush1.msra.mxu0 0.0
    %2545 = vmatprep.subr.mxu0 0.0
    %2546 = vmatpush1.msra.mxu0 0.0
    %2547 = vmatprep.subr.mxu0 0.0
    %2548 = vmatpush1.msra.mxu0 0.0
    %2549 = vmatprep.subr.mxu0 0.0
    %2550 = vmatpush1.msra.mxu0 0.0
    %2551 = vmatprep.subr.mxu0 0.0
    %2552 = vmatpush1.msra.mxu0 0.0
    %2553 = vmatprep.subr.mxu0 0.0
    %2554 = vmatpush1.msra.mxu0 0.0
    %2555 = vmatprep.subr.mxu0 0.0
    %2556 = vmatpush1.msra.mxu0 0.0
    %2557 = vmatprep.subr.mxu0 0.0
    %2558 = vmatpush1.msra.mxu0 0.0
    %2559 = vmatprep.subr.mxu0 0.0
    %2560 = vmatpush1.msra.mxu0 0.0
    %2561 = vmatprep.subr.mxu0 0.0
    %2562 = vmatpush1.msra.mxu0 0.0
    %2563 = vmatprep.subr.mxu0 0.0
    %2564 = vmatpush1.msra.mxu0 0.0
    %2565 = vmatprep.subr.mxu0 0.0
    %2566 = vmatpush1.msra.mxu0 0.0
    %2567 = vmatprep.subr.mxu0 0.0
    %2568 = vmatpush1.msra.mxu0 0.0
    %2569 = vmatprep.subr.mxu0 0.0
    %2570 = vmatpush1.msra.mxu0 0.0
    %2571 = vmatprep.subr.mxu0 0.0
    %2572 = vmatpush1.msra.mxu0 0.0
    %2573 = vmatprep.subr.mxu0 0.0
    %2574 = vmatpush1.msra.mxu0 0.0
    %2575 = vmatprep.mubr.f32.mxu0 0.0
    %2576 = vmatmul.mubr.f32.gmra.mrb[0].mxu0 %v2506
    %v2577 = vpop.f32.mrb[0].mxu0
    %v2578 = vadd.f32 0.0, %v2577
    %v2579 = vpop.f32.mrb[0].mxu0
    %2580 = vmatprep.mubr.f32.mxu0 0.0
    %2581 = vmatmul.mubr.f32.gmra.mrb[0].mxu0 %v2509
    %v2582 = vpop.f32.mrb[0].mxu0
    %v2583 = vadd.f32 0.0, %v2582
    %v2584 = vpop.f32.mrb[0].mxu0
    %2585 = vdwg.mxu0
    %v2587 = vsel %vm473, %v2206, 0
    %v2590 = vsel %vm473, %v2211, 0
    %v2593 = vsel %vm473, %v2296, 0
    %v2596 = vsel %vm473, %v2301, 0
    %2598 = vmatprep.subr.mxu0 0.0
    %2599 = vmatpush1.xpose.msra.mxu0 %v2593
    %2600 = vmatprep.subr.mxu0 0.0
    %2601 = vmatpush1.xpose.msra.mxu0 %v2596
    %2602 = vmatprep.subr.mxu0 0.0
    %2603 = vmatpush1.xpose.msra.mxu0 0.0
    %2604 = vmatprep.subr.mxu0 0.0
    %2605 = vmatpush1.xpose.msra.mxu0 0.0
    %2606 = vmatprep.subr.mxu0 0.0
    %2607 = vmatpush1.xpose.msra.mxu0 0.0
    %2608 = vmatprep.subr.mxu0 0.0
    %2609 = vmatpush1.xpose.msra.mxu0 0.0
    %2610 = vmatprep.subr.mxu0 0.0
    %2611 = vmatpush1.xpose.msra.mxu0 0.0
    %2612 = vmatprep.subr.mxu0 0.0
    %2613 = vmatpush1.xpose.msra.mxu0 0.0
    %2614 = vmatprep.subr.mxu0 0.0
    %2615 = vmatpush1.xpose.msra.mxu0 0.0
    %2616 = vmatprep.subr.mxu0 0.0
    %2617 = vmatpush1.xpose.msra.mxu0 0.0
    %2618 = vmatprep.subr.mxu0 0.0
    %2619 = vmatpush1.xpose.msra.mxu0 0.0
    %2620 = vmatprep.subr.mxu0 0.0
    %2621 = vmatpush1.xpose.msra.mxu0 0.0
    %2622 = vmatprep.subr.mxu0 0.0
    %2623 = vmatpush1.xpose.msra.mxu0 0.0
    %2624 = vmatprep.subr.mxu0 0.0
    %2625 = vmatpush1.xpose.msra.mxu0 0.0
    %2626 = vmatprep.subr.mxu0 0.0
    %2627 = vmatpush1.xpose.msra.mxu0 0.0
    %2628 = vmatprep.subr.mxu0 0.0
    %2629 = vmatpush1.xpose.msra.mxu0 0.0
    %2630 = vmatprep.subr.mxu0 0.0
    %2631 = vmatpush1.xpose.msra.mxu0 0.0
    %2632 = vmatprep.subr.mxu0 0.0
    %2633 = vmatpush1.xpose.msra.mxu0 0.0
    %2634 = vmatprep.subr.mxu0 0.0
    %2635 = vmatpush1.xpose.msra.mxu0 0.0
    %2636 = vmatprep.subr.mxu0 0.0
    %2637 = vmatpush1.xpose.msra.mxu0 0.0
    %2638 = vmatprep.subr.mxu0 0.0
    %2639 = vmatpush1.xpose.msra.mxu0 0.0
    %2640 = vmatprep.subr.mxu0 0.0
    %2641 = vmatpush1.xpose.msra.mxu0 0.0
    %2642 = vmatprep.subr.mxu0 0.0
    %2643 = vmatpush1.xpose.msra.mxu0 0.0
    %2644 = vmatprep.subr.mxu0 0.0
    %2645 = vmatpush1.xpose.msra.mxu0 0.0
    %2646 = vmatprep.subr.mxu0 0.0
    %2647 = vmatpush1.xpose.msra.mxu0 0.0
    %2648 = vmatprep.subr.mxu0 0.0
    %2649 = vmatpush1.xpose.msra.mxu0 0.0
    %2650 = vmatprep.subr.mxu0 0.0
    %2651 = vmatpush1.xpose.msra.mxu0 0.0
    %2652 = vmatprep.subr.mxu0 0.0
    %2653 = vmatpush1.xpose.msra.mxu0 0.0
    %2654 = vmatprep.subr.mxu0 0.0
    %2655 = vmatpush1.xpose.msra.mxu0 0.0
    %2656 = vmatprep.subr.mxu0 0.0
    %2657 = vmatpush1.xpose.msra.mxu0 0.0
    %2658 = vmatprep.subr.mxu0 0.0
    %2659 = vmatpush1.xpose.msra.mxu0 0.0
    %2660 = vmatprep.subr.mxu0 0.0
    %2661 = vmatpush1.xpose.msra.mxu0 0.0
    %2662 = vmatprep.mubr.f32.mxu0 0.0
    %2663 = vmatmul.mubr.f32.gmra.mrb[0].mxu0 %v2587
    %v2664 = vpop.f32.mrb[0].mxu0
    %v2665 = vadd.f32 0.0, %v2664
    %v2666 = vpop.f32.mrb[0].mxu0
    %2667 = vmatprep.mubr.f32.mxu0 0.0
    %2668 = vmatmul.mubr.f32.gmra.mrb[0].mxu0 %v2590
    %v2669 = vpop.f32.mrb[0].mxu0
    %v2670 = vadd.f32 0.0, %v2669
    %v2671 = vpop.f32.mrb[0].mxu0
    %2672 = vdwg.mxu0
    %v2673 = vmul.f32 %v2665, 0.25
    %v2674 = vmul.f32 %v2670, 0.25
    %v2675 = vsel %vm473, %v2673, -inf
    %2676 = vmax.xlane.f32.xlu0 %v2675
    %v2677 = vpop.xlane.xlu0 %2676
    %v2678 = vsel %vm473, %v2674, -inf
    %2679 = vmax.xlane.f32.xlu0 %v2678
    %v2680 = vpop.xlane.xlu0 %2679
    %v2681 = vsub.f32 %v2673, %v2677
    %v2682 = vsub.f32 %v2674, %v2680
    %v2683 = vmul.f32 %v2681, 1.442695
    %v2684 = vpow.pop %v2683
    %v2685 = vmul.f32 %v2682, 1.442695
    %v2686 = vpow.pop %v2685
    %v2687 = vsel %vm473, %v2684, 0.0
    %2688 = vadd.xlane.f32.xlu0 %v2687
    %v2689 = vpop.xlane.xlu0 %2688
    %v2690 = vsel %vm473, %v2686, 0.0
    %2691 = vadd.xlane.f32.xlu0 %v2690
    %v2692 = vpop.xlane.xlu0 %2691
    %v2693 = vrcp.pop %v2689
    %v2694 = vmul.f32 %v2684, %v2693
    %v2695 = vrcp.pop %v2692
    %v2696 = vmul.f32 %v2686, %v2695
    %v2698 = vsel %vm473, %v2694, 0
    %v2701 = vsel %vm473, %v2696, 0
    %2703 = vmatprep.subr.mxu0 0.0
    %2704 = vmatpush1.msra.mxu0 %v2386
    %2705 = vmatprep.subr.mxu0 0.0
    %2706 = vmatpush1.msra.mxu0 %v2391
    %2707 = vmatprep.subr.mxu0 0.0
    %2708 = vmatpush1.msra.mxu0 0.0
    %2709 = vmatprep.subr.mxu0 0.0
    %2710 = vmatpush1.msra.mxu0 0.0
    %2711 = vmatprep.subr.mxu0 0.0
    %2712 = vmatpush1.msra.mxu0 0.0
    %2713 = vmatprep.subr.mxu0 0.0
    %2714 = vmatpush1.msra.mxu0 0.0
    %2715 = vmatprep.subr.mxu0 0.0
    %2716 = vmatpush1.msra.mxu0 0.0
    %2717 = vmatprep.subr.mxu0 0.0
    %2718 = vmatpush1.msra.mxu0 0.0
    %2719 = vmatprep.subr.mxu0 0.0
    %2720 = vmatpush1.msra.mxu0 0.0
    %2721 = vmatprep.subr.mxu0 0.0
    %2722 = vmatpush1.msra.mxu0 0.0
    %2723 = vmatprep.subr.mxu0 0.0
    %2724 = vmatpush1.msra.mxu0 0.0
    %2725 = vmatprep.subr.mxu0 0.0
    %2726 = vmatpush1.msra.mxu0 0.0
    %2727 = vmatprep.subr.mxu0 0.0
    %2728 = vmatpush1.msra.mxu0 0.0
    %2729 = vmatprep.subr.mxu0 0.0
    %2730 = vmatpush1.msra.mxu0 0.0
    %2731 = vmatprep.subr.mxu0 0.0
    %2732 = vmatpush1.msra.mxu0 0.0
    %2733 = vmatprep.subr.mxu0 0.0
    %2734 = vmatpush1.msra.mxu0 0.0
    %2735 = vmatprep.subr.mxu0 0.0
    %2736 = vmatpush1.msra.mxu0 0.0
    %2737 = vmatprep.subr.mxu0 0.0
    %2738 = vmatpush1.msra.mxu0 0.0
    %2739 = vmatprep.subr.mxu0 0.0
    %2740 = vmatpush1.msra.mxu0 0.0
    %2741 = vmatprep.subr.mxu0 0.0
    %2742 = vmatpush1.msra.mxu0 0.0
    %2743 = vmatprep.subr.mxu0 0.0
    %2744 = vmatpush1.msra.mxu0 0.0
    %2745 = vmatprep.subr.mxu0 0.0
    %2746 = vmatpush1.msra.mxu0 0.0
    %2747 = vmatprep.subr.mxu0 0.0
    %2748 = vmatpush1.msra.mxu0 0.0
    %2749 = vmatprep.subr.mxu0 0.0
    %2750 = vmatpush1.msra.mxu0 0.0
    %2751 = vmatprep.subr.mxu0 0.0
    %2752 = vmatpush1.msra.mxu0 0.0
    %2753 = vmatprep.subr.mxu0 0.0
    %2754 = vmatpush1.msra.mxu0 0.0
    %2755 = vmatprep.subr.mxu0 0.0
    %2756 = vmatpush1.msra.mxu0 0.0
    %2757 = vmatprep.subr.mxu0 0.0
    %2758 = vmatpush1.msra.mxu0 0.0
    %2759 = vmatprep.subr.mxu0 0.0
    %2760 = vmatpush1.msra.mxu0 0.0
    %2761 = vmatprep.subr.mxu0 0.0
    %2762 = vmatpush1.msra.mxu0 0.0
    %2763 = vmatprep.subr.mxu0 0.0
    %2764 = vmatpush1.msra.mxu0 0.0
    %2765 = vmatprep.subr.mxu0 0.0
    %2766 = vmatpush1.msra.mxu0 0.0
    %2767 = vmatprep.mubr.f32.mxu0 0.0
    %2768 = vmatmul.mubr.f32.gmra.mrb[0].mxu0 %v2698
    %v2769 = vpop.f32.mrb[0].mxu0
    %v2770 = vadd.f32 0.0, %v2769
    %v2771 = vpop.f32.mrb[0].mxu0
    %2772 = vmatprep.mubr.f32.mxu0 0.0
    %2773 = vmatmul.mubr.f32.gmra.mrb[0].mxu0 %v2701
    %v2774 = vpop.f32.mrb[0].mxu0
    %v2775 = vadd.f32 0.0, %v2774
    %v2776 = vpop.f32.mrb[0].mxu0
    %2777 = vdwg.mxu0
    %s2778 = scalar_lea.vmem %s11, 64
    %v2779 = vld [vmem:[%s2778] sm:$0xff]
    %v2780 = vld [vmem:[%s2778 + $0x8] sm:$0xff]
    %v2781 = vld [vmem:[%s2778 + $0x10] sm:$0xff]
    %v2782 = vld [vmem:[%s2778 + $0x18] sm:$0xff]
    %s2783 = scalar_lea.vmem %s5, 96
    %v2784 = vld [vmem:[%s2783] sm:$0xff]
    %v2785 = vld [vmem:[%s2783 + $0x8] sm:$0xff]
    %v2786 = vld [vmem:[%s2783 + $0x10] sm:$0xff]
    %v2787 = vld [vmem:[%s2783 + $0x18] sm:$0xff]
    %2788 = vmatprep.subr.mxu0 0.0
    %2789 = vmatpush1.msra.mxu0 %v2784
    %2790 = vmatprep.subr.mxu0 0.0
    %2791 = vmatpush1.msra.mxu0 %v2785
    %2792 = vmatprep.subr.mxu0 0.0
    %2793 = vmatpush1.msra.mxu0 %v2786
    %2794 = vmatprep.subr.mxu0 0.0
    %2795 = vmatpush1.msra.mxu0 %v2787
    %2796 = vmatprep.subr.mxu0 0.0
    %2797 = vmatpush1.msra.mxu0 0.0
    %2798 = vmatprep.subr.mxu0 0.0
    %2799 = vmatpush1.msra.mxu0 0.0
    %2800 = vmatprep.subr.mxu0 0.0
    %2801 = vmatpush1.msra.mxu0 0.0
    %2802 = vmatprep.subr.mxu0 0.0
    %2803 = vmatpush1.msra.mxu0 0.0
    %2804 = vmatprep.subr.mxu0 0.0
    %2805 = vmatpush1.msra.mxu0 0.0
    %2806 = vmatprep.subr.mxu0 0.0
    %2807 = vmatpush1.msra.mxu0 0.0
    %2808 = vmatprep.subr.mxu0 0.0
    %2809 = vmatpush1.msra.mxu0 0.0
    %2810 = vmatprep.subr.mxu0 0.0
    %2811 = vmatpush1.msra.mxu0 0.0
    %2812 = vmatprep.subr.mxu0 0.0
    %2813 = vmatpush1.msra.mxu0 0.0
    %2814 = vmatprep.subr.mxu0 0.0
    %2815 = vmatpush1.msra.mxu0 0.0
    %2816 = vmatprep.subr.mxu0 0.0
    %2817 = vmatpush1.msra.mxu0 0.0
    %2818 = vmatprep.subr.mxu0 0.0
    %2819 = vmatpush1.msra.mxu0 0.0
    %2820 = vmatprep.subr.mxu0 0.0
    %2821 = vmatpush1.msra.mxu0 0.0
    %2822 = vmatprep.subr.mxu0 0.0
    %2823 = vmatpush1.msra.mxu0 0.0
    %2824 = vmatprep.subr.mxu0 0.0
    %2825 = vmatpush1.msra.mxu0 0.0
    %2826 = vmatprep.subr.mxu0 0.0
    %2827 = vmatpush1.msra.mxu0 0.0
    %2828 = vmatprep.subr.mxu0 0.0
    %2829 = vmatpush1.msra.mxu0 0.0
    %2830 = vmatprep.subr.mxu0 0.0
    %2831 = vmatpush1.msra.mxu0 0.0
    %2832 = vmatprep.subr.mxu0 0.0
    %2833 = vmatpush1.msra.mxu0 0.0
    %2834 = vmatprep.subr.mxu0 0.0
    %2835 = vmatpush1.msra.mxu0 0.0
    %2836 = vmatprep.subr.mxu0 0.0
    %2837 = vmatpush1.msra.mxu0 0.0
    %2838 = vmatprep.subr.mxu0 0.0
    %2839 = vmatpush1.msra.mxu0 0.0
    %2840 = vmatprep.subr.mxu0 0.0
    %2841 = vmatpush1.msra.mxu0 0.0
    %2842 = vmatprep.subr.mxu0 0.0
    %2843 = vmatpush1.msra.mxu0 0.0
    %2844 = vmatprep.subr.mxu0 0.0
    %2845 = vmatpush1.msra.mxu0 0.0
    %2846 = vmatprep.subr.mxu0 0.0
    %2847 = vmatpush1.msra.mxu0 0.0
    %2848 = vmatprep.subr.mxu0 0.0
    %2849 = vmatpush1.msra.mxu0 0.0
    %2850 = vmatprep.subr.mxu0 0.0
    %2851 = vmatpush1.msra.mxu0 0.0
    %2852 = vmatprep.mubr.f32.mxu0 0.0
    %2853 = vmatmul.mubr.f32.gmra.mrb[0].mxu0 %v2118
    %v2854 = vpop.f32.mrb[0].mxu0
    %v2855 = vadd.f32 0.0, %v2854
    %v2856 = vpop.f32.mrb[0].mxu0
    %2857 = vmatprep.mubr.f32.mxu0 0.0
    %2858 = vmatmul.mubr.f32.gmra.mrb[0].mxu0 %v2121
    %v2859 = vpop.f32.mrb[0].mxu0
    %v2860 = vadd.f32 0.0, %v2859
    %v2861 = vpop.f32.mrb[0].mxu0
    %2862 = vmatprep.mubr.f32.mxu0 0.0
    %2863 = vmatmul.mubr.f32.gmra.mrb[0].mxu0 %v2124
    %v2864 = vpop.f32.mrb[0].mxu0
    %v2865 = vadd.f32 0.0, %v2864
    %v2866 = vpop.f32.mrb[0].mxu0
    %2867 = vmatprep.mubr.f32.mxu0 0.0
    %2868 = vmatmul.mubr.f32.gmra.mrb[0].mxu0 %v2127
    %v2869 = vpop.f32.mrb[0].mxu0
    %v2870 = vadd.f32 0.0, %v2869
    %v2871 = vpop.f32.mrb[0].mxu0
    %2872 = vdwg.mxu0
    %s2873 = scalar_lea.vmem %s7, 96
    %v2874 = vld [vmem:[%s2873] sm:$0xff]
    %v2875 = vld [vmem:[%s2873 + $0x8] sm:$0xff]
    %v2876 = vld [vmem:[%s2873 + $0x10] sm:$0xff]
    %v2877 = vld [vmem:[%s2873 + $0x18] sm:$0xff]
    %2878 = vmatprep.subr.mxu0 0.0
    %2879 = vmatpush1.msra.mxu0 %v2874
    %2880 = vmatprep.subr.mxu0 0.0
    %2881 = vmatpush1.msra.mxu0 %v2875
    %2882 = vmatprep.subr.mxu0 0.0
    %2883 = vmatpush1.msra.mxu0 %v2876
    %2884 = vmatprep.subr.mxu0 0.0
    %2885 = vmatpush1.msra.mxu0 %v2877
    %2886 = vmatprep.subr.mxu0 0.0
    %2887 = vmatpush1.msra.mxu0 0.0
    %2888 = vmatprep.subr.mxu0 0.0
    %2889 = vmatpush1.msra.mxu0 0.0
    %2890 = vmatprep.subr.mxu0 0.0
    %2891 = vmatpush1.msra.mxu0 0.0
    %2892 = vmatprep.subr.mxu0 0.0
    %2893 = vmatpush1.msra.mxu0 0.0
    %2894 = vmatprep.subr.mxu0 0.0
    %2895 = vmatpush1.msra.mxu0 0.0
    %2896 = vmatprep.subr.mxu0 0.0
    %2897 = vmatpush1.msra.mxu0 0.0
    %2898 = vmatprep.subr.mxu0 0.0
    %2899 = vmatpush1.msra.mxu0 0.0
    %2900 = vmatprep.subr.mxu0 0.0
    %2901 = vmatpush1.msra.mxu0 0.0
    %2902 = vmatprep.subr.mxu0 0.0
    %2903 = vmatpush1.msra.mxu0 0.0
    %2904 = vmatprep.subr.mxu0 0.0
    %2905 = vmatpush1.msra.mxu0 0.0
    %2906 = vmatprep.subr.mxu0 0.0
    %2907 = vmatpush1.msra.mxu0 0.0
    %2908 = vmatprep.subr.mxu0 0.0
    %2909 = vmatpush1.msra.mxu0 0.0
    %2910 = vmatprep.subr.mxu0 0.0
    %2911 = vmatpush1.msra.mxu0 0.0
    %2912 = vmatprep.subr.mxu0 0.0
    %2913 = vmatpush1.msra.mxu0 0.0
    %2914 = vmatprep.subr.mxu0 0.0
    %2915 = vmatpush1.msra.mxu0 0.0
    %2916 = vmatprep.subr.mxu0 0.0
    %2917 = vmatpush1.msra.mxu0 0.0
    %2918 = vmatprep.subr.mxu0 0.0
    %2919 = vmatpush1.msra.mxu0 0.0
    %2920 = vmatprep.subr.mxu0 0.0
    %2921 = vmatpush1.msra.mxu0 0.0
    %2922 = vmatprep.subr.mxu0 0.0
    %2923 = vmatpush1.msra.mxu0 0.0
    %2924 = vmatprep.subr.mxu0 0.0
    %2925 = vmatpush1.msra.mxu0 0.0
    %2926 = vmatprep.subr.mxu0 0.0
    %2927 = vmatpush1.msra.mxu0 0.0
    %2928 = vmatprep.subr.mxu0 0.0
    %2929 = vmatpush1.msra.mxu0 0.0
    %2930 = vmatprep.subr.mxu0 0.0
    %2931 = vmatpush1.msra.mxu0 0.0
    %2932 = vmatprep.subr.mxu0 0.0
    %2933 = vmatpush1.msra.mxu0 0.0
    %2934 = vmatprep.subr.mxu0 0.0
    %2935 = vmatpush1.msra.mxu0 0.0
    %2936 = vmatprep.subr.mxu0 0.0
    %2937 = vmatpush1.msra.mxu0 0.0
    %2938 = vmatprep.subr.mxu0 0.0
    %2939 = vmatpush1.msra.mxu0 0.0
    %2940 = vmatprep.subr.mxu0 0.0
    %2941 = vmatpush1.msra.mxu0 0.0
    %2942 = vmatprep.mubr.f32.mxu0 0.0
    %2943 = vmatmul.mubr.f32.gmra.mrb[0].mxu0 %v2118
    %v2944 = vpop.f32.mrb[0].mxu0
    %v2945 = vadd.f32 0.0, %v2944
    %v2946 = vpop.f32.mrb[0].mxu0
    %2947 = vmatprep.mubr.f32.mxu0 0.0
    %2948 = vmatmul.mubr.f32.gmra.mrb[0].mxu0 %v2121
    %v2949 = vpop.f32.mrb[0].mxu0
    %v2950 = vadd.f32 0.0, %v2949
    %v2951 = vpop.f32.mrb[0].mxu0
    %2952 = vmatprep.mubr.f32.mxu0 0.0
    %2953 = vmatmul.mubr.f32.gmra.mrb[0].mxu0 %v2124
    %v2954 = vpop.f32.mrb[0].mxu0
    %v2955 = vadd.f32 0.0, %v2954
    %v2956 = vpop.f32.mrb[0].mxu0
    %2957 = vmatprep.mubr.f32.mxu0 0.0
    %2958 = vmatmul.mubr.f32.gmra.mrb[0].mxu0 %v2127
    %v2959 = vpop.f32.mrb[0].mxu0
    %v2960 = vadd.f32 0.0, %v2959
    %v2961 = vpop.f32.mrb[0].mxu0
    %2962 = vdwg.mxu0
    %s2963 = scalar_lea.vmem %s9, 96
    %v2964 = vld [vmem:[%s2963] sm:$0xff]
    %v2965 = vld [vmem:[%s2963 + $0x8] sm:$0xff]
    %v2966 = vld [vmem:[%s2963 + $0x10] sm:$0xff]
    %v2967 = vld [vmem:[%s2963 + $0x18] sm:$0xff]
    %2968 = vmatprep.subr.mxu0 0.0
    %2969 = vmatpush1.msra.mxu0 %v2964
    %2970 = vmatprep.subr.mxu0 0.0
    %2971 = vmatpush1.msra.mxu0 %v2965
    %2972 = vmatprep.subr.mxu0 0.0
    %2973 = vmatpush1.msra.mxu0 %v2966
    %2974 = vmatprep.subr.mxu0 0.0
    %2975 = vmatpush1.msra.mxu0 %v2967
    %2976 = vmatprep.subr.mxu0 0.0
    %2977 = vmatpush1.msra.mxu0 0.0
    %2978 = vmatprep.subr.mxu0 0.0
    %2979 = vmatpush1.msra.mxu0 0.0
    %2980 = vmatprep.subr.mxu0 0.0
    %2981 = vmatpush1.msra.mxu0 0.0
    %2982 = vmatprep.subr.mxu0 0.0
    %2983 = vmatpush1.msra.mxu0 0.0
    %2984 = vmatprep.subr.mxu0 0.0
    %2985 = vmatpush1.msra.mxu0 0.0
    %2986 = vmatprep.subr.mxu0 0.0
    %2987 = vmatpush1.msra.mxu0 0.0
    %2988 = vmatprep.subr.mxu0 0.0
    %2989 = vmatpush1.msra.mxu0 0.0
    %2990 = vmatprep.subr.mxu0 0.0
    %2991 = vmatpush1.msra.mxu0 0.0
    %2992 = vmatprep.subr.mxu0 0.0
    %2993 = vmatpush1.msra.mxu0 0.0
    %2994 = vmatprep.subr.mxu0 0.0
    %2995 = vmatpush1.msra.mxu0 0.0
    %2996 = vmatprep.subr.mxu0 0.0
    %2997 = vmatpush1.msra.mxu0 0.0
    %2998 = vmatprep.subr.mxu0 0.0
    %2999 = vmatpush1.msra.mxu0 0.0
    %3000 = vmatprep.subr.mxu0 0.0
    %3001 = vmatpush1.msra.mxu0 0.0
    %3002 = vmatprep.subr.mxu0 0.0
    %3003 = vmatpush1.msra.mxu0 0.0
    %3004 = vmatprep.subr.mxu0 0.0
    %3005 = vmatpush1.msra.mxu0 0.0
    %3006 = vmatprep.subr.mxu0 0.0
    %3007 = vmatpush1.msra.mxu0 0.0
    %3008 = vmatprep.subr.mxu0 0.0
    %3009 = vmatpush1.msra.mxu0 0.0
    %3010 = vmatprep.subr.mxu0 0.0
    %3011 = vmatpush1.msra.mxu0 0.0
    %3012 = vmatprep.subr.mxu0 0.0
    %3013 = vmatpush1.msra.mxu0 0.0
    %3014 = vmatprep.subr.mxu0 0.0
    %3015 = vmatpush1.msra.mxu0 0.0
    %3016 = vmatprep.subr.mxu0 0.0
    %3017 = vmatpush1.msra.mxu0 0.0
    %3018 = vmatprep.subr.mxu0 0.0
    %3019 = vmatpush1.msra.mxu0 0.0
    %3020 = vmatprep.subr.mxu0 0.0
    %3021 = vmatpush1.msra.mxu0 0.0
    %3022 = vmatprep.subr.mxu0 0.0
    %3023 = vmatpush1.msra.mxu0 0.0
    %3024 = vmatprep.subr.mxu0 0.0
    %3025 = vmatpush1.msra.mxu0 0.0
    %3026 = vmatprep.subr.mxu0 0.0
    %3027 = vmatpush1.msra.mxu0 0.0
    %3028 = vmatprep.subr.mxu0 0.0
    %3029 = vmatpush1.msra.mxu0 0.0
    %3030 = vmatprep.subr.mxu0 0.0
    %3031 = vmatpush1.msra.mxu0 0.0
    %3032 = vmatprep.mubr.f32.mxu0 0.0
    %3033 = vmatmul.mubr.f32.gmra.mrb[0].mxu0 %v2118
    %v3034 = vpop.f32.mrb[0].mxu0
    %v3035 = vadd.f32 0.0, %v3034
    %v3036 = vpop.f32.mrb[0].mxu0
    %3037 = vmatprep.mubr.f32.mxu0 0.0
    %3038 = vmatmul.mubr.f32.gmra.mrb[0].mxu0 %v2121
    %v3039 = vpop.f32.mrb[0].mxu0
    %v3040 = vadd.f32 0.0, %v3039
    %v3041 = vpop.f32.mrb[0].mxu0
    %3042 = vmatprep.mubr.f32.mxu0 0.0
    %3043 = vmatmul.mubr.f32.gmra.mrb[0].mxu0 %v2124
    %v3044 = vpop.f32.mrb[0].mxu0
    %v3045 = vadd.f32 0.0, %v3044
    %v3046 = vpop.f32.mrb[0].mxu0
    %3047 = vmatprep.mubr.f32.mxu0 0.0
    %3048 = vmatmul.mubr.f32.gmra.mrb[0].mxu0 %v2127
    %v3049 = vpop.f32.mrb[0].mxu0
    %v3050 = vadd.f32 0.0, %v3049
    %v3051 = vpop.f32.mrb[0].mxu0
    %3052 = vdwg.mxu0
    %v3054 = vsel %vm473, %v2855, 0
    %v3057 = vsel %vm473, %v2860, 0
    %v3060 = vsel %vm473, %v2945, 0
    %v3063 = vsel %vm473, %v2950, 0
    %3065 = vmatprep.subr.mxu0 0.0
    %3066 = vmatpush1.xpose.msra.mxu0 %v3060
    %3067 = vmatprep.subr.mxu0 0.0
    %3068 = vmatpush1.xpose.msra.mxu0 %v3063
    %3069 = vmatprep.subr.mxu0 0.0
    %3070 = vmatpush1.xpose.msra.mxu0 0.0
    %3071 = vmatprep.subr.mxu0 0.0
    %3072 = vmatpush1.xpose.msra.mxu0 0.0
    %3073 = vmatprep.subr.mxu0 0.0
    %3074 = vmatpush1.xpose.msra.mxu0 0.0
    %3075 = vmatprep.subr.mxu0 0.0
    %3076 = vmatpush1.xpose.msra.mxu0 0.0
    %3077 = vmatprep.subr.mxu0 0.0
    %3078 = vmatpush1.xpose.msra.mxu0 0.0
    %3079 = vmatprep.subr.mxu0 0.0
    %3080 = vmatpush1.xpose.msra.mxu0 0.0
    %3081 = vmatprep.subr.mxu0 0.0
    %3082 = vmatpush1.xpose.msra.mxu0 0.0
    %3083 = vmatprep.subr.mxu0 0.0
    %3084 = vmatpush1.xpose.msra.mxu0 0.0
    %3085 = vmatprep.subr.mxu0 0.0
    %3086 = vmatpush1.xpose.msra.mxu0 0.0
    %3087 = vmatprep.subr.mxu0 0.0
    %3088 = vmatpush1.xpose.msra.mxu0 0.0
    %3089 = vmatprep.subr.mxu0 0.0
    %3090 = vmatpush1.xpose.msra.mxu0 0.0
    %3091 = vmatprep.subr.mxu0 0.0
    %3092 = vmatpush1.xpose.msra.mxu0 0.0
    %3093 = vmatprep.subr.mxu0 0.0
    %3094 = vmatpush1.xpose.msra.mxu0 0.0
    %3095 = vmatprep.subr.mxu0 0.0
    %3096 = vmatpush1.xpose.msra.mxu0 0.0
    %3097 = vmatprep.subr.mxu0 0.0
    %3098 = vmatpush1.xpose.msra.mxu0 0.0
    %3099 = vmatprep.subr.mxu0 0.0
    %3100 = vmatpush1.xpose.msra.mxu0 0.0
    %3101 = vmatprep.subr.mxu0 0.0
    %3102 = vmatpush1.xpose.msra.mxu0 0.0
    %3103 = vmatprep.subr.mxu0 0.0
    %3104 = vmatpush1.xpose.msra.mxu0 0.0
    %3105 = vmatprep.subr.mxu0 0.0
    %3106 = vmatpush1.xpose.msra.mxu0 0.0
    %3107 = vmatprep.subr.mxu0 0.0
    %3108 = vmatpush1.xpose.msra.mxu0 0.0
    %3109 = vmatprep.subr.mxu0 0.0
    %3110 = vmatpush1.xpose.msra.mxu0 0.0
    %3111 = vmatprep.subr.mxu0 0.0
    %3112 = vmatpush1.xpose.msra.mxu0 0.0
    %3113 = vmatprep.subr.mxu0 0.0
    %3114 = vmatpush1.xpose.msra.mxu0 0.0
    %3115 = vmatprep.subr.mxu0 0.0
    %3116 = vmatpush1.xpose.msra.mxu0 0.0
    %3117 = vmatprep.subr.mxu0 0.0
    %3118 = vmatpush1.xpose.msra.mxu0 0.0
    %3119 = vmatprep.subr.mxu0 0.0
    %3120 = vmatpush1.xpose.msra.mxu0 0.0
    %3121 = vmatprep.subr.mxu0 0.0
    %3122 = vmatpush1.xpose.msra.mxu0 0.0
    %3123 = vmatprep.subr.mxu0 0.0
    %3124 = vmatpush1.xpose.msra.mxu0 0.0
    %3125 = vmatprep.subr.mxu0 0.0
    %3126 = vmatpush1.xpose.msra.mxu0 0.0
    %3127 = vmatprep.subr.mxu0 0.0
    %3128 = vmatpush1.xpose.msra.mxu0 0.0
    %3129 = vmatprep.mubr.f32.mxu0 0.0
    %3130 = vmatmul.mubr.f32.gmra.mrb[0].mxu0 %v3054
    %v3131 = vpop.f32.mrb[0].mxu0
    %v3132 = vadd.f32 0.0, %v3131
    %v3133 = vpop.f32.mrb[0].mxu0
    %3134 = vmatprep.mubr.f32.mxu0 0.0
    %3135 = vmatmul.mubr.f32.gmra.mrb[0].mxu0 %v3057
    %v3136 = vpop.f32.mrb[0].mxu0
    %v3137 = vadd.f32 0.0, %v3136
    %v3138 = vpop.f32.mrb[0].mxu0
    %3139 = vdwg.mxu0
    %v3140 = vmul.f32 %v3132, 0.25
    %v3141 = vmul.f32 %v3137, 0.25
    %v3142 = vsel %vm473, %v3140, -inf
    %3143 = vmax.xlane.f32.xlu0 %v3142
    %v3144 = vpop.xlane.xlu0 %3143
    %v3145 = vsel %vm473, %v3141, -inf
    %3146 = vmax.xlane.f32.xlu0 %v3145
    %v3147 = vpop.xlane.xlu0 %3146
    %v3148 = vsub.f32 %v3140, %v3144
    %v3149 = vsub.f32 %v3141, %v3147
    %v3150 = vmul.f32 %v3148, 1.442695
    %v3151 = vpow.pop %v3150
    %v3152 = vmul.f32 %v3149, 1.442695
    %v3153 = vpow.pop %v3152
    %v3154 = vsel %vm473, %v3151, 0.0
    %3155 = vadd.xlane.f32.xlu0 %v3154
    %v3156 = vpop.xlane.xlu0 %3155
    %v3157 = vsel %vm473, %v3153, 0.0
    %3158 = vadd.xlane.f32.xlu0 %v3157
    %v3159 = vpop.xlane.xlu0 %3158
    %v3160 = vrcp.pop %v3156
    %v3161 = vmul.f32 %v3151, %v3160
    %v3162 = vrcp.pop %v3159
    %v3163 = vmul.f32 %v3153, %v3162
    %v3165 = vsel %vm473, %v3161, 0
    %v3168 = vsel %vm473, %v3163, 0
    %3170 = vmatprep.subr.mxu0 0.0
    %3171 = vmatpush1.msra.mxu0 %v3035
    %3172 = vmatprep.subr.mxu0 0.0
    %3173 = vmatpush1.msra.mxu0 %v3040
    %3174 = vmatprep.subr.mxu0 0.0
    %3175 = vmatpush1.msra.mxu0 0.0
    %3176 = vmatprep.subr.mxu0 0.0
    %3177 = vmatpush1.msra.mxu0 0.0
    %3178 = vmatprep.subr.mxu0 0.0
    %3179 = vmatpush1.msra.mxu0 0.0
    %3180 = vmatprep.subr.mxu0 0.0
    %3181 = vmatpush1.msra.mxu0 0.0
    %3182 = vmatprep.subr.mxu0 0.0
    %3183 = vmatpush1.msra.mxu0 0.0
    %3184 = vmatprep.subr.mxu0 0.0
    %3185 = vmatpush1.msra.mxu0 0.0
    %3186 = vmatprep.subr.mxu0 0.0
    %3187 = vmatpush1.msra.mxu0 0.0
    %3188 = vmatprep.subr.mxu0 0.0
    %3189 = vmatpush1.msra.mxu0 0.0
    %3190 = vmatprep.subr.mxu0 0.0
    %3191 = vmatpush1.msra.mxu0 0.0
    %3192 = vmatprep.subr.mxu0 0.0
    %3193 = vmatpush1.msra.mxu0 0.0
    %3194 = vmatprep.subr.mxu0 0.0
    %3195 = vmatpush1.msra.mxu0 0.0
    %3196 = vmatprep.subr.mxu0 0.0
    %3197 = vmatpush1.msra.mxu0 0.0
    %3198 = vmatprep.subr.mxu0 0.0
    %3199 = vmatpush1.msra.mxu0 0.0
    %3200 = vmatprep.subr.mxu0 0.0
    %3201 = vmatpush1.msra.mxu0 0.0
    %3202 = vmatprep.subr.mxu0 0.0
    %3203 = vmatpush1.msra.mxu0 0.0
    %3204 = vmatprep.subr.mxu0 0.0
    %3205 = vmatpush1.msra.mxu0 0.0
    %3206 = vmatprep.subr.mxu0 0.0
    %3207 = vmatpush1.msra.mxu0 0.0
    %3208 = vmatprep.subr.mxu0 0.0
    %3209 = vmatpush1.msra.mxu0 0.0
    %3210 = vmatprep.subr.mxu0 0.0
    %3211 = vmatpush1.msra.mxu0 0.0
    %3212 = vmatprep.subr.mxu0 0.0
    %3213 = vmatpush1.msra.mxu0 0.0
    %3214 = vmatprep.subr.mxu0 0.0
    %3215 = vmatpush1.msra.mxu0 0.0
    %3216 = vmatprep.subr.mxu0 0.0
    %3217 = vmatpush1.msra.mxu0 0.0
    %3218 = vmatprep.subr.mxu0 0.0
    %3219 = vmatpush1.msra.mxu0 0.0
    %3220 = vmatprep.subr.mxu0 0.0
    %3221 = vmatpush1.msra.mxu0 0.0
    %3222 = vmatprep.subr.mxu0 0.0
    %3223 = vmatpush1.msra.mxu0 0.0
    %3224 = vmatprep.subr.mxu0 0.0
    %3225 = vmatpush1.msra.mxu0 0.0
    %3226 = vmatprep.subr.mxu0 0.0
    %3227 = vmatpush1.msra.mxu0 0.0
    %3228 = vmatprep.subr.mxu0 0.0
    %3229 = vmatpush1.msra.mxu0 0.0
    %3230 = vmatprep.subr.mxu0 0.0
    %3231 = vmatpush1.msra.mxu0 0.0
    %3232 = vmatprep.subr.mxu0 0.0
    %3233 = vmatpush1.msra.mxu0 0.0
    %3234 = vmatprep.mubr.f32.mxu0 0.0
    %3235 = vmatmul.mubr.f32.gmra.mrb[0].mxu0 %v3165
    %v3236 = vpop.f32.mrb[0].mxu0
    %v3237 = vadd.f32 0.0, %v3236
    %v3238 = vpop.f32.mrb[0].mxu0
    %3239 = vmatprep.mubr.f32.mxu0 0.0
    %3240 = vmatmul.mubr.f32.gmra.mrb[0].mxu0 %v3168
    %v3241 = vpop.f32.mrb[0].mxu0
    %v3242 = vadd.f32 0.0, %v3241
    %v3243 = vpop.f32.mrb[0].mxu0
    %3244 = vdwg.mxu0
    %v3246 = vsel %vm473, %v2865, 0
    %v3249 = vsel %vm473, %v2870, 0
    %v3252 = vsel %vm473, %v2955, 0
    %v3255 = vsel %vm473, %v2960, 0
    %3257 = vmatprep.subr.mxu0 0.0
    %3258 = vmatpush1.xpose.msra.mxu0 %v3252
    %3259 = vmatprep.subr.mxu0 0.0
    %3260 = vmatpush1.xpose.msra.mxu0 %v3255
    %3261 = vmatprep.subr.mxu0 0.0
    %3262 = vmatpush1.xpose.msra.mxu0 0.0
    %3263 = vmatprep.subr.mxu0 0.0
    %3264 = vmatpush1.xpose.msra.mxu0 0.0
    %3265 = vmatprep.subr.mxu0 0.0
    %3266 = vmatpush1.xpose.msra.mxu0 0.0
    %3267 = vmatprep.subr.mxu0 0.0
    %3268 = vmatpush1.xpose.msra.mxu0 0.0
    %3269 = vmatprep.subr.mxu0 0.0
    %3270 = vmatpush1.xpose.msra.mxu0 0.0
    %3271 = vmatprep.subr.mxu0 0.0
    %3272 = vmatpush1.xpose.msra.mxu0 0.0
    %3273 = vmatprep.subr.mxu0 0.0
    %3274 = vmatpush1.xpose.msra.mxu0 0.0
    %3275 = vmatprep.subr.mxu0 0.0
    %3276 = vmatpush1.xpose.msra.mxu0 0.0
    %3277 = vmatprep.subr.mxu0 0.0
    %3278 = vmatpush1.xpose.msra.mxu0 0.0
    %3279 = vmatprep.subr.mxu0 0.0
    %3280 = vmatpush1.xpose.msra.mxu0 0.0
    %3281 = vmatprep.subr.mxu0 0.0
    %3282 = vmatpush1.xpose.msra.mxu0 0.0
    %3283 = vmatprep.subr.mxu0 0.0
    %3284 = vmatpush1.xpose.msra.mxu0 0.0
    %3285 = vmatprep.subr.mxu0 0.0
    %3286 = vmatpush1.xpose.msra.mxu0 0.0
    %3287 = vmatprep.subr.mxu0 0.0
    %3288 = vmatpush1.xpose.msra.mxu0 0.0
    %3289 = vmatprep.subr.mxu0 0.0
    %3290 = vmatpush1.xpose.msra.mxu0 0.0
    %3291 = vmatprep.subr.mxu0 0.0
    %3292 = vmatpush1.xpose.msra.mxu0 0.0
    %3293 = vmatprep.subr.mxu0 0.0
    %3294 = vmatpush1.xpose.msra.mxu0 0.0
    %3295 = vmatprep.subr.mxu0 0.0
    %3296 = vmatpush1.xpose.msra.mxu0 0.0
    %3297 = vmatprep.subr.mxu0 0.0
    %3298 = vmatpush1.xpose.msra.mxu0 0.0
    %3299 = vmatprep.subr.mxu0 0.0
    %3300 = vmatpush1.xpose.msra.mxu0 0.0
    %3301 = vmatprep.subr.mxu0 0.0
    %3302 = vmatpush1.xpose.msra.mxu0 0.0
    %3303 = vmatprep.subr.mxu0 0.0
    %3304 = vmatpush1.xpose.msra.mxu0 0.0
    %3305 = vmatprep.subr.mxu0 0.0
    %3306 = vmatpush1.xpose.msra.mxu0 0.0
    %3307 = vmatprep.subr.mxu0 0.0
    %3308 = vmatpush1.xpose.msra.mxu0 0.0
    %3309 = vmatprep.subr.mxu0 0.0
    %3310 = vmatpush1.xpose.msra.mxu0 0.0
    %3311 = vmatprep.subr.mxu0 0.0
    %3312 = vmatpush1.xpose.msra.mxu0 0.0
    %3313 = vmatprep.subr.mxu0 0.0
    %3314 = vmatpush1.xpose.msra.mxu0 0.0
    %3315 = vmatprep.subr.mxu0 0.0
    %3316 = vmatpush1.xpose.msra.mxu0 0.0
    %3317 = vmatprep.subr.mxu0 0.0
    %3318 = vmatpush1.xpose.msra.mxu0 0.0
    %3319 = vmatprep.subr.mxu0 0.0
    %3320 = vmatpush1.xpose.msra.mxu0 0.0
    %3321 = vmatprep.mubr.f32.mxu0 0.0
    %3322 = vmatmul.mubr.f32.gmra.mrb[0].mxu0 %v3246
    %v3323 = vpop.f32.mrb[0].mxu0
    %v3324 = vadd.f32 0.0, %v3323
    %v3325 = vpop.f32.mrb[0].mxu0
    %3326 = vmatprep.mubr.f32.mxu0 0.0
    %3327 = vmatmul.mubr.f32.gmra.mrb[0].mxu0 %v3249
    %v3328 = vpop.f32.mrb[0].mxu0
    %v3329 = vadd.f32 0.0, %v3328
    %v3330 = vpop.f32.mrb[0].mxu0
    %3331 = vdwg.mxu0
    %v3332 = vmul.f32 %v3324, 0.25
    %v3333 = vmul.f32 %v3329, 0.25
    %v3334 = vsel %vm473, %v3332, -inf
    %3335 = vmax.xlane.f32.xlu0 %v3334
    %v3336 = vpop.xlane.xlu0 %3335
    %v3337 = vsel %vm473, %v3333, -inf
    %3338 = vmax.xlane.f32.xlu0 %v3337
    %v3339 = vpop.xlane.xlu0 %3338
    %v3340 = vsub.f32 %v3332, %v3336
    %v3341 = vsub.f32 %v3333, %v3339
    %v3342 = vmul.f32 %v3340, 1.442695
    %v3343 = vpow.pop %v3342
    %v3344 = vmul.f32 %v3341, 1.442695
    %v3345 = vpow.pop %v3344
    %v3346 = vsel %vm473, %v3343, 0.0
    %3347 = vadd.xlane.f32.xlu0 %v3346
    %v3348 = vpop.xlane.xlu0 %3347
    %v3349 = vsel %vm473, %v3345, 0.0
    %3350 = vadd.xlane.f32.xlu0 %v3349
    %v3351 = vpop.xlane.xlu0 %3350
    %v3352 = vrcp.pop %v3348
    %v3353 = vmul.f32 %v3343, %v3352
    %v3354 = vrcp.pop %v3351
    %v3355 = vmul.f32 %v3345, %v3354
    %v3357 = vsel %vm473, %v3353, 0
    %v3360 = vsel %vm473, %v3355, 0
    %3362 = vmatprep.subr.mxu0 0.0
    %3363 = vmatpush1.msra.mxu0 %v3045
    %3364 = vmatprep.subr.mxu0 0.0
    %3365 = vmatpush1.msra.mxu0 %v3050
    %3366 = vmatprep.subr.mxu0 0.0
    %3367 = vmatpush1.msra.mxu0 0.0
    %3368 = vmatprep.subr.mxu0 0.0
    %3369 = vmatpush1.msra.mxu0 0.0
    %3370 = vmatprep.subr.mxu0 0.0
    %3371 = vmatpush1.msra.mxu0 0.0
    %3372 = vmatprep.subr.mxu0 0.0
    %3373 = vmatpush1.msra.mxu0 0.0
    %3374 = vmatprep.subr.mxu0 0.0
    %3375 = vmatpush1.msra.mxu0 0.0
    %3376 = vmatprep.subr.mxu0 0.0
    %3377 = vmatpush1.msra.mxu0 0.0
    %3378 = vmatprep.subr.mxu0 0.0
    %3379 = vmatpush1.msra.mxu0 0.0
    %3380 = vmatprep.subr.mxu0 0.0
    %3381 = vmatpush1.msra.mxu0 0.0
    %3382 = vmatprep.subr.mxu0 0.0
    %3383 = vmatpush1.msra.mxu0 0.0
    %3384 = vmatprep.subr.mxu0 0.0
    %3385 = vmatpush1.msra.mxu0 0.0
    %3386 = vmatprep.subr.mxu0 0.0
    %3387 = vmatpush1.msra.mxu0 0.0
    %3388 = vmatprep.subr.mxu0 0.0
    %3389 = vmatpush1.msra.mxu0 0.0
    %3390 = vmatprep.subr.mxu0 0.0
    %3391 = vmatpush1.msra.mxu0 0.0
    %3392 = vmatprep.subr.mxu0 0.0
    %3393 = vmatpush1.msra.mxu0 0.0
    %3394 = vmatprep.subr.mxu0 0.0
    %3395 = vmatpush1.msra.mxu0 0.0
    %3396 = vmatprep.subr.mxu0 0.0
    %3397 = vmatpush1.msra.mxu0 0.0
    %3398 = vmatprep.subr.mxu0 0.0
    %3399 = vmatpush1.msra.mxu0 0.0
    %3400 = vmatprep.subr.mxu0 0.0
    %3401 = vmatpush1.msra.mxu0 0.0
    %3402 = vmatprep.subr.mxu0 0.0
    %3403 = vmatpush1.msra.mxu0 0.0
    %3404 = vmatprep.subr.mxu0 0.0
    %3405 = vmatpush1.msra.mxu0 0.0
    %3406 = vmatprep.subr.mxu0 0.0
    %3407 = vmatpush1.msra.mxu0 0.0
    %3408 = vmatprep.subr.mxu0 0.0
    %3409 = vmatpush1.msra.mxu0 0.0
    %3410 = vmatprep.subr.mxu0 0.0
    %3411 = vmatpush1.msra.mxu0 0.0
    %3412 = vmatprep.subr.mxu0 0.0
    %3413 = vmatpush1.msra.mxu0 0.0
    %3414 = vmatprep.subr.mxu0 0.0
    %3415 = vmatpush1.msra.mxu0 0.0
    %3416 = vmatprep.subr.mxu0 0.0
    %3417 = vmatpush1.msra.mxu0 0.0
    %3418 = vmatprep.subr.mxu0 0.0
    %3419 = vmatpush1.msra.mxu0 0.0
    %3420 = vmatprep.subr.mxu0 0.0
    %3421 = vmatpush1.msra.mxu0 0.0
    %3422 = vmatprep.subr.mxu0 0.0
    %3423 = vmatpush1.msra.mxu0 0.0
    %3424 = vmatprep.subr.mxu0 0.0
    %3425 = vmatpush1.msra.mxu0 0.0
    %3426 = vmatprep.mubr.f32.mxu0 0.0
    %3427 = vmatmul.mubr.f32.gmra.mrb[0].mxu0 %v3357
    %v3428 = vpop.f32.mrb[0].mxu0
    %v3429 = vadd.f32 0.0, %v3428
    %v3430 = vpop.f32.mrb[0].mxu0
    %3431 = vmatprep.mubr.f32.mxu0 0.0
    %3432 = vmatmul.mubr.f32.gmra.mrb[0].mxu0 %v3360
    %v3433 = vpop.f32.mrb[0].mxu0
    %v3434 = vadd.f32 0.0, %v3433
    %v3435 = vpop.f32.mrb[0].mxu0
    %3436 = vdwg.mxu0
    %s3437 = scalar_lea.vmem %s11, 96
    %v3438 = vld [vmem:[%s3437] sm:$0xff]
    %v3439 = vld [vmem:[%s3437 + $0x8] sm:$0xff]
    %v3440 = vld [vmem:[%s3437 + $0x10] sm:$0xff]
    %v3441 = vld [vmem:[%s3437 + $0x18] sm:$0xff]
    %v3443 = vsel %vm197, %v3237, 0
    %v3446 = vsel %vm197, %v3242, 0
    %v3449 = vsel %vm197, %v3429, 0
    %v3452 = vsel %vm197, %v3434, 0
    %3454 = vmatprep.subr.mxu0 0.0
    %3455 = vmatpush1.msra.mxu0 %v3438
    %3456 = vmatprep.subr.mxu0 0.0
    %3457 = vmatpush1.msra.mxu0 %v3439
    %3458 = vmatprep.subr.mxu0 0.0
    %3459 = vmatpush1.msra.mxu0 %v3440
    %3460 = vmatprep.subr.mxu0 0.0
    %3461 = vmatpush1.msra.mxu0 %v3441
    %3462 = vmatprep.subr.mxu0 0.0
    %3463 = vmatpush1.msra.mxu0 0.0
    %3464 = vmatprep.subr.mxu0 0.0
    %3465 = vmatpush1.msra.mxu0 0.0
    %3466 = vmatprep.subr.mxu0 0.0
    %3467 = vmatpush1.msra.mxu0 0.0
    %3468 = vmatprep.subr.mxu0 0.0
    %3469 = vmatpush1.msra.mxu0 0.0
    %3470 = vmatprep.subr.mxu0 0.0
    %3471 = vmatpush1.msra.mxu0 0.0
    %3472 = vmatprep.subr.mxu0 0.0
    %3473 = vmatpush1.msra.mxu0 0.0
    %3474 = vmatprep.subr.mxu0 0.0
    %3475 = vmatpush1.msra.mxu0 0.0
    %3476 = vmatprep.subr.mxu0 0.0
    %3477 = vmatpush1.msra.mxu0 0.0
    %3478 = vmatprep.subr.mxu0 0.0
    %3479 = vmatpush1.msra.mxu0 0.0
    %3480 = vmatprep.subr.mxu0 0.0
    %3481 = vmatpush1.msra.mxu0 0.0
    %3482 = vmatprep.subr.mxu0 0.0
    %3483 = vmatpush1.msra.mxu0 0.0
    %3484 = vmatprep.subr.mxu0 0.0
    %3485 = vmatpush1.msra.mxu0 0.0
    %3486 = vmatprep.subr.mxu0 0.0
    %3487 = vmatpush1.msra.mxu0 0.0
    %3488 = vmatprep.subr.mxu0 0.0
    %3489 = vmatpush1.msra.mxu0 0.0
    %3490 = vmatprep.subr.mxu0 0.0
    %3491 = vmatpush1.msra.mxu0 0.0
    %3492 = vmatprep.subr.mxu0 0.0
    %3493 = vmatpush1.msra.mxu0 0.0
    %3494 = vmatprep.subr.mxu0 0.0
    %3495 = vmatpush1.msra.mxu0 0.0
    %3496 = vmatprep.subr.mxu0 0.0
    %3497 = vmatpush1.msra.mxu0 0.0
    %3498 = vmatprep.subr.mxu0 0.0
    %3499 = vmatpush1.msra.mxu0 0.0
    %3500 = vmatprep.subr.mxu0 0.0
    %3501 = vmatpush1.msra.mxu0 0.0
    %3502 = vmatprep.subr.mxu0 0.0
    %3503 = vmatpush1.msra.mxu0 0.0
    %3504 = vmatprep.subr.mxu0 0.0
    %3505 = vmatpush1.msra.mxu0 0.0
    %3506 = vmatprep.subr.mxu0 0.0
    %3507 = vmatpush1.msra.mxu0 0.0
    %3508 = vmatprep.subr.mxu0 0.0
    %3509 = vmatpush1.msra.mxu0 0.0
    %3510 = vmatprep.subr.mxu0 0.0
    %3511 = vmatpush1.msra.mxu0 0.0
    %3512 = vmatprep.subr.mxu0 0.0
    %3513 = vmatpush1.msra.mxu0 0.0
    %3514 = vmatprep.subr.mxu0 0.0
    %3515 = vmatpush1.msra.mxu0 0.0
    %3516 = vmatprep.subr.mxu0 0.0
    %3517 = vmatpush1.msra.mxu0 0.0
    %3518 = vmatprep.mubr.f32.mxu0 0.0
    %3519 = vmatmul.mubr.f32.gmra.mrb[0].mxu0 %v3443
    %v3520 = vpop.f32.mrb[0].mxu0
    %v3521 = vadd.f32 0.0, %v3520
    %v3522 = vpop.f32.mrb[0].mxu0
    %3523 = vmatprep.mubr.f32.mxu0 0.0
    %3524 = vmatmul.mubr.f32.gmra.mrb[0].mxu0 %v3446
    %v3525 = vpop.f32.mrb[0].mxu0
    %v3526 = vadd.f32 0.0, %v3525
    %v3527 = vpop.f32.mrb[0].mxu0
    %3528 = vmatprep.mubr.f32.mxu0 0.0
    %3529 = vmatmul.mubr.f32.gmra.mrb[0].mxu0 %v3449
    %v3530 = vpop.f32.mrb[0].mxu0
    %v3531 = vadd.f32 0.0, %v3530
    %v3532 = vpop.f32.mrb[0].mxu0
    %3533 = vmatprep.mubr.f32.mxu0 0.0
    %3534 = vmatmul.mubr.f32.gmra.mrb[0].mxu0 %v3452
    %v3535 = vpop.f32.mrb[0].mxu0
    %v3536 = vadd.f32 0.0, %v3535
    %v3537 = vpop.f32.mrb[0].mxu0
    %3538 = vdwg.mxu0
    %v3540 = vsel %vm197, %v2578, 0
    %v3543 = vsel %vm197, %v2583, 0
    %v3546 = vsel %vm197, %v2770, 0
    %v3549 = vsel %vm197, %v2775, 0
    %3551 = vmatprep.subr.mxu0 0.0
    %3552 = vmatpush1.msra.mxu0 %v2779
    %3553 = vmatprep.subr.mxu0 0.0
    %3554 = vmatpush1.msra.mxu0 %v2780
    %3555 = vmatprep.subr.mxu0 0.0
    %3556 = vmatpush1.msra.mxu0 %v2781
    %3557 = vmatprep.subr.mxu0 0.0
    %3558 = vmatpush1.msra.mxu0 %v2782
    %3559 = vmatprep.subr.mxu0 0.0
    %3560 = vmatpush1.msra.mxu0 0.0
    %3561 = vmatprep.subr.mxu0 0.0
    %3562 = vmatpush1.msra.mxu0 0.0
    %3563 = vmatprep.subr.mxu0 0.0
    %3564 = vmatpush1.msra.mxu0 0.0
    %3565 = vmatprep.subr.mxu0 0.0
    %3566 = vmatpush1.msra.mxu0 0.0
    %3567 = vmatprep.subr.mxu0 0.0
    %3568 = vmatpush1.msra.mxu0 0.0
    %3569 = vmatprep.subr.mxu0 0.0
    %3570 = vmatpush1.msra.mxu0 0.0
    %3571 = vmatprep.subr.mxu0 0.0
    %3572 = vmatpush1.msra.mxu0 0.0
    %3573 = vmatprep.subr.mxu0 0.0
    %3574 = vmatpush1.msra.mxu0 0.0
    %3575 = vmatprep.subr.mxu0 0.0
    %3576 = vmatpush1.msra.mxu0 0.0
    %3577 = vmatprep.subr.mxu0 0.0
    %3578 = vmatpush1.msra.mxu0 0.0
    %3579 = vmatprep.subr.mxu0 0.0
    %3580 = vmatpush1.msra.mxu0 0.0
    %3581 = vmatprep.subr.mxu0 0.0
    %3582 = vmatpush1.msra.mxu0 0.0
    %3583 = vmatprep.subr.mxu0 0.0
    %3584 = vmatpush1.msra.mxu0 0.0
    %3585 = vmatprep.subr.mxu0 0.0
    %3586 = vmatpush1.msra.mxu0 0.0
    %3587 = vmatprep.subr.mxu0 0.0
    %3588 = vmatpush1.msra.mxu0 0.0
    %3589 = vmatprep.subr.mxu0 0.0
    %3590 = vmatpush1.msra.mxu0 0.0
    %3591 = vmatprep.subr.mxu0 0.0
    %3592 = vmatpush1.msra.mxu0 0.0
    %3593 = vmatprep.subr.mxu0 0.0
    %3594 = vmatpush1.msra.mxu0 0.0
    %3595 = vmatprep.subr.mxu0 0.0
    %3596 = vmatpush1.msra.mxu0 0.0
    %3597 = vmatprep.subr.mxu0 0.0
    %3598 = vmatpush1.msra.mxu0 0.0
    %3599 = vmatprep.subr.mxu0 0.0
    %3600 = vmatpush1.msra.mxu0 0.0
    %3601 = vmatprep.subr.mxu0 0.0
    %3602 = vmatpush1.msra.mxu0 0.0
    %3603 = vmatprep.subr.mxu0 0.0
    %3604 = vmatpush1.msra.mxu0 0.0
    %3605 = vmatprep.subr.mxu0 0.0
    %3606 = vmatpush1.msra.mxu0 0.0
    %3607 = vmatprep.subr.mxu0 0.0
    %3608 = vmatpush1.msra.mxu0 0.0
    %3609 = vmatprep.subr.mxu0 0.0
    %3610 = vmatpush1.msra.mxu0 0.0
    %3611 = vmatprep.subr.mxu0 0.0
    %3612 = vmatpush1.msra.mxu0 0.0
    %3613 = vmatprep.subr.mxu0 0.0
    %3614 = vmatpush1.msra.mxu0 0.0
    %3615 = vmatprep.mubr.f32.mxu0 0.0
    %3616 = vmatmul.mubr.f32.gmra.mrb[0].mxu0 %v3540
    %v3617 = vpop.f32.mrb[0].mxu0
    %v3618 = vadd.f32 %v3521, %v3617
    %v3619 = vpop.f32.mrb[0].mxu0
    %3620 = vmatprep.mubr.f32.mxu0 0.0
    %3621 = vmatmul.mubr.f32.gmra.mrb[0].mxu0 %v3543
    %v3622 = vpop.f32.mrb[0].mxu0
    %v3623 = vadd.f32 %v3526, %v3622
    %v3624 = vpop.f32.mrb[0].mxu0
    %3625 = vmatprep.mubr.f32.mxu0 0.0
    %3626 = vmatmul.mubr.f32.gmra.mrb[0].mxu0 %v3546
    %v3627 = vpop.f32.mrb[0].mxu0
    %v3628 = vadd.f32 %v3531, %v3627
    %v3629 = vpop.f32.mrb[0].mxu0
    %3630 = vmatprep.mubr.f32.mxu0 0.0
    %3631 = vmatmul.mubr.f32.gmra.mrb[0].mxu0 %v3549
    %v3632 = vpop.f32.mrb[0].mxu0
    %v3633 = vadd.f32 %v3536, %v3632
    %v3634 = vpop.f32.mrb[0].mxu0
    %3635 = vdwg.mxu0
    %v3636 = vadd.f32 %v2108, %v3618
    %v3637 = vadd.f32 %v2109, %v3623
    %v3638 = vadd.f32 %v2110, %v3628
    %v3639 = vadd.f32 %v2111, %v3633
    %s3640 = scalar_lea.vmem %s13, 1
    %v3641 = vld [vmem:[%s3640] sm:$0x1]
    %s3642 = scalar_lea.vmem %s15, 1
    %v3643 = vld [vmem:[%s3642] sm:$0x1]
    %v3644 = vsel %vm197, %v3636, 0.0
    %3645 = vadd.xlane.f32.xlu0 %v3644
    %v3646 = vpop.xlane.xlu0 %3645
    %v3647 = vsel %vm197, %v3637, 0.0
    %3648 = vadd.xlane.f32.xlu0 %v3647
    %v3649 = vpop.xlane.xlu0 %3648
    %v3650 = vsel %vm197, %v3638, 0.0
    %3651 = vadd.xlane.f32.xlu0 %v3650
    %v3652 = vpop.xlane.xlu0 %3651
    %v3653 = vsel %vm197, %v3639, 0.0
    %3654 = vadd.xlane.f32.xlu0 %v3653
    %v3655 = vpop.xlane.xlu0 %3654
    %v3656 = vmul.f32 %v3646, %v1733
    %v3657 = vmul.f32 %v3649, %v1733
    %v3658 = vmul.f32 %v3652, %v1733
    %v3659 = vmul.f32 %v3655, %v1733
    %v3660 = vsub.f32 %v3636, %v3656
    %v3661 = vsub.f32 %v3637, %v3657
    %v3662 = vsub.f32 %v3638, %v3658
    %v3663 = vsub.f32 %v3639, %v3659
    %v3664 = vmul.f32 %v3660, %v3660
    %v3665 = vmul.f32 %v3661, %v3661
    %v3666 = vmul.f32 %v3662, %v3662
    %v3667 = vmul.f32 %v3663, %v3663
    %v3668 = vsel %vm197, %v3664, 0.0
    %3669 = vadd.xlane.f32.xlu0 %v3668
    %v3670 = vpop.xlane.xlu0 %3669
    %v3671 = vsel %vm197, %v3665, 0.0
    %3672 = vadd.xlane.f32.xlu0 %v3671
    %v3673 = vpop.xlane.xlu0 %3672
    %v3674 = vsel %vm197, %v3666, 0.0
    %3675 = vadd.xlane.f32.xlu0 %v3674
    %v3676 = vpop.xlane.xlu0 %3675
    %v3677 = vsel %vm197, %v3667, 0.0
    %3678 = vadd.xlane.f32.xlu0 %v3677
    %v3679 = vpop.xlane.xlu0 %3678
    %v3680 = vmul.f32 %v3670, %v1733
    %v3681 = vmul.f32 %v3673, %v1733
    %v3682 = vmul.f32 %v3676, %v1733
    %v3683 = vmul.f32 %v3679, %v1733
    %v3684 = vadd.f32 %v3680, 1e-05
    %v3685 = vadd.f32 %v3681, 1e-05
    %v3686 = vadd.f32 %v3682, 1e-05
    %v3687 = vadd.f32 %v3683, 1e-05
    %v3688 = vrsqrt.pop %v3684
    %v3689 = vrsqrt.pop %v3685
    %v3690 = vrsqrt.pop %v3686
    %v3691 = vrsqrt.pop %v3687
    %v3692 = vmul.f32 %v3660, %v3688
    %v3693 = vmul.f32 %v3661, %v3689
    %v3694 = vmul.f32 %v3662, %v3690
    %v3695 = vmul.f32 %v3663, %v3691
    %v3697 = vlaneseq
    %v3698 = vshrl.u32 %v3697, 7
    %v3699 = vsub.s32 0, %v3698
    %v3700 = vrot.slane %v3641, %v3699
    %v3702 = vmul.f32 %v3692, %v3700
    %v3703 = vmul.f32 %v3693, %v3700
    %v3704 = vmul.f32 %v3694, %v3700
    %v3705 = vmul.f32 %v3695, %v3700
    %v3707 = vlaneseq
    %v3708 = vshrl.u32 %v3707, 7
    %v3709 = vsub.s32 0, %v3708
    %v3710 = vrot.slane %v3643, %v3709
    %v3712 = vadd.f32 %v3702, %v3710
    %v3713 = vadd.f32 %v3703, %v3710
    %v3714 = vadd.f32 %v3704, %v3710
    %v3715 = vadd.f32 %v3705, %v3710
    %s3716 = scalar_lea.vmem %s21, 32
    %v3717 = vld [vmem:[%s3716] sm:$0xff]
    %v3718 = vld [vmem:[%s3716 + $0x8] sm:$0xff]
    %v3719 = vld [vmem:[%s3716 + $0x10] sm:$0xff]
    %v3720 = vld [vmem:[%s3716 + $0x18] sm:$0xff]
    %s3721 = scalar_lea.vmem %s23, 1
    %v3722 = vld [vmem:[%s3721] sm:$0x1]
    %s3723 = scalar_lea.vmem %s17, 32
    %v3724 = vld [vmem:[%s3723] sm:$0xff]
    %v3725 = vld [vmem:[%s3723 + $0x8] sm:$0xff]
    %v3726 = vld [vmem:[%s3723 + $0x10] sm:$0xff]
    %v3727 = vld [vmem:[%s3723 + $0x18] sm:$0xff]
    %s3728 = scalar_lea.vmem %s19, 1
    %v3729 = vld [vmem:[%s3728] sm:$0x1]
    %v3731 = vlaneseq
    %v3732 = vshrl.u32 %v3731, 7
    %v3733 = vsub.s32 0, %v3732
    %v3734 = vrot.slane %v3722, %v3733
    %v3737 = vsel %vm197, %v3712, 0
    %v3740 = vsel %vm197, %v3713, 0
    %v3743 = vsel %vm197, %v3714, 0
    %v3746 = vsel %vm197, %v3715, 0
    %3748 = vmatprep.subr.mxu0 0.0
    %3749 = vmatpush1.msra.mxu0 %v3717
    %3750 = vmatprep.subr.mxu0 0.0
    %3751 = vmatpush1.msra.mxu0 %v3718
    %3752 = vmatprep.subr.mxu0 0.0
    %3753 = vmatpush1.msra.mxu0 %v3719
    %3754 = vmatprep.subr.mxu0 0.0
    %3755 = vmatpush1.msra.mxu0 %v3720
    %3756 = vmatprep.subr.mxu0 0.0
    %3757 = vmatpush1.msra.mxu0 0.0
    %3758 = vmatprep.subr.mxu0 0.0
    %3759 = vmatpush1.msra.mxu0 0.0
    %3760 = vmatprep.subr.mxu0 0.0
    %3761 = vmatpush1.msra.mxu0 0.0
    %3762 = vmatprep.subr.mxu0 0.0
    %3763 = vmatpush1.msra.mxu0 0.0
    %3764 = vmatprep.subr.mxu0 0.0
    %3765 = vmatpush1.msra.mxu0 0.0
    %3766 = vmatprep.subr.mxu0 0.0
    %3767 = vmatpush1.msra.mxu0 0.0
    %3768 = vmatprep.subr.mxu0 0.0
    %3769 = vmatpush1.msra.mxu0 0.0
    %3770 = vmatprep.subr.mxu0 0.0
    %3771 = vmatpush1.msra.mxu0 0.0
    %3772 = vmatprep.subr.mxu0 0.0
    %3773 = vmatpush1.msra.mxu0 0.0
    %3774 = vmatprep.subr.mxu0 0.0
    %3775 = vmatpush1.msra.mxu0 0.0
    %3776 = vmatprep.subr.mxu0 0.0
    %3777 = vmatpush1.msra.mxu0 0.0
    %3778 = vmatprep.subr.mxu0 0.0
    %3779 = vmatpush1.msra.mxu0 0.0
    %3780 = vmatprep.subr.mxu0 0.0
    %3781 = vmatpush1.msra.mxu0 0.0
    %3782 = vmatprep.subr.mxu0 0.0
    %3783 = vmatpush1.msra.mxu0 0.0
    %3784 = vmatprep.subr.mxu0 0.0
    %3785 = vmatpush1.msra.mxu0 0.0
    %3786 = vmatprep.subr.mxu0 0.0
    %3787 = vmatpush1.msra.mxu0 0.0
    %3788 = vmatprep.subr.mxu0 0.0
    %3789 = vmatpush1.msra.mxu0 0.0
    %3790 = vmatprep.subr.mxu0 0.0
    %3791 = vmatpush1.msra.mxu0 0.0
    %3792 = vmatprep.subr.mxu0 0.0
    %3793 = vmatpush1.msra.mxu0 0.0
    %3794 = vmatprep.subr.mxu0 0.0
    %3795 = vmatpush1.msra.mxu0 0.0
    %3796 = vmatprep.subr.mxu0 0.0
    %3797 = vmatpush1.msra.mxu0 0.0
    %3798 = vmatprep.subr.mxu0 0.0
    %3799 = vmatpush1.msra.mxu0 0.0
    %3800 = vmatprep.subr.mxu0 0.0
    %3801 = vmatpush1.msra.mxu0 0.0
    %3802 = vmatprep.subr.mxu0 0.0
    %3803 = vmatpush1.msra.mxu0 0.0
    %3804 = vmatprep.subr.mxu0 0.0
    %3805 = vmatpush1.msra.mxu0 0.0
    %3806 = vmatprep.subr.mxu0 0.0
    %3807 = vmatpush1.msra.mxu0 0.0
    %3808 = vmatprep.subr.mxu0 0.0
    %3809 = vmatpush1.msra.mxu0 0.0
    %3810 = vmatprep.subr.mxu0 0.0
    %3811 = vmatpush1.msra.mxu0 0.0
    %3812 = vmatprep.mubr.f32.mxu0 0.0
    %3813 = vmatmul.mubr.f32.gmra.mrb[0].mxu0 %v3737
    %v3814 = vpop.f32.mrb[0].mxu0
    %v3815 = vadd.f32 %v3734, %v3814
    %v3816 = vpop.f32.mrb[0].mxu0
    %3817 = vmatprep.mubr.f32.mxu0 0.0
    %3818 = vmatmul.mubr.f32.gmra.mrb[0].mxu0 %v3740
    %v3819 = vpop.f32.mrb[0].mxu0
    %v3820 = vadd.f32 %v3734, %v3819
    %v3821 = vpop.f32.mrb[0].mxu0
    %3822 = vmatprep.mubr.f32.mxu0 0.0
    %3823 = vmatmul.mubr.f32.gmra.mrb[0].mxu0 %v3743
    %v3824 = vpop.f32.mrb[0].mxu0
    %v3825 = vadd.f32 %v3734, %v3824
    %v3826 = vpop.f32.mrb[0].mxu0
    %3827 = vmatprep.mubr.f32.mxu0 0.0
    %3828 = vmatmul.mubr.f32.gmra.mrb[0].mxu0 %v3746
    %v3829 = vpop.f32.mrb[0].mxu0
    %v3830 = vadd.f32 %v3734, %v3829
    %v3831 = vpop.f32.mrb[0].mxu0
    %3832 = vdwg.mxu0
    %vm3833 = vcmp.gt.f32.partialorder %v3815, 0.0
    %vm3834 = vcmp.gt.f32.partialorder %v3820, 0.0
    %vm3835 = vcmp.gt.f32.partialorder %v3825, 0.0
    %vm3836 = vcmp.gt.f32.partialorder %v3830, 0.0
    %v3837 = vmin.f32 %v3815, 0.0
    %v3838 = vmin.f32 %v3820, 0.0
    %v3839 = vmin.f32 %v3825, 0.0
    %v3840 = vmin.f32 %v3830, 0.0
    %v3841 = vmul.f32 %v3837, 1.442695
    %v3842 = vpow.pop %v3841
    %v3843 = vmul.f32 %v3838, 1.442695
    %v3844 = vpow.pop %v3843
    %v3845 = vmul.f32 %v3839, 1.442695
    %v3846 = vpow.pop %v3845
    %v3847 = vmul.f32 %v3840, 1.442695
    %v3848 = vpow.pop %v3847
    %v3849 = vsub.f32 %v3842, 1.0
    %v3850 = vsub.f32 %v3844, 1.0
    %v3851 = vsub.f32 %v3846, 1.0
    %v3852 = vsub.f32 %v3848, 1.0
    %v3853 = vsel %vm3833, %v3815, %v3849
    %v3854 = vsel %vm3834, %v3820, %v3850
    %v3855 = vsel %vm3835, %v3825, %v3851
    %v3856 = vsel %vm3836, %v3830, %v3852
    %v3858 = vlaneseq
    %v3859 = vshrl.u32 %v3858, 7
    %v3860 = vsub.s32 0, %v3859
    %v3861 = vrot.slane %v3729, %v3860
    %v3864 = vsel %vm197, %v3853, 0
    %v3867 = vsel %vm197, %v3854, 0
    %v3870 = vsel %vm197, %v3855, 0
    %v3873 = vsel %vm197, %v3856, 0
    %3875 = vmatprep.subr.mxu0 0.0
    %3876 = vmatpush1.msra.mxu0 %v3724
    %3877 = vmatprep.subr.mxu0 0.0
    %3878 = vmatpush1.msra.mxu0 %v3725
    %3879 = vmatprep.subr.mxu0 0.0
    %3880 = vmatpush1.msra.mxu0 %v3726
    %3881 = vmatprep.subr.mxu0 0.0
    %3882 = vmatpush1.msra.mxu0 %v3727
    %3883 = vmatprep.subr.mxu0 0.0
    %3884 = vmatpush1.msra.mxu0 0.0
    %3885 = vmatprep.subr.mxu0 0.0
    %3886 = vmatpush1.msra.mxu0 0.0
    %3887 = vmatprep.subr.mxu0 0.0
    %3888 = vmatpush1.msra.mxu0 0.0
    %3889 = vmatprep.subr.mxu0 0.0
    %3890 = vmatpush1.msra.mxu0 0.0
    %3891 = vmatprep.subr.mxu0 0.0
    %3892 = vmatpush1.msra.mxu0 0.0
    %3893 = vmatprep.subr.mxu0 0.0
    %3894 = vmatpush1.msra.mxu0 0.0
    %3895 = vmatprep.subr.mxu0 0.0
    %3896 = vmatpush1.msra.mxu0 0.0
    %3897 = vmatprep.subr.mxu0 0.0
    %3898 = vmatpush1.msra.mxu0 0.0
    %3899 = vmatprep.subr.mxu0 0.0
    %3900 = vmatpush1.msra.mxu0 0.0
    %3901 = vmatprep.subr.mxu0 0.0
    %3902 = vmatpush1.msra.mxu0 0.0
    %3903 = vmatprep.subr.mxu0 0.0
    %3904 = vmatpush1.msra.mxu0 0.0
    %3905 = vmatprep.subr.mxu0 0.0
    %3906 = vmatpush1.msra.mxu0 0.0
    %3907 = vmatprep.subr.mxu0 0.0
    %3908 = vmatpush1.msra.mxu0 0.0
    %3909 = vmatprep.subr.mxu0 0.0
    %3910 = vmatpush1.msra.mxu0 0.0
    %3911 = vmatprep.subr.mxu0 0.0
    %3912 = vmatpush1.msra.mxu0 0.0
    %3913 = vmatprep.subr.mxu0 0.0
    %3914 = vmatpush1.msra.mxu0 0.0
    %3915 = vmatprep.subr.mxu0 0.0
    %3916 = vmatpush1.msra.mxu0 0.0
    %3917 = vmatprep.subr.mxu0 0.0
    %3918 = vmatpush1.msra.mxu0 0.0
    %3919 = vmatprep.subr.mxu0 0.0
    %3920 = vmatpush1.msra.mxu0 0.0
    %3921 = vmatprep.subr.mxu0 0.0
    %3922 = vmatpush1.msra.mxu0 0.0
    %3923 = vmatprep.subr.mxu0 0.0
    %3924 = vmatpush1.msra.mxu0 0.0
    %3925 = vmatprep.subr.mxu0 0.0
    %3926 = vmatpush1.msra.mxu0 0.0
    %3927 = vmatprep.subr.mxu0 0.0
    %3928 = vmatpush1.msra.mxu0 0.0
    %3929 = vmatprep.subr.mxu0 0.0
    %3930 = vmatpush1.msra.mxu0 0.0
    %3931 = vmatprep.subr.mxu0 0.0
    %3932 = vmatpush1.msra.mxu0 0.0
    %3933 = vmatprep.subr.mxu0 0.0
    %3934 = vmatpush1.msra.mxu0 0.0
    %3935 = vmatprep.subr.mxu0 0.0
    %3936 = vmatpush1.msra.mxu0 0.0
    %3937 = vmatprep.subr.mxu0 0.0
    %3938 = vmatpush1.msra.mxu0 0.0
    %3939 = vmatprep.mubr.f32.mxu0 0.0
    %3940 = vmatmul.mubr.f32.gmra.mrb[0].mxu0 %v3864
    %v3941 = vpop.f32.mrb[0].mxu0
    %v3942 = vadd.f32 %v3861, %v3941
    %v3943 = vpop.f32.mrb[0].mxu0
    %3944 = vmatprep.mubr.f32.mxu0 0.0
    %3945 = vmatmul.mubr.f32.gmra.mrb[0].mxu0 %v3867
    %v3946 = vpop.f32.mrb[0].mxu0
    %v3947 = vadd.f32 %v3861, %v3946
    %v3948 = vpop.f32.mrb[0].mxu0
    %3949 = vmatprep.mubr.f32.mxu0 0.0
    %3950 = vmatmul.mubr.f32.gmra.mrb[0].mxu0 %v3870
    %v3951 = vpop.f32.mrb[0].mxu0
    %v3952 = vadd.f32 %v3861, %v3951
    %v3953 = vpop.f32.mrb[0].mxu0
    %3954 = vmatprep.mubr.f32.mxu0 0.0
    %3955 = vmatmul.mubr.f32.gmra.mrb[0].mxu0 %v3873
    %v3956 = vpop.f32.mrb[0].mxu0
    %v3957 = vadd.f32 %v3861, %v3956
    %v3958 = vpop.f32.mrb[0].mxu0
    %3959 = vdwg.mxu0
    %v3960 = vadd.f32 %v3712, %v3942
    %v3961 = vadd.f32 %v3713, %v3947
    %v3962 = vadd.f32 %v3714, %v3952
    %v3963 = vadd.f32 %v3715, %v3957
    %s3964 = scalar_lea.vmem %s25, 1
    %v3965 = vld [vmem:[%s3964] sm:$0x1]
    %s3966 = scalar_lea.vmem %s27, 1
    %v3967 = vld [vmem:[%s3966] sm:$0x1]
    %v3968 = vsel %vm197, %v3960, 0.0
    %3969 = vadd.xlane.f32.xlu0 %v3968
    %v3970 = vpop.xlane.xlu0 %3969
    %v3971 = vsel %vm197, %v3961, 0.0
    %3972 = vadd.xlane.f32.xlu0 %v3971
    %v3973 = vpop.xlane.xlu0 %3972
    %v3974 = vsel %vm197, %v3962, 0.0
    %3975 = vadd.xlane.f32.xlu0 %v3974
    %v3976 = vpop.xlane.xlu0 %3975
    %v3977 = vsel %vm197, %v3963, 0.0
    %3978 = vadd.xlane.f32.xlu0 %v3977
    %v3979 = vpop.xlane.xlu0 %3978
    %v3980 = vmul.f32 %v3970, %v1733
    %v3981 = vmul.f32 %v3973, %v1733
    %v3982 = vmul.f32 %v3976, %v1733
    %v3983 = vmul.f32 %v3979, %v1733
    %v3984 = vsub.f32 %v3960, %v3980
    %v3985 = vsub.f32 %v3961, %v3981
    %v3986 = vsub.f32 %v3962, %v3982
    %v3987 = vsub.f32 %v3963, %v3983
    %v3988 = vmul.f32 %v3984, %v3984
    %v3989 = vmul.f32 %v3985, %v3985
    %v3990 = vmul.f32 %v3986, %v3986
    %v3991 = vmul.f32 %v3987, %v3987
    %v3992 = vsel %vm197, %v3988, 0.0
    %3993 = vadd.xlane.f32.xlu0 %v3992
    %v3994 = vpop.xlane.xlu0 %3993
    %v3995 = vsel %vm197, %v3989, 0.0
    %3996 = vadd.xlane.f32.xlu0 %v3995
    %v3997 = vpop.xlane.xlu0 %3996
    %v3998 = vsel %vm197, %v3990, 0.0
    %3999 = vadd.xlane.f32.xlu0 %v3998
    %v4000 = vpop.xlane.xlu0 %3999
    %v4001 = vsel %vm197, %v3991, 0.0
    %4002 = vadd.xlane.f32.xlu0 %v4001
    %v4003 = vpop.xlane.xlu0 %4002
    %v4004 = vmul.f32 %v3994, %v1733
    %v4005 = vmul.f32 %v3997, %v1733
    %v4006 = vmul.f32 %v4000, %v1733
    %v4007 = vmul.f32 %v4003, %v1733
    %v4008 = vadd.f32 %v4004, 1e-05
    %v4009 = vadd.f32 %v4005, 1e-05
    %v4010 = vadd.f32 %v4006, 1e-05
    %v4011 = vadd.f32 %v4007, 1e-05
    %v4012 = vrsqrt.pop %v4008
    %v4013 = vrsqrt.pop %v4009
    %v4014 = vrsqrt.pop %v4010
    %v4015 = vrsqrt.pop %v4011
    %v4016 = vmul.f32 %v3984, %v4012
    %v4017 = vmul.f32 %v3985, %v4013
    %v4018 = vmul.f32 %v3986, %v4014
    %v4019 = vmul.f32 %v3987, %v4015
    %v4021 = vlaneseq
    %v4022 = vshrl.u32 %v4021, 7
    %v4023 = vsub.s32 0, %v4022
    %v4024 = vrot.slane %v3965, %v4023
    %v4026 = vmul.f32 %v4016, %v4024
    %v4027 = vmul.f32 %v4017, %v4024
    %v4028 = vmul.f32 %v4018, %v4024
    %v4029 = vmul.f32 %v4019, %v4024
    %v4031 = vlaneseq
    %v4032 = vshrl.u32 %v4031, 7
    %v4033 = vsub.s32 0, %v4032
    %v4034 = vrot.slane %v3967, %v4033
    %v4036 = vadd.f32 %v4026, %v4034
    %v4037 = vadd.f32 %v4027, %v4034
    %v4038 = vadd.f32 %v4028, %v4034
    %v4039 = vadd.f32 %v4029, %v4034
    %v4040 = vld [vmem:[%s3] sm:$0xff]
    %v4041 = vld [vmem:[%s3 + $0x8] sm:$0xff]
    %v4042 = vld [vmem:[%s29] sm:$0xff]
    %v4043 = vld [vmem:[%s29 + $0x8] sm:$0xff]
    %v4044 = vld [vmem:[%s29 + $0x10] sm:$0xff]
    %v4045 = vld [vmem:[%s29 + $0x18] sm:$0xff]
    %v4047 = vsel %vm197, %v4040, 0
    %v4050 = vsel %vm197, %v4041, 0
    %4052 = vmatprep.subr.mxu0 0.0
    %4053 = vmatpush1.msra.mxu0 %v4042
    %4054 = vmatprep.subr.mxu0 0.0
    %4055 = vmatpush1.msra.mxu0 %v4043
    %4056 = vmatprep.subr.mxu0 0.0
    %4057 = vmatpush1.msra.mxu0 %v4044
    %4058 = vmatprep.subr.mxu0 0.0
    %4059 = vmatpush1.msra.mxu0 %v4045
    %4060 = vmatprep.subr.mxu0 0.0
    %4061 = vmatpush1.msra.mxu0 0.0
    %4062 = vmatprep.subr.mxu0 0.0
    %4063 = vmatpush1.msra.mxu0 0.0
    %4064 = vmatprep.subr.mxu0 0.0
    %4065 = vmatpush1.msra.mxu0 0.0
    %4066 = vmatprep.subr.mxu0 0.0
    %4067 = vmatpush1.msra.mxu0 0.0
    %4068 = vmatprep.subr.mxu0 0.0
    %4069 = vmatpush1.msra.mxu0 0.0
    %4070 = vmatprep.subr.mxu0 0.0
    %4071 = vmatpush1.msra.mxu0 0.0
    %4072 = vmatprep.subr.mxu0 0.0
    %4073 = vmatpush1.msra.mxu0 0.0
    %4074 = vmatprep.subr.mxu0 0.0
    %4075 = vmatpush1.msra.mxu0 0.0
    %4076 = vmatprep.subr.mxu0 0.0
    %4077 = vmatpush1.msra.mxu0 0.0
    %4078 = vmatprep.subr.mxu0 0.0
    %4079 = vmatpush1.msra.mxu0 0.0
    %4080 = vmatprep.subr.mxu0 0.0
    %4081 = vmatpush1.msra.mxu0 0.0
    %4082 = vmatprep.subr.mxu0 0.0
    %4083 = vmatpush1.msra.mxu0 0.0
    %4084 = vmatprep.subr.mxu0 0.0
    %4085 = vmatpush1.msra.mxu0 0.0
    %4086 = vmatprep.subr.mxu0 0.0
    %4087 = vmatpush1.msra.mxu0 0.0
    %4088 = vmatprep.subr.mxu0 0.0
    %4089 = vmatpush1.msra.mxu0 0.0
    %4090 = vmatprep.subr.mxu0 0.0
    %4091 = vmatpush1.msra.mxu0 0.0
    %4092 = vmatprep.subr.mxu0 0.0
    %4093 = vmatpush1.msra.mxu0 0.0
    %4094 = vmatprep.subr.mxu0 0.0
    %4095 = vmatpush1.msra.mxu0 0.0
    %4096 = vmatprep.subr.mxu0 0.0
    %4097 = vmatpush1.msra.mxu0 0.0
    %4098 = vmatprep.subr.mxu0 0.0
    %4099 = vmatpush1.msra.mxu0 0.0
    %4100 = vmatprep.subr.mxu0 0.0
    %4101 = vmatpush1.msra.mxu0 0.0
    %4102 = vmatprep.subr.mxu0 0.0
    %4103 = vmatpush1.msra.mxu0 0.0
    %4104 = vmatprep.subr.mxu0 0.0
    %4105 = vmatpush1.msra.mxu0 0.0
    %4106 = vmatprep.subr.mxu0 0.0
    %4107 = vmatpush1.msra.mxu0 0.0
    %4108 = vmatprep.subr.mxu0 0.0
    %4109 = vmatpush1.msra.mxu0 0.0
    %4110 = vmatprep.subr.mxu0 0.0
    %4111 = vmatpush1.msra.mxu0 0.0
    %4112 = vmatprep.subr.mxu0 0.0
    %4113 = vmatpush1.msra.mxu0 0.0
    %4114 = vmatprep.subr.mxu0 0.0
    %4115 = vmatpush1.msra.mxu0 0.0
    %4116 = vmatprep.mubr.f32.mxu0 0.0
    %4117 = vmatmul.mubr.f32.gmra.mrb[0].mxu0 %v4047
    %v4118 = vpop.f32.mrb[0].mxu0
    %v4119 = vadd.f32 0.0, %v4118
    %v4120 = vpop.f32.mrb[0].mxu0
    %4121 = vmatprep.mubr.f32.mxu0 0.0
    %4122 = vmatmul.mubr.f32.gmra.mrb[0].mxu0 %v4050
    %v4123 = vpop.f32.mrb[0].mxu0
    %v4124 = vadd.f32 0.0, %v4123
    %v4125 = vpop.f32.mrb[0].mxu0
    %4126 = vdwg.mxu0
    %v4127 = vld [vmem:[%s31] sm:$0xff]
    %v4128 = vld [vmem:[%s31 + $0x8] sm:$0xff]
    %v4129 = vld [vmem:[%s31 + $0x10] sm:$0xff]
    %v4130 = vld [vmem:[%s31 + $0x18] sm:$0xff]
    %4131 = vmatprep.subr.mxu0 0.0
    %4132 = vmatpush1.msra.mxu0 %v4127
    %4133 = vmatprep.subr.mxu0 0.0
    %4134 = vmatpush1.msra.mxu0 %v4128
    %4135 = vmatprep.subr.mxu0 0.0
    %4136 = vmatpush1.msra.mxu0 %v4129
    %4137 = vmatprep.subr.mxu0 0.0
    %4138 = vmatpush1.msra.mxu0 %v4130
    %4139 = vmatprep.subr.mxu0 0.0
    %4140 = vmatpush1.msra.mxu0 0.0
    %4141 = vmatprep.subr.mxu0 0.0
    %4142 = vmatpush1.msra.mxu0 0.0
    %4143 = vmatprep.subr.mxu0 0.0
    %4144 = vmatpush1.msra.mxu0 0.0
    %4145 = vmatprep.subr.mxu0 0.0
    %4146 = vmatpush1.msra.mxu0 0.0
    %4147 = vmatprep.subr.mxu0 0.0
    %4148 = vmatpush1.msra.mxu0 0.0
    %4149 = vmatprep.subr.mxu0 0.0
    %4150 = vmatpush1.msra.mxu0 0.0
    %4151 = vmatprep.subr.mxu0 0.0
    %4152 = vmatpush1.msra.mxu0 0.0
    %4153 = vmatprep.subr.mxu0 0.0
    %4154 = vmatpush1.msra.mxu0 0.0
    %4155 = vmatprep.subr.mxu0 0.0
    %4156 = vmatpush1.msra.mxu0 0.0
    %4157 = vmatprep.subr.mxu0 0.0
    %4158 = vmatpush1.msra.mxu0 0.0
    %4159 = vmatprep.subr.mxu0 0.0
    %4160 = vmatpush1.msra.mxu0 0.0
    %4161 = vmatprep.subr.mxu0 0.0
    %4162 = vmatpush1.msra.mxu0 0.0
    %4163 = vmatprep.subr.mxu0 0.0
    %4164 = vmatpush1.msra.mxu0 0.0
    %4165 = vmatprep.subr.mxu0 0.0
    %4166 = vmatpush1.msra.mxu0 0.0
    %4167 = vmatprep.subr.mxu0 0.0
    %4168 = vmatpush1.msra.mxu0 0.0
    %4169 = vmatprep.subr.mxu0 0.0
    %4170 = vmatpush1.msra.mxu0 0.0
    %4171 = vmatprep.subr.mxu0 0.0
    %4172 = vmatpush1.msra.mxu0 0.0
    %4173 = vmatprep.subr.mxu0 0.0
    %4174 = vmatpush1.msra.mxu0 0.0
    %4175 = vmatprep.subr.mxu0 0.0
    %4176 = vmatpush1.msra.mxu0 0.0
    %4177 = vmatprep.subr.mxu0 0.0
    %4178 = vmatpush1.msra.mxu0 0.0
    %4179 = vmatprep.subr.mxu0 0.0
    %4180 = vmatpush1.msra.mxu0 0.0
    %4181 = vmatprep.subr.mxu0 0.0
    %4182 = vmatpush1.msra.mxu0 0.0
    %4183 = vmatprep.subr.mxu0 0.0
    %4184 = vmatpush1.msra.mxu0 0.0
    %4185 = vmatprep.subr.mxu0 0.0
    %4186 = vmatpush1.msra.mxu0 0.0
    %4187 = vmatprep.subr.mxu0 0.0
    %4188 = vmatpush1.msra.mxu0 0.0
    %4189 = vmatprep.subr.mxu0 0.0
    %4190 = vmatpush1.msra.mxu0 0.0
    %4191 = vmatprep.subr.mxu0 0.0
    %4192 = vmatpush1.msra.mxu0 0.0
    %4193 = vmatprep.subr.mxu0 0.0
    %4194 = vmatpush1.msra.mxu0 0.0
    %4195 = vmatprep.mubr.f32.mxu0 0.0
    %4196 = vmatmul.mubr.f32.gmra.mrb[0].mxu0 %v4047
    %v4197 = vpop.f32.mrb[0].mxu0
    %v4198 = vadd.f32 0.0, %v4197
    %v4199 = vpop.f32.mrb[0].mxu0
    %4200 = vmatprep.mubr.f32.mxu0 0.0
    %4201 = vmatmul.mubr.f32.gmra.mrb[0].mxu0 %v4050
    %v4202 = vpop.f32.mrb[0].mxu0
    %v4203 = vadd.f32 0.0, %v4202
    %v4204 = vpop.f32.mrb[0].mxu0
    %4205 = vdwg.mxu0
    %v4206 = vld [vmem:[%s33] sm:$0xff]
    %v4207 = vld [vmem:[%s33 + $0x8] sm:$0xff]
    %v4208 = vld [vmem:[%s33 + $0x10] sm:$0xff]
    %v4209 = vld [vmem:[%s33 + $0x18] sm:$0xff]
    %4210 = vmatprep.subr.mxu0 0.0
    %4211 = vmatpush1.msra.mxu0 %v4206
    %4212 = vmatprep.subr.mxu0 0.0
    %4213 = vmatpush1.msra.mxu0 %v4207
    %4214 = vmatprep.subr.mxu0 0.0
    %4215 = vmatpush1.msra.mxu0 %v4208
    %4216 = vmatprep.subr.mxu0 0.0
    %4217 = vmatpush1.msra.mxu0 %v4209
    %4218 = vmatprep.subr.mxu0 0.0
    %4219 = vmatpush1.msra.mxu0 0.0
    %4220 = vmatprep.subr.mxu0 0.0
    %4221 = vmatpush1.msra.mxu0 0.0
    %4222 = vmatprep.subr.mxu0 0.0
    %4223 = vmatpush1.msra.mxu0 0.0
    %4224 = vmatprep.subr.mxu0 0.0
    %4225 = vmatpush1.msra.mxu0 0.0
    %4226 = vmatprep.subr.mxu0 0.0
    %4227 = vmatpush1.msra.mxu0 0.0
    %4228 = vmatprep.subr.mxu0 0.0
    %4229 = vmatpush1.msra.mxu0 0.0
    %4230 = vmatprep.subr.mxu0 0.0
    %4231 = vmatpush1.msra.mxu0 0.0
    %4232 = vmatprep.subr.mxu0 0.0
    %4233 = vmatpush1.msra.mxu0 0.0
    %4234 = vmatprep.subr.mxu0 0.0
    %4235 = vmatpush1.msra.mxu0 0.0
    %4236 = vmatprep.subr.mxu0 0.0
    %4237 = vmatpush1.msra.mxu0 0.0
    %4238 = vmatprep.subr.mxu0 0.0
    %4239 = vmatpush1.msra.mxu0 0.0
    %4240 = vmatprep.subr.mxu0 0.0
    %4241 = vmatpush1.msra.mxu0 0.0
    %4242 = vmatprep.subr.mxu0 0.0
    %4243 = vmatpush1.msra.mxu0 0.0
    %4244 = vmatprep.subr.mxu0 0.0
    %4245 = vmatpush1.msra.mxu0 0.0
    %4246 = vmatprep.subr.mxu0 0.0
    %4247 = vmatpush1.msra.mxu0 0.0
    %4248 = vmatprep.subr.mxu0 0.0
    %4249 = vmatpush1.msra.mxu0 0.0
    %4250 = vmatprep.subr.mxu0 0.0
    %4251 = vmatpush1.msra.mxu0 0.0
    %4252 = vmatprep.subr.mxu0 0.0
    %4253 = vmatpush1.msra.mxu0 0.0
    %4254 = vmatprep.subr.mxu0 0.0
    %4255 = vmatpush1.msra.mxu0 0.0
    %4256 = vmatprep.subr.mxu0 0.0
    %4257 = vmatpush1.msra.mxu0 0.0
    %4258 = vmatprep.subr.mxu0 0.0
    %4259 = vmatpush1.msra.mxu0 0.0
    %4260 = vmatprep.subr.mxu0 0.0
    %4261 = vmatpush1.msra.mxu0 0.0
    %4262 = vmatprep.subr.mxu0 0.0
    %4263 = vmatpush1.msra.mxu0 0.0
    %4264 = vmatprep.subr.mxu0 0.0
    %4265 = vmatpush1.msra.mxu0 0.0
    %4266 = vmatprep.subr.mxu0 0.0
    %4267 = vmatpush1.msra.mxu0 0.0
    %4268 = vmatprep.subr.mxu0 0.0
    %4269 = vmatpush1.msra.mxu0 0.0
    %4270 = vmatprep.subr.mxu0 0.0
    %4271 = vmatpush1.msra.mxu0 0.0
    %4272 = vmatprep.subr.mxu0 0.0
    %4273 = vmatpush1.msra.mxu0 0.0
    %4274 = vmatprep.mubr.f32.mxu0 0.0
    %4275 = vmatmul.mubr.f32.gmra.mrb[0].mxu0 %v4047
    %v4276 = vpop.f32.mrb[0].mxu0
    %v4277 = vadd.f32 0.0, %v4276
    %v4278 = vpop.f32.mrb[0].mxu0
    %4279 = vmatprep.mubr.f32.mxu0 0.0
    %4280 = vmatmul.mubr.f32.gmra.mrb[0].mxu0 %v4050
    %v4281 = vpop.f32.mrb[0].mxu0
    %v4282 = vadd.f32 0.0, %v4281
    %v4283 = vpop.f32.mrb[0].mxu0
    %4284 = vdwg.mxu0
    %v4286 = vsel %vm473, %v4119, 0
    %v4289 = vsel %vm473, %v4198, 0
    %4291 = vmatprep.subr.mxu0 0.0
    %4292 = vmatpush1.xpose.msra.mxu0 %v4289
    %4293 = vmatprep.subr.mxu0 0.0
    %4294 = vmatpush1.xpose.msra.mxu0 0.0
    %4295 = vmatprep.subr.mxu0 0.0
    %4296 = vmatpush1.xpose.msra.mxu0 0.0
    %4297 = vmatprep.subr.mxu0 0.0
    %4298 = vmatpush1.xpose.msra.mxu0 0.0
    %4299 = vmatprep.subr.mxu0 0.0
    %4300 = vmatpush1.xpose.msra.mxu0 0.0
    %4301 = vmatprep.subr.mxu0 0.0
    %4302 = vmatpush1.xpose.msra.mxu0 0.0
    %4303 = vmatprep.subr.mxu0 0.0
    %4304 = vmatpush1.xpose.msra.mxu0 0.0
    %4305 = vmatprep.subr.mxu0 0.0
    %4306 = vmatpush1.xpose.msra.mxu0 0.0
    %4307 = vmatprep.subr.mxu0 0.0
    %4308 = vmatpush1.xpose.msra.mxu0 0.0
    %4309 = vmatprep.subr.mxu0 0.0
    %4310 = vmatpush1.xpose.msra.mxu0 0.0
    %4311 = vmatprep.subr.mxu0 0.0
    %4312 = vmatpush1.xpose.msra.mxu0 0.0
    %4313 = vmatprep.subr.mxu0 0.0
    %4314 = vmatpush1.xpose.msra.mxu0 0.0
    %4315 = vmatprep.subr.mxu0 0.0
    %4316 = vmatpush1.xpose.msra.mxu0 0.0
    %4317 = vmatprep.subr.mxu0 0.0
    %4318 = vmatpush1.xpose.msra.mxu0 0.0
    %4319 = vmatprep.subr.mxu0 0.0
    %4320 = vmatpush1.xpose.msra.mxu0 0.0
    %4321 = vmatprep.subr.mxu0 0.0
    %4322 = vmatpush1.xpose.msra.mxu0 0.0
    %4323 = vmatprep.subr.mxu0 0.0
    %4324 = vmatpush1.xpose.msra.mxu0 0.0
    %4325 = vmatprep.subr.mxu0 0.0
    %4326 = vmatpush1.xpose.msra.mxu0 0.0
    %4327 = vmatprep.subr.mxu0 0.0
    %4328 = vmatpush1.xpose.msra.mxu0 0.0
    %4329 = vmatprep.subr.mxu0 0.0
    %4330 = vmatpush1.xpose.msra.mxu0 0.0
    %4331 = vmatprep.subr.mxu0 0.0
    %4332 = vmatpush1.xpose.msra.mxu0 0.0
    %4333 = vmatprep.subr.mxu0 0.0
    %4334 = vmatpush1.xpose.msra.mxu0 0.0
    %4335 = vmatprep.subr.mxu0 0.0
    %4336 = vmatpush1.xpose.msra.mxu0 0.0
    %4337 = vmatprep.subr.mxu0 0.0
    %4338 = vmatpush1.xpose.msra.mxu0 0.0
    %4339 = vmatprep.subr.mxu0 0.0
    %4340 = vmatpush1.xpose.msra.mxu0 0.0
    %4341 = vmatprep.subr.mxu0 0.0
    %4342 = vmatpush1.xpose.msra.mxu0 0.0
    %4343 = vmatprep.subr.mxu0 0.0
    %4344 = vmatpush1.xpose.msra.mxu0 0.0
    %4345 = vmatprep.subr.mxu0 0.0
    %4346 = vmatpush1.xpose.msra.mxu0 0.0
    %4347 = vmatprep.subr.mxu0 0.0
    %4348 = vmatpush1.xpose.msra.mxu0 0.0
    %4349 = vmatprep.subr.mxu0 0.0
    %4350 = vmatpush1.xpose.msra.mxu0 0.0
    %4351 = vmatprep.subr.mxu0 0.0
    %4352 = vmatpush1.xpose.msra.mxu0 0.0
    %4353 = vmatprep.subr.mxu0 0.0
    %4354 = vmatpush1.xpose.msra.mxu0 0.0
    %4355 = vmatprep.mubr.f32.mxu0 0.0
    %4356 = vmatmul.mubr.f32.gmra.mrb[0].mxu0 %v4286
    %v4357 = vpop.f32.mrb[0].mxu0
    %v4358 = vadd.f32 0.0, %v4357
    %v4359 = vpop.f32.mrb[0].mxu0
    %4360 = vdwg.mxu0
    %v4361 = vmul.f32 %v4358, 0.25
    %vm4362 = vcmask 64512
    %v4363 = vsel %vm4362, %v4361, -inf
    %4364 = vmax.xlane.f32.xlu0 %v4363
    %v4365 = vpop.xlane.xlu0 %4364
    %v4366 = vsub.f32 %v4361, %v4365
    %v4367 = vmul.f32 %v4366, 1.442695
    %v4368 = vpow.pop %v4367
    %v4369 = vsel %vm4362, %v4368, 0.0
    %4370 = vadd.xlane.f32.xlu0 %v4369
    %v4371 = vpop.xlane.xlu0 %4370
    %v4372 = vrcp.pop %v4371
    %v4373 = vmul.f32 %v4368, %v4372
    %v4375 = vsel %vm4362, %v4373, 0
    %4377 = vmatprep.subr.mxu0 0.0
    %4378 = vmatpush1.msra.mxu0 %v4277
    %4379 = vmatprep.subr.mxu0 0.0
    %4380 = vmatpush1.msra.mxu0 0.0
    %4381 = vmatprep.subr.mxu0 0.0
    %4382 = vmatpush1.msra.mxu0 0.0
    %4383 = vmatprep.subr.mxu0 0.0
    %4384 = vmatpush1.msra.mxu0 0.0
    %4385 = vmatprep.subr.mxu0 0.0
    %4386 = vmatpush1.msra.mxu0 0.0
    %4387 = vmatprep.subr.mxu0 0.0
    %4388 = vmatpush1.msra.mxu0 0.0
    %4389 = vmatprep.subr.mxu0 0.0
    %4390 = vmatpush1.msra.mxu0 0.0
    %4391 = vmatprep.subr.mxu0 0.0
    %4392 = vmatpush1.msra.mxu0 0.0
    %4393 = vmatprep.subr.mxu0 0.0
    %4394 = vmatpush1.msra.mxu0 0.0
    %4395 = vmatprep.subr.mxu0 0.0
    %4396 = vmatpush1.msra.mxu0 0.0
    %4397 = vmatprep.subr.mxu0 0.0
    %4398 = vmatpush1.msra.mxu0 0.0
    %4399 = vmatprep.subr.mxu0 0.0
    %4400 = vmatpush1.msra.mxu0 0.0
    %4401 = vmatprep.subr.mxu0 0.0
    %4402 = vmatpush1.msra.mxu0 0.0
    %4403 = vmatprep.subr.mxu0 0.0
    %4404 = vmatpush1.msra.mxu0 0.0
    %4405 = vmatprep.subr.mxu0 0.0
    %4406 = vmatpush1.msra.mxu0 0.0
    %4407 = vmatprep.subr.mxu0 0.0
    %4408 = vmatpush1.msra.mxu0 0.0
    %4409 = vmatprep.subr.mxu0 0.0
    %4410 = vmatpush1.msra.mxu0 0.0
    %4411 = vmatprep.subr.mxu0 0.0
    %4412 = vmatpush1.msra.mxu0 0.0
    %4413 = vmatprep.subr.mxu0 0.0
    %4414 = vmatpush1.msra.mxu0 0.0
    %4415 = vmatprep.subr.mxu0 0.0
    %4416 = vmatpush1.msra.mxu0 0.0
    %4417 = vmatprep.subr.mxu0 0.0
    %4418 = vmatpush1.msra.mxu0 0.0
    %4419 = vmatprep.subr.mxu0 0.0
    %4420 = vmatpush1.msra.mxu0 0.0
    %4421 = vmatprep.subr.mxu0 0.0
    %4422 = vmatpush1.msra.mxu0 0.0
    %4423 = vmatprep.subr.mxu0 0.0
    %4424 = vmatpush1.msra.mxu0 0.0
    %4425 = vmatprep.subr.mxu0 0.0
    %4426 = vmatpush1.msra.mxu0 0.0
    %4427 = vmatprep.subr.mxu0 0.0
    %4428 = vmatpush1.msra.mxu0 0.0
    %4429 = vmatprep.subr.mxu0 0.0
    %4430 = vmatpush1.msra.mxu0 0.0
    %4431 = vmatprep.subr.mxu0 0.0
    %4432 = vmatpush1.msra.mxu0 0.0
    %4433 = vmatprep.subr.mxu0 0.0
    %4434 = vmatpush1.msra.mxu0 0.0
    %4435 = vmatprep.subr.mxu0 0.0
    %4436 = vmatpush1.msra.mxu0 0.0
    %4437 = vmatprep.subr.mxu0 0.0
    %4438 = vmatpush1.msra.mxu0 0.0
    %4439 = vmatprep.subr.mxu0 0.0
    %4440 = vmatpush1.msra.mxu0 0.0
    %4441 = vmatprep.mubr.f32.mxu0 0.0
    %4442 = vmatmul.mubr.f32.gmra.mrb[0].mxu0 %v4375
    %v4443 = vpop.f32.mrb[0].mxu0
    %v4444 = vadd.f32 0.0, %v4443
    %v4445 = vpop.f32.mrb[0].mxu0
    %4446 = vdwg.mxu0
    %v4448 = vsel %vm473, %v4124, 0
    %v4451 = vsel %vm473, %v4203, 0
    %4453 = vmatprep.subr.mxu0 0.0
    %4454 = vmatpush1.xpose.msra.mxu0 %v4451
    %4455 = vmatprep.subr.mxu0 0.0
    %4456 = vmatpush1.xpose.msra.mxu0 0.0
    %4457 = vmatprep.subr.mxu0 0.0
    %4458 = vmatpush1.xpose.msra.mxu0 0.0
    %4459 = vmatprep.subr.mxu0 0.0
    %4460 = vmatpush1.xpose.msra.mxu0 0.0
    %4461 = vmatprep.subr.mxu0 0.0
    %4462 = vmatpush1.xpose.msra.mxu0 0.0
    %4463 = vmatprep.subr.mxu0 0.0
    %4464 = vmatpush1.xpose.msra.mxu0 0.0
    %4465 = vmatprep.subr.mxu0 0.0
    %4466 = vmatpush1.xpose.msra.mxu0 0.0
    %4467 = vmatprep.subr.mxu0 0.0
    %4468 = vmatpush1.xpose.msra.mxu0 0.0
    %4469 = vmatprep.subr.mxu0 0.0
    %4470 = vmatpush1.xpose.msra.mxu0 0.0
    %4471 = vmatprep.subr.mxu0 0.0
    %4472 = vmatpush1.xpose.msra.mxu0 0.0
    %4473 = vmatprep.subr.mxu0 0.0
    %4474 = vmatpush1.xpose.msra.mxu0 0.0
    %4475 = vmatprep.subr.mxu0 0.0
    %4476 = vmatpush1.xpose.msra.mxu0 0.0
    %4477 = vmatprep.subr.mxu0 0.0
    %4478 = vmatpush1.xpose.msra.mxu0 0.0
    %4479 = vmatprep.subr.mxu0 0.0
    %4480 = vmatpush1.xpose.msra.mxu0 0.0
    %4481 = vmatprep.subr.mxu0 0.0
    %4482 = vmatpush1.xpose.msra.mxu0 0.0
    %4483 = vmatprep.subr.mxu0 0.0
    %4484 = vmatpush1.xpose.msra.mxu0 0.0
    %4485 = vmatprep.subr.mxu0 0.0
    %4486 = vmatpush1.xpose.msra.mxu0 0.0
    %4487 = vmatprep.subr.mxu0 0.0
    %4488 = vmatpush1.xpose.msra.mxu0 0.0
    %4489 = vmatprep.subr.mxu0 0.0
    %4490 = vmatpush1.xpose.msra.mxu0 0.0
    %4491 = vmatprep.subr.mxu0 0.0
    %4492 = vmatpush1.xpose.msra.mxu0 0.0
    %4493 = vmatprep.subr.mxu0 0.0
    %4494 = vmatpush1.xpose.msra.mxu0 0.0
    %4495 = vmatprep.subr.mxu0 0.0
    %4496 = vmatpush1.xpose.msra.mxu0 0.0
    %4497 = vmatprep.subr.mxu0 0.0
    %4498 = vmatpush1.xpose.msra.mxu0 0.0
    %4499 = vmatprep.subr.mxu0 0.0
    %4500 = vmatpush1.xpose.msra.mxu0 0.0
    %4501 = vmatprep.subr.mxu0 0.0
    %4502 = vmatpush1.xpose.msra.mxu0 0.0
    %4503 = vmatprep.subr.mxu0 0.0
    %4504 = vmatpush1.xpose.msra.mxu0 0.0
    %4505 = vmatprep.subr.mxu0 0.0
    %4506 = vmatpush1.xpose.msra.mxu0 0.0
    %4507 = vmatprep.subr.mxu0 0.0
    %4508 = vmatpush1.xpose.msra.mxu0 0.0
    %4509 = vmatprep.subr.mxu0 0.0
    %4510 = vmatpush1.xpose.msra.mxu0 0.0
    %4511 = vmatprep.subr.mxu0 0.0
    %4512 = vmatpush1.xpose.msra.mxu0 0.0
    %4513 = vmatprep.subr.mxu0 0.0
    %4514 = vmatpush1.xpose.msra.mxu0 0.0
    %4515 = vmatprep.subr.mxu0 0.0
    %4516 = vmatpush1.xpose.msra.mxu0 0.0
    %4517 = vmatprep.mubr.f32.mxu0 0.0
    %4518 = vmatmul.mubr.f32.gmra.mrb[0].mxu0 %v4448
    %v4519 = vpop.f32.mrb[0].mxu0
    %v4520 = vadd.f32 0.0, %v4519
    %v4521 = vpop.f32.mrb[0].mxu0
    %4522 = vdwg.mxu0
    %v4523 = vmul.f32 %v4520, 0.25
    %v4524 = vsel %vm4362, %v4523, -inf
    %4525 = vmax.xlane.f32.xlu0 %v4524
    %v4526 = vpop.xlane.xlu0 %4525
    %v4527 = vsub.f32 %v4523, %v4526
    %v4528 = vmul.f32 %v4527, 1.442695
    %v4529 = vpow.pop %v4528
    %v4530 = vsel %vm4362, %v4529, 0.0
    %4531 = vadd.xlane.f32.xlu0 %v4530
    %v4532 = vpop.xlane.xlu0 %4531
    %v4533 = vrcp.pop %v4532
    %v4534 = vmul.f32 %v4529, %v4533
    %v4536 = vsel %vm4362, %v4534, 0
    %4538 = vmatprep.subr.mxu0 0.0
    %4539 = vmatpush1.msra.mxu0 %v4282
    %4540 = vmatprep.subr.mxu0 0.0
    %4541 = vmatpush1.msra.mxu0 0.0
    %4542 = vmatprep.subr.mxu0 0.0
    %4543 = vmatpush1.msra.mxu0 0.0
    %4544 = vmatprep.subr.mxu0 0.0
    %4545 = vmatpush1.msra.mxu0 0.0
    %4546 = vmatprep.subr.mxu0 0.0
    %4547 = vmatpush1.msra.mxu0 0.0
    %4548 = vmatprep.subr.mxu0 0.0
    %4549 = vmatpush1.msra.mxu0 0.0
    %4550 = vmatprep.subr.mxu0 0.0
    %4551 = vmatpush1.msra.mxu0 0.0
    %4552 = vmatprep.subr.mxu0 0.0
    %4553 = vmatpush1.msra.mxu0 0.0
    %4554 = vmatprep.subr.mxu0 0.0
    %4555 = vmatpush1.msra.mxu0 0.0
    %4556 = vmatprep.subr.mxu0 0.0
    %4557 = vmatpush1.msra.mxu0 0.0
    %4558 = vmatprep.subr.mxu0 0.0
    %4559 = vmatpush1.msra.mxu0 0.0
    %4560 = vmatprep.subr.mxu0 0.0
    %4561 = vmatpush1.msra.mxu0 0.0
    %4562 = vmatprep.subr.mxu0 0.0
    %4563 = vmatpush1.msra.mxu0 0.0
    %4564 = vmatprep.subr.mxu0 0.0
    %4565 = vmatpush1.msra.mxu0 0.0
    %4566 = vmatprep.subr.mxu0 0.0
    %4567 = vmatpush1.msra.mxu0 0.0
    %4568 = vmatprep.subr.mxu0 0.0
    %4569 = vmatpush1.msra.mxu0 0.0
    %4570 = vmatprep.subr.mxu0 0.0
    %4571 = vmatpush1.msra.mxu0 0.0
    %4572 = vmatprep.subr.mxu0 0.0
    %4573 = vmatpush1.msra.mxu0 0.0
    %4574 = vmatprep.subr.mxu0 0.0
    %4575 = vmatpush1.msra.mxu0 0.0
    %4576 = vmatprep.subr.mxu0 0.0
    %4577 = vmatpush1.msra.mxu0 0.0
    %4578 = vmatprep.subr.mxu0 0.0
    %4579 = vmatpush1.msra.mxu0 0.0
    %4580 = vmatprep.subr.mxu0 0.0
    %4581 = vmatpush1.msra.mxu0 0.0
    %4582 = vmatprep.subr.mxu0 0.0
    %4583 = vmatpush1.msra.mxu0 0.0
    %4584 = vmatprep.subr.mxu0 0.0
    %4585 = vmatpush1.msra.mxu0 0.0
    %4586 = vmatprep.subr.mxu0 0.0
    %4587 = vmatpush1.msra.mxu0 0.0
    %4588 = vmatprep.subr.mxu0 0.0
    %4589 = vmatpush1.msra.mxu0 0.0
    %4590 = vmatprep.subr.mxu0 0.0
    %4591 = vmatpush1.msra.mxu0 0.0
    %4592 = vmatprep.subr.mxu0 0.0
    %4593 = vmatpush1.msra.mxu0 0.0
    %4594 = vmatprep.subr.mxu0 0.0
    %4595 = vmatpush1.msra.mxu0 0.0
    %4596 = vmatprep.subr.mxu0 0.0
    %4597 = vmatpush1.msra.mxu0 0.0
    %4598 = vmatprep.subr.mxu0 0.0
    %4599 = vmatpush1.msra.mxu0 0.0
    %4600 = vmatprep.subr.mxu0 0.0
    %4601 = vmatpush1.msra.mxu0 0.0
    %4602 = vmatprep.mubr.f32.mxu0 0.0
    %4603 = vmatmul.mubr.f32.gmra.mrb[0].mxu0 %v4536
    %v4604 = vpop.f32.mrb[0].mxu0
    %v4605 = vadd.f32 0.0, %v4604
    %v4606 = vpop.f32.mrb[0].mxu0
    %4607 = vdwg.mxu0
    %v4608 = vld [vmem:[%s35] sm:$0xff]
    %v4609 = vld [vmem:[%s35 + $0x8] sm:$0xff]
    %v4610 = vld [vmem:[%s35 + $0x10] sm:$0xff]
    %v4611 = vld [vmem:[%s35 + $0x18] sm:$0xff]
    %s4612 = scalar_lea.vmem %s29, 32
    %v4613 = vld [vmem:[%s4612] sm:$0xff]
    %v4614 = vld [vmem:[%s4612 + $0x8] sm:$0xff]
    %v4615 = vld [vmem:[%s4612 + $0x10] sm:$0xff]
    %v4616 = vld [vmem:[%s4612 + $0x18] sm:$0xff]
    %4617 = vmatprep.subr.mxu0 0.0
    %4618 = vmatpush1.msra.mxu0 %v4613
    %4619 = vmatprep.subr.mxu0 0.0
    %4620 = vmatpush1.msra.mxu0 %v4614
    %4621 = vmatprep.subr.mxu0 0.0
    %4622 = vmatpush1.msra.mxu0 %v4615
    %4623 = vmatprep.subr.mxu0 0.0
    %4624 = vmatpush1.msra.mxu0 %v4616
    %4625 = vmatprep.subr.mxu0 0.0
    %4626 = vmatpush1.msra.mxu0 0.0
    %4627 = vmatprep.subr.mxu0 0.0
    %4628 = vmatpush1.msra.mxu0 0.0
    %4629 = vmatprep.subr.mxu0 0.0
    %4630 = vmatpush1.msra.mxu0 0.0
    %4631 = vmatprep.subr.mxu0 0.0
    %4632 = vmatpush1.msra.mxu0 0.0
    %4633 = vmatprep.subr.mxu0 0.0
    %4634 = vmatpush1.msra.mxu0 0.0
    %4635 = vmatprep.subr.mxu0 0.0
    %4636 = vmatpush1.msra.mxu0 0.0
    %4637 = vmatprep.subr.mxu0 0.0
    %4638 = vmatpush1.msra.mxu0 0.0
    %4639 = vmatprep.subr.mxu0 0.0
    %4640 = vmatpush1.msra.mxu0 0.0
    %4641 = vmatprep.subr.mxu0 0.0
    %4642 = vmatpush1.msra.mxu0 0.0
    %4643 = vmatprep.subr.mxu0 0.0
    %4644 = vmatpush1.msra.mxu0 0.0
    %4645 = vmatprep.subr.mxu0 0.0
    %4646 = vmatpush1.msra.mxu0 0.0
    %4647 = vmatprep.subr.mxu0 0.0
    %4648 = vmatpush1.msra.mxu0 0.0
    %4649 = vmatprep.subr.mxu0 0.0
    %4650 = vmatpush1.msra.mxu0 0.0
    %4651 = vmatprep.subr.mxu0 0.0
    %4652 = vmatpush1.msra.mxu0 0.0
    %4653 = vmatprep.subr.mxu0 0.0
    %4654 = vmatpush1.msra.mxu0 0.0
    %4655 = vmatprep.subr.mxu0 0.0
    %4656 = vmatpush1.msra.mxu0 0.0
    %4657 = vmatprep.subr.mxu0 0.0
    %4658 = vmatpush1.msra.mxu0 0.0
    %4659 = vmatprep.subr.mxu0 0.0
    %4660 = vmatpush1.msra.mxu0 0.0
    %4661 = vmatprep.subr.mxu0 0.0
    %4662 = vmatpush1.msra.mxu0 0.0
    %4663 = vmatprep.subr.mxu0 0.0
    %4664 = vmatpush1.msra.mxu0 0.0
    %4665 = vmatprep.subr.mxu0 0.0
    %4666 = vmatpush1.msra.mxu0 0.0
    %4667 = vmatprep.subr.mxu0 0.0
    %4668 = vmatpush1.msra.mxu0 0.0
    %4669 = vmatprep.subr.mxu0 0.0
    %4670 = vmatpush1.msra.mxu0 0.0
    %4671 = vmatprep.subr.mxu0 0.0
    %4672 = vmatpush1.msra.mxu0 0.0
    %4673 = vmatprep.subr.mxu0 0.0
    %4674 = vmatpush1.msra.mxu0 0.0
    %4675 = vmatprep.subr.mxu0 0.0
    %4676 = vmatpush1.msra.mxu0 0.0
    %4677 = vmatprep.subr.mxu0 0.0
    %4678 = vmatpush1.msra.mxu0 0.0
    %4679 = vmatprep.subr.mxu0 0.0
    %4680 = vmatpush1.msra.mxu0 0.0
    %4681 = vmatprep.mubr.f32.mxu0 0.0
    %4682 = vmatmul.mubr.f32.gmra.mrb[0].mxu0 %v4047
    %v4683 = vpop.f32.mrb[0].mxu0
    %v4684 = vadd.f32 0.0, %v4683
    %v4685 = vpop.f32.mrb[0].mxu0
    %4686 = vmatprep.mubr.f32.mxu0 0.0
    %4687 = vmatmul.mubr.f32.gmra.mrb[0].mxu0 %v4050
    %v4688 = vpop.f32.mrb[0].mxu0
    %v4689 = vadd.f32 0.0, %v4688
    %v4690 = vpop.f32.mrb[0].mxu0
    %4691 = vdwg.mxu0
    %s4692 = scalar_lea.vmem %s31, 32
    %v4693 = vld [vmem:[%s4692] sm:$0xff]
    %v4694 = vld [vmem:[%s4692 + $0x8] sm:$0xff]
    %v4695 = vld [vmem:[%s4692 + $0x10] sm:$0xff]
    %v4696 = vld [vmem:[%s4692 + $0x18] sm:$0xff]
    %4697 = vmatprep.subr.mxu0 0.0
    %4698 = vmatpush1.msra.mxu0 %v4693
    %4699 = vmatprep.subr.mxu0 0.0
    %4700 = vmatpush1.msra.mxu0 %v4694
    %4701 = vmatprep.subr.mxu0 0.0
    %4702 = vmatpush1.msra.mxu0 %v4695
    %4703 = vmatprep.subr.mxu0 0.0
    %4704 = vmatpush1.msra.mxu0 %v4696
    %4705 = vmatprep.subr.mxu0 0.0
    %4706 = vmatpush1.msra.mxu0 0.0
    %4707 = vmatprep.subr.mxu0 0.0
    %4708 = vmatpush1.msra.mxu0 0.0
    %4709 = vmatprep.subr.mxu0 0.0
    %4710 = vmatpush1.msra.mxu0 0.0
    %4711 = vmatprep.subr.mxu0 0.0
    %4712 = vmatpush1.msra.mxu0 0.0
    %4713 = vmatprep.subr.mxu0 0.0
    %4714 = vmatpush1.msra.mxu0 0.0
    %4715 = vmatprep.subr.mxu0 0.0
    %4716 = vmatpush1.msra.mxu0 0.0
    %4717 = vmatprep.subr.mxu0 0.0
    %4718 = vmatpush1.msra.mxu0 0.0
    %4719 = vmatprep.subr.mxu0 0.0
    %4720 = vmatpush1.msra.mxu0 0.0
    %4721 = vmatprep.subr.mxu0 0.0
    %4722 = vmatpush1.msra.mxu0 0.0
    %4723 = vmatprep.subr.mxu0 0.0
    %4724 = vmatpush1.msra.mxu0 0.0
    %4725 = vmatprep.subr.mxu0 0.0
    %4726 = vmatpush1.msra.mxu0 0.0
    %4727 = vmatprep.subr.mxu0 0.0
    %4728 = vmatpush1.msra.mxu0 0.0
    %4729 = vmatprep.subr.mxu0 0.0
    %4730 = vmatpush1.msra.mxu0 0.0
    %4731 = vmatprep.subr.mxu0 0.0
    %4732 = vmatpush1.msra.mxu0 0.0
    %4733 = vmatprep.subr.mxu0 0.0
    %4734 = vmatpush1.msra.mxu0 0.0
    %4735 = vmatprep.subr.mxu0 0.0
    %4736 = vmatpush1.msra.mxu0 0.0
    %4737 = vmatprep.subr.mxu0 0.0
    %4738 = vmatpush1.msra.mxu0 0.0
    %4739 = vmatprep.subr.mxu0 0.0
    %4740 = vmatpush1.msra.mxu0 0.0
    %4741 = vmatprep.subr.mxu0 0.0
    %4742 = vmatpush1.msra.mxu0 0.0
    %4743 = vmatprep.subr.mxu0 0.0
    %4744 = vmatpush1.msra.mxu0 0.0
    %4745 = vmatprep.subr.mxu0 0.0
    %4746 = vmatpush1.msra.mxu0 0.0
    %4747 = vmatprep.subr.mxu0 0.0
    %4748 = vmatpush1.msra.mxu0 0.0
    %4749 = vmatprep.subr.mxu0 0.0
    %4750 = vmatpush1.msra.mxu0 0.0
    %4751 = vmatprep.subr.mxu0 0.0
    %4752 = vmatpush1.msra.mxu0 0.0
    %4753 = vmatprep.subr.mxu0 0.0
    %4754 = vmatpush1.msra.mxu0 0.0
    %4755 = vmatprep.subr.mxu0 0.0
    %4756 = vmatpush1.msra.mxu0 0.0
    %4757 = vmatprep.subr.mxu0 0.0
    %4758 = vmatpush1.msra.mxu0 0.0
    %4759 = vmatprep.subr.mxu0 0.0
    %4760 = vmatpush1.msra.mxu0 0.0
    %4761 = vmatprep.mubr.f32.mxu0 0.0
    %4762 = vmatmul.mubr.f32.gmra.mrb[0].mxu0 %v4047
    %v4763 = vpop.f32.mrb[0].mxu0
    %v4764 = vadd.f32 0.0, %v4763
    %v4765 = vpop.f32.mrb[0].mxu0
    %4766 = vmatprep.mubr.f32.mxu0 0.0
    %4767 = vmatmul.mubr.f32.gmra.mrb[0].mxu0 %v4050
    %v4768 = vpop.f32.mrb[0].mxu0
    %v4769 = vadd.f32 0.0, %v4768
    %v4770 = vpop.f32.mrb[0].mxu0
    %4771 = vdwg.mxu0
    %s4772 = scalar_lea.vmem %s33, 32
    %v4773 = vld [vmem:[%s4772] sm:$0xff]
    %v4774 = vld [vmem:[%s4772 + $0x8] sm:$0xff]
    %v4775 = vld [vmem:[%s4772 + $0x10] sm:$0xff]
    %v4776 = vld [vmem:[%s4772 + $0x18] sm:$0xff]
    %4777 = vmatprep.subr.mxu0 0.0
    %4778 = vmatpush1.msra.mxu0 %v4773
    %4779 = vmatprep.subr.mxu0 0.0
    %4780 = vmatpush1.msra.mxu0 %v4774
    %4781 = vmatprep.subr.mxu0 0.0
    %4782 = vmatpush1.msra.mxu0 %v4775
    %4783 = vmatprep.subr.mxu0 0.0
    %4784 = vmatpush1.msra.mxu0 %v4776
    %4785 = vmatprep.subr.mxu0 0.0
    %4786 = vmatpush1.msra.mxu0 0.0
    %4787 = vmatprep.subr.mxu0 0.0
    %4788 = vmatpush1.msra.mxu0 0.0
    %4789 = vmatprep.subr.mxu0 0.0
    %4790 = vmatpush1.msra.mxu0 0.0
    %4791 = vmatprep.subr.mxu0 0.0
    %4792 = vmatpush1.msra.mxu0 0.0
    %4793 = vmatprep.subr.mxu0 0.0
    %4794 = vmatpush1.msra.mxu0 0.0
    %4795 = vmatprep.subr.mxu0 0.0
    %4796 = vmatpush1.msra.mxu0 0.0
    %4797 = vmatprep.subr.mxu0 0.0
    %4798 = vmatpush1.msra.mxu0 0.0
    %4799 = vmatprep.subr.mxu0 0.0
    %4800 = vmatpush1.msra.mxu0 0.0
    %4801 = vmatprep.subr.mxu0 0.0
    %4802 = vmatpush1.msra.mxu0 0.0
    %4803 = vmatprep.subr.mxu0 0.0
    %4804 = vmatpush1.msra.mxu0 0.0
    %4805 = vmatprep.subr.mxu0 0.0
    %4806 = vmatpush1.msra.mxu0 0.0
    %4807 = vmatprep.subr.mxu0 0.0
    %4808 = vmatpush1.msra.mxu0 0.0
    %4809 = vmatprep.subr.mxu0 0.0
    %4810 = vmatpush1.msra.mxu0 0.0
    %4811 = vmatprep.subr.mxu0 0.0
    %4812 = vmatpush1.msra.mxu0 0.0
    %4813 = vmatprep.subr.mxu0 0.0
    %4814 = vmatpush1.msra.mxu0 0.0
    %4815 = vmatprep.subr.mxu0 0.0
    %4816 = vmatpush1.msra.mxu0 0.0
    %4817 = vmatprep.subr.mxu0 0.0
    %4818 = vmatpush1.msra.mxu0 0.0
    %4819 = vmatprep.subr.mxu0 0.0
    %4820 = vmatpush1.msra.mxu0 0.0
    %4821 = vmatprep.subr.mxu0 0.0
    %4822 = vmatpush1.msra.mxu0 0.0
    %4823 = vmatprep.subr.mxu0 0.0
    %4824 = vmatpush1.msra.mxu0 0.0
    %4825 = vmatprep.subr.mxu0 0.0
    %4826 = vmatpush1.msra.mxu0 0.0
    %4827 = vmatprep.subr.mxu0 0.0
    %4828 = vmatpush1.msra.mxu0 0.0
    %4829 = vmatprep.subr.mxu0 0.0
    %4830 = vmatpush1.msra.mxu0 0.0
    %4831 = vmatprep.subr.mxu0 0.0
    %4832 = vmatpush1.msra.mxu0 0.0
    %4833 = vmatprep.subr.mxu0 0.0
    %4834 = vmatpush1.msra.mxu0 0.0
    %4835 = vmatprep.subr.mxu0 0.0
    %4836 = vmatpush1.msra.mxu0 0.0
    %4837 = vmatprep.subr.mxu0 0.0
    %4838 = vmatpush1.msra.mxu0 0.0
    %4839 = vmatprep.subr.mxu0 0.0
    %4840 = vmatpush1.msra.mxu0 0.0
    %4841 = vmatprep.mubr.f32.mxu0 0.0
    %4842 = vmatmul.mubr.f32.gmra.mrb[0].mxu0 %v4047
    %v4843 = vpop.f32.mrb[0].mxu0
    %v4844 = vadd.f32 0.0, %v4843
    %v4845 = vpop.f32.mrb[0].mxu0
    %4846 = vmatprep.mubr.f32.mxu0 0.0
    %4847 = vmatmul.mubr.f32.gmra.mrb[0].mxu0 %v4050
    %v4848 = vpop.f32.mrb[0].mxu0
    %v4849 = vadd.f32 0.0, %v4848
    %v4850 = vpop.f32.mrb[0].mxu0
    %4851 = vdwg.mxu0
    %v4853 = vsel %vm473, %v4684, 0
    %v4856 = vsel %vm473, %v4764, 0
    %4858 = vmatprep.subr.mxu0 0.0
    %4859 = vmatpush1.xpose.msra.mxu0 %v4856
    %4860 = vmatprep.subr.mxu0 0.0
    %4861 = vmatpush1.xpose.msra.mxu0 0.0
    %4862 = vmatprep.subr.mxu0 0.0
    %4863 = vmatpush1.xpose.msra.mxu0 0.0
    %4864 = vmatprep.subr.mxu0 0.0
    %4865 = vmatpush1.xpose.msra.mxu0 0.0
    %4866 = vmatprep.subr.mxu0 0.0
    %4867 = vmatpush1.xpose.msra.mxu0 0.0
    %4868 = vmatprep.subr.mxu0 0.0
    %4869 = vmatpush1.xpose.msra.mxu0 0.0
    %4870 = vmatprep.subr.mxu0 0.0
    %4871 = vmatpush1.xpose.msra.mxu0 0.0
    %4872 = vmatprep.subr.mxu0 0.0
    %4873 = vmatpush1.xpose.msra.mxu0 0.0
    %4874 = vmatprep.subr.mxu0 0.0
    %4875 = vmatpush1.xpose.msra.mxu0 0.0
    %4876 = vmatprep.subr.mxu0 0.0
    %4877 = vmatpush1.xpose.msra.mxu0 0.0
    %4878 = vmatprep.subr.mxu0 0.0
    %4879 = vmatpush1.xpose.msra.mxu0 0.0
    %4880 = vmatprep.subr.mxu0 0.0
    %4881 = vmatpush1.xpose.msra.mxu0 0.0
    %4882 = vmatprep.subr.mxu0 0.0
    %4883 = vmatpush1.xpose.msra.mxu0 0.0
    %4884 = vmatprep.subr.mxu0 0.0
    %4885 = vmatpush1.xpose.msra.mxu0 0.0
    %4886 = vmatprep.subr.mxu0 0.0
    %4887 = vmatpush1.xpose.msra.mxu0 0.0
    %4888 = vmatprep.subr.mxu0 0.0
    %4889 = vmatpush1.xpose.msra.mxu0 0.0
    %4890 = vmatprep.subr.mxu0 0.0
    %4891 = vmatpush1.xpose.msra.mxu0 0.0
    %4892 = vmatprep.subr.mxu0 0.0
    %4893 = vmatpush1.xpose.msra.mxu0 0.0
    %4894 = vmatprep.subr.mxu0 0.0
    %4895 = vmatpush1.xpose.msra.mxu0 0.0
    %4896 = vmatprep.subr.mxu0 0.0
    %4897 = vmatpush1.xpose.msra.mxu0 0.0
    %4898 = vmatprep.subr.mxu0 0.0
    %4899 = vmatpush1.xpose.msra.mxu0 0.0
    %4900 = vmatprep.subr.mxu0 0.0
    %4901 = vmatpush1.xpose.msra.mxu0 0.0
    %4902 = vmatprep.subr.mxu0 0.0
    %4903 = vmatpush1.xpose.msra.mxu0 0.0
    %4904 = vmatprep.subr.mxu0 0.0
    %4905 = vmatpush1.xpose.msra.mxu0 0.0
    %4906 = vmatprep.subr.mxu0 0.0
    %4907 = vmatpush1.xpose.msra.mxu0 0.0
    %4908 = vmatprep.subr.mxu0 0.0
    %4909 = vmatpush1.xpose.msra.mxu0 0.0
    %4910 = vmatprep.subr.mxu0 0.0
    %4911 = vmatpush1.xpose.msra.mxu0 0.0
    %4912 = vmatprep.subr.mxu0 0.0
    %4913 = vmatpush1.xpose.msra.mxu0 0.0
    %4914 = vmatprep.subr.mxu0 0.0
    %4915 = vmatpush1.xpose.msra.mxu0 0.0
    %4916 = vmatprep.subr.mxu0 0.0
    %4917 = vmatpush1.xpose.msra.mxu0 0.0
    %4918 = vmatprep.subr.mxu0 0.0
    %4919 = vmatpush1.xpose.msra.mxu0 0.0
    %4920 = vmatprep.subr.mxu0 0.0
    %4921 = vmatpush1.xpose.msra.mxu0 0.0
    %4922 = vmatprep.mubr.f32.mxu0 0.0
    %4923 = vmatmul.mubr.f32.gmra.mrb[0].mxu0 %v4853
    %v4924 = vpop.f32.mrb[0].mxu0
    %v4925 = vadd.f32 0.0, %v4924
    %v4926 = vpop.f32.mrb[0].mxu0
    %4927 = vdwg.mxu0
    %v4928 = vmul.f32 %v4925, 0.25
    %v4929 = vsel %vm4362, %v4928, -inf
    %4930 = vmax.xlane.f32.xlu0 %v4929
    %v4931 = vpop.xlane.xlu0 %4930
    %v4932 = vsub.f32 %v4928, %v4931
    %v4933 = vmul.f32 %v4932, 1.442695
    %v4934 = vpow.pop %v4933
    %v4935 = vsel %vm4362, %v4934, 0.0
    %4936 = vadd.xlane.f32.xlu0 %v4935
    %v4937 = vpop.xlane.xlu0 %4936
    %v4938 = vrcp.pop %v4937
    %v4939 = vmul.f32 %v4934, %v4938
    %v4941 = vsel %vm4362, %v4939, 0
    %4943 = vmatprep.subr.mxu0 0.0
    %4944 = vmatpush1.msra.mxu0 %v4844
    %4945 = vmatprep.subr.mxu0 0.0
    %4946 = vmatpush1.msra.mxu0 0.0
    %4947 = vmatprep.subr.mxu0 0.0
    %4948 = vmatpush1.msra.mxu0 0.0
    %4949 = vmatprep.subr.mxu0 0.0
    %4950 = vmatpush1.msra.mxu0 0.0
    %4951 = vmatprep.subr.mxu0 0.0
    %4952 = vmatpush1.msra.mxu0 0.0
    %4953 = vmatprep.subr.mxu0 0.0
    %4954 = vmatpush1.msra.mxu0 0.0
    %4955 = vmatprep.subr.mxu0 0.0
    %4956 = vmatpush1.msra.mxu0 0.0
    %4957 = vmatprep.subr.mxu0 0.0
    %4958 = vmatpush1.msra.mxu0 0.0
    %4959 = vmatprep.subr.mxu0 0.0
    %4960 = vmatpush1.msra.mxu0 0.0
    %4961 = vmatprep.subr.mxu0 0.0
    %4962 = vmatpush1.msra.mxu0 0.0
    %4963 = vmatprep.subr.mxu0 0.0
    %4964 = vmatpush1.msra.mxu0 0.0
    %4965 = vmatprep.subr.mxu0 0.0
    %4966 = vmatpush1.msra.mxu0 0.0
    %4967 = vmatprep.subr.mxu0 0.0
    %4968 = vmatpush1.msra.mxu0 0.0
    %4969 = vmatprep.subr.mxu0 0.0
    %4970 = vmatpush1.msra.mxu0 0.0
    %4971 = vmatprep.subr.mxu0 0.0
    %4972 = vmatpush1.msra.mxu0 0.0
    %4973 = vmatprep.subr.mxu0 0.0
    %4974 = vmatpush1.msra.mxu0 0.0
    %4975 = vmatprep.subr.mxu0 0.0
    %4976 = vmatpush1.msra.mxu0 0.0
    %4977 = vmatprep.subr.mxu0 0.0
    %4978 = vmatpush1.msra.mxu0 0.0
    %4979 = vmatprep.subr.mxu0 0.0
    %4980 = vmatpush1.msra.mxu0 0.0
    %4981 = vmatprep.subr.mxu0 0.0
    %4982 = vmatpush1.msra.mxu0 0.0
    %4983 = vmatprep.subr.mxu0 0.0
    %4984 = vmatpush1.msra.mxu0 0.0
    %4985 = vmatprep.subr.mxu0 0.0
    %4986 = vmatpush1.msra.mxu0 0.0
    %4987 = vmatprep.subr.mxu0 0.0
    %4988 = vmatpush1.msra.mxu0 0.0
    %4989 = vmatprep.subr.mxu0 0.0
    %4990 = vmatpush1.msra.mxu0 0.0
    %4991 = vmatprep.subr.mxu0 0.0
    %4992 = vmatpush1.msra.mxu0 0.0
    %4993 = vmatprep.subr.mxu0 0.0
    %4994 = vmatpush1.msra.mxu0 0.0
    %4995 = vmatprep.subr.mxu0 0.0
    %4996 = vmatpush1.msra.mxu0 0.0
    %4997 = vmatprep.subr.mxu0 0.0
    %4998 = vmatpush1.msra.mxu0 0.0
    %4999 = vmatprep.subr.mxu0 0.0
    %5000 = vmatpush1.msra.mxu0 0.0
    %5001 = vmatprep.subr.mxu0 0.0
    %5002 = vmatpush1.msra.mxu0 0.0
    %5003 = vmatprep.subr.mxu0 0.0
    %5004 = vmatpush1.msra.mxu0 0.0
    %5005 = vmatprep.subr.mxu0 0.0
    %5006 = vmatpush1.msra.mxu0 0.0
    %5007 = vmatprep.mubr.f32.mxu0 0.0
    %5008 = vmatmul.mubr.f32.gmra.mrb[0].mxu0 %v4941
    %v5009 = vpop.f32.mrb[0].mxu0
    %v5010 = vadd.f32 0.0, %v5009
    %v5011 = vpop.f32.mrb[0].mxu0
    %5012 = vdwg.mxu0
    %v5014 = vsel %vm473, %v4689, 0
    %v5017 = vsel %vm473, %v4769, 0
    %5019 = vmatprep.subr.mxu0 0.0
    %5020 = vmatpush1.xpose.msra.mxu0 %v5017
    %5021 = vmatprep.subr.mxu0 0.0
    %5022 = vmatpush1.xpose.msra.mxu0 0.0
    %5023 = vmatprep.subr.mxu0 0.0
    %5024 = vmatpush1.xpose.msra.mxu0 0.0
    %5025 = vmatprep.subr.mxu0 0.0
    %5026 = vmatpush1.xpose.msra.mxu0 0.0
    %5027 = vmatprep.subr.mxu0 0.0
    %5028 = vmatpush1.xpose.msra.mxu0 0.0
    %5029 = vmatprep.subr.mxu0 0.0
    %5030 = vmatpush1.xpose.msra.mxu0 0.0
    %5031 = vmatprep.subr.mxu0 0.0
    %5032 = vmatpush1.xpose.msra.mxu0 0.0
    %5033 = vmatprep.subr.mxu0 0.0
    %5034 = vmatpush1.xpose.msra.mxu0 0.0
    %5035 = vmatprep.subr.mxu0 0.0
    %5036 = vmatpush1.xpose.msra.mxu0 0.0
    %5037 = vmatprep.subr.mxu0 0.0
    %5038 = vmatpush1.xpose.msra.mxu0 0.0
    %5039 = vmatprep.subr.mxu0 0.0
    %5040 = vmatpush1.xpose.msra.mxu0 0.0
    %5041 = vmatprep.subr.mxu0 0.0
    %5042 = vmatpush1.xpose.msra.mxu0 0.0
    %5043 = vmatprep.subr.mxu0 0.0
    %5044 = vmatpush1.xpose.msra.mxu0 0.0
    %5045 = vmatprep.subr.mxu0 0.0
    %5046 = vmatpush1.xpose.msra.mxu0 0.0
    %5047 = vmatprep.subr.mxu0 0.0
    %5048 = vmatpush1.xpose.msra.mxu0 0.0
    %5049 = vmatprep.subr.mxu0 0.0
    %5050 = vmatpush1.xpose.msra.mxu0 0.0
    %5051 = vmatprep.subr.mxu0 0.0
    %5052 = vmatpush1.xpose.msra.mxu0 0.0
    %5053 = vmatprep.subr.mxu0 0.0
    %5054 = vmatpush1.xpose.msra.mxu0 0.0
    %5055 = vmatprep.subr.mxu0 0.0
    %5056 = vmatpush1.xpose.msra.mxu0 0.0
    %5057 = vmatprep.subr.mxu0 0.0
    %5058 = vmatpush1.xpose.msra.mxu0 0.0
    %5059 = vmatprep.subr.mxu0 0.0
    %5060 = vmatpush1.xpose.msra.mxu0 0.0
    %5061 = vmatprep.subr.mxu0 0.0
    %5062 = vmatpush1.xpose.msra.mxu0 0.0
    %5063 = vmatprep.subr.mxu0 0.0
    %5064 = vmatpush1.xpose.msra.mxu0 0.0
    %5065 = vmatprep.subr.mxu0 0.0
    %5066 = vmatpush1.xpose.msra.mxu0 0.0
    %5067 = vmatprep.subr.mxu0 0.0
    %5068 = vmatpush1.xpose.msra.mxu0 0.0
    %5069 = vmatprep.subr.mxu0 0.0
    %5070 = vmatpush1.xpose.msra.mxu0 0.0
    %5071 = vmatprep.subr.mxu0 0.0
    %5072 = vmatpush1.xpose.msra.mxu0 0.0
    %5073 = vmatprep.subr.mxu0 0.0
    %5074 = vmatpush1.xpose.msra.mxu0 0.0
    %5075 = vmatprep.subr.mxu0 0.0
    %5076 = vmatpush1.xpose.msra.mxu0 0.0
    %5077 = vmatprep.subr.mxu0 0.0
    %5078 = vmatpush1.xpose.msra.mxu0 0.0
    %5079 = vmatprep.subr.mxu0 0.0
    %5080 = vmatpush1.xpose.msra.mxu0 0.0
    %5081 = vmatprep.subr.mxu0 0.0
    %5082 = vmatpush1.xpose.msra.mxu0 0.0
    %5083 = vmatprep.mubr.f32.mxu0 0.0
    %5084 = vmatmul.mubr.f32.gmra.mrb[0].mxu0 %v5014
    %v5085 = vpop.f32.mrb[0].mxu0
    %v5086 = vadd.f32 0.0, %v5085
    %v5087 = vpop.f32.mrb[0].mxu0
    %5088 = vdwg.mxu0
    %v5089 = vmul.f32 %v5086, 0.25
    %v5090 = vsel %vm4362, %v5089, -inf
    %5091 = vmax.xlane.f32.xlu0 %v5090
    %v5092 = vpop.xlane.xlu0 %5091
    %v5093 = vsub.f32 %v5089, %v5092
    %v5094 = vmul.f32 %v5093, 1.442695
    %v5095 = vpow.pop %v5094
    %v5096 = vsel %vm4362, %v5095, 0.0
    %5097 = vadd.xlane.f32.xlu0 %v5096
    %v5098 = vpop.xlane.xlu0 %5097
    %v5099 = vrcp.pop %v5098
    %v5100 = vmul.f32 %v5095, %v5099
    %v5102 = vsel %vm4362, %v5100, 0
    %5104 = vmatprep.subr.mxu0 0.0
    %5105 = vmatpush1.msra.mxu0 %v4849
    %5106 = vmatprep.subr.mxu0 0.0
    %5107 = vmatpush1.msra.mxu0 0.0
    %5108 = vmatprep.subr.mxu0 0.0
    %5109 = vmatpush1.msra.mxu0 0.0
    %5110 = vmatprep.subr.mxu0 0.0
    %5111 = vmatpush1.msra.mxu0 0.0
    %5112 = vmatprep.subr.mxu0 0.0
    %5113 = vmatpush1.msra.mxu0 0.0
    %5114 = vmatprep.subr.mxu0 0.0
    %5115 = vmatpush1.msra.mxu0 0.0
    %5116 = vmatprep.subr.mxu0 0.0
    %5117 = vmatpush1.msra.mxu0 0.0
    %5118 = vmatprep.subr.mxu0 0.0
    %5119 = vmatpush1.msra.mxu0 0.0
    %5120 = vmatprep.subr.mxu0 0.0
    %5121 = vmatpush1.msra.mxu0 0.0
    %5122 = vmatprep.subr.mxu0 0.0
    %5123 = vmatpush1.msra.mxu0 0.0
    %5124 = vmatprep.subr.mxu0 0.0
    %5125 = vmatpush1.msra.mxu0 0.0
    %5126 = vmatprep.subr.mxu0 0.0
    %5127 = vmatpush1.msra.mxu0 0.0
    %5128 = vmatprep.subr.mxu0 0.0
    %5129 = vmatpush1.msra.mxu0 0.0
    %5130 = vmatprep.subr.mxu0 0.0
    %5131 = vmatpush1.msra.mxu0 0.0
    %5132 = vmatprep.subr.mxu0 0.0
    %5133 = vmatpush1.msra.mxu0 0.0
    %5134 = vmatprep.subr.mxu0 0.0
    %5135 = vmatpush1.msra.mxu0 0.0
    %5136 = vmatprep.subr.mxu0 0.0
    %5137 = vmatpush1.msra.mxu0 0.0
    %5138 = vmatprep.subr.mxu0 0.0
    %5139 = vmatpush1.msra.mxu0 0.0
    %5140 = vmatprep.subr.mxu0 0.0
    %5141 = vmatpush1.msra.mxu0 0.0
    %5142 = vmatprep.subr.mxu0 0.0
    %5143 = vmatpush1.msra.mxu0 0.0
    %5144 = vmatprep.subr.mxu0 0.0
    %5145 = vmatpush1.msra.mxu0 0.0
    %5146 = vmatprep.subr.mxu0 0.0
    %5147 = vmatpush1.msra.mxu0 0.0
    %5148 = vmatprep.subr.mxu0 0.0
    %5149 = vmatpush1.msra.mxu0 0.0
    %5150 = vmatprep.subr.mxu0 0.0
    %5151 = vmatpush1.msra.mxu0 0.0
    %5152 = vmatprep.subr.mxu0 0.0
    %5153 = vmatpush1.msra.mxu0 0.0
    %5154 = vmatprep.subr.mxu0 0.0
    %5155 = vmatpush1.msra.mxu0 0.0
    %5156 = vmatprep.subr.mxu0 0.0
    %5157 = vmatpush1.msra.mxu0 0.0
    %5158 = vmatprep.subr.mxu0 0.0
    %5159 = vmatpush1.msra.mxu0 0.0
    %5160 = vmatprep.subr.mxu0 0.0
    %5161 = vmatpush1.msra.mxu0 0.0
    %5162 = vmatprep.subr.mxu0 0.0
    %5163 = vmatpush1.msra.mxu0 0.0
    %5164 = vmatprep.subr.mxu0 0.0
    %5165 = vmatpush1.msra.mxu0 0.0
    %5166 = vmatprep.subr.mxu0 0.0
    %5167 = vmatpush1.msra.mxu0 0.0
    %5168 = vmatprep.mubr.f32.mxu0 0.0
    %5169 = vmatmul.mubr.f32.gmra.mrb[0].mxu0 %v5102
    %v5170 = vpop.f32.mrb[0].mxu0
    %v5171 = vadd.f32 0.0, %v5170
    %v5172 = vpop.f32.mrb[0].mxu0
    %5173 = vdwg.mxu0
    %s5174 = scalar_lea.vmem %s35, 32
    %v5175 = vld [vmem:[%s5174] sm:$0xff]
    %v5176 = vld [vmem:[%s5174 + $0x8] sm:$0xff]
    %v5177 = vld [vmem:[%s5174 + $0x10] sm:$0xff]
    %v5178 = vld [vmem:[%s5174 + $0x18] sm:$0xff]
    %v5180 = vsel %vm197, %v5010, 0
    %v5183 = vsel %vm197, %v5171, 0
    %5185 = vmatprep.subr.mxu0 0.0
    %5186 = vmatpush1.msra.mxu0 %v5175
    %5187 = vmatprep.subr.mxu0 0.0
    %5188 = vmatpush1.msra.mxu0 %v5176
    %5189 = vmatprep.subr.mxu0 0.0
    %5190 = vmatpush1.msra.mxu0 %v5177
    %5191 = vmatprep.subr.mxu0 0.0
    %5192 = vmatpush1.msra.mxu0 %v5178
    %5193 = vmatprep.subr.mxu0 0.0
    %5194 = vmatpush1.msra.mxu0 0.0
    %5195 = vmatprep.subr.mxu0 0.0
    %5196 = vmatpush1.msra.mxu0 0.0
    %5197 = vmatprep.subr.mxu0 0.0
    %5198 = vmatpush1.msra.mxu0 0.0
    %5199 = vmatprep.subr.mxu0 0.0
    %5200 = vmatpush1.msra.mxu0 0.0
    %5201 = vmatprep.subr.mxu0 0.0
    %5202 = vmatpush1.msra.mxu0 0.0
    %5203 = vmatprep.subr.mxu0 0.0
    %5204 = vmatpush1.msra.mxu0 0.0
    %5205 = vmatprep.subr.mxu0 0.0
    %5206 = vmatpush1.msra.mxu0 0.0
    %5207 = vmatprep.subr.mxu0 0.0
    %5208 = vmatpush1.msra.mxu0 0.0
    %5209 = vmatprep.subr.mxu0 0.0
    %5210 = vmatpush1.msra.mxu0 0.0
    %5211 = vmatprep.subr.mxu0 0.0
    %5212 = vmatpush1.msra.mxu0 0.0
    %5213 = vmatprep.subr.mxu0 0.0
    %5214 = vmatpush1.msra.mxu0 0.0
    %5215 = vmatprep.subr.mxu0 0.0
    %5216 = vmatpush1.msra.mxu0 0.0
    %5217 = vmatprep.subr.mxu0 0.0
    %5218 = vmatpush1.msra.mxu0 0.0
    %5219 = vmatprep.subr.mxu0 0.0
    %5220 = vmatpush1.msra.mxu0 0.0
    %5221 = vmatprep.subr.mxu0 0.0
    %5222 = vmatpush1.msra.mxu0 0.0
    %5223 = vmatprep.subr.mxu0 0.0
    %5224 = vmatpush1.msra.mxu0 0.0
    %5225 = vmatprep.subr.mxu0 0.0
    %5226 = vmatpush1.msra.mxu0 0.0
    %5227 = vmatprep.subr.mxu0 0.0
    %5228 = vmatpush1.msra.mxu0 0.0
    %5229 = vmatprep.subr.mxu0 0.0
    %5230 = vmatpush1.msra.mxu0 0.0
    %5231 = vmatprep.subr.mxu0 0.0
    %5232 = vmatpush1.msra.mxu0 0.0
    %5233 = vmatprep.subr.mxu0 0.0
    %5234 = vmatpush1.msra.mxu0 0.0
    %5235 = vmatprep.subr.mxu0 0.0
    %5236 = vmatpush1.msra.mxu0 0.0
    %5237 = vmatprep.subr.mxu0 0.0
    %5238 = vmatpush1.msra.mxu0 0.0
    %5239 = vmatprep.subr.mxu0 0.0
    %5240 = vmatpush1.msra.mxu0 0.0
    %5241 = vmatprep.subr.mxu0 0.0
    %5242 = vmatpush1.msra.mxu0 0.0
    %5243 = vmatprep.subr.mxu0 0.0
    %5244 = vmatpush1.msra.mxu0 0.0
    %5245 = vmatprep.subr.mxu0 0.0
    %5246 = vmatpush1.msra.mxu0 0.0
    %5247 = vmatprep.subr.mxu0 0.0
    %5248 = vmatpush1.msra.mxu0 0.0
    %5249 = vmatprep.mubr.f32.mxu0 0.0
    %5250 = vmatmul.mubr.f32.gmra.mrb[0].mxu0 %v5180
    %v5251 = vpop.f32.mrb[0].mxu0
    %v5252 = vadd.f32 0.0, %v5251
    %v5253 = vpop.f32.mrb[0].mxu0
    %5254 = vmatprep.mubr.f32.mxu0 0.0
    %5255 = vmatmul.mubr.f32.gmra.mrb[0].mxu0 %v5183
    %v5256 = vpop.f32.mrb[0].mxu0
    %v5257 = vadd.f32 0.0, %v5256
    %v5258 = vpop.f32.mrb[0].mxu0
    %5259 = vdwg.mxu0
    %v5261 = vsel %vm197, %v4444, 0
    %v5264 = vsel %vm197, %v4605, 0
    %5266 = vmatprep.subr.mxu0 0.0
    %5267 = vmatpush1.msra.mxu0 %v4608
    %5268 = vmatprep.subr.mxu0 0.0
    %5269 = vmatpush1.msra.mxu0 %v4609
    %5270 = vmatprep.subr.mxu0 0.0
    %5271 = vmatpush1.msra.mxu0 %v4610
    %5272 = vmatprep.subr.mxu0 0.0
    %5273 = vmatpush1.msra.mxu0 %v4611
    %5274 = vmatprep.subr.mxu0 0.0
    %5275 = vmatpush1.msra.mxu0 0.0
    %5276 = vmatprep.subr.mxu0 0.0
    %5277 = vmatpush1.msra.mxu0 0.0
    %5278 = vmatprep.subr.mxu0 0.0
    %5279 = vmatpush1.msra.mxu0 0.0
    %5280 = vmatprep.subr.mxu0 0.0
    %5281 = vmatpush1.msra.mxu0 0.0
    %5282 = vmatprep.subr.mxu0 0.0
    %5283 = vmatpush1.msra.mxu0 0.0
    %5284 = vmatprep.subr.mxu0 0.0
    %5285 = vmatpush1.msra.mxu0 0.0
    %5286 = vmatprep.subr.mxu0 0.0
    %5287 = vmatpush1.msra.mxu0 0.0
    %5288 = vmatprep.subr.mxu0 0.0
    %5289 = vmatpush1.msra.mxu0 0.0
    %5290 = vmatprep.subr.mxu0 0.0
    %5291 = vmatpush1.msra.mxu0 0.0
    %5292 = vmatprep.subr.mxu0 0.0
    %5293 = vmatpush1.msra.mxu0 0.0
    %5294 = vmatprep.subr.mxu0 0.0
    %5295 = vmatpush1.msra.mxu0 0.0
    %5296 = vmatprep.subr.mxu0 0.0
    %5297 = vmatpush1.msra.mxu0 0.0
    %5298 = vmatprep.subr.mxu0 0.0
    %5299 = vmatpush1.msra.mxu0 0.0
    %5300 = vmatprep.subr.mxu0 0.0
    %5301 = vmatpush1.msra.mxu0 0.0
    %5302 = vmatprep.subr.mxu0 0.0
    %5303 = vmatpush1.msra.mxu0 0.0
    %5304 = vmatprep.subr.mxu0 0.0
    %5305 = vmatpush1.msra.mxu0 0.0
    %5306 = vmatprep.subr.mxu0 0.0
    %5307 = vmatpush1.msra.mxu0 0.0
    %5308 = vmatprep.subr.mxu0 0.0
    %5309 = vmatpush1.msra.mxu0 0.0
    %5310 = vmatprep.subr.mxu0 0.0
    %5311 = vmatpush1.msra.mxu0 0.0
    %5312 = vmatprep.subr.mxu0 0.0
    %5313 = vmatpush1.msra.mxu0 0.0
    %5314 = vmatprep.subr.mxu0 0.0
    %5315 = vmatpush1.msra.mxu0 0.0
    %5316 = vmatprep.subr.mxu0 0.0
    %5317 = vmatpush1.msra.mxu0 0.0
    %5318 = vmatprep.subr.mxu0 0.0
    %5319 = vmatpush1.msra.mxu0 0.0
    %5320 = vmatprep.subr.mxu0 0.0
    %5321 = vmatpush1.msra.mxu0 0.0
    %5322 = vmatprep.subr.mxu0 0.0
    %5323 = vmatpush1.msra.mxu0 0.0
    %5324 = vmatprep.subr.mxu0 0.0
    %5325 = vmatpush1.msra.mxu0 0.0
    %5326 = vmatprep.subr.mxu0 0.0
    %5327 = vmatpush1.msra.mxu0 0.0
    %5328 = vmatprep.subr.mxu0 0.0
    %5329 = vmatpush1.msra.mxu0 0.0
    %5330 = vmatprep.mubr.f32.mxu0 0.0
    %5331 = vmatmul.mubr.f32.gmra.mrb[0].mxu0 %v5261
    %v5332 = vpop.f32.mrb[0].mxu0
    %v5333 = vadd.f32 %v5252, %v5332
    %v5334 = vpop.f32.mrb[0].mxu0
    %5335 = vmatprep.mubr.f32.mxu0 0.0
    %5336 = vmatmul.mubr.f32.gmra.mrb[0].mxu0 %v5264
    %v5337 = vpop.f32.mrb[0].mxu0
    %v5338 = vadd.f32 %v5257, %v5337
    %v5339 = vpop.f32.mrb[0].mxu0
    %5340 = vdwg.mxu0
    %v5341 = vadd.f32 %v5333, %v4040
    %v5342 = vadd.f32 %v5338, %v4041
    %v5343 = vld [vmem:[%s53] sm:$0x1]
    %v5344 = vld [vmem:[%s55] sm:$0x1]
    %v5345 = vsel %vm197, %v5341, 0.0
    %5346 = vadd.xlane.f32.xlu0 %v5345
    %v5347 = vpop.xlane.xlu0 %5346
    %v5348 = vsel %vm197, %v5342, 0.0
    %5349 = vadd.xlane.f32.xlu0 %v5348
    %v5350 = vpop.xlane.xlu0 %5349
    %v5351 = vmul.f32 %v5347, %v1733
    %v5352 = vmul.f32 %v5350, %v1733
    %v5353 = vsub.f32 %v5341, %v5351
    %v5354 = vsub.f32 %v5342, %v5352
    %v5355 = vmul.f32 %v5353, %v5353
    %v5356 = vmul.f32 %v5354, %v5354
    %v5357 = vsel %vm197, %v5355, 0.0
    %5358 = vadd.xlane.f32.xlu0 %v5357
    %v5359 = vpop.xlane.xlu0 %5358
    %v5360 = vsel %vm197, %v5356, 0.0
    %5361 = vadd.xlane.f32.xlu0 %v5360
    %v5362 = vpop.xlane.xlu0 %5361
    %v5363 = vmul.f32 %v5359, %v1733
    %v5364 = vmul.f32 %v5362, %v1733
    %v5365 = vadd.f32 %v5363, 1e-05
    %v5366 = vadd.f32 %v5364, 1e-05
    %v5367 = vrsqrt.pop %v5365
    %v5368 = vrsqrt.pop %v5366
    %v5369 = vmul.f32 %v5353, %v5367
    %v5370 = vmul.f32 %v5354, %v5368
    %v5372 = vlaneseq
    %v5373 = vshrl.u32 %v5372, 7
    %v5374 = vsub.s32 0, %v5373
    %v5375 = vrot.slane %v5343, %v5374
    %v5377 = vmul.f32 %v5369, %v5375
    %v5378 = vmul.f32 %v5370, %v5375
    %v5380 = vlaneseq
    %v5381 = vshrl.u32 %v5380, 7
    %v5382 = vsub.s32 0, %v5381
    %v5383 = vrot.slane %v5344, %v5382
    %v5385 = vadd.f32 %v5377, %v5383
    %v5386 = vadd.f32 %v5378, %v5383
    %v5387 = vld [vmem:[%s37] sm:$0xff]
    %v5388 = vld [vmem:[%s37 + $0x8] sm:$0xff]
    %v5389 = vld [vmem:[%s37 + $0x10] sm:$0xff]
    %v5390 = vld [vmem:[%s37 + $0x18] sm:$0xff]
    %v5392 = vsel %vm197, %v5385, 0
    %v5395 = vsel %vm197, %v5386, 0
    %5397 = vmatprep.subr.mxu0 0.0
    %5398 = vmatpush1.msra.mxu0 %v5387
    %5399 = vmatprep.subr.mxu0 0.0
    %5400 = vmatpush1.msra.mxu0 %v5388
    %5401 = vmatprep.subr.mxu0 0.0
    %5402 = vmatpush1.msra.mxu0 %v5389
    %5403 = vmatprep.subr.mxu0 0.0
    %5404 = vmatpush1.msra.mxu0 %v5390
    %5405 = vmatprep.subr.mxu0 0.0
    %5406 = vmatpush1.msra.mxu0 0.0
    %5407 = vmatprep.subr.mxu0 0.0
    %5408 = vmatpush1.msra.mxu0 0.0
    %5409 = vmatprep.subr.mxu0 0.0
    %5410 = vmatpush1.msra.mxu0 0.0
    %5411 = vmatprep.subr.mxu0 0.0
    %5412 = vmatpush1.msra.mxu0 0.0
    %5413 = vmatprep.subr.mxu0 0.0
    %5414 = vmatpush1.msra.mxu0 0.0
    %5415 = vmatprep.subr.mxu0 0.0
    %5416 = vmatpush1.msra.mxu0 0.0
    %5417 = vmatprep.subr.mxu0 0.0
    %5418 = vmatpush1.msra.mxu0 0.0
    %5419 = vmatprep.subr.mxu0 0.0
    %5420 = vmatpush1.msra.mxu0 0.0
    %5421 = vmatprep.subr.mxu0 0.0
    %5422 = vmatpush1.msra.mxu0 0.0
    %5423 = vmatprep.subr.mxu0 0.0
    %5424 = vmatpush1.msra.mxu0 0.0
    %5425 = vmatprep.subr.mxu0 0.0
    %5426 = vmatpush1.msra.mxu0 0.0
    %5427 = vmatprep.subr.mxu0 0.0
    %5428 = vmatpush1.msra.mxu0 0.0
    %5429 = vmatprep.subr.mxu0 0.0
    %5430 = vmatpush1.msra.mxu0 0.0
    %5431 = vmatprep.subr.mxu0 0.0
    %5432 = vmatpush1.msra.mxu0 0.0
    %5433 = vmatprep.subr.mxu0 0.0
    %5434 = vmatpush1.msra.mxu0 0.0
    %5435 = vmatprep.subr.mxu0 0.0
    %5436 = vmatpush1.msra.mxu0 0.0
    %5437 = vmatprep.subr.mxu0 0.0
    %5438 = vmatpush1.msra.mxu0 0.0
    %5439 = vmatprep.subr.mxu0 0.0
    %5440 = vmatpush1.msra.mxu0 0.0
    %5441 = vmatprep.subr.mxu0 0.0
    %5442 = vmatpush1.msra.mxu0 0.0
    %5443 = vmatprep.subr.mxu0 0.0
    %5444 = vmatpush1.msra.mxu0 0.0
    %5445 = vmatprep.subr.mxu0 0.0
    %5446 = vmatpush1.msra.mxu0 0.0
    %5447 = vmatprep.subr.mxu0 0.0
    %5448 = vmatpush1.msra.mxu0 0.0
    %5449 = vmatprep.subr.mxu0 0.0
    %5450 = vmatpush1.msra.mxu0 0.0
    %5451 = vmatprep.subr.mxu0 0.0
    %5452 = vmatpush1.msra.mxu0 0.0
    %5453 = vmatprep.subr.mxu0 0.0
    %5454 = vmatpush1.msra.mxu0 0.0
    %5455 = vmatprep.subr.mxu0 0.0
    %5456 = vmatpush1.msra.mxu0 0.0
    %5457 = vmatprep.subr.mxu0 0.0
    %5458 = vmatpush1.msra.mxu0 0.0
    %5459 = vmatprep.subr.mxu0 0.0
    %5460 = vmatpush1.msra.mxu0 0.0
    %5461 = vmatprep.mubr.f32.mxu0 0.0
    %5462 = vmatmul.mubr.f32.gmra.mrb[0].mxu0 %v5392
    %v5463 = vpop.f32.mrb[0].mxu0
    %v5464 = vadd.f32 0.0, %v5463
    %v5465 = vpop.f32.mrb[0].mxu0
    %5466 = vmatprep.mubr.f32.mxu0 0.0
    %5467 = vmatmul.mubr.f32.gmra.mrb[0].mxu0 %v5395
    %v5468 = vpop.f32.mrb[0].mxu0
    %v5469 = vadd.f32 0.0, %v5468
    %v5470 = vpop.f32.mrb[0].mxu0
    %5471 = vdwg.mxu0
    %v5472 = vld [vmem:[%s39] sm:$0xff]
    %v5473 = vld [vmem:[%s39 + $0x8] sm:$0xff]
    %v5474 = vld [vmem:[%s39 + $0x10] sm:$0xff]
    %v5475 = vld [vmem:[%s39 + $0x18] sm:$0xff]
    %v5477 = vsel %vm197, %v4036, 0
    %v5480 = vsel %vm197, %v4037, 0
    %v5483 = vsel %vm197, %v4038, 0
    %v5486 = vsel %vm197, %v4039, 0
    %5488 = vmatprep.subr.mxu0 0.0
    %5489 = vmatpush1.msra.mxu0 %v5472
    %5490 = vmatprep.subr.mxu0 0.0
    %5491 = vmatpush1.msra.mxu0 %v5473
    %5492 = vmatprep.subr.mxu0 0.0
    %5493 = vmatpush1.msra.mxu0 %v5474
    %5494 = vmatprep.subr.mxu0 0.0
    %5495 = vmatpush1.msra.mxu0 %v5475
    %5496 = vmatprep.subr.mxu0 0.0
    %5497 = vmatpush1.msra.mxu0 0.0
    %5498 = vmatprep.subr.mxu0 0.0
    %5499 = vmatpush1.msra.mxu0 0.0
    %5500 = vmatprep.subr.mxu0 0.0
    %5501 = vmatpush1.msra.mxu0 0.0
    %5502 = vmatprep.subr.mxu0 0.0
    %5503 = vmatpush1.msra.mxu0 0.0
    %5504 = vmatprep.subr.mxu0 0.0
    %5505 = vmatpush1.msra.mxu0 0.0
    %5506 = vmatprep.subr.mxu0 0.0
    %5507 = vmatpush1.msra.mxu0 0.0
    %5508 = vmatprep.subr.mxu0 0.0
    %5509 = vmatpush1.msra.mxu0 0.0
    %5510 = vmatprep.subr.mxu0 0.0
    %5511 = vmatpush1.msra.mxu0 0.0
    %5512 = vmatprep.subr.mxu0 0.0
    %5513 = vmatpush1.msra.mxu0 0.0
    %5514 = vmatprep.subr.mxu0 0.0
    %5515 = vmatpush1.msra.mxu0 0.0
    %5516 = vmatprep.subr.mxu0 0.0
    %5517 = vmatpush1.msra.mxu0 0.0
    %5518 = vmatprep.subr.mxu0 0.0
    %5519 = vmatpush1.msra.mxu0 0.0
    %5520 = vmatprep.subr.mxu0 0.0
    %5521 = vmatpush1.msra.mxu0 0.0
    %5522 = vmatprep.subr.mxu0 0.0
    %5523 = vmatpush1.msra.mxu0 0.0
    %5524 = vmatprep.subr.mxu0 0.0
    %5525 = vmatpush1.msra.mxu0 0.0
    %5526 = vmatprep.subr.mxu0 0.0
    %5527 = vmatpush1.msra.mxu0 0.0
    %5528 = vmatprep.subr.mxu0 0.0
    %5529 = vmatpush1.msra.mxu0 0.0
    %5530 = vmatprep.subr.mxu0 0.0
    %5531 = vmatpush1.msra.mxu0 0.0
    %5532 = vmatprep.subr.mxu0 0.0
    %5533 = vmatpush1.msra.mxu0 0.0
    %5534 = vmatprep.subr.mxu0 0.0
    %5535 = vmatpush1.msra.mxu0 0.0
    %5536 = vmatprep.subr.mxu0 0.0
    %5537 = vmatpush1.msra.mxu0 0.0
    %5538 = vmatprep.subr.mxu0 0.0
    %5539 = vmatpush1.msra.mxu0 0.0
    %5540 = vmatprep.subr.mxu0 0.0
    %5541 = vmatpush1.msra.mxu0 0.0
    %5542 = vmatprep.subr.mxu0 0.0
    %5543 = vmatpush1.msra.mxu0 0.0
    %5544 = vmatprep.subr.mxu0 0.0
    %5545 = vmatpush1.msra.mxu0 0.0
    %5546 = vmatprep.subr.mxu0 0.0
    %5547 = vmatpush1.msra.mxu0 0.0
    %5548 = vmatprep.subr.mxu0 0.0
    %5549 = vmatpush1.msra.mxu0 0.0
    %5550 = vmatprep.subr.mxu0 0.0
    %5551 = vmatpush1.msra.mxu0 0.0
    %5552 = vmatprep.mubr.f32.mxu0 0.0
    %5553 = vmatmul.mubr.f32.gmra.mrb[0].mxu0 %v5477
    %v5554 = vpop.f32.mrb[0].mxu0
    %v5555 = vadd.f32 0.0, %v5554
    %v5556 = vpop.f32.mrb[0].mxu0
    %5557 = vmatprep.mubr.f32.mxu0 0.0
    %5558 = vmatmul.mubr.f32.gmra.mrb[0].mxu0 %v5480
    %v5559 = vpop.f32.mrb[0].mxu0
    %v5560 = vadd.f32 0.0, %v5559
    %v5561 = vpop.f32.mrb[0].mxu0
    %5562 = vmatprep.mubr.f32.mxu0 0.0
    %5563 = vmatmul.mubr.f32.gmra.mrb[0].mxu0 %v5483
    %v5564 = vpop.f32.mrb[0].mxu0
    %v5565 = vadd.f32 0.0, %v5564
    %v5566 = vpop.f32.mrb[0].mxu0
    %5567 = vmatprep.mubr.f32.mxu0 0.0
    %5568 = vmatmul.mubr.f32.gmra.mrb[0].mxu0 %v5486
    %v5569 = vpop.f32.mrb[0].mxu0
    %v5570 = vadd.f32 0.0, %v5569
    %v5571 = vpop.f32.mrb[0].mxu0
    %5572 = vdwg.mxu0
    %v5573 = vld [vmem:[%s41] sm:$0xff]
    %v5574 = vld [vmem:[%s41 + $0x8] sm:$0xff]
    %v5575 = vld [vmem:[%s41 + $0x10] sm:$0xff]
    %v5576 = vld [vmem:[%s41 + $0x18] sm:$0xff]
    %5577 = vmatprep.subr.mxu0 0.0
    %5578 = vmatpush1.msra.mxu0 %v5573
    %5579 = vmatprep.subr.mxu0 0.0
    %5580 = vmatpush1.msra.mxu0 %v5574
    %5581 = vmatprep.subr.mxu0 0.0
    %5582 = vmatpush1.msra.mxu0 %v5575
    %5583 = vmatprep.subr.mxu0 0.0
    %5584 = vmatpush1.msra.mxu0 %v5576
    %5585 = vmatprep.subr.mxu0 0.0
    %5586 = vmatpush1.msra.mxu0 0.0
    %5587 = vmatprep.subr.mxu0 0.0
    %5588 = vmatpush1.msra.mxu0 0.0
    %5589 = vmatprep.subr.mxu0 0.0
    %5590 = vmatpush1.msra.mxu0 0.0
    %5591 = vmatprep.subr.mxu0 0.0
    %5592 = vmatpush1.msra.mxu0 0.0
    %5593 = vmatprep.subr.mxu0 0.0
    %5594 = vmatpush1.msra.mxu0 0.0
    %5595 = vmatprep.subr.mxu0 0.0
    %5596 = vmatpush1.msra.mxu0 0.0
    %5597 = vmatprep.subr.mxu0 0.0
    %5598 = vmatpush1.msra.mxu0 0.0
    %5599 = vmatprep.subr.mxu0 0.0
    %5600 = vmatpush1.msra.mxu0 0.0
    %5601 = vmatprep.subr.mxu0 0.0
    %5602 = vmatpush1.msra.mxu0 0.0
    %5603 = vmatprep.subr.mxu0 0.0
    %5604 = vmatpush1.msra.mxu0 0.0
    %5605 = vmatprep.subr.mxu0 0.0
    %5606 = vmatpush1.msra.mxu0 0.0
    %5607 = vmatprep.subr.mxu0 0.0
    %5608 = vmatpush1.msra.mxu0 0.0
    %5609 = vmatprep.subr.mxu0 0.0
    %5610 = vmatpush1.msra.mxu0 0.0
    %5611 = vmatprep.subr.mxu0 0.0
    %5612 = vmatpush1.msra.mxu0 0.0
    %5613 = vmatprep.subr.mxu0 0.0
    %5614 = vmatpush1.msra.mxu0 0.0
    %5615 = vmatprep.subr.mxu0 0.0
    %5616 = vmatpush1.msra.mxu0 0.0
    %5617 = vmatprep.subr.mxu0 0.0
    %5618 = vmatpush1.msra.mxu0 0.0
    %5619 = vmatprep.subr.mxu0 0.0
    %5620 = vmatpush1.msra.mxu0 0.0
    %5621 = vmatprep.subr.mxu0 0.0
    %5622 = vmatpush1.msra.mxu0 0.0
    %5623 = vmatprep.subr.mxu0 0.0
    %5624 = vmatpush1.msra.mxu0 0.0
    %5625 = vmatprep.subr.mxu0 0.0
    %5626 = vmatpush1.msra.mxu0 0.0
    %5627 = vmatprep.subr.mxu0 0.0
    %5628 = vmatpush1.msra.mxu0 0.0
    %5629 = vmatprep.subr.mxu0 0.0
    %5630 = vmatpush1.msra.mxu0 0.0
    %5631 = vmatprep.subr.mxu0 0.0
    %5632 = vmatpush1.msra.mxu0 0.0
    %5633 = vmatprep.subr.mxu0 0.0
    %5634 = vmatpush1.msra.mxu0 0.0
    %5635 = vmatprep.subr.mxu0 0.0
    %5636 = vmatpush1.msra.mxu0 0.0
    %5637 = vmatprep.subr.mxu0 0.0
    %5638 = vmatpush1.msra.mxu0 0.0
    %5639 = vmatprep.subr.mxu0 0.0
    %5640 = vmatpush1.msra.mxu0 0.0
    %5641 = vmatprep.mubr.f32.mxu0 0.0
    %5642 = vmatmul.mubr.f32.gmra.mrb[0].mxu0 %v5477
    %v5643 = vpop.f32.mrb[0].mxu0
    %v5644 = vadd.f32 0.0, %v5643
    %v5645 = vpop.f32.mrb[0].mxu0
    %5646 = vmatprep.mubr.f32.mxu0 0.0
    %5647 = vmatmul.mubr.f32.gmra.mrb[0].mxu0 %v5480
    %v5648 = vpop.f32.mrb[0].mxu0
    %v5649 = vadd.f32 0.0, %v5648
    %v5650 = vpop.f32.mrb[0].mxu0
    %5651 = vmatprep.mubr.f32.mxu0 0.0
    %5652 = vmatmul.mubr.f32.gmra.mrb[0].mxu0 %v5483
    %v5653 = vpop.f32.mrb[0].mxu0
    %v5654 = vadd.f32 0.0, %v5653
    %v5655 = vpop.f32.mrb[0].mxu0
    %5656 = vmatprep.mubr.f32.mxu0 0.0
    %5657 = vmatmul.mubr.f32.gmra.mrb[0].mxu0 %v5486
    %v5658 = vpop.f32.mrb[0].mxu0
    %v5659 = vadd.f32 0.0, %v5658
    %v5660 = vpop.f32.mrb[0].mxu0
    %5661 = vdwg.mxu0
    %v5663 = vsel %vm473, %v5464, 0
    %v5666 = vsel %vm473, %v5555, 0
    %v5669 = vsel %vm473, %v5560, 0
    %5671 = vmatprep.subr.mxu0 0.0
    %5672 = vmatpush1.xpose.msra.mxu0 %v5666
    %5673 = vmatprep.subr.mxu0 0.0
    %5674 = vmatpush1.xpose.msra.mxu0 %v5669
    %5675 = vmatprep.subr.mxu0 0.0
    %5676 = vmatpush1.xpose.msra.mxu0 0.0
    %5677 = vmatprep.subr.mxu0 0.0
    %5678 = vmatpush1.xpose.msra.mxu0 0.0
    %5679 = vmatprep.subr.mxu0 0.0
    %5680 = vmatpush1.xpose.msra.mxu0 0.0
    %5681 = vmatprep.subr.mxu0 0.0
    %5682 = vmatpush1.xpose.msra.mxu0 0.0
    %5683 = vmatprep.subr.mxu0 0.0
    %5684 = vmatpush1.xpose.msra.mxu0 0.0
    %5685 = vmatprep.subr.mxu0 0.0
    %5686 = vmatpush1.xpose.msra.mxu0 0.0
    %5687 = vmatprep.subr.mxu0 0.0
    %5688 = vmatpush1.xpose.msra.mxu0 0.0
    %5689 = vmatprep.subr.mxu0 0.0
    %5690 = vmatpush1.xpose.msra.mxu0 0.0
    %5691 = vmatprep.subr.mxu0 0.0
    %5692 = vmatpush1.xpose.msra.mxu0 0.0
    %5693 = vmatprep.subr.mxu0 0.0
    %5694 = vmatpush1.xpose.msra.mxu0 0.0
    %5695 = vmatprep.subr.mxu0 0.0
    %5696 = vmatpush1.xpose.msra.mxu0 0.0
    %5697 = vmatprep.subr.mxu0 0.0
    %5698 = vmatpush1.xpose.msra.mxu0 0.0
    %5699 = vmatprep.subr.mxu0 0.0
    %5700 = vmatpush1.xpose.msra.mxu0 0.0
    %5701 = vmatprep.subr.mxu0 0.0
    %5702 = vmatpush1.xpose.msra.mxu0 0.0
    %5703 = vmatprep.subr.mxu0 0.0
    %5704 = vmatpush1.xpose.msra.mxu0 0.0
    %5705 = vmatprep.subr.mxu0 0.0
    %5706 = vmatpush1.xpose.msra.mxu0 0.0
    %5707 = vmatprep.subr.mxu0 0.0
    %5708 = vmatpush1.xpose.msra.mxu0 0.0
    %5709 = vmatprep.subr.mxu0 0.0
    %5710 = vmatpush1.xpose.msra.mxu0 0.0
    %5711 = vmatprep.subr.mxu0 0.0
    %5712 = vmatpush1.xpose.msra.mxu0 0.0
    %5713 = vmatprep.subr.mxu0 0.0
    %5714 = vmatpush1.xpose.msra.mxu0 0.0
    %5715 = vmatprep.subr.mxu0 0.0
    %5716 = vmatpush1.xpose.msra.mxu0 0.0
    %5717 = vmatprep.subr.mxu0 0.0
    %5718 = vmatpush1.xpose.msra.mxu0 0.0
    %5719 = vmatprep.subr.mxu0 0.0
    %5720 = vmatpush1.xpose.msra.mxu0 0.0
    %5721 = vmatprep.subr.mxu0 0.0
    %5722 = vmatpush1.xpose.msra.mxu0 0.0
    %5723 = vmatprep.subr.mxu0 0.0
    %5724 = vmatpush1.xpose.msra.mxu0 0.0
    %5725 = vmatprep.subr.mxu0 0.0
    %5726 = vmatpush1.xpose.msra.mxu0 0.0
    %5727 = vmatprep.subr.mxu0 0.0
    %5728 = vmatpush1.xpose.msra.mxu0 0.0
    %5729 = vmatprep.subr.mxu0 0.0
    %5730 = vmatpush1.xpose.msra.mxu0 0.0
    %5731 = vmatprep.subr.mxu0 0.0
    %5732 = vmatpush1.xpose.msra.mxu0 0.0
    %5733 = vmatprep.subr.mxu0 0.0
    %5734 = vmatpush1.xpose.msra.mxu0 0.0
    %5735 = vmatprep.mubr.f32.mxu0 0.0
    %5736 = vmatmul.mubr.f32.gmra.mrb[0].mxu0 %v5663
    %v5737 = vpop.f32.mrb[0].mxu0
    %v5738 = vadd.f32 0.0, %v5737
    %v5739 = vpop.f32.mrb[0].mxu0
    %5740 = vdwg.mxu0
    %v5741 = vmul.f32 %v5738, 0.25
    %v5742 = vsel %vm473, %v5741, -inf
    %5743 = vmax.xlane.f32.xlu0 %v5742
    %v5744 = vpop.xlane.xlu0 %5743
    %v5745 = vsub.f32 %v5741, %v5744
    %v5746 = vmul.f32 %v5745, 1.442695
    %v5747 = vpow.pop %v5746
    %v5748 = vsel %vm473, %v5747, 0.0
    %5749 = vadd.xlane.f32.xlu0 %v5748
    %v5750 = vpop.xlane.xlu0 %5749
    %v5751 = vrcp.pop %v5750
    %v5752 = vmul.f32 %v5747, %v5751
    %v5754 = vsel %vm473, %v5752, 0
    %5756 = vmatprep.subr.mxu0 0.0
    %5757 = vmatpush1.msra.mxu0 %v5644
    %5758 = vmatprep.subr.mxu0 0.0
    %5759 = vmatpush1.msra.mxu0 %v5649
    %5760 = vmatprep.subr.mxu0 0.0
    %5761 = vmatpush1.msra.mxu0 0.0
    %5762 = vmatprep.subr.mxu0 0.0
    %5763 = vmatpush1.msra.mxu0 0.0
    %5764 = vmatprep.subr.mxu0 0.0
    %5765 = vmatpush1.msra.mxu0 0.0
    %5766 = vmatprep.subr.mxu0 0.0
    %5767 = vmatpush1.msra.mxu0 0.0
    %5768 = vmatprep.subr.mxu0 0.0
    %5769 = vmatpush1.msra.mxu0 0.0
    %5770 = vmatprep.subr.mxu0 0.0
    %5771 = vmatpush1.msra.mxu0 0.0
    %5772 = vmatprep.subr.mxu0 0.0
    %5773 = vmatpush1.msra.mxu0 0.0
    %5774 = vmatprep.subr.mxu0 0.0
    %5775 = vmatpush1.msra.mxu0 0.0
    %5776 = vmatprep.subr.mxu0 0.0
    %5777 = vmatpush1.msra.mxu0 0.0
    %5778 = vmatprep.subr.mxu0 0.0
    %5779 = vmatpush1.msra.mxu0 0.0
    %5780 = vmatprep.subr.mxu0 0.0
    %5781 = vmatpush1.msra.mxu0 0.0
    %5782 = vmatprep.subr.mxu0 0.0
    %5783 = vmatpush1.msra.mxu0 0.0
    %5784 = vmatprep.subr.mxu0 0.0
    %5785 = vmatpush1.msra.mxu0 0.0
    %5786 = vmatprep.subr.mxu0 0.0
    %5787 = vmatpush1.msra.mxu0 0.0
    %5788 = vmatprep.subr.mxu0 0.0
    %5789 = vmatpush1.msra.mxu0 0.0
    %5790 = vmatprep.subr.mxu0 0.0
    %5791 = vmatpush1.msra.mxu0 0.0
    %5792 = vmatprep.subr.mxu0 0.0
    %5793 = vmatpush1.msra.mxu0 0.0
    %5794 = vmatprep.subr.mxu0 0.0
    %5795 = vmatpush1.msra.mxu0 0.0
    %5796 = vmatprep.subr.mxu0 0.0
    %5797 = vmatpush1.msra.mxu0 0.0
    %5798 = vmatprep.subr.mxu0 0.0
    %5799 = vmatpush1.msra.mxu0 0.0
    %5800 = vmatprep.subr.mxu0 0.0
    %5801 = vmatpush1.msra.mxu0 0.0
    %5802 = vmatprep.subr.mxu0 0.0
    %5803 = vmatpush1.msra.mxu0 0.0
    %5804 = vmatprep.subr.mxu0 0.0
    %5805 = vmatpush1.msra.mxu0 0.0
    %5806 = vmatprep.subr.mxu0 0.0
    %5807 = vmatpush1.msra.mxu0 0.0
    %5808 = vmatprep.subr.mxu0 0.0
    %5809 = vmatpush1.msra.mxu0 0.0
    %5810 = vmatprep.subr.mxu0 0.0
    %5811 = vmatpush1.msra.mxu0 0.0
    %5812 = vmatprep.subr.mxu0 0.0
    %5813 = vmatpush1.msra.mxu0 0.0
    %5814 = vmatprep.subr.mxu0 0.0
    %5815 = vmatpush1.msra.mxu0 0.0
    %5816 = vmatprep.subr.mxu0 0.0
    %5817 = vmatpush1.msra.mxu0 0.0
    %5818 = vmatprep.subr.mxu0 0.0
    %5819 = vmatpush1.msra.mxu0 0.0
    %5820 = vmatprep.mubr.f32.mxu0 0.0
    %5821 = vmatmul.mubr.f32.gmra.mrb[0].mxu0 %v5754
    %v5822 = vpop.f32.mrb[0].mxu0
    %v5823 = vadd.f32 0.0, %v5822
    %v5824 = vpop.f32.mrb[0].mxu0
    %5825 = vdwg.mxu0
    %v5827 = vsel %vm473, %v5469, 0
    %v5830 = vsel %vm473, %v5565, 0
    %v5833 = vsel %vm473, %v5570, 0
    %5835 = vmatprep.subr.mxu0 0.0
    %5836 = vmatpush1.xpose.msra.mxu0 %v5830
    %5837 = vmatprep.subr.mxu0 0.0
    %5838 = vmatpush1.xpose.msra.mxu0 %v5833
    %5839 = vmatprep.subr.mxu0 0.0
    %5840 = vmatpush1.xpose.msra.mxu0 0.0
    %5841 = vmatprep.subr.mxu0 0.0
    %5842 = vmatpush1.xpose.msra.mxu0 0.0
    %5843 = vmatprep.subr.mxu0 0.0
    %5844 = vmatpush1.xpose.msra.mxu0 0.0
    %5845 = vmatprep.subr.mxu0 0.0
    %5846 = vmatpush1.xpose.msra.mxu0 0.0
    %5847 = vmatprep.subr.mxu0 0.0
    %5848 = vmatpush1.xpose.msra.mxu0 0.0
    %5849 = vmatprep.subr.mxu0 0.0
    %5850 = vmatpush1.xpose.msra.mxu0 0.0
    %5851 = vmatprep.subr.mxu0 0.0
    %5852 = vmatpush1.xpose.msra.mxu0 0.0
    %5853 = vmatprep.subr.mxu0 0.0
    %5854 = vmatpush1.xpose.msra.mxu0 0.0
    %5855 = vmatprep.subr.mxu0 0.0
    %5856 = vmatpush1.xpose.msra.mxu0 0.0
    %5857 = vmatprep.subr.mxu0 0.0
    %5858 = vmatpush1.xpose.msra.mxu0 0.0
    %5859 = vmatprep.subr.mxu0 0.0
    %5860 = vmatpush1.xpose.msra.mxu0 0.0
    %5861 = vmatprep.subr.mxu0 0.0
    %5862 = vmatpush1.xpose.msra.mxu0 0.0
    %5863 = vmatprep.subr.mxu0 0.0
    %5864 = vmatpush1.xpose.msra.mxu0 0.0
    %5865 = vmatprep.subr.mxu0 0.0
    %5866 = vmatpush1.xpose.msra.mxu0 0.0
    %5867 = vmatprep.subr.mxu0 0.0
    %5868 = vmatpush1.xpose.msra.mxu0 0.0
    %5869 = vmatprep.subr.mxu0 0.0
    %5870 = vmatpush1.xpose.msra.mxu0 0.0
    %5871 = vmatprep.subr.mxu0 0.0
    %5872 = vmatpush1.xpose.msra.mxu0 0.0
    %5873 = vmatprep.subr.mxu0 0.0
    %5874 = vmatpush1.xpose.msra.mxu0 0.0
    %5875 = vmatprep.subr.mxu0 0.0
    %5876 = vmatpush1.xpose.msra.mxu0 0.0
    %5877 = vmatprep.subr.mxu0 0.0
    %5878 = vmatpush1.xpose.msra.mxu0 0.0
    %5879 = vmatprep.subr.mxu0 0.0
    %5880 = vmatpush1.xpose.msra.mxu0 0.0
    %5881 = vmatprep.subr.mxu0 0.0
    %5882 = vmatpush1.xpose.msra.mxu0 0.0
    %5883 = vmatprep.subr.mxu0 0.0
    %5884 = vmatpush1.xpose.msra.mxu0 0.0
    %5885 = vmatprep.subr.mxu0 0.0
    %5886 = vmatpush1.xpose.msra.mxu0 0.0
    %5887 = vmatprep.subr.mxu0 0.0
    %5888 = vmatpush1.xpose.msra.mxu0 0.0
    %5889 = vmatprep.subr.mxu0 0.0
    %5890 = vmatpush1.xpose.msra.mxu0 0.0
    %5891 = vmatprep.subr.mxu0 0.0
    %5892 = vmatpush1.xpose.msra.mxu0 0.0
    %5893 = vmatprep.subr.mxu0 0.0
    %5894 = vmatpush1.xpose.msra.mxu0 0.0
    %5895 = vmatprep.subr.mxu0 0.0
    %5896 = vmatpush1.xpose.msra.mxu0 0.0
    %5897 = vmatprep.subr.mxu0 0.0
    %5898 = vmatpush1.xpose.msra.mxu0 0.0
    %5899 = vmatprep.mubr.f32.mxu0 0.0
    %5900 = vmatmul.mubr.f32.gmra.mrb[0].mxu0 %v5827
    %v5901 = vpop.f32.mrb[0].mxu0
    %v5902 = vadd.f32 0.0, %v5901
    %v5903 = vpop.f32.mrb[0].mxu0
    %5904 = vdwg.mxu0
    %v5905 = vmul.f32 %v5902, 0.25
    %v5906 = vsel %vm473, %v5905, -inf
    %5907 = vmax.xlane.f32.xlu0 %v5906
    %v5908 = vpop.xlane.xlu0 %5907
    %v5909 = vsub.f32 %v5905, %v5908
    %v5910 = vmul.f32 %v5909, 1.442695
    %v5911 = vpow.pop %v5910
    %v5912 = vsel %vm473, %v5911, 0.0
    %5913 = vadd.xlane.f32.xlu0 %v5912
    %v5914 = vpop.xlane.xlu0 %5913
    %v5915 = vrcp.pop %v5914
    %v5916 = vmul.f32 %v5911, %v5915
    %v5918 = vsel %vm473, %v5916, 0
    %5920 = vmatprep.subr.mxu0 0.0
    %5921 = vmatpush1.msra.mxu0 %v5654
    %5922 = vmatprep.subr.mxu0 0.0
    %5923 = vmatpush1.msra.mxu0 %v5659
    %5924 = vmatprep.subr.mxu0 0.0
    %5925 = vmatpush1.msra.mxu0 0.0
    %5926 = vmatprep.subr.mxu0 0.0
    %5927 = vmatpush1.msra.mxu0 0.0
    %5928 = vmatprep.subr.mxu0 0.0
    %5929 = vmatpush1.msra.mxu0 0.0
    %5930 = vmatprep.subr.mxu0 0.0
    %5931 = vmatpush1.msra.mxu0 0.0
    %5932 = vmatprep.subr.mxu0 0.0
    %5933 = vmatpush1.msra.mxu0 0.0
    %5934 = vmatprep.subr.mxu0 0.0
    %5935 = vmatpush1.msra.mxu0 0.0
    %5936 = vmatprep.subr.mxu0 0.0
    %5937 = vmatpush1.msra.mxu0 0.0
    %5938 = vmatprep.subr.mxu0 0.0
    %5939 = vmatpush1.msra.mxu0 0.0
    %5940 = vmatprep.subr.mxu0 0.0
    %5941 = vmatpush1.msra.mxu0 0.0
    %5942 = vmatprep.subr.mxu0 0.0
    %5943 = vmatpush1.msra.mxu0 0.0
    %5944 = vmatprep.subr.mxu0 0.0
    %5945 = vmatpush1.msra.mxu0 0.0
    %5946 = vmatprep.subr.mxu0 0.0
    %5947 = vmatpush1.msra.mxu0 0.0
    %5948 = vmatprep.subr.mxu0 0.0
    %5949 = vmatpush1.msra.mxu0 0.0
    %5950 = vmatprep.subr.mxu0 0.0
    %5951 = vmatpush1.msra.mxu0 0.0
    %5952 = vmatprep.subr.mxu0 0.0
    %5953 = vmatpush1.msra.mxu0 0.0
    %5954 = vmatprep.subr.mxu0 0.0
    %5955 = vmatpush1.msra.mxu0 0.0
    %5956 = vmatprep.subr.mxu0 0.0
    %5957 = vmatpush1.msra.mxu0 0.0
    %5958 = vmatprep.subr.mxu0 0.0
    %5959 = vmatpush1.msra.mxu0 0.0
    %5960 = vmatprep.subr.mxu0 0.0
    %5961 = vmatpush1.msra.mxu0 0.0
    %5962 = vmatprep.subr.mxu0 0.0
    %5963 = vmatpush1.msra.mxu0 0.0
    %5964 = vmatprep.subr.mxu0 0.0
    %5965 = vmatpush1.msra.mxu0 0.0
    %5966 = vmatprep.subr.mxu0 0.0
    %5967 = vmatpush1.msra.mxu0 0.0
    %5968 = vmatprep.subr.mxu0 0.0
    %5969 = vmatpush1.msra.mxu0 0.0
    %5970 = vmatprep.subr.mxu0 0.0
    %5971 = vmatpush1.msra.mxu0 0.0
    %5972 = vmatprep.subr.mxu0 0.0
    %5973 = vmatpush1.msra.mxu0 0.0
    %5974 = vmatprep.subr.mxu0 0.0
    %5975 = vmatpush1.msra.mxu0 0.0
    %5976 = vmatprep.subr.mxu0 0.0
    %5977 = vmatpush1.msra.mxu0 0.0
    %5978 = vmatprep.subr.mxu0 0.0
    %5979 = vmatpush1.msra.mxu0 0.0
    %5980 = vmatprep.subr.mxu0 0.0
    %5981 = vmatpush1.msra.mxu0 0.0
    %5982 = vmatprep.subr.mxu0 0.0
    %5983 = vmatpush1.msra.mxu0 0.0
    %5984 = vmatprep.mubr.f32.mxu0 0.0
    %5985 = vmatmul.mubr.f32.gmra.mrb[0].mxu0 %v5918
    %v5986 = vpop.f32.mrb[0].mxu0
    %v5987 = vadd.f32 0.0, %v5986
    %v5988 = vpop.f32.mrb[0].mxu0
    %5989 = vdwg.mxu0
    %v5990 = vld [vmem:[%s43] sm:$0xff]
    %v5991 = vld [vmem:[%s43 + $0x8] sm:$0xff]
    %v5992 = vld [vmem:[%s43 + $0x10] sm:$0xff]
    %v5993 = vld [vmem:[%s43 + $0x18] sm:$0xff]
    %s5994 = scalar_lea.vmem %s37, 32
    %v5995 = vld [vmem:[%s5994] sm:$0xff]
    %v5996 = vld [vmem:[%s5994 + $0x8] sm:$0xff]
    %v5997 = vld [vmem:[%s5994 + $0x10] sm:$0xff]
    %v5998 = vld [vmem:[%s5994 + $0x18] sm:$0xff]
    %5999 = vmatprep.subr.mxu0 0.0
    %6000 = vmatpush1.msra.mxu0 %v5995
    %6001 = vmatprep.subr.mxu0 0.0
    %6002 = vmatpush1.msra.mxu0 %v5996
    %6003 = vmatprep.subr.mxu0 0.0
    %6004 = vmatpush1.msra.mxu0 %v5997
    %6005 = vmatprep.subr.mxu0 0.0
    %6006 = vmatpush1.msra.mxu0 %v5998
    %6007 = vmatprep.subr.mxu0 0.0
    %6008 = vmatpush1.msra.mxu0 0.0
    %6009 = vmatprep.subr.mxu0 0.0
    %6010 = vmatpush1.msra.mxu0 0.0
    %6011 = vmatprep.subr.mxu0 0.0
    %6012 = vmatpush1.msra.mxu0 0.0
    %6013 = vmatprep.subr.mxu0 0.0
    %6014 = vmatpush1.msra.mxu0 0.0
    %6015 = vmatprep.subr.mxu0 0.0
    %6016 = vmatpush1.msra.mxu0 0.0
    %6017 = vmatprep.subr.mxu0 0.0
    %6018 = vmatpush1.msra.mxu0 0.0
    %6019 = vmatprep.subr.mxu0 0.0
    %6020 = vmatpush1.msra.mxu0 0.0
    %6021 = vmatprep.subr.mxu0 0.0
    %6022 = vmatpush1.msra.mxu0 0.0
    %6023 = vmatprep.subr.mxu0 0.0
    %6024 = vmatpush1.msra.mxu0 0.0
    %6025 = vmatprep.subr.mxu0 0.0
    %6026 = vmatpush1.msra.mxu0 0.0
    %6027 = vmatprep.subr.mxu0 0.0
    %6028 = vmatpush1.msra.mxu0 0.0
    %6029 = vmatprep.subr.mxu0 0.0
    %6030 = vmatpush1.msra.mxu0 0.0
    %6031 = vmatprep.subr.mxu0 0.0
    %6032 = vmatpush1.msra.mxu0 0.0
    %6033 = vmatprep.subr.mxu0 0.0
    %6034 = vmatpush1.msra.mxu0 0.0
    %6035 = vmatprep.subr.mxu0 0.0
    %6036 = vmatpush1.msra.mxu0 0.0
    %6037 = vmatprep.subr.mxu0 0.0
    %6038 = vmatpush1.msra.mxu0 0.0
    %6039 = vmatprep.subr.mxu0 0.0
    %6040 = vmatpush1.msra.mxu0 0.0
    %6041 = vmatprep.subr.mxu0 0.0
    %6042 = vmatpush1.msra.mxu0 0.0
    %6043 = vmatprep.subr.mxu0 0.0
    %6044 = vmatpush1.msra.mxu0 0.0
    %6045 = vmatprep.subr.mxu0 0.0
    %6046 = vmatpush1.msra.mxu0 0.0
    %6047 = vmatprep.subr.mxu0 0.0
    %6048 = vmatpush1.msra.mxu0 0.0
    %6049 = vmatprep.subr.mxu0 0.0
    %6050 = vmatpush1.msra.mxu0 0.0
    %6051 = vmatprep.subr.mxu0 0.0
    %6052 = vmatpush1.msra.mxu0 0.0
    %6053 = vmatprep.subr.mxu0 0.0
    %6054 = vmatpush1.msra.mxu0 0.0
    %6055 = vmatprep.subr.mxu0 0.0
    %6056 = vmatpush1.msra.mxu0 0.0
    %6057 = vmatprep.subr.mxu0 0.0
    %6058 = vmatpush1.msra.mxu0 0.0
    %6059 = vmatprep.subr.mxu0 0.0
    %6060 = vmatpush1.msra.mxu0 0.0
    %6061 = vmatprep.subr.mxu0 0.0
    %6062 = vmatpush1.msra.mxu0 0.0
    %6063 = vmatprep.mubr.f32.mxu0 0.0
    %6064 = vmatmul.mubr.f32.gmra.mrb[0].mxu0 %v5392
    %v6065 = vpop.f32.mrb[0].mxu0
    %v6066 = vadd.f32 0.0, %v6065
    %v6067 = vpop.f32.mrb[0].mxu0
    %6068 = vmatprep.mubr.f32.mxu0 0.0
    %6069 = vmatmul.mubr.f32.gmra.mrb[0].mxu0 %v5395
    %v6070 = vpop.f32.mrb[0].mxu0
    %v6071 = vadd.f32 0.0, %v6070
    %v6072 = vpop.f32.mrb[0].mxu0
    %6073 = vdwg.mxu0
    %s6074 = scalar_lea.vmem %s39, 32
    %v6075 = vld [vmem:[%s6074] sm:$0xff]
    %v6076 = vld [vmem:[%s6074 + $0x8] sm:$0xff]
    %v6077 = vld [vmem:[%s6074 + $0x10] sm:$0xff]
    %v6078 = vld [vmem:[%s6074 + $0x18] sm:$0xff]
    %6079 = vmatprep.subr.mxu0 0.0
    %6080 = vmatpush1.msra.mxu0 %v6075
    %6081 = vmatprep.subr.mxu0 0.0
    %6082 = vmatpush1.msra.mxu0 %v6076
    %6083 = vmatprep.subr.mxu0 0.0
    %6084 = vmatpush1.msra.mxu0 %v6077
    %6085 = vmatprep.subr.mxu0 0.0
    %6086 = vmatpush1.msra.mxu0 %v6078
    %6087 = vmatprep.subr.mxu0 0.0
    %6088 = vmatpush1.msra.mxu0 0.0
    %6089 = vmatprep.subr.mxu0 0.0
    %6090 = vmatpush1.msra.mxu0 0.0
    %6091 = vmatprep.subr.mxu0 0.0
    %6092 = vmatpush1.msra.mxu0 0.0
    %6093 = vmatprep.subr.mxu0 0.0
    %6094 = vmatpush1.msra.mxu0 0.0
    %6095 = vmatprep.subr.mxu0 0.0
    %6096 = vmatpush1.msra.mxu0 0.0
    %6097 = vmatprep.subr.mxu0 0.0
    %6098 = vmatpush1.msra.mxu0 0.0
    %6099 = vmatprep.subr.mxu0 0.0
    %6100 = vmatpush1.msra.mxu0 0.0
    %6101 = vmatprep.subr.mxu0 0.0
    %6102 = vmatpush1.msra.mxu0 0.0
    %6103 = vmatprep.subr.mxu0 0.0
    %6104 = vmatpush1.msra.mxu0 0.0
    %6105 = vmatprep.subr.mxu0 0.0
    %6106 = vmatpush1.msra.mxu0 0.0
    %6107 = vmatprep.subr.mxu0 0.0
    %6108 = vmatpush1.msra.mxu0 0.0
    %6109 = vmatprep.subr.mxu0 0.0
    %6110 = vmatpush1.msra.mxu0 0.0
    %6111 = vmatprep.subr.mxu0 0.0
    %6112 = vmatpush1.msra.mxu0 0.0
    %6113 = vmatprep.subr.mxu0 0.0
    %6114 = vmatpush1.msra.mxu0 0.0
    %6115 = vmatprep.subr.mxu0 0.0
    %6116 = vmatpush1.msra.mxu0 0.0
    %6117 = vmatprep.subr.mxu0 0.0
    %6118 = vmatpush1.msra.mxu0 0.0
    %6119 = vmatprep.subr.mxu0 0.0
    %6120 = vmatpush1.msra.mxu0 0.0
    %6121 = vmatprep.subr.mxu0 0.0
    %6122 = vmatpush1.msra.mxu0 0.0
    %6123 = vmatprep.subr.mxu0 0.0
    %6124 = vmatpush1.msra.mxu0 0.0
    %6125 = vmatprep.subr.mxu0 0.0
    %6126 = vmatpush1.msra.mxu0 0.0
    %6127 = vmatprep.subr.mxu0 0.0
    %6128 = vmatpush1.msra.mxu0 0.0
    %6129 = vmatprep.subr.mxu0 0.0
    %6130 = vmatpush1.msra.mxu0 0.0
    %6131 = vmatprep.subr.mxu0 0.0
    %6132 = vmatpush1.msra.mxu0 0.0
    %6133 = vmatprep.subr.mxu0 0.0
    %6134 = vmatpush1.msra.mxu0 0.0
    %6135 = vmatprep.subr.mxu0 0.0
    %6136 = vmatpush1.msra.mxu0 0.0
    %6137 = vmatprep.subr.mxu0 0.0
    %6138 = vmatpush1.msra.mxu0 0.0
    %6139 = vmatprep.subr.mxu0 0.0
    %6140 = vmatpush1.msra.mxu0 0.0
    %6141 = vmatprep.subr.mxu0 0.0
    %6142 = vmatpush1.msra.mxu0 0.0
    %6143 = vmatprep.mubr.f32.mxu0 0.0
    %6144 = vmatmul.mubr.f32.gmra.mrb[0].mxu0 %v5477
    %v6145 = vpop.f32.mrb[0].mxu0
    %v6146 = vadd.f32 0.0, %v6145
    %v6147 = vpop.f32.mrb[0].mxu0
    %6148 = vmatprep.mubr.f32.mxu0 0.0
    %6149 = vmatmul.mubr.f32.gmra.mrb[0].mxu0 %v5480
    %v6150 = vpop.f32.mrb[0].mxu0
    %v6151 = vadd.f32 0.0, %v6150
    %v6152 = vpop.f32.mrb[0].mxu0
    %6153 = vmatprep.mubr.f32.mxu0 0.0
    %6154 = vmatmul.mubr.f32.gmra.mrb[0].mxu0 %v5483
    %v6155 = vpop.f32.mrb[0].mxu0
    %v6156 = vadd.f32 0.0, %v6155
    %v6157 = vpop.f32.mrb[0].mxu0
    %6158 = vmatprep.mubr.f32.mxu0 0.0
    %6159 = vmatmul.mubr.f32.gmra.mrb[0].mxu0 %v5486
    %v6160 = vpop.f32.mrb[0].mxu0
    %v6161 = vadd.f32 0.0, %v6160
    %v6162 = vpop.f32.mrb[0].mxu0
    %6163 = vdwg.mxu0
    %s6164 = scalar_lea.vmem %s41, 32
    %v6165 = vld [vmem:[%s6164] sm:$0xff]
    %v6166 = vld [vmem:[%s6164 + $0x8] sm:$0xff]
    %v6167 = vld [vmem:[%s6164 + $0x10] sm:$0xff]
    %v6168 = vld [vmem:[%s6164 + $0x18] sm:$0xff]
    %6169 = vmatprep.subr.mxu0 0.0
    %6170 = vmatpush1.msra.mxu0 %v6165
    %6171 = vmatprep.subr.mxu0 0.0
    %6172 = vmatpush1.msra.mxu0 %v6166
    %6173 = vmatprep.subr.mxu0 0.0
    %6174 = vmatpush1.msra.mxu0 %v6167
    %6175 = vmatprep.subr.mxu0 0.0
    %6176 = vmatpush1.msra.mxu0 %v6168
    %6177 = vmatprep.subr.mxu0 0.0
    %6178 = vmatpush1.msra.mxu0 0.0
    %6179 = vmatprep.subr.mxu0 0.0
    %6180 = vmatpush1.msra.mxu0 0.0
    %6181 = vmatprep.subr.mxu0 0.0
    %6182 = vmatpush1.msra.mxu0 0.0
    %6183 = vmatprep.subr.mxu0 0.0
    %6184 = vmatpush1.msra.mxu0 0.0
    %6185 = vmatprep.subr.mxu0 0.0
    %6186 = vmatpush1.msra.mxu0 0.0
    %6187 = vmatprep.subr.mxu0 0.0
    %6188 = vmatpush1.msra.mxu0 0.0
    %6189 = vmatprep.subr.mxu0 0.0
    %6190 = vmatpush1.msra.mxu0 0.0
    %6191 = vmatprep.subr.mxu0 0.0
    %6192 = vmatpush1.msra.mxu0 0.0
    %6193 = vmatprep.subr.mxu0 0.0
    %6194 = vmatpush1.msra.mxu0 0.0
    %6195 = vmatprep.subr.mxu0 0.0
    %6196 = vmatpush1.msra.mxu0 0.0
    %6197 = vmatprep.subr.mxu0 0.0
    %6198 = vmatpush1.msra.mxu0 0.0
    %6199 = vmatprep.subr.mxu0 0.0
    %6200 = vmatpush1.msra.mxu0 0.0
    %6201 = vmatprep.subr.mxu0 0.0
    %6202 = vmatpush1.msra.mxu0 0.0
    %6203 = vmatprep.subr.mxu0 0.0
    %6204 = vmatpush1.msra.mxu0 0.0
    %6205 = vmatprep.subr.mxu0 0.0
    %6206 = vmatpush1.msra.mxu0 0.0
    %6207 = vmatprep.subr.mxu0 0.0
    %6208 = vmatpush1.msra.mxu0 0.0
    %6209 = vmatprep.subr.mxu0 0.0
    %6210 = vmatpush1.msra.mxu0 0.0
    %6211 = vmatprep.subr.mxu0 0.0
    %6212 = vmatpush1.msra.mxu0 0.0
    %6213 = vmatprep.subr.mxu0 0.0
    %6214 = vmatpush1.msra.mxu0 0.0
    %6215 = vmatprep.subr.mxu0 0.0
    %6216 = vmatpush1.msra.mxu0 0.0
    %6217 = vmatprep.subr.mxu0 0.0
    %6218 = vmatpush1.msra.mxu0 0.0
    %6219 = vmatprep.subr.mxu0 0.0
    %6220 = vmatpush1.msra.mxu0 0.0
    %6221 = vmatprep.subr.mxu0 0.0
    %6222 = vmatpush1.msra.mxu0 0.0
    %6223 = vmatprep.subr.mxu0 0.0
    %6224 = vmatpush1.msra.mxu0 0.0
    %6225 = vmatprep.subr.mxu0 0.0
    %6226 = vmatpush1.msra.mxu0 0.0
    %6227 = vmatprep.subr.mxu0 0.0
    %6228 = vmatpush1.msra.mxu0 0.0
    %6229 = vmatprep.subr.mxu0 0.0
    %6230 = vmatpush1.msra.mxu0 0.0
    %6231 = vmatprep.subr.mxu0 0.0
    %6232 = vmatpush1.msra.mxu0 0.0
    %6233 = vmatprep.mubr.f32.mxu0 0.0
    %6234 = vmatmul.mubr.f32.gmra.mrb[0].mxu0 %v5477
    %v6235 = vpop.f32.mrb[0].mxu0
    %v6236 = vadd.f32 0.0, %v6235
    %v6237 = vpop.f32.mrb[0].mxu0
    %6238 = vmatprep.mubr.f32.mxu0 0.0
    %6239 = vmatmul.mubr.f32.gmra.mrb[0].mxu0 %v5480
    %v6240 = vpop.f32.mrb[0].mxu0
    %v6241 = vadd.f32 0.0, %v6240
    %v6242 = vpop.f32.mrb[0].mxu0
    %6243 = vmatprep.mubr.f32.mxu0 0.0
    %6244 = vmatmul.mubr.f32.gmra.mrb[0].mxu0 %v5483
    %v6245 = vpop.f32.mrb[0].mxu0
    %v6246 = vadd.f32 0.0, %v6245
    %v6247 = vpop.f32.mrb[0].mxu0
    %6248 = vmatprep.mubr.f32.mxu0 0.0
    %6249 = vmatmul.mubr.f32.gmra.mrb[0].mxu0 %v5486
    %v6250 = vpop.f32.mrb[0].mxu0
    %v6251 = vadd.f32 0.0, %v6250
    %v6252 = vpop.f32.mrb[0].mxu0
    %6253 = vdwg.mxu0
    %v6255 = vsel %vm473, %v6066, 0
    %v6258 = vsel %vm473, %v6146, 0
    %v6261 = vsel %vm473, %v6151, 0
    %6263 = vmatprep.subr.mxu0 0.0
    %6264 = vmatpush1.xpose.msra.mxu0 %v6258
    %6265 = vmatprep.subr.mxu0 0.0
    %6266 = vmatpush1.xpose.msra.mxu0 %v6261
    %6267 = vmatprep.subr.mxu0 0.0
    %6268 = vmatpush1.xpose.msra.mxu0 0.0
    %6269 = vmatprep.subr.mxu0 0.0
    %6270 = vmatpush1.xpose.msra.mxu0 0.0
    %6271 = vmatprep.subr.mxu0 0.0
    %6272 = vmatpush1.xpose.msra.mxu0 0.0
    %6273 = vmatprep.subr.mxu0 0.0
    %6274 = vmatpush1.xpose.msra.mxu0 0.0
    %6275 = vmatprep.subr.mxu0 0.0
    %6276 = vmatpush1.xpose.msra.mxu0 0.0
    %6277 = vmatprep.subr.mxu0 0.0
    %6278 = vmatpush1.xpose.msra.mxu0 0.0
    %6279 = vmatprep.subr.mxu0 0.0
    %6280 = vmatpush1.xpose.msra.mxu0 0.0
    %6281 = vmatprep.subr.mxu0 0.0
    %6282 = vmatpush1.xpose.msra.mxu0 0.0
    %6283 = vmatprep.subr.mxu0 0.0
    %6284 = vmatpush1.xpose.msra.mxu0 0.0
    %6285 = vmatprep.subr.mxu0 0.0
    %6286 = vmatpush1.xpose.msra.mxu0 0.0
    %6287 = vmatprep.subr.mxu0 0.0
    %6288 = vmatpush1.xpose.msra.mxu0 0.0
    %6289 = vmatprep.subr.mxu0 0.0
    %6290 = vmatpush1.xpose.msra.mxu0 0.0
    %6291 = vmatprep.subr.mxu0 0.0
    %6292 = vmatpush1.xpose.msra.mxu0 0.0
    %6293 = vmatprep.subr.mxu0 0.0
    %6294 = vmatpush1.xpose.msra.mxu0 0.0
    %6295 = vmatprep.subr.mxu0 0.0
    %6296 = vmatpush1.xpose.msra.mxu0 0.0
    %6297 = vmatprep.subr.mxu0 0.0
    %6298 = vmatpush1.xpose.msra.mxu0 0.0
    %6299 = vmatprep.subr.mxu0 0.0
    %6300 = vmatpush1.xpose.msra.mxu0 0.0
    %6301 = vmatprep.subr.mxu0 0.0
    %6302 = vmatpush1.xpose.msra.mxu0 0.0
    %6303 = vmatprep.subr.mxu0 0.0
    %6304 = vmatpush1.xpose.msra.mxu0 0.0
    %6305 = vmatprep.subr.mxu0 0.0
    %6306 = vmatpush1.xpose.msra.mxu0 0.0
    %6307 = vmatprep.subr.mxu0 0.0
    %6308 = vmatpush1.xpose.msra.mxu0 0.0
    %6309 = vmatprep.subr.mxu0 0.0
    %6310 = vmatpush1.xpose.msra.mxu0 0.0
    %6311 = vmatprep.subr.mxu0 0.0
    %6312 = vmatpush1.xpose.msra.mxu0 0.0
    %6313 = vmatprep.subr.mxu0 0.0
    %6314 = vmatpush1.xpose.msra.mxu0 0.0
    %6315 = vmatprep.subr.mxu0 0.0
    %6316 = vmatpush1.xpose.msra.mxu0 0.0
    %6317 = vmatprep.subr.mxu0 0.0
    %6318 = vmatpush1.xpose.msra.mxu0 0.0
    %6319 = vmatprep.subr.mxu0 0.0
    %6320 = vmatpush1.xpose.msra.mxu0 0.0
    %6321 = vmatprep.subr.mxu0 0.0
    %6322 = vmatpush1.xpose.msra.mxu0 0.0
    %6323 = vmatprep.subr.mxu0 0.0
    %6324 = vmatpush1.xpose.msra.mxu0 0.0
    %6325 = vmatprep.subr.mxu0 0.0
    %6326 = vmatpush1.xpose.msra.mxu0 0.0
    %6327 = vmatprep.mubr.f32.mxu0 0.0
    %6328 = vmatmul.mubr.f32.gmra.mrb[0].mxu0 %v6255
    %v6329 = vpop.f32.mrb[0].mxu0
    %v6330 = vadd.f32 0.0, %v6329
    %v6331 = vpop.f32.mrb[0].mxu0
    %6332 = vdwg.mxu0
    %v6333 = vmul.f32 %v6330, 0.25
    %v6334 = vsel %vm473, %v6333, -inf
    %6335 = vmax.xlane.f32.xlu0 %v6334
    %v6336 = vpop.xlane.xlu0 %6335
    %v6337 = vsub.f32 %v6333, %v6336
    %v6338 = vmul.f32 %v6337, 1.442695
    %v6339 = vpow.pop %v6338
    %v6340 = vsel %vm473, %v6339, 0.0
    %6341 = vadd.xlane.f32.xlu0 %v6340
    %v6342 = vpop.xlane.xlu0 %6341
    %v6343 = vrcp.pop %v6342
    %v6344 = vmul.f32 %v6339, %v6343
    %v6346 = vsel %vm473, %v6344, 0
    %6348 = vmatprep.subr.mxu0 0.0
    %6349 = vmatpush1.msra.mxu0 %v6236
    %6350 = vmatprep.subr.mxu0 0.0
    %6351 = vmatpush1.msra.mxu0 %v6241
    %6352 = vmatprep.subr.mxu0 0.0
    %6353 = vmatpush1.msra.mxu0 0.0
    %6354 = vmatprep.subr.mxu0 0.0
    %6355 = vmatpush1.msra.mxu0 0.0
    %6356 = vmatprep.subr.mxu0 0.0
    %6357 = vmatpush1.msra.mxu0 0.0
    %6358 = vmatprep.subr.mxu0 0.0
    %6359 = vmatpush1.msra.mxu0 0.0
    %6360 = vmatprep.subr.mxu0 0.0
    %6361 = vmatpush1.msra.mxu0 0.0
    %6362 = vmatprep.subr.mxu0 0.0
    %6363 = vmatpush1.msra.mxu0 0.0
    %6364 = vmatprep.subr.mxu0 0.0
    %6365 = vmatpush1.msra.mxu0 0.0
    %6366 = vmatprep.subr.mxu0 0.0
    %6367 = vmatpush1.msra.mxu0 0.0
    %6368 = vmatprep.subr.mxu0 0.0
    %6369 = vmatpush1.msra.mxu0 0.0
    %6370 = vmatprep.subr.mxu0 0.0
    %6371 = vmatpush1.msra.mxu0 0.0
    %6372 = vmatprep.subr.mxu0 0.0
    %6373 = vmatpush1.msra.mxu0 0.0
    %6374 = vmatprep.subr.mxu0 0.0
    %6375 = vmatpush1.msra.mxu0 0.0
    %6376 = vmatprep.subr.mxu0 0.0
    %6377 = vmatpush1.msra.mxu0 0.0
    %6378 = vmatprep.subr.mxu0 0.0
    %6379 = vmatpush1.msra.mxu0 0.0
    %6380 = vmatprep.subr.mxu0 0.0
    %6381 = vmatpush1.msra.mxu0 0.0
    %6382 = vmatprep.subr.mxu0 0.0
    %6383 = vmatpush1.msra.mxu0 0.0
    %6384 = vmatprep.subr.mxu0 0.0
    %6385 = vmatpush1.msra.mxu0 0.0
    %6386 = vmatprep.subr.mxu0 0.0
    %6387 = vmatpush1.msra.mxu0 0.0
    %6388 = vmatprep.subr.mxu0 0.0
    %6389 = vmatpush1.msra.mxu0 0.0
    %6390 = vmatprep.subr.mxu0 0.0
    %6391 = vmatpush1.msra.mxu0 0.0
    %6392 = vmatprep.subr.mxu0 0.0
    %6393 = vmatpush1.msra.mxu0 0.0
    %6394 = vmatprep.subr.mxu0 0.0
    %6395 = vmatpush1.msra.mxu0 0.0
    %6396 = vmatprep.subr.mxu0 0.0
    %6397 = vmatpush1.msra.mxu0 0.0
    %6398 = vmatprep.subr.mxu0 0.0
    %6399 = vmatpush1.msra.mxu0 0.0
    %6400 = vmatprep.subr.mxu0 0.0
    %6401 = vmatpush1.msra.mxu0 0.0
    %6402 = vmatprep.subr.mxu0 0.0
    %6403 = vmatpush1.msra.mxu0 0.0
    %6404 = vmatprep.subr.mxu0 0.0
    %6405 = vmatpush1.msra.mxu0 0.0
    %6406 = vmatprep.subr.mxu0 0.0
    %6407 = vmatpush1.msra.mxu0 0.0
    %6408 = vmatprep.subr.mxu0 0.0
    %6409 = vmatpush1.msra.mxu0 0.0
    %6410 = vmatprep.subr.mxu0 0.0
    %6411 = vmatpush1.msra.mxu0 0.0
    %6412 = vmatprep.mubr.f32.mxu0 0.0
    %6413 = vmatmul.mubr.f32.gmra.mrb[0].mxu0 %v6346
    %v6414 = vpop.f32.mrb[0].mxu0
    %v6415 = vadd.f32 0.0, %v6414
    %v6416 = vpop.f32.mrb[0].mxu0
    %6417 = vdwg.mxu0
    %v6419 = vsel %vm473, %v6071, 0
    %v6422 = vsel %vm473, %v6156, 0
    %v6425 = vsel %vm473, %v6161, 0
    %6427 = vmatprep.subr.mxu0 0.0
    %6428 = vmatpush1.xpose.msra.mxu0 %v6422
    %6429 = vmatprep.subr.mxu0 0.0
    %6430 = vmatpush1.xpose.msra.mxu0 %v6425
    %6431 = vmatprep.subr.mxu0 0.0
    %6432 = vmatpush1.xpose.msra.mxu0 0.0
    %6433 = vmatprep.subr.mxu0 0.0
    %6434 = vmatpush1.xpose.msra.mxu0 0.0
    %6435 = vmatprep.subr.mxu0 0.0
    %6436 = vmatpush1.xpose.msra.mxu0 0.0
    %6437 = vmatprep.subr.mxu0 0.0
    %6438 = vmatpush1.xpose.msra.mxu0 0.0
    %6439 = vmatprep.subr.mxu0 0.0
    %6440 = vmatpush1.xpose.msra.mxu0 0.0
    %6441 = vmatprep.subr.mxu0 0.0
    %6442 = vmatpush1.xpose.msra.mxu0 0.0
    %6443 = vmatprep.subr.mxu0 0.0
    %6444 = vmatpush1.xpose.msra.mxu0 0.0
    %6445 = vmatprep.subr.mxu0 0.0
    %6446 = vmatpush1.xpose.msra.mxu0 0.0
    %6447 = vmatprep.subr.mxu0 0.0
    %6448 = vmatpush1.xpose.msra.mxu0 0.0
    %6449 = vmatprep.subr.mxu0 0.0
    %6450 = vmatpush1.xpose.msra.mxu0 0.0
    %6451 = vmatprep.subr.mxu0 0.0
    %6452 = vmatpush1.xpose.msra.mxu0 0.0
    %6453 = vmatprep.subr.mxu0 0.0
    %6454 = vmatpush1.xpose.msra.mxu0 0.0
    %6455 = vmatprep.subr.mxu0 0.0
    %6456 = vmatpush1.xpose.msra.mxu0 0.0
    %6457 = vmatprep.subr.mxu0 0.0
    %6458 = vmatpush1.xpose.msra.mxu0 0.0
    %6459 = vmatprep.subr.mxu0 0.0
    %6460 = vmatpush1.xpose.msra.mxu0 0.0
    %6461 = vmatprep.subr.mxu0 0.0
    %6462 = vmatpush1.xpose.msra.mxu0 0.0
    %6463 = vmatprep.subr.mxu0 0.0
    %6464 = vmatpush1.xpose.msra.mxu0 0.0
    %6465 = vmatprep.subr.mxu0 0.0
    %6466 = vmatpush1.xpose.msra.mxu0 0.0
    %6467 = vmatprep.subr.mxu0 0.0
    %6468 = vmatpush1.xpose.msra.mxu0 0.0
    %6469 = vmatprep.subr.mxu0 0.0
    %6470 = vmatpush1.xpose.msra.mxu0 0.0
    %6471 = vmatprep.subr.mxu0 0.0
    %6472 = vmatpush1.xpose.msra.mxu0 0.0
    %6473 = vmatprep.subr.mxu0 0.0
    %6474 = vmatpush1.xpose.msra.mxu0 0.0
    %6475 = vmatprep.subr.mxu0 0.0
    %6476 = vmatpush1.xpose.msra.mxu0 0.0
    %6477 = vmatprep.subr.mxu0 0.0
    %6478 = vmatpush1.xpose.msra.mxu0 0.0
    %6479 = vmatprep.subr.mxu0 0.0
    %6480 = vmatpush1.xpose.msra.mxu0 0.0
    %6481 = vmatprep.subr.mxu0 0.0
    %6482 = vmatpush1.xpose.msra.mxu0 0.0
    %6483 = vmatprep.subr.mxu0 0.0
    %6484 = vmatpush1.xpose.msra.mxu0 0.0
    %6485 = vmatprep.subr.mxu0 0.0
    %6486 = vmatpush1.xpose.msra.mxu0 0.0
    %6487 = vmatprep.subr.mxu0 0.0
    %6488 = vmatpush1.xpose.msra.mxu0 0.0
    %6489 = vmatprep.subr.mxu0 0.0
    %6490 = vmatpush1.xpose.msra.mxu0 0.0
    %6491 = vmatprep.mubr.f32.mxu0 0.0
    %6492 = vmatmul.mubr.f32.gmra.mrb[0].mxu0 %v6419
    %v6493 = vpop.f32.mrb[0].mxu0
    %v6494 = vadd.f32 0.0, %v6493
    %v6495 = vpop.f32.mrb[0].mxu0
    %6496 = vdwg.mxu0
    %v6497 = vmul.f32 %v6494, 0.25
    %v6498 = vsel %vm473, %v6497, -inf
    %6499 = vmax.xlane.f32.xlu0 %v6498
    %v6500 = vpop.xlane.xlu0 %6499
    %v6501 = vsub.f32 %v6497, %v6500
    %v6502 = vmul.f32 %v6501, 1.442695
    %v6503 = vpow.pop %v6502
    %v6504 = vsel %vm473, %v6503, 0.0
    %6505 = vadd.xlane.f32.xlu0 %v6504
    %v6506 = vpop.xlane.xlu0 %6505
    %v6507 = vrcp.pop %v6506
    %v6508 = vmul.f32 %v6503, %v6507
    %v6510 = vsel %vm473, %v6508, 0
    %6512 = vmatprep.subr.mxu0 0.0
    %6513 = vmatpush1.msra.mxu0 %v6246
    %6514 = vmatprep.subr.mxu0 0.0
    %6515 = vmatpush1.msra.mxu0 %v6251
    %6516 = vmatprep.subr.mxu0 0.0
    %6517 = vmatpush1.msra.mxu0 0.0
    %6518 = vmatprep.subr.mxu0 0.0
    %6519 = vmatpush1.msra.mxu0 0.0
    %6520 = vmatprep.subr.mxu0 0.0
    %6521 = vmatpush1.msra.mxu0 0.0
    %6522 = vmatprep.subr.mxu0 0.0
    %6523 = vmatpush1.msra.mxu0 0.0
    %6524 = vmatprep.subr.mxu0 0.0
    %6525 = vmatpush1.msra.mxu0 0.0
    %6526 = vmatprep.subr.mxu0 0.0
    %6527 = vmatpush1.msra.mxu0 0.0
    %6528 = vmatprep.subr.mxu0 0.0
    %6529 = vmatpush1.msra.mxu0 0.0
    %6530 = vmatprep.subr.mxu0 0.0
    %6531 = vmatpush1.msra.mxu0 0.0
    %6532 = vmatprep.subr.mxu0 0.0
    %6533 = vmatpush1.msra.mxu0 0.0
    %6534 = vmatprep.subr.mxu0 0.0
    %6535 = vmatpush1.msra.mxu0 0.0
    %6536 = vmatprep.subr.mxu0 0.0
    %6537 = vmatpush1.msra.mxu0 0.0
    %6538 = vmatprep.subr.mxu0 0.0
    %6539 = vmatpush1.msra.mxu0 0.0
    %6540 = vmatprep.subr.mxu0 0.0
    %6541 = vmatpush1.msra.mxu0 0.0
    %6542 = vmatprep.subr.mxu0 0.0
    %6543 = vmatpush1.msra.mxu0 0.0
    %6544 = vmatprep.subr.mxu0 0.0
    %6545 = vmatpush1.msra.mxu0 0.0
    %6546 = vmatprep.subr.mxu0 0.0
    %6547 = vmatpush1.msra.mxu0 0.0
    %6548 = vmatprep.subr.mxu0 0.0
    %6549 = vmatpush1.msra.mxu0 0.0
    %6550 = vmatprep.subr.mxu0 0.0
    %6551 = vmatpush1.msra.mxu0 0.0
    %6552 = vmatprep.subr.mxu0 0.0
    %6553 = vmatpush1.msra.mxu0 0.0
    %6554 = vmatprep.subr.mxu0 0.0
    %6555 = vmatpush1.msra.mxu0 0.0
    %6556 = vmatprep.subr.mxu0 0.0
    %6557 = vmatpush1.msra.mxu0 0.0
    %6558 = vmatprep.subr.mxu0 0.0
    %6559 = vmatpush1.msra.mxu0 0.0
    %6560 = vmatprep.subr.mxu0 0.0
    %6561 = vmatpush1.msra.mxu0 0.0
    %6562 = vmatprep.subr.mxu0 0.0
    %6563 = vmatpush1.msra.mxu0 0.0
    %6564 = vmatprep.subr.mxu0 0.0
    %6565 = vmatpush1.msra.mxu0 0.0
    %6566 = vmatprep.subr.mxu0 0.0
    %6567 = vmatpush1.msra.mxu0 0.0
    %6568 = vmatprep.subr.mxu0 0.0
    %6569 = vmatpush1.msra.mxu0 0.0
    %6570 = vmatprep.subr.mxu0 0.0
    %6571 = vmatpush1.msra.mxu0 0.0
    %6572 = vmatprep.subr.mxu0 0.0
    %6573 = vmatpush1.msra.mxu0 0.0
    %6574 = vmatprep.subr.mxu0 0.0
    %6575 = vmatpush1.msra.mxu0 0.0
    %6576 = vmatprep.mubr.f32.mxu0 0.0
    %6577 = vmatmul.mubr.f32.gmra.mrb[0].mxu0 %v6510
    %v6578 = vpop.f32.mrb[0].mxu0
    %v6579 = vadd.f32 0.0, %v6578
    %v6580 = vpop.f32.mrb[0].mxu0
    %6581 = vdwg.mxu0
    %s6582 = scalar_lea.vmem %s43, 32
    %v6583 = vld [vmem:[%s6582] sm:$0xff]
    %v6584 = vld [vmem:[%s6582 + $0x8] sm:$0xff]
    %v6585 = vld [vmem:[%s6582 + $0x10] sm:$0xff]
    %v6586 = vld [vmem:[%s6582 + $0x18] sm:$0xff]
    %v6588 = vsel %vm197, %v6415, 0
    %v6591 = vsel %vm197, %v6579, 0
    %6593 = vmatprep.subr.mxu0 0.0
    %6594 = vmatpush1.msra.mxu0 %v6583
    %6595 = vmatprep.subr.mxu0 0.0
    %6596 = vmatpush1.msra.mxu0 %v6584
    %6597 = vmatprep.subr.mxu0 0.0
    %6598 = vmatpush1.msra.mxu0 %v6585
    %6599 = vmatprep.subr.mxu0 0.0
    %6600 = vmatpush1.msra.mxu0 %v6586
    %6601 = vmatprep.subr.mxu0 0.0
    %6602 = vmatpush1.msra.mxu0 0.0
    %6603 = vmatprep.subr.mxu0 0.0
    %6604 = vmatpush1.msra.mxu0 0.0
    %6605 = vmatprep.subr.mxu0 0.0
    %6606 = vmatpush1.msra.mxu0 0.0
    %6607 = vmatprep.subr.mxu0 0.0
    %6608 = vmatpush1.msra.mxu0 0.0
    %6609 = vmatprep.subr.mxu0 0.0
    %6610 = vmatpush1.msra.mxu0 0.0
    %6611 = vmatprep.subr.mxu0 0.0
    %6612 = vmatpush1.msra.mxu0 0.0
    %6613 = vmatprep.subr.mxu0 0.0
    %6614 = vmatpush1.msra.mxu0 0.0
    %6615 = vmatprep.subr.mxu0 0.0
    %6616 = vmatpush1.msra.mxu0 0.0
    %6617 = vmatprep.subr.mxu0 0.0
    %6618 = vmatpush1.msra.mxu0 0.0
    %6619 = vmatprep.subr.mxu0 0.0
    %6620 = vmatpush1.msra.mxu0 0.0
    %6621 = vmatprep.subr.mxu0 0.0
    %6622 = vmatpush1.msra.mxu0 0.0
    %6623 = vmatprep.subr.mxu0 0.0
    %6624 = vmatpush1.msra.mxu0 0.0
    %6625 = vmatprep.subr.mxu0 0.0
    %6626 = vmatpush1.msra.mxu0 0.0
    %6627 = vmatprep.subr.mxu0 0.0
    %6628 = vmatpush1.msra.mxu0 0.0
    %6629 = vmatprep.subr.mxu0 0.0
    %6630 = vmatpush1.msra.mxu0 0.0
    %6631 = vmatprep.subr.mxu0 0.0
    %6632 = vmatpush1.msra.mxu0 0.0
    %6633 = vmatprep.subr.mxu0 0.0
    %6634 = vmatpush1.msra.mxu0 0.0
    %6635 = vmatprep.subr.mxu0 0.0
    %6636 = vmatpush1.msra.mxu0 0.0
    %6637 = vmatprep.subr.mxu0 0.0
    %6638 = vmatpush1.msra.mxu0 0.0
    %6639 = vmatprep.subr.mxu0 0.0
    %6640 = vmatpush1.msra.mxu0 0.0
    %6641 = vmatprep.subr.mxu0 0.0
    %6642 = vmatpush1.msra.mxu0 0.0
    %6643 = vmatprep.subr.mxu0 0.0
    %6644 = vmatpush1.msra.mxu0 0.0
    %6645 = vmatprep.subr.mxu0 0.0
    %6646 = vmatpush1.msra.mxu0 0.0
    %6647 = vmatprep.subr.mxu0 0.0
    %6648 = vmatpush1.msra.mxu0 0.0
    %6649 = vmatprep.subr.mxu0 0.0
    %6650 = vmatpush1.msra.mxu0 0.0
    %6651 = vmatprep.subr.mxu0 0.0
    %6652 = vmatpush1.msra.mxu0 0.0
    %6653 = vmatprep.subr.mxu0 0.0
    %6654 = vmatpush1.msra.mxu0 0.0
    %6655 = vmatprep.subr.mxu0 0.0
    %6656 = vmatpush1.msra.mxu0 0.0
    %6657 = vmatprep.mubr.f32.mxu0 0.0
    %6658 = vmatmul.mubr.f32.gmra.mrb[0].mxu0 %v6588
    %v6659 = vpop.f32.mrb[0].mxu0
    %v6660 = vadd.f32 0.0, %v6659
    %v6661 = vpop.f32.mrb[0].mxu0
    %6662 = vmatprep.mubr.f32.mxu0 0.0
    %6663 = vmatmul.mubr.f32.gmra.mrb[0].mxu0 %v6591
    %v6664 = vpop.f32.mrb[0].mxu0
    %v6665 = vadd.f32 0.0, %v6664
    %v6666 = vpop.f32.mrb[0].mxu0
    %6667 = vdwg.mxu0
    %v6669 = vsel %vm197, %v5823, 0
    %v6672 = vsel %vm197, %v5987, 0
    %6674 = vmatprep.subr.mxu0 0.0
    %6675 = vmatpush1.msra.mxu0 %v5990
    %6676 = vmatprep.subr.mxu0 0.0
    %6677 = vmatpush1.msra.mxu0 %v5991
    %6678 = vmatprep.subr.mxu0 0.0
    %6679 = vmatpush1.msra.mxu0 %v5992
    %6680 = vmatprep.subr.mxu0 0.0
    %6681 = vmatpush1.msra.mxu0 %v5993
    %6682 = vmatprep.subr.mxu0 0.0
    %6683 = vmatpush1.msra.mxu0 0.0
    %6684 = vmatprep.subr.mxu0 0.0
    %6685 = vmatpush1.msra.mxu0 0.0
    %6686 = vmatprep.subr.mxu0 0.0
    %6687 = vmatpush1.msra.mxu0 0.0
    %6688 = vmatprep.subr.mxu0 0.0
    %6689 = vmatpush1.msra.mxu0 0.0
    %6690 = vmatprep.subr.mxu0 0.0
    %6691 = vmatpush1.msra.mxu0 0.0
    %6692 = vmatprep.subr.mxu0 0.0
    %6693 = vmatpush1.msra.mxu0 0.0
    %6694 = vmatprep.subr.mxu0 0.0
    %6695 = vmatpush1.msra.mxu0 0.0
    %6696 = vmatprep.subr.mxu0 0.0
    %6697 = vmatpush1.msra.mxu0 0.0
    %6698 = vmatprep.subr.mxu0 0.0
    %6699 = vmatpush1.msra.mxu0 0.0
    %6700 = vmatprep.subr.mxu0 0.0
    %6701 = vmatpush1.msra.mxu0 0.0
    %6702 = vmatprep.subr.mxu0 0.0
    %6703 = vmatpush1.msra.mxu0 0.0
    %6704 = vmatprep.subr.mxu0 0.0
    %6705 = vmatpush1.msra.mxu0 0.0
    %6706 = vmatprep.subr.mxu0 0.0
    %6707 = vmatpush1.msra.mxu0 0.0
    %6708 = vmatprep.subr.mxu0 0.0
    %6709 = vmatpush1.msra.mxu0 0.0
    %6710 = vmatprep.subr.mxu0 0.0
    %6711 = vmatpush1.msra.mxu0 0.0
    %6712 = vmatprep.subr.mxu0 0.0
    %6713 = vmatpush1.msra.mxu0 0.0
    %6714 = vmatprep.subr.mxu0 0.0
    %6715 = vmatpush1.msra.mxu0 0.0
    %6716 = vmatprep.subr.mxu0 0.0
    %6717 = vmatpush1.msra.mxu0 0.0
    %6718 = vmatprep.subr.mxu0 0.0
    %6719 = vmatpush1.msra.mxu0 0.0
    %6720 = vmatprep.subr.mxu0 0.0
    %6721 = vmatpush1.msra.mxu0 0.0
    %6722 = vmatprep.subr.mxu0 0.0
    %6723 = vmatpush1.msra.mxu0 0.0
    %6724 = vmatprep.subr.mxu0 0.0
    %6725 = vmatpush1.msra.mxu0 0.0
    %6726 = vmatprep.subr.mxu0 0.0
    %6727 = vmatpush1.msra.mxu0 0.0
    %6728 = vmatprep.subr.mxu0 0.0
    %6729 = vmatpush1.msra.mxu0 0.0
    %6730 = vmatprep.subr.mxu0 0.0
    %6731 = vmatpush1.msra.mxu0 0.0
    %6732 = vmatprep.subr.mxu0 0.0
    %6733 = vmatpush1.msra.mxu0 0.0
    %6734 = vmatprep.subr.mxu0 0.0
    %6735 = vmatpush1.msra.mxu0 0.0
    %6736 = vmatprep.subr.mxu0 0.0
    %6737 = vmatpush1.msra.mxu0 0.0
    %6738 = vmatprep.mubr.f32.mxu0 0.0
    %6739 = vmatmul.mubr.f32.gmra.mrb[0].mxu0 %v6669
    %v6740 = vpop.f32.mrb[0].mxu0
    %v6741 = vadd.f32 %v6660, %v6740
    %v6742 = vpop.f32.mrb[0].mxu0
    %6743 = vmatprep.mubr.f32.mxu0 0.0
    %6744 = vmatmul.mubr.f32.gmra.mrb[0].mxu0 %v6672
    %v6745 = vpop.f32.mrb[0].mxu0
    %v6746 = vadd.f32 %v6665, %v6745
    %v6747 = vpop.f32.mrb[0].mxu0
    %6748 = vdwg.mxu0
    %v6749 = vadd.f32 %v6741, %v5385
    %v6750 = vadd.f32 %v6746, %v5386
    %v6751 = vld [vmem:[%s57] sm:$0x1]
    %v6752 = vld [vmem:[#allocation4] sm:$0x1]
    %v6753 = vsel %vm197, %v6749, 0.0
    %6754 = vadd.xlane.f32.xlu0 %v6753
    %v6755 = vpop.xlane.xlu0 %6754
    %v6756 = vsel %vm197, %v6750, 0.0
    %6757 = vadd.xlane.f32.xlu0 %v6756
    %v6758 = vpop.xlane.xlu0 %6757
    %v6759 = vmul.f32 %v6755, %v1733
    %v6760 = vmul.f32 %v6758, %v1733
    %v6761 = vsub.f32 %v6749, %v6759
    %v6762 = vsub.f32 %v6750, %v6760
    %v6763 = vmul.f32 %v6761, %v6761
    %v6764 = vmul.f32 %v6762, %v6762
    %v6765 = vsel %vm197, %v6763, 0.0
    %6766 = vadd.xlane.f32.xlu0 %v6765
    %v6767 = vpop.xlane.xlu0 %6766
    %v6768 = vsel %vm197, %v6764, 0.0
    %6769 = vadd.xlane.f32.xlu0 %v6768
    %v6770 = vpop.xlane.xlu0 %6769
    %v6771 = vmul.f32 %v6767, %v1733
    %v6772 = vmul.f32 %v6770, %v1733
    %v6773 = vadd.f32 %v6771, 1e-05
    %v6774 = vadd.f32 %v6772, 1e-05
    %v6775 = vrsqrt.pop %v6773
    %v6776 = vrsqrt.pop %v6774
    %v6777 = vmul.f32 %v6761, %v6775
    %v6778 = vmul.f32 %v6762, %v6776
    %v6780 = vlaneseq
    %v6781 = vshrl.u32 %v6780, 7
    %v6782 = vsub.s32 0, %v6781
    %v6783 = vrot.slane %v6751, %v6782
    %v6785 = vmul.f32 %v6777, %v6783
    %v6786 = vmul.f32 %v6778, %v6783
    %v6788 = vlaneseq
    %v6789 = vshrl.u32 %v6788, 7
    %v6790 = vsub.s32 0, %v6789
    %v6791 = vrot.slane %v6752, %v6790
    %v6793 = vadd.f32 %v6785, %v6791
    %v6794 = vadd.f32 %v6786, %v6791
    %v6795 = vld [vmem:[#allocation2] sm:$0xff]
    %v6796 = vld [vmem:[#allocation2 + $0x8] sm:$0xff]
    %v6797 = vld [vmem:[#allocation2 + $0x10] sm:$0xff]
    %v6798 = vld [vmem:[#allocation2 + $0x18] sm:$0xff]
    %v6799 = vld [vmem:[%s51] sm:$0x1]
    %v6800 = vld [vmem:[%s45] sm:$0xff]
    %v6801 = vld [vmem:[%s45 + $0x8] sm:$0xff]
    %v6802 = vld [vmem:[%s45 + $0x10] sm:$0xff]
    %v6803 = vld [vmem:[%s45 + $0x18] sm:$0xff]
    %v6804 = vld [vmem:[%s47] sm:$0x1]
    %v6806 = vlaneseq
    %v6807 = vshrl.u32 %v6806, 7
    %v6808 = vsub.s32 0, %v6807
    %v6809 = vrot.slane %v6799, %v6808
    %v6812 = vsel %vm197, %v6793, 0
    %v6815 = vsel %vm197, %v6794, 0
    %6817 = vmatprep.subr.mxu0 0.0
    %6818 = vmatpush1.msra.mxu0 %v6795
    %6819 = vmatprep.subr.mxu0 0.0
    %6820 = vmatpush1.msra.mxu0 %v6796
    %6821 = vmatprep.subr.mxu0 0.0
    %6822 = vmatpush1.msra.mxu0 %v6797
    %6823 = vmatprep.subr.mxu0 0.0
    %6824 = vmatpush1.msra.mxu0 %v6798
    %6825 = vmatprep.subr.mxu0 0.0
    %6826 = vmatpush1.msra.mxu0 0.0
    %6827 = vmatprep.subr.mxu0 0.0
    %6828 = vmatpush1.msra.mxu0 0.0
    %6829 = vmatprep.subr.mxu0 0.0
    %6830 = vmatpush1.msra.mxu0 0.0
    %6831 = vmatprep.subr.mxu0 0.0
    %6832 = vmatpush1.msra.mxu0 0.0
    %6833 = vmatprep.subr.mxu0 0.0
    %6834 = vmatpush1.msra.mxu0 0.0
    %6835 = vmatprep.subr.mxu0 0.0
    %6836 = vmatpush1.msra.mxu0 0.0
    %6837 = vmatprep.subr.mxu0 0.0
    %6838 = vmatpush1.msra.mxu0 0.0
    %6839 = vmatprep.subr.mxu0 0.0
    %6840 = vmatpush1.msra.mxu0 0.0
    %6841 = vmatprep.subr.mxu0 0.0
    %6842 = vmatpush1.msra.mxu0 0.0
    %6843 = vmatprep.subr.mxu0 0.0
    %6844 = vmatpush1.msra.mxu0 0.0
    %6845 = vmatprep.subr.mxu0 0.0
    %6846 = vmatpush1.msra.mxu0 0.0
    %6847 = vmatprep.subr.mxu0 0.0
    %6848 = vmatpush1.msra.mxu0 0.0
    %6849 = vmatprep.subr.mxu0 0.0
    %6850 = vmatpush1.msra.mxu0 0.0
    %6851 = vmatprep.subr.mxu0 0.0
    %6852 = vmatpush1.msra.mxu0 0.0
    %6853 = vmatprep.subr.mxu0 0.0
    %6854 = vmatpush1.msra.mxu0 0.0
    %6855 = vmatprep.subr.mxu0 0.0
    %6856 = vmatpush1.msra.mxu0 0.0
    %6857 = vmatprep.subr.mxu0 0.0
    %6858 = vmatpush1.msra.mxu0 0.0
    %6859 = vmatprep.subr.mxu0 0.0
    %6860 = vmatpush1.msra.mxu0 0.0
    %6861 = vmatprep.subr.mxu0 0.0
    %6862 = vmatpush1.msra.mxu0 0.0
    %6863 = vmatprep.subr.mxu0 0.0
    %6864 = vmatpush1.msra.mxu0 0.0
    %6865 = vmatprep.subr.mxu0 0.0
    %6866 = vmatpush1.msra.mxu0 0.0
    %6867 = vmatprep.subr.mxu0 0.0
    %6868 = vmatpush1.msra.mxu0 0.0
    %6869 = vmatprep.subr.mxu0 0.0
    %6870 = vmatpush1.msra.mxu0 0.0
    %6871 = vmatprep.subr.mxu0 0.0
    %6872 = vmatpush1.msra.mxu0 0.0
    %6873 = vmatprep.subr.mxu0 0.0
    %6874 = vmatpush1.msra.mxu0 0.0
    %6875 = vmatprep.subr.mxu0 0.0
    %6876 = vmatpush1.msra.mxu0 0.0
    %6877 = vmatprep.subr.mxu0 0.0
    %6878 = vmatpush1.msra.mxu0 0.0
    %6879 = vmatprep.subr.mxu0 0.0
    %6880 = vmatpush1.msra.mxu0 0.0
    %6881 = vmatprep.mubr.f32.mxu0 0.0
    %6882 = vmatmul.mubr.f32.gmra.mrb[0].mxu0 %v6812
    %v6883 = vpop.f32.mrb[0].mxu0
    %v6884 = vadd.f32 %v6809, %v6883
    %v6885 = vpop.f32.mrb[0].mxu0
    %6886 = vmatprep.mubr.f32.mxu0 0.0
    %6887 = vmatmul.mubr.f32.gmra.mrb[0].mxu0 %v6815
    %v6888 = vpop.f32.mrb[0].mxu0
    %v6889 = vadd.f32 %v6809, %v6888
    %v6890 = vpop.f32.mrb[0].mxu0
    %6891 = vdwg.mxu0
    %vm6892 = vcmp.gt.f32.partialorder %v6884, 0.0
    %vm6893 = vcmp.gt.f32.partialorder %v6889, 0.0
    %v6894 = vmin.f32 %v6884, 0.0
    %v6895 = vmin.f32 %v6889, 0.0
    %v6896 = vmul.f32 %v6894, 1.442695
    %v6897 = vpow.pop %v6896
    %v6898 = vmul.f32 %v6895, 1.442695
    %v6899 = vpow.pop %v6898
    %v6900 = vsub.f32 %v6897, 1.0
    %v6901 = vsub.f32 %v6899, 1.0
    %v6902 = vsel %vm6892, %v6884, %v6900
    %v6903 = vsel %vm6893, %v6889, %v6901
    %v6905 = vlaneseq
    %v6906 = vshrl.u32 %v6905, 7
    %v6907 = vsub.s32 0, %v6906
    %v6908 = vrot.slane %v6804, %v6907
    %v6911 = vsel %vm197, %v6902, 0
    %v6914 = vsel %vm197, %v6903, 0
    %6916 = vmatprep.subr.mxu0 0.0
    %6917 = vmatpush1.msra.mxu0 %v6800
    %6918 = vmatprep.subr.mxu0 0.0
    %6919 = vmatpush1.msra.mxu0 %v6801
    %6920 = vmatprep.subr.mxu0 0.0
    %6921 = vmatpush1.msra.mxu0 %v6802
    %6922 = vmatprep.subr.mxu0 0.0
    %6923 = vmatpush1.msra.mxu0 %v6803
    %6924 = vmatprep.subr.mxu0 0.0
    %6925 = vmatpush1.msra.mxu0 0.0
    %6926 = vmatprep.subr.mxu0 0.0
    %6927 = vmatpush1.msra.mxu0 0.0
    %6928 = vmatprep.subr.mxu0 0.0
    %6929 = vmatpush1.msra.mxu0 0.0
    %6930 = vmatprep.subr.mxu0 0.0
    %6931 = vmatpush1.msra.mxu0 0.0
    %6932 = vmatprep.subr.mxu0 0.0
    %6933 = vmatpush1.msra.mxu0 0.0
    %6934 = vmatprep.subr.mxu0 0.0
    %6935 = vmatpush1.msra.mxu0 0.0
    %6936 = vmatprep.subr.mxu0 0.0
    %6937 = vmatpush1.msra.mxu0 0.0
    %6938 = vmatprep.subr.mxu0 0.0
    %6939 = vmatpush1.msra.mxu0 0.0
    %6940 = vmatprep.subr.mxu0 0.0
    %6941 = vmatpush1.msra.mxu0 0.0
    %6942 = vmatprep.subr.mxu0 0.0
    %6943 = vmatpush1.msra.mxu0 0.0
    %6944 = vmatprep.subr.mxu0 0.0
    %6945 = vmatpush1.msra.mxu0 0.0
    %6946 = vmatprep.subr.mxu0 0.0
    %6947 = vmatpush1.msra.mxu0 0.0
    %6948 = vmatprep.subr.mxu0 0.0
    %6949 = vmatpush1.msra.mxu0 0.0
    %6950 = vmatprep.subr.mxu0 0.0
    %6951 = vmatpush1.msra.mxu0 0.0
    %6952 = vmatprep.subr.mxu0 0.0
    %6953 = vmatpush1.msra.mxu0 0.0
    %6954 = vmatprep.subr.mxu0 0.0
    %6955 = vmatpush1.msra.mxu0 0.0
    %6956 = vmatprep.subr.mxu0 0.0
    %6957 = vmatpush1.msra.mxu0 0.0
    %6958 = vmatprep.subr.mxu0 0.0
    %6959 = vmatpush1.msra.mxu0 0.0
    %6960 = vmatprep.subr.mxu0 0.0
    %6961 = vmatpush1.msra.mxu0 0.0
    %6962 = vmatprep.subr.mxu0 0.0
    %6963 = vmatpush1.msra.mxu0 0.0
    %6964 = vmatprep.subr.mxu0 0.0
    %6965 = vmatpush1.msra.mxu0 0.0
    %6966 = vmatprep.subr.mxu0 0.0
    %6967 = vmatpush1.msra.mxu0 0.0
    %6968 = vmatprep.subr.mxu0 0.0
    %6969 = vmatpush1.msra.mxu0 0.0
    %6970 = vmatprep.subr.mxu0 0.0
    %6971 = vmatpush1.msra.mxu0 0.0
    %6972 = vmatprep.subr.mxu0 0.0
    %6973 = vmatpush1.msra.mxu0 0.0
    %6974 = vmatprep.subr.mxu0 0.0
    %6975 = vmatpush1.msra.mxu0 0.0
    %6976 = vmatprep.subr.mxu0 0.0
    %6977 = vmatpush1.msra.mxu0 0.0
    %6978 = vmatprep.subr.mxu0 0.0
    %6979 = vmatpush1.msra.mxu0 0.0
    %6980 = vmatprep.mubr.f32.mxu0 0.0
    %6981 = vmatmul.mubr.f32.gmra.mrb[0].mxu0 %v6911
    %v6982 = vpop.f32.mrb[0].mxu0
    %v6983 = vadd.f32 %v6908, %v6982
    %v6984 = vpop.f32.mrb[0].mxu0
    %6985 = vmatprep.mubr.f32.mxu0 0.0
    %6986 = vmatmul.mubr.f32.gmra.mrb[0].mxu0 %v6914
    %v6987 = vpop.f32.mrb[0].mxu0
    %v6988 = vadd.f32 %v6908, %v6987
    %v6989 = vpop.f32.mrb[0].mxu0
    %6990 = vdwg.mxu0
    %v6991 = vadd.f32 %v6793, %v6983
    %v6992 = vadd.f32 %v6794, %v6988
    %v6993 = vld [vmem:[#allocation6] sm:$0x1]
    %v6994 = vld [vmem:[#allocation7] sm:$0x1]
    %v6995 = vsel %vm197, %v6991, 0.0
    %6996 = vadd.xlane.f32.xlu0 %v6995
    %v6997 = vpop.xlane.xlu0 %6996
    %v6998 = vsel %vm197, %v6992, 0.0
    %6999 = vadd.xlane.f32.xlu0 %v6998
    %v7000 = vpop.xlane.xlu0 %6999
    %v7001 = vmul.f32 %v6997, %v1733
    %v7002 = vmul.f32 %v7000, %v1733
    %v7003 = vsub.f32 %v6991, %v7001
    %v7004 = vsub.f32 %v6992, %v7002
    %v7005 = vmul.f32 %v7003, %v7003
    %v7006 = vmul.f32 %v7004, %v7004
    %v7007 = vsel %vm197, %v7005, 0.0
    %7008 = vadd.xlane.f32.xlu0 %v7007
    %v7009 = vpop.xlane.xlu0 %7008
    %v7010 = vsel %vm197, %v7006, 0.0
    %7011 = vadd.xlane.f32.xlu0 %v7010
    %v7012 = vpop.xlane.xlu0 %7011
    %v7013 = vmul.f32 %v7009, %v1733
    %v7014 = vmul.f32 %v7012, %v1733
    %v7015 = vadd.f32 %v7013, 1e-05
    %v7016 = vadd.f32 %v7014, 1e-05
    %v7017 = vrsqrt.pop %v7015
    %v7018 = vrsqrt.pop %v7016
    %v7019 = vmul.f32 %v7003, %v7017
    %v7020 = vmul.f32 %v7004, %v7018
    %v7022 = vlaneseq
    %v7023 = vshrl.u32 %v7022, 7
    %v7024 = vsub.s32 0, %v7023
    %v7025 = vrot.slane %v6993, %v7024
    %v7027 = vmul.f32 %v7019, %v7025
    %v7028 = vmul.f32 %v7020, %v7025
    %v7030 = vlaneseq
    %v7031 = vshrl.u32 %v7030, 7
    %v7032 = vsub.s32 0, %v7031
    %v7033 = vrot.slane %v6994, %v7032
    %v7035 = vadd.f32 %v7027, %v7033
    %v7036 = vadd.f32 %v7028, %v7033
    %s7037 = scalar_lea.vmem %s29, 64
    %v7038 = vld [vmem:[%s7037] sm:$0xff]
    %v7039 = vld [vmem:[%s7037 + $0x8] sm:$0xff]
    %v7040 = vld [vmem:[%s7037 + $0x10] sm:$0xff]
    %v7041 = vld [vmem:[%s7037 + $0x18] sm:$0xff]
    %v7043 = vsel %vm197, %v7035, 0
    %v7046 = vsel %vm197, %v7036, 0
    %7048 = vmatprep.subr.mxu0 0.0
    %7049 = vmatpush1.msra.mxu0 %v7038
    %7050 = vmatprep.subr.mxu0 0.0
    %7051 = vmatpush1.msra.mxu0 %v7039
    %7052 = vmatprep.subr.mxu0 0.0
    %7053 = vmatpush1.msra.mxu0 %v7040
    %7054 = vmatprep.subr.mxu0 0.0
    %7055 = vmatpush1.msra.mxu0 %v7041
    %7056 = vmatprep.subr.mxu0 0.0
    %7057 = vmatpush1.msra.mxu0 0.0
    %7058 = vmatprep.subr.mxu0 0.0
    %7059 = vmatpush1.msra.mxu0 0.0
    %7060 = vmatprep.subr.mxu0 0.0
    %7061 = vmatpush1.msra.mxu0 0.0
    %7062 = vmatprep.subr.mxu0 0.0
    %7063 = vmatpush1.msra.mxu0 0.0
    %7064 = vmatprep.subr.mxu0 0.0
    %7065 = vmatpush1.msra.mxu0 0.0
    %7066 = vmatprep.subr.mxu0 0.0
    %7067 = vmatpush1.msra.mxu0 0.0
    %7068 = vmatprep.subr.mxu0 0.0
    %7069 = vmatpush1.msra.mxu0 0.0
    %7070 = vmatprep.subr.mxu0 0.0
    %7071 = vmatpush1.msra.mxu0 0.0
    %7072 = vmatprep.subr.mxu0 0.0
    %7073 = vmatpush1.msra.mxu0 0.0
    %7074 = vmatprep.subr.mxu0 0.0
    %7075 = vmatpush1.msra.mxu0 0.0
    %7076 = vmatprep.subr.mxu0 0.0
    %7077 = vmatpush1.msra.mxu0 0.0
    %7078 = vmatprep.subr.mxu0 0.0
    %7079 = vmatpush1.msra.mxu0 0.0
    %7080 = vmatprep.subr.mxu0 0.0
    %7081 = vmatpush1.msra.mxu0 0.0
    %7082 = vmatprep.subr.mxu0 0.0
    %7083 = vmatpush1.msra.mxu0 0.0
    %7084 = vmatprep.subr.mxu0 0.0
    %7085 = vmatpush1.msra.mxu0 0.0
    %7086 = vmatprep.subr.mxu0 0.0
    %7087 = vmatpush1.msra.mxu0 0.0
    %7088 = vmatprep.subr.mxu0 0.0
    %7089 = vmatpush1.msra.mxu0 0.0
    %7090 = vmatprep.subr.mxu0 0.0
    %7091 = vmatpush1.msra.mxu0 0.0
    %7092 = vmatprep.subr.mxu0 0.0
    %7093 = vmatpush1.msra.mxu0 0.0
    %7094 = vmatprep.subr.mxu0 0.0
    %7095 = vmatpush1.msra.mxu0 0.0
    %7096 = vmatprep.subr.mxu0 0.0
    %7097 = vmatpush1.msra.mxu0 0.0
    %7098 = vmatprep.subr.mxu0 0.0
    %7099 = vmatpush1.msra.mxu0 0.0
    %7100 = vmatprep.subr.mxu0 0.0
    %7101 = vmatpush1.msra.mxu0 0.0
    %7102 = vmatprep.subr.mxu0 0.0
    %7103 = vmatpush1.msra.mxu0 0.0
    %7104 = vmatprep.subr.mxu0 0.0
    %7105 = vmatpush1.msra.mxu0 0.0
    %7106 = vmatprep.subr.mxu0 0.0
    %7107 = vmatpush1.msra.mxu0 0.0
    %7108 = vmatprep.subr.mxu0 0.0
    %7109 = vmatpush1.msra.mxu0 0.0
    %7110 = vmatprep.subr.mxu0 0.0
    %7111 = vmatpush1.msra.mxu0 0.0
    %7112 = vmatprep.mubr.f32.mxu0 0.0
    %7113 = vmatmul.mubr.f32.gmra.mrb[0].mxu0 %v7043
    %v7114 = vpop.f32.mrb[0].mxu0
    %v7115 = vadd.f32 0.0, %v7114
    %v7116 = vpop.f32.mrb[0].mxu0
    %7117 = vmatprep.mubr.f32.mxu0 0.0
    %7118 = vmatmul.mubr.f32.gmra.mrb[0].mxu0 %v7046
    %v7119 = vpop.f32.mrb[0].mxu0
    %v7120 = vadd.f32 0.0, %v7119
    %v7121 = vpop.f32.mrb[0].mxu0
    %7122 = vdwg.mxu0
    %s7123 = scalar_lea.vmem %s31, 64
    %v7124 = vld [vmem:[%s7123] sm:$0xff]
    %v7125 = vld [vmem:[%s7123 + $0x8] sm:$0xff]
    %v7126 = vld [vmem:[%s7123 + $0x10] sm:$0xff]
    %v7127 = vld [vmem:[%s7123 + $0x18] sm:$0xff]
    %7128 = vmatprep.subr.mxu0 0.0
    %7129 = vmatpush1.msra.mxu0 %v7124
    %7130 = vmatprep.subr.mxu0 0.0
    %7131 = vmatpush1.msra.mxu0 %v7125
    %7132 = vmatprep.subr.mxu0 0.0
    %7133 = vmatpush1.msra.mxu0 %v7126
    %7134 = vmatprep.subr.mxu0 0.0
    %7135 = vmatpush1.msra.mxu0 %v7127
    %7136 = vmatprep.subr.mxu0 0.0
    %7137 = vmatpush1.msra.mxu0 0.0
    %7138 = vmatprep.subr.mxu0 0.0
    %7139 = vmatpush1.msra.mxu0 0.0
    %7140 = vmatprep.subr.mxu0 0.0
    %7141 = vmatpush1.msra.mxu0 0.0
    %7142 = vmatprep.subr.mxu0 0.0
    %7143 = vmatpush1.msra.mxu0 0.0
    %7144 = vmatprep.subr.mxu0 0.0
    %7145 = vmatpush1.msra.mxu0 0.0
    %7146 = vmatprep.subr.mxu0 0.0
    %7147 = vmatpush1.msra.mxu0 0.0
    %7148 = vmatprep.subr.mxu0 0.0
    %7149 = vmatpush1.msra.mxu0 0.0
    %7150 = vmatprep.subr.mxu0 0.0
    %7151 = vmatpush1.msra.mxu0 0.0
    %7152 = vmatprep.subr.mxu0 0.0
    %7153 = vmatpush1.msra.mxu0 0.0
    %7154 = vmatprep.subr.mxu0 0.0
    %7155 = vmatpush1.msra.mxu0 0.0
    %7156 = vmatprep.subr.mxu0 0.0
    %7157 = vmatpush1.msra.mxu0 0.0
    %7158 = vmatprep.subr.mxu0 0.0
    %7159 = vmatpush1.msra.mxu0 0.0
    %7160 = vmatprep.subr.mxu0 0.0
    %7161 = vmatpush1.msra.mxu0 0.0
    %7162 = vmatprep.subr.mxu0 0.0
    %7163 = vmatpush1.msra.mxu0 0.0
    %7164 = vmatprep.subr.mxu0 0.0
    %7165 = vmatpush1.msra.mxu0 0.0
    %7166 = vmatprep.subr.mxu0 0.0
    %7167 = vmatpush1.msra.mxu0 0.0
    %7168 = vmatprep.subr.mxu0 0.0
    %7169 = vmatpush1.msra.mxu0 0.0
    %7170 = vmatprep.subr.mxu0 0.0
    %7171 = vmatpush1.msra.mxu0 0.0
    %7172 = vmatprep.subr.mxu0 0.0
    %7173 = vmatpush1.msra.mxu0 0.0
    %7174 = vmatprep.subr.mxu0 0.0
    %7175 = vmatpush1.msra.mxu0 0.0
    %7176 = vmatprep.subr.mxu0 0.0
    %7177 = vmatpush1.msra.mxu0 0.0
    %7178 = vmatprep.subr.mxu0 0.0
    %7179 = vmatpush1.msra.mxu0 0.0
    %7180 = vmatprep.subr.mxu0 0.0
    %7181 = vmatpush1.msra.mxu0 0.0
    %7182 = vmatprep.subr.mxu0 0.0
    %7183 = vmatpush1.msra.mxu0 0.0
    %7184 = vmatprep.subr.mxu0 0.0
    %7185 = vmatpush1.msra.mxu0 0.0
    %7186 = vmatprep.subr.mxu0 0.0
    %7187 = vmatpush1.msra.mxu0 0.0
    %7188 = vmatprep.subr.mxu0 0.0
    %7189 = vmatpush1.msra.mxu0 0.0
    %7190 = vmatprep.subr.mxu0 0.0
    %7191 = vmatpush1.msra.mxu0 0.0
    %7192 = vmatprep.mubr.f32.mxu0 0.0
    %7193 = vmatmul.mubr.f32.gmra.mrb[0].mxu0 %v7043
    %v7194 = vpop.f32.mrb[0].mxu0
    %v7195 = vadd.f32 0.0, %v7194
    %v7196 = vpop.f32.mrb[0].mxu0
    %7197 = vmatprep.mubr.f32.mxu0 0.0
    %7198 = vmatmul.mubr.f32.gmra.mrb[0].mxu0 %v7046
    %v7199 = vpop.f32.mrb[0].mxu0
    %v7200 = vadd.f32 0.0, %v7199
    %v7201 = vpop.f32.mrb[0].mxu0
    %7202 = vdwg.mxu0
    %s7203 = scalar_lea.vmem %s33, 64
    %v7204 = vld [vmem:[%s7203] sm:$0xff]
    %v7205 = vld [vmem:[%s7203 + $0x8] sm:$0xff]
    %v7206 = vld [vmem:[%s7203 + $0x10] sm:$0xff]
    %v7207 = vld [vmem:[%s7203 + $0x18] sm:$0xff]
    %7208 = vmatprep.subr.mxu0 0.0
    %7209 = vmatpush1.msra.mxu0 %v7204
    %7210 = vmatprep.subr.mxu0 0.0
    %7211 = vmatpush1.msra.mxu0 %v7205
    %7212 = vmatprep.subr.mxu0 0.0
    %7213 = vmatpush1.msra.mxu0 %v7206
    %7214 = vmatprep.subr.mxu0 0.0
    %7215 = vmatpush1.msra.mxu0 %v7207
    %7216 = vmatprep.subr.mxu0 0.0
    %7217 = vmatpush1.msra.mxu0 0.0
    %7218 = vmatprep.subr.mxu0 0.0
    %7219 = vmatpush1.msra.mxu0 0.0
    %7220 = vmatprep.subr.mxu0 0.0
    %7221 = vmatpush1.msra.mxu0 0.0
    %7222 = vmatprep.subr.mxu0 0.0
    %7223 = vmatpush1.msra.mxu0 0.0
    %7224 = vmatprep.subr.mxu0 0.0
    %7225 = vmatpush1.msra.mxu0 0.0
    %7226 = vmatprep.subr.mxu0 0.0
    %7227 = vmatpush1.msra.mxu0 0.0
    %7228 = vmatprep.subr.mxu0 0.0
    %7229 = vmatpush1.msra.mxu0 0.0
    %7230 = vmatprep.subr.mxu0 0.0
    %7231 = vmatpush1.msra.mxu0 0.0
    %7232 = vmatprep.subr.mxu0 0.0
    %7233 = vmatpush1.msra.mxu0 0.0
    %7234 = vmatprep.subr.mxu0 0.0
    %7235 = vmatpush1.msra.mxu0 0.0
    %7236 = vmatprep.subr.mxu0 0.0
    %7237 = vmatpush1.msra.mxu0 0.0
    %7238 = vmatprep.subr.mxu0 0.0
    %7239 = vmatpush1.msra.mxu0 0.0
    %7240 = vmatprep.subr.mxu0 0.0
    %7241 = vmatpush1.msra.mxu0 0.0
    %7242 = vmatprep.subr.mxu0 0.0
    %7243 = vmatpush1.msra.mxu0 0.0
    %7244 = vmatprep.subr.mxu0 0.0
    %7245 = vmatpush1.msra.mxu0 0.0
    %7246 = vmatprep.subr.mxu0 0.0
    %7247 = vmatpush1.msra.mxu0 0.0
    %7248 = vmatprep.subr.mxu0 0.0
    %7249 = vmatpush1.msra.mxu0 0.0
    %7250 = vmatprep.subr.mxu0 0.0
    %7251 = vmatpush1.msra.mxu0 0.0
    %7252 = vmatprep.subr.mxu0 0.0
    %7253 = vmatpush1.msra.mxu0 0.0
    %7254 = vmatprep.subr.mxu0 0.0
    %7255 = vmatpush1.msra.mxu0 0.0
    %7256 = vmatprep.subr.mxu0 0.0
    %7257 = vmatpush1.msra.mxu0 0.0
    %7258 = vmatprep.subr.mxu0 0.0
    %7259 = vmatpush1.msra.mxu0 0.0
    %7260 = vmatprep.subr.mxu0 0.0
    %7261 = vmatpush1.msra.mxu0 0.0
    %7262 = vmatprep.subr.mxu0 0.0
    %7263 = vmatpush1.msra.mxu0 0.0
    %7264 = vmatprep.subr.mxu0 0.0
    %7265 = vmatpush1.msra.mxu0 0.0
    %7266 = vmatprep.subr.mxu0 0.0
    %7267 = vmatpush1.msra.mxu0 0.0
    %7268 = vmatprep.subr.mxu0 0.0
    %7269 = vmatpush1.msra.mxu0 0.0
    %7270 = vmatprep.subr.mxu0 0.0
    %7271 = vmatpush1.msra.mxu0 0.0
    %7272 = vmatprep.mubr.f32.mxu0 0.0
    %7273 = vmatmul.mubr.f32.gmra.mrb[0].mxu0 %v7043
    %v7274 = vpop.f32.mrb[0].mxu0
    %v7275 = vadd.f32 0.0, %v7274
    %v7276 = vpop.f32.mrb[0].mxu0
    %7277 = vmatprep.mubr.f32.mxu0 0.0
    %7278 = vmatmul.mubr.f32.gmra.mrb[0].mxu0 %v7046
    %v7279 = vpop.f32.mrb[0].mxu0
    %v7280 = vadd.f32 0.0, %v7279
    %v7281 = vpop.f32.mrb[0].mxu0
    %7282 = vdwg.mxu0
    %v7284 = vsel %vm473, %v7115, 0
    %v7287 = vsel %vm473, %v7195, 0
    %7289 = vmatprep.subr.mxu0 0.0
    %7290 = vmatpush1.xpose.msra.mxu0 %v7287
    %7291 = vmatprep.subr.mxu0 0.0
    %7292 = vmatpush1.xpose.msra.mxu0 0.0
    %7293 = vmatprep.subr.mxu0 0.0
    %7294 = vmatpush1.xpose.msra.mxu0 0.0
    %7295 = vmatprep.subr.mxu0 0.0
    %7296 = vmatpush1.xpose.msra.mxu0 0.0
    %7297 = vmatprep.subr.mxu0 0.0
    %7298 = vmatpush1.xpose.msra.mxu0 0.0
    %7299 = vmatprep.subr.mxu0 0.0
    %7300 = vmatpush1.xpose.msra.mxu0 0.0
    %7301 = vmatprep.subr.mxu0 0.0
    %7302 = vmatpush1.xpose.msra.mxu0 0.0
    %7303 = vmatprep.subr.mxu0 0.0
    %7304 = vmatpush1.xpose.msra.mxu0 0.0
    %7305 = vmatprep.subr.mxu0 0.0
    %7306 = vmatpush1.xpose.msra.mxu0 0.0
    %7307 = vmatprep.subr.mxu0 0.0
    %7308 = vmatpush1.xpose.msra.mxu0 0.0
    %7309 = vmatprep.subr.mxu0 0.0
    %7310 = vmatpush1.xpose.msra.mxu0 0.0
    %7311 = vmatprep.subr.mxu0 0.0
    %7312 = vmatpush1.xpose.msra.mxu0 0.0
    %7313 = vmatprep.subr.mxu0 0.0
    %7314 = vmatpush1.xpose.msra.mxu0 0.0
    %7315 = vmatprep.subr.mxu0 0.0
    %7316 = vmatpush1.xpose.msra.mxu0 0.0
    %7317 = vmatprep.subr.mxu0 0.0
    %7318 = vmatpush1.xpose.msra.mxu0 0.0
    %7319 = vmatprep.subr.mxu0 0.0
    %7320 = vmatpush1.xpose.msra.mxu0 0.0
    %7321 = vmatprep.subr.mxu0 0.0
    %7322 = vmatpush1.xpose.msra.mxu0 0.0
    %7323 = vmatprep.subr.mxu0 0.0
    %7324 = vmatpush1.xpose.msra.mxu0 0.0
    %7325 = vmatprep.subr.mxu0 0.0
    %7326 = vmatpush1.xpose.msra.mxu0 0.0
    %7327 = vmatprep.subr.mxu0 0.0
    %7328 = vmatpush1.xpose.msra.mxu0 0.0
    %7329 = vmatprep.subr.mxu0 0.0
    %7330 = vmatpush1.xpose.msra.mxu0 0.0
    %7331 = vmatprep.subr.mxu0 0.0
    %7332 = vmatpush1.xpose.msra.mxu0 0.0
    %7333 = vmatprep.subr.mxu0 0.0
    %7334 = vmatpush1.xpose.msra.mxu0 0.0
    %7335 = vmatprep.subr.mxu0 0.0
    %7336 = vmatpush1.xpose.msra.mxu0 0.0
    %7337 = vmatprep.subr.mxu0 0.0
    %7338 = vmatpush1.xpose.msra.mxu0 0.0
    %7339 = vmatprep.subr.mxu0 0.0
    %7340 = vmatpush1.xpose.msra.mxu0 0.0
    %7341 = vmatprep.subr.mxu0 0.0
    %7342 = vmatpush1.xpose.msra.mxu0 0.0
    %7343 = vmatprep.subr.mxu0 0.0
    %7344 = vmatpush1.xpose.msra.mxu0 0.0
    %7345 = vmatprep.subr.mxu0 0.0
    %7346 = vmatpush1.xpose.msra.mxu0 0.0
    %7347 = vmatprep.subr.mxu0 0.0
    %7348 = vmatpush1.xpose.msra.mxu0 0.0
    %7349 = vmatprep.subr.mxu0 0.0
    %7350 = vmatpush1.xpose.msra.mxu0 0.0
    %7351 = vmatprep.subr.mxu0 0.0
    %7352 = vmatpush1.xpose.msra.mxu0 0.0
    %7353 = vmatprep.mubr.f32.mxu0 0.0
    %7354 = vmatmul.mubr.f32.gmra.mrb[0].mxu0 %v7284
    %v7355 = vpop.f32.mrb[0].mxu0
    %v7356 = vadd.f32 0.0, %v7355
    %v7357 = vpop.f32.mrb[0].mxu0
    %7358 = vdwg.mxu0
    %v7359 = vmul.f32 %v7356, 0.25
    %v7360 = vsel %vm4362, %v7359, -inf
    %7361 = vmax.xlane.f32.xlu0 %v7360
    %v7362 = vpop.xlane.xlu0 %7361
    %v7363 = vsub.f32 %v7359, %v7362
    %v7364 = vmul.f32 %v7363, 1.442695
    %v7365 = vpow.pop %v7364
    %v7366 = vsel %vm4362, %v7365, 0.0
    %7367 = vadd.xlane.f32.xlu0 %v7366
    %v7368 = vpop.xlane.xlu0 %7367
    %v7369 = vrcp.pop %v7368
    %v7370 = vmul.f32 %v7365, %v7369
    %v7372 = vsel %vm4362, %v7370, 0
    %7374 = vmatprep.subr.mxu0 0.0
    %7375 = vmatpush1.msra.mxu0 %v7275
    %7376 = vmatprep.subr.mxu0 0.0
    %7377 = vmatpush1.msra.mxu0 0.0
    %7378 = vmatprep.subr.mxu0 0.0
    %7379 = vmatpush1.msra.mxu0 0.0
    %7380 = vmatprep.subr.mxu0 0.0
    %7381 = vmatpush1.msra.mxu0 0.0
    %7382 = vmatprep.subr.mxu0 0.0
    %7383 = vmatpush1.msra.mxu0 0.0
    %7384 = vmatprep.subr.mxu0 0.0
    %7385 = vmatpush1.msra.mxu0 0.0
    %7386 = vmatprep.subr.mxu0 0.0
    %7387 = vmatpush1.msra.mxu0 0.0
    %7388 = vmatprep.subr.mxu0 0.0
    %7389 = vmatpush1.msra.mxu0 0.0
    %7390 = vmatprep.subr.mxu0 0.0
    %7391 = vmatpush1.msra.mxu0 0.0
    %7392 = vmatprep.subr.mxu0 0.0
    %7393 = vmatpush1.msra.mxu0 0.0
    %7394 = vmatprep.subr.mxu0 0.0
    %7395 = vmatpush1.msra.mxu0 0.0
    %7396 = vmatprep.subr.mxu0 0.0
    %7397 = vmatpush1.msra.mxu0 0.0
    %7398 = vmatprep.subr.mxu0 0.0
    %7399 = vmatpush1.msra.mxu0 0.0
    %7400 = vmatprep.subr.mxu0 0.0
    %7401 = vmatpush1.msra.mxu0 0.0
    %7402 = vmatprep.subr.mxu0 0.0
    %7403 = vmatpush1.msra.mxu0 0.0
    %7404 = vmatprep.subr.mxu0 0.0
    %7405 = vmatpush1.msra.mxu0 0.0
    %7406 = vmatprep.subr.mxu0 0.0
    %7407 = vmatpush1.msra.mxu0 0.0
    %7408 = vmatprep.subr.mxu0 0.0
    %7409 = vmatpush1.msra.mxu0 0.0
    %7410 = vmatprep.subr.mxu0 0.0
    %7411 = vmatpush1.msra.mxu0 0.0
    %7412 = vmatprep.subr.mxu0 0.0
    %7413 = vmatpush1.msra.mxu0 0.0
    %7414 = vmatprep.subr.mxu0 0.0
    %7415 = vmatpush1.msra.mxu0 0.0
    %7416 = vmatprep.subr.mxu0 0.0
    %7417 = vmatpush1.msra.mxu0 0.0
    %7418 = vmatprep.subr.mxu0 0.0
    %7419 = vmatpush1.msra.mxu0 0.0
    %7420 = vmatprep.subr.mxu0 0.0
    %7421 = vmatpush1.msra.mxu0 0.0
    %7422 = vmatprep.subr.mxu0 0.0
    %7423 = vmatpush1.msra.mxu0 0.0
    %7424 = vmatprep.subr.mxu0 0.0
    %7425 = vmatpush1.msra.mxu0 0.0
    %7426 = vmatprep.subr.mxu0 0.0
    %7427 = vmatpush1.msra.mxu0 0.0
    %7428 = vmatprep.subr.mxu0 0.0
    %7429 = vmatpush1.msra.mxu0 0.0
    %7430 = vmatprep.subr.mxu0 0.0
    %7431 = vmatpush1.msra.mxu0 0.0
    %7432 = vmatprep.subr.mxu0 0.0
    %7433 = vmatpush1.msra.mxu0 0.0
    %7434 = vmatprep.subr.mxu0 0.0
    %7435 = vmatpush1.msra.mxu0 0.0
    %7436 = vmatprep.subr.mxu0 0.0
    %7437 = vmatpush1.msra.mxu0 0.0
    %7438 = vmatprep.mubr.f32.mxu0 0.0
    %7439 = vmatmul.mubr.f32.gmra.mrb[0].mxu0 %v7372
    %v7440 = vpop.f32.mrb[0].mxu0
    %v7441 = vadd.f32 0.0, %v7440
    %v7442 = vpop.f32.mrb[0].mxu0
    %7443 = vdwg.mxu0
    %v7445 = vsel %vm473, %v7120, 0
    %v7448 = vsel %vm473, %v7200, 0
    %7450 = vmatprep.subr.mxu0 0.0
    %7451 = vmatpush1.xpose.msra.mxu0 %v7448
    %7452 = vmatprep.subr.mxu0 0.0
    %7453 = vmatpush1.xpose.msra.mxu0 0.0
    %7454 = vmatprep.subr.mxu0 0.0
    %7455 = vmatpush1.xpose.msra.mxu0 0.0
    %7456 = vmatprep.subr.mxu0 0.0
    %7457 = vmatpush1.xpose.msra.mxu0 0.0
    %7458 = vmatprep.subr.mxu0 0.0
    %7459 = vmatpush1.xpose.msra.mxu0 0.0
    %7460 = vmatprep.subr.mxu0 0.0
    %7461 = vmatpush1.xpose.msra.mxu0 0.0
    %7462 = vmatprep.subr.mxu0 0.0
    %7463 = vmatpush1.xpose.msra.mxu0 0.0
    %7464 = vmatprep.subr.mxu0 0.0
    %7465 = vmatpush1.xpose.msra.mxu0 0.0
    %7466 = vmatprep.subr.mxu0 0.0
    %7467 = vmatpush1.xpose.msra.mxu0 0.0
    %7468 = vmatprep.subr.mxu0 0.0
    %7469 = vmatpush1.xpose.msra.mxu0 0.0
    %7470 = vmatprep.subr.mxu0 0.0
    %7471 = vmatpush1.xpose.msra.mxu0 0.0
    %7472 = vmatprep.subr.mxu0 0.0
    %7473 = vmatpush1.xpose.msra.mxu0 0.0
    %7474 = vmatprep.subr.mxu0 0.0
    %7475 = vmatpush1.xpose.msra.mxu0 0.0
    %7476 = vmatprep.subr.mxu0 0.0
    %7477 = vmatpush1.xpose.msra.mxu0 0.0
    %7478 = vmatprep.subr.mxu0 0.0
    %7479 = vmatpush1.xpose.msra.mxu0 0.0
    %7480 = vmatprep.subr.mxu0 0.0
    %7481 = vmatpush1.xpose.msra.mxu0 0.0
    %7482 = vmatprep.subr.mxu0 0.0
    %7483 = vmatpush1.xpose.msra.mxu0 0.0
    %7484 = vmatprep.subr.mxu0 0.0
    %7485 = vmatpush1.xpose.msra.mxu0 0.0
    %7486 = vmatprep.subr.mxu0 0.0
    %7487 = vmatpush1.xpose.msra.mxu0 0.0
    %7488 = vmatprep.subr.mxu0 0.0
    %7489 = vmatpush1.xpose.msra.mxu0 0.0
    %7490 = vmatprep.subr.mxu0 0.0
    %7491 = vmatpush1.xpose.msra.mxu0 0.0
    %7492 = vmatprep.subr.mxu0 0.0
    %7493 = vmatpush1.xpose.msra.mxu0 0.0
    %7494 = vmatprep.subr.mxu0 0.0
    %7495 = vmatpush1.xpose.msra.mxu0 0.0
    %7496 = vmatprep.subr.mxu0 0.0
    %7497 = vmatpush1.xpose.msra.mxu0 0.0
    %7498 = vmatprep.subr.mxu0 0.0
    %7499 = vmatpush1.xpose.msra.mxu0 0.0
    %7500 = vmatprep.subr.mxu0 0.0
    %7501 = vmatpush1.xpose.msra.mxu0 0.0
    %7502 = vmatprep.subr.mxu0 0.0
    %7503 = vmatpush1.xpose.msra.mxu0 0.0
    %7504 = vmatprep.subr.mxu0 0.0
    %7505 = vmatpush1.xpose.msra.mxu0 0.0
    %7506 = vmatprep.subr.mxu0 0.0
    %7507 = vmatpush1.xpose.msra.mxu0 0.0
    %7508 = vmatprep.subr.mxu0 0.0
    %7509 = vmatpush1.xpose.msra.mxu0 0.0
    %7510 = vmatprep.subr.mxu0 0.0
    %7511 = vmatpush1.xpose.msra.mxu0 0.0
    %7512 = vmatprep.subr.mxu0 0.0
    %7513 = vmatpush1.xpose.msra.mxu0 0.0
    %7514 = vmatprep.mubr.f32.mxu0 0.0
    %7515 = vmatmul.mubr.f32.gmra.mrb[0].mxu0 %v7445
    %v7516 = vpop.f32.mrb[0].mxu0
    %v7517 = vadd.f32 0.0, %v7516
    %v7518 = vpop.f32.mrb[0].mxu0
    %7519 = vdwg.mxu0
    %v7520 = vmul.f32 %v7517, 0.25
    %v7521 = vsel %vm4362, %v7520, -inf
    %7522 = vmax.xlane.f32.xlu0 %v7521
    %v7523 = vpop.xlane.xlu0 %7522
    %v7524 = vsub.f32 %v7520, %v7523
    %v7525 = vmul.f32 %v7524, 1.442695
    %v7526 = vpow.pop %v7525
    %v7527 = vsel %vm4362, %v7526, 0.0
    %7528 = vadd.xlane.f32.xlu0 %v7527
    %v7529 = vpop.xlane.xlu0 %7528
    %v7530 = vrcp.pop %v7529
    %v7531 = vmul.f32 %v7526, %v7530
    %v7533 = vsel %vm4362, %v7531, 0
    %7535 = vmatprep.subr.mxu0 0.0
    %7536 = vmatpush1.msra.mxu0 %v7280
    %7537 = vmatprep.subr.mxu0 0.0
    %7538 = vmatpush1.msra.mxu0 0.0
    %7539 = vmatprep.subr.mxu0 0.0
    %7540 = vmatpush1.msra.mxu0 0.0
    %7541 = vmatprep.subr.mxu0 0.0
    %7542 = vmatpush1.msra.mxu0 0.0
    %7543 = vmatprep.subr.mxu0 0.0
    %7544 = vmatpush1.msra.mxu0 0.0
    %7545 = vmatprep.subr.mxu0 0.0
    %7546 = vmatpush1.msra.mxu0 0.0
    %7547 = vmatprep.subr.mxu0 0.0
    %7548 = vmatpush1.msra.mxu0 0.0
    %7549 = vmatprep.subr.mxu0 0.0
    %7550 = vmatpush1.msra.mxu0 0.0
    %7551 = vmatprep.subr.mxu0 0.0
    %7552 = vmatpush1.msra.mxu0 0.0
    %7553 = vmatprep.subr.mxu0 0.0
    %7554 = vmatpush1.msra.mxu0 0.0
    %7555 = vmatprep.subr.mxu0 0.0
    %7556 = vmatpush1.msra.mxu0 0.0
    %7557 = vmatprep.subr.mxu0 0.0
    %7558 = vmatpush1.msra.mxu0 0.0
    %7559 = vmatprep.subr.mxu0 0.0
    %7560 = vmatpush1.msra.mxu0 0.0
    %7561 = vmatprep.subr.mxu0 0.0
    %7562 = vmatpush1.msra.mxu0 0.0
    %7563 = vmatprep.subr.mxu0 0.0
    %7564 = vmatpush1.msra.mxu0 0.0
    %7565 = vmatprep.subr.mxu0 0.0
    %7566 = vmatpush1.msra.mxu0 0.0
    %7567 = vmatprep.subr.mxu0 0.0
    %7568 = vmatpush1.msra.mxu0 0.0
    %7569 = vmatprep.subr.mxu0 0.0
    %7570 = vmatpush1.msra.mxu0 0.0
    %7571 = vmatprep.subr.mxu0 0.0
    %7572 = vmatpush1.msra.mxu0 0.0
    %7573 = vmatprep.subr.mxu0 0.0
    %7574 = vmatpush1.msra.mxu0 0.0
    %7575 = vmatprep.subr.mxu0 0.0
    %7576 = vmatpush1.msra.mxu0 0.0
    %7577 = vmatprep.subr.mxu0 0.0
    %7578 = vmatpush1.msra.mxu0 0.0
    %7579 = vmatprep.subr.mxu0 0.0
    %7580 = vmatpush1.msra.mxu0 0.0
    %7581 = vmatprep.subr.mxu0 0.0
    %7582 = vmatpush1.msra.mxu0 0.0
    %7583 = vmatprep.subr.mxu0 0.0
    %7584 = vmatpush1.msra.mxu0 0.0
    %7585 = vmatprep.subr.mxu0 0.0
    %7586 = vmatpush1.msra.mxu0 0.0
    %7587 = vmatprep.subr.mxu0 0.0
    %7588 = vmatpush1.msra.mxu0 0.0
    %7589 = vmatprep.subr.mxu0 0.0
    %7590 = vmatpush1.msra.mxu0 0.0
    %7591 = vmatprep.subr.mxu0 0.0
    %7592 = vmatpush1.msra.mxu0 0.0
    %7593 = vmatprep.subr.mxu0 0.0
    %7594 = vmatpush1.msra.mxu0 0.0
    %7595 = vmatprep.subr.mxu0 0.0
    %7596 = vmatpush1.msra.mxu0 0.0
    %7597 = vmatprep.subr.mxu0 0.0
    %7598 = vmatpush1.msra.mxu0 0.0
    %7599 = vmatprep.mubr.f32.mxu0 0.0
    %7600 = vmatmul.mubr.f32.gmra.mrb[0].mxu0 %v7533
    %v7601 = vpop.f32.mrb[0].mxu0
    %v7602 = vadd.f32 0.0, %v7601
    %v7603 = vpop.f32.mrb[0].mxu0
    %7604 = vdwg.mxu0
    %s7605 = scalar_lea.vmem %s35, 64
    %v7606 = vld [vmem:[%s7605] sm:$0xff]
    %v7607 = vld [vmem:[%s7605 + $0x8] sm:$0xff]
    %v7608 = vld [vmem:[%s7605 + $0x10] sm:$0xff]
    %v7609 = vld [vmem:[%s7605 + $0x18] sm:$0xff]
    %s7610 = scalar_lea.vmem %s29, 96
    %v7611 = vld [vmem:[%s7610] sm:$0xff]
    %v7612 = vld [vmem:[%s7610 + $0x8] sm:$0xff]
    %v7613 = vld [vmem:[%s7610 + $0x10] sm:$0xff]
    %v7614 = vld [vmem:[%s7610 + $0x18] sm:$0xff]
    %7615 = vmatprep.subr.mxu0 0.0
    %7616 = vmatpush1.msra.mxu0 %v7611
    %7617 = vmatprep.subr.mxu0 0.0
    %7618 = vmatpush1.msra.mxu0 %v7612
    %7619 = vmatprep.subr.mxu0 0.0
    %7620 = vmatpush1.msra.mxu0 %v7613
    %7621 = vmatprep.subr.mxu0 0.0
    %7622 = vmatpush1.msra.mxu0 %v7614
    %7623 = vmatprep.subr.mxu0 0.0
    %7624 = vmatpush1.msra.mxu0 0.0
    %7625 = vmatprep.subr.mxu0 0.0
    %7626 = vmatpush1.msra.mxu0 0.0
    %7627 = vmatprep.subr.mxu0 0.0
    %7628 = vmatpush1.msra.mxu0 0.0
    %7629 = vmatprep.subr.mxu0 0.0
    %7630 = vmatpush1.msra.mxu0 0.0
    %7631 = vmatprep.subr.mxu0 0.0
    %7632 = vmatpush1.msra.mxu0 0.0
    %7633 = vmatprep.subr.mxu0 0.0
    %7634 = vmatpush1.msra.mxu0 0.0
    %7635 = vmatprep.subr.mxu0 0.0
    %7636 = vmatpush1.msra.mxu0 0.0
    %7637 = vmatprep.subr.mxu0 0.0
    %7638 = vmatpush1.msra.mxu0 0.0
    %7639 = vmatprep.subr.mxu0 0.0
    %7640 = vmatpush1.msra.mxu0 0.0
    %7641 = vmatprep.subr.mxu0 0.0
    %7642 = vmatpush1.msra.mxu0 0.0
    %7643 = vmatprep.subr.mxu0 0.0
    %7644 = vmatpush1.msra.mxu0 0.0
    %7645 = vmatprep.subr.mxu0 0.0
    %7646 = vmatpush1.msra.mxu0 0.0
    %7647 = vmatprep.subr.mxu0 0.0
    %7648 = vmatpush1.msra.mxu0 0.0
    %7649 = vmatprep.subr.mxu0 0.0
    %7650 = vmatpush1.msra.mxu0 0.0
    %7651 = vmatprep.subr.mxu0 0.0
    %7652 = vmatpush1.msra.mxu0 0.0
    %7653 = vmatprep.subr.mxu0 0.0
    %7654 = vmatpush1.msra.mxu0 0.0
    %7655 = vmatprep.subr.mxu0 0.0
    %7656 = vmatpush1.msra.mxu0 0.0
    %7657 = vmatprep.subr.mxu0 0.0
    %7658 = vmatpush1.msra.mxu0 0.0
    %7659 = vmatprep.subr.mxu0 0.0
    %7660 = vmatpush1.msra.mxu0 0.0
    %7661 = vmatprep.subr.mxu0 0.0
    %7662 = vmatpush1.msra.mxu0 0.0
    %7663 = vmatprep.subr.mxu0 0.0
    %7664 = vmatpush1.msra.mxu0 0.0
    %7665 = vmatprep.subr.mxu0 0.0
    %7666 = vmatpush1.msra.mxu0 0.0
    %7667 = vmatprep.subr.mxu0 0.0
    %7668 = vmatpush1.msra.mxu0 0.0
    %7669 = vmatprep.subr.mxu0 0.0
    %7670 = vmatpush1.msra.mxu0 0.0
    %7671 = vmatprep.subr.mxu0 0.0
    %7672 = vmatpush1.msra.mxu0 0.0
    %7673 = vmatprep.subr.mxu0 0.0
    %7674 = vmatpush1.msra.mxu0 0.0
    %7675 = vmatprep.subr.mxu0 0.0
    %7676 = vmatpush1.msra.mxu0 0.0
    %7677 = vmatprep.subr.mxu0 0.0
    %7678 = vmatpush1.msra.mxu0 0.0
    %7679 = vmatprep.mubr.f32.mxu0 0.0
    %7680 = vmatmul.mubr.f32.gmra.mrb[0].mxu0 %v7043
    %v7681 = vpop.f32.mrb[0].mxu0
    %v7682 = vadd.f32 0.0, %v7681
    %v7683 = vpop.f32.mrb[0].mxu0
    %7684 = vmatprep.mubr.f32.mxu0 0.0
    %7685 = vmatmul.mubr.f32.gmra.mrb[0].mxu0 %v7046
    %v7686 = vpop.f32.mrb[0].mxu0
    %v7687 = vadd.f32 0.0, %v7686
    %v7688 = vpop.f32.mrb[0].mxu0
    %7689 = vdwg.mxu0
    %s7690 = scalar_lea.vmem %s31, 96
    %v7691 = vld [vmem:[%s7690] sm:$0xff]
    %v7692 = vld [vmem:[%s7690 + $0x8] sm:$0xff]
    %v7693 = vld [vmem:[%s7690 + $0x10] sm:$0xff]
    %v7694 = vld [vmem:[%s7690 + $0x18] sm:$0xff]
    %7695 = vmatprep.subr.mxu0 0.0
    %7696 = vmatpush1.msra.mxu0 %v7691
    %7697 = vmatprep.subr.mxu0 0.0
    %7698 = vmatpush1.msra.mxu0 %v7692
    %7699 = vmatprep.subr.mxu0 0.0
    %7700 = vmatpush1.msra.mxu0 %v7693
    %7701 = vmatprep.subr.mxu0 0.0
    %7702 = vmatpush1.msra.mxu0 %v7694
    %7703 = vmatprep.subr.mxu0 0.0
    %7704 = vmatpush1.msra.mxu0 0.0
    %7705 = vmatprep.subr.mxu0 0.0
    %7706 = vmatpush1.msra.mxu0 0.0
    %7707 = vmatprep.subr.mxu0 0.0
    %7708 = vmatpush1.msra.mxu0 0.0
    %7709 = vmatprep.subr.mxu0 0.0
    %7710 = vmatpush1.msra.mxu0 0.0
    %7711 = vmatprep.subr.mxu0 0.0
    %7712 = vmatpush1.msra.mxu0 0.0
    %7713 = vmatprep.subr.mxu0 0.0
    %7714 = vmatpush1.msra.mxu0 0.0
    %7715 = vmatprep.subr.mxu0 0.0
    %7716 = vmatpush1.msra.mxu0 0.0
    %7717 = vmatprep.subr.mxu0 0.0
    %7718 = vmatpush1.msra.mxu0 0.0
    %7719 = vmatprep.subr.mxu0 0.0
    %7720 = vmatpush1.msra.mxu0 0.0
    %7721 = vmatprep.subr.mxu0 0.0
    %7722 = vmatpush1.msra.mxu0 0.0
    %7723 = vmatprep.subr.mxu0 0.0
    %7724 = vmatpush1.msra.mxu0 0.0
    %7725 = vmatprep.subr.mxu0 0.0
    %7726 = vmatpush1.msra.mxu0 0.0
    %7727 = vmatprep.subr.mxu0 0.0
    %7728 = vmatpush1.msra.mxu0 0.0
    %7729 = vmatprep.subr.mxu0 0.0
    %7730 = vmatpush1.msra.mxu0 0.0
    %7731 = vmatprep.subr.mxu0 0.0
    %7732 = vmatpush1.msra.mxu0 0.0
    %7733 = vmatprep.subr.mxu0 0.0
    %7734 = vmatpush1.msra.mxu0 0.0
    %7735 = vmatprep.subr.mxu0 0.0
    %7736 = vmatpush1.msra.mxu0 0.0
    %7737 = vmatprep.subr.mxu0 0.0
    %7738 = vmatpush1.msra.mxu0 0.0
    %7739 = vmatprep.subr.mxu0 0.0
    %7740 = vmatpush1.msra.mxu0 0.0
    %7741 = vmatprep.subr.mxu0 0.0
    %7742 = vmatpush1.msra.mxu0 0.0
    %7743 = vmatprep.subr.mxu0 0.0
    %7744 = vmatpush1.msra.mxu0 0.0
    %7745 = vmatprep.subr.mxu0 0.0
    %7746 = vmatpush1.msra.mxu0 0.0
    %7747 = vmatprep.subr.mxu0 0.0
    %7748 = vmatpush1.msra.mxu0 0.0
    %7749 = vmatprep.subr.mxu0 0.0
    %7750 = vmatpush1.msra.mxu0 0.0
    %7751 = vmatprep.subr.mxu0 0.0
    %7752 = vmatpush1.msra.mxu0 0.0
    %7753 = vmatprep.subr.mxu0 0.0
    %7754 = vmatpush1.msra.mxu0 0.0
    %7755 = vmatprep.subr.mxu0 0.0
    %7756 = vmatpush1.msra.mxu0 0.0
    %7757 = vmatprep.subr.mxu0 0.0
    %7758 = vmatpush1.msra.mxu0 0.0
    %7759 = vmatprep.mubr.f32.mxu0 0.0
    %7760 = vmatmul.mubr.f32.gmra.mrb[0].mxu0 %v7043
    %v7761 = vpop.f32.mrb[0].mxu0
    %v7762 = vadd.f32 0.0, %v7761
    %v7763 = vpop.f32.mrb[0].mxu0
    %7764 = vmatprep.mubr.f32.mxu0 0.0
    %7765 = vmatmul.mubr.f32.gmra.mrb[0].mxu0 %v7046
    %v7766 = vpop.f32.mrb[0].mxu0
    %v7767 = vadd.f32 0.0, %v7766
    %v7768 = vpop.f32.mrb[0].mxu0
    %7769 = vdwg.mxu0
    %s7770 = scalar_lea.vmem %s33, 96
    %v7771 = vld [vmem:[%s7770] sm:$0xff]
    %v7772 = vld [vmem:[%s7770 + $0x8] sm:$0xff]
    %v7773 = vld [vmem:[%s7770 + $0x10] sm:$0xff]
    %v7774 = vld [vmem:[%s7770 + $0x18] sm:$0xff]
    %7775 = vmatprep.subr.mxu0 0.0
    %7776 = vmatpush1.msra.mxu0 %v7771
    %7777 = vmatprep.subr.mxu0 0.0
    %7778 = vmatpush1.msra.mxu0 %v7772
    %7779 = vmatprep.subr.mxu0 0.0
    %7780 = vmatpush1.msra.mxu0 %v7773
    %7781 = vmatprep.subr.mxu0 0.0
    %7782 = vmatpush1.msra.mxu0 %v7774
    %7783 = vmatprep.subr.mxu0 0.0
    %7784 = vmatpush1.msra.mxu0 0.0
    %7785 = vmatprep.subr.mxu0 0.0
    %7786 = vmatpush1.msra.mxu0 0.0
    %7787 = vmatprep.subr.mxu0 0.0
    %7788 = vmatpush1.msra.mxu0 0.0
    %7789 = vmatprep.subr.mxu0 0.0
    %7790 = vmatpush1.msra.mxu0 0.0
    %7791 = vmatprep.subr.mxu0 0.0
    %7792 = vmatpush1.msra.mxu0 0.0
    %7793 = vmatprep.subr.mxu0 0.0
    %7794 = vmatpush1.msra.mxu0 0.0
    %7795 = vmatprep.subr.mxu0 0.0
    %7796 = vmatpush1.msra.mxu0 0.0
    %7797 = vmatprep.subr.mxu0 0.0
    %7798 = vmatpush1.msra.mxu0 0.0
    %7799 = vmatprep.subr.mxu0 0.0
    %7800 = vmatpush1.msra.mxu0 0.0
    %7801 = vmatprep.subr.mxu0 0.0
    %7802 = vmatpush1.msra.mxu0 0.0
    %7803 = vmatprep.subr.mxu0 0.0
    %7804 = vmatpush1.msra.mxu0 0.0
    %7805 = vmatprep.subr.mxu0 0.0
    %7806 = vmatpush1.msra.mxu0 0.0
    %7807 = vmatprep.subr.mxu0 0.0
    %7808 = vmatpush1.msra.mxu0 0.0
    %7809 = vmatprep.subr.mxu0 0.0
    %7810 = vmatpush1.msra.mxu0 0.0
    %7811 = vmatprep.subr.mxu0 0.0
    %7812 = vmatpush1.msra.mxu0 0.0
    %7813 = vmatprep.subr.mxu0 0.0
    %7814 = vmatpush1.msra.mxu0 0.0
    %7815 = vmatprep.subr.mxu0 0.0
    %7816 = vmatpush1.msra.mxu0 0.0
    %7817 = vmatprep.subr.mxu0 0.0
    %7818 = vmatpush1.msra.mxu0 0.0
    %7819 = vmatprep.subr.mxu0 0.0
    %7820 = vmatpush1.msra.mxu0 0.0
    %7821 = vmatprep.subr.mxu0 0.0
    %7822 = vmatpush1.msra.mxu0 0.0
    %7823 = vmatprep.subr.mxu0 0.0
    %7824 = vmatpush1.msra.mxu0 0.0
    %7825 = vmatprep.subr.mxu0 0.0
    %7826 = vmatpush1.msra.mxu0 0.0
    %7827 = vmatprep.subr.mxu0 0.0
    %7828 = vmatpush1.msra.mxu0 0.0
    %7829 = vmatprep.subr.mxu0 0.0
    %7830 = vmatpush1.msra.mxu0 0.0
    %7831 = vmatprep.subr.mxu0 0.0
    %7832 = vmatpush1.msra.mxu0 0.0
    %7833 = vmatprep.subr.mxu0 0.0
    %7834 = vmatpush1.msra.mxu0 0.0
    %7835 = vmatprep.subr.mxu0 0.0
    %7836 = vmatpush1.msra.mxu0 0.0
    %7837 = vmatprep.subr.mxu0 0.0
    %7838 = vmatpush1.msra.mxu0 0.0
    %7839 = vmatprep.mubr.f32.mxu0 0.0
    %7840 = vmatmul.mubr.f32.gmra.mrb[0].mxu0 %v7043
    %v7841 = vpop.f32.mrb[0].mxu0
    %v7842 = vadd.f32 0.0, %v7841
    %v7843 = vpop.f32.mrb[0].mxu0
    %7844 = vmatprep.mubr.f32.mxu0 0.0
    %7845 = vmatmul.mubr.f32.gmra.mrb[0].mxu0 %v7046
    %v7846 = vpop.f32.mrb[0].mxu0
    %v7847 = vadd.f32 0.0, %v7846
    %v7848 = vpop.f32.mrb[0].mxu0
    %7849 = vdwg.mxu0
    %v7851 = vsel %vm473, %v7682, 0
    %v7854 = vsel %vm473, %v7762, 0
    %7856 = vmatprep.subr.mxu0 0.0
    %7857 = vmatpush1.xpose.msra.mxu0 %v7854
    %7858 = vmatprep.subr.mxu0 0.0
    %7859 = vmatpush1.xpose.msra.mxu0 0.0
    %7860 = vmatprep.subr.mxu0 0.0
    %7861 = vmatpush1.xpose.msra.mxu0 0.0
    %7862 = vmatprep.subr.mxu0 0.0
    %7863 = vmatpush1.xpose.msra.mxu0 0.0
    %7864 = vmatprep.subr.mxu0 0.0
    %7865 = vmatpush1.xpose.msra.mxu0 0.0
    %7866 = vmatprep.subr.mxu0 0.0
    %7867 = vmatpush1.xpose.msra.mxu0 0.0
    %7868 = vmatprep.subr.mxu0 0.0
    %7869 = vmatpush1.xpose.msra.mxu0 0.0
    %7870 = vmatprep.subr.mxu0 0.0
    %7871 = vmatpush1.xpose.msra.mxu0 0.0
    %7872 = vmatprep.subr.mxu0 0.0
    %7873 = vmatpush1.xpose.msra.mxu0 0.0
    %7874 = vmatprep.subr.mxu0 0.0
    %7875 = vmatpush1.xpose.msra.mxu0 0.0
    %7876 = vmatprep.subr.mxu0 0.0
    %7877 = vmatpush1.xpose.msra.mxu0 0.0
    %7878 = vmatprep.subr.mxu0 0.0
    %7879 = vmatpush1.xpose.msra.mxu0 0.0
    %7880 = vmatprep.subr.mxu0 0.0
    %7881 = vmatpush1.xpose.msra.mxu0 0.0
    %7882 = vmatprep.subr.mxu0 0.0
    %7883 = vmatpush1.xpose.msra.mxu0 0.0
    %7884 = vmatprep.subr.mxu0 0.0
    %7885 = vmatpush1.xpose.msra.mxu0 0.0
    %7886 = vmatprep.subr.mxu0 0.0
    %7887 = vmatpush1.xpose.msra.mxu0 0.0
    %7888 = vmatprep.subr.mxu0 0.0
    %7889 = vmatpush1.xpose.msra.mxu0 0.0
    %7890 = vmatprep.subr.mxu0 0.0
    %7891 = vmatpush1.xpose.msra.mxu0 0.0
    %7892 = vmatprep.subr.mxu0 0.0
    %7893 = vmatpush1.xpose.msra.mxu0 0.0
    %7894 = vmatprep.subr.mxu0 0.0
    %7895 = vmatpush1.xpose.msra.mxu0 0.0
    %7896 = vmatprep.subr.mxu0 0.0
    %7897 = vmatpush1.xpose.msra.mxu0 0.0
    %7898 = vmatprep.subr.mxu0 0.0
    %7899 = vmatpush1.xpose.msra.mxu0 0.0
    %7900 = vmatprep.subr.mxu0 0.0
    %7901 = vmatpush1.xpose.msra.mxu0 0.0
    %7902 = vmatprep.subr.mxu0 0.0
    %7903 = vmatpush1.xpose.msra.mxu0 0.0
    %7904 = vmatprep.subr.mxu0 0.0
    %7905 = vmatpush1.xpose.msra.mxu0 0.0
    %7906 = vmatprep.subr.mxu0 0.0
    %7907 = vmatpush1.xpose.msra.mxu0 0.0
    %7908 = vmatprep.subr.mxu0 0.0
    %7909 = vmatpush1.xpose.msra.mxu0 0.0
    %7910 = vmatprep.subr.mxu0 0.0
    %7911 = vmatpush1.xpose.msra.mxu0 0.0
    %7912 = vmatprep.subr.mxu0 0.0
    %7913 = vmatpush1.xpose.msra.mxu0 0.0
    %7914 = vmatprep.subr.mxu0 0.0
    %7915 = vmatpush1.xpose.msra.mxu0 0.0
    %7916 = vmatprep.subr.mxu0 0.0
    %7917 = vmatpush1.xpose.msra.mxu0 0.0
    %7918 = vmatprep.subr.mxu0 0.0
    %7919 = vmatpush1.xpose.msra.mxu0 0.0
    %7920 = vmatprep.mubr.f32.mxu0 0.0
    %7921 = vmatmul.mubr.f32.gmra.mrb[0].mxu0 %v7851
    %v7922 = vpop.f32.mrb[0].mxu0
    %v7923 = vadd.f32 0.0, %v7922
    %v7924 = vpop.f32.mrb[0].mxu0
    %7925 = vdwg.mxu0
    %v7926 = vmul.f32 %v7923, 0.25
    %v7927 = vsel %vm4362, %v7926, -inf
    %7928 = vmax.xlane.f32.xlu0 %v7927
    %v7929 = vpop.xlane.xlu0 %7928
    %v7930 = vsub.f32 %v7926, %v7929
    %v7931 = vmul.f32 %v7930, 1.442695
    %v7932 = vpow.pop %v7931
    %v7933 = vsel %vm4362, %v7932, 0.0
    %7934 = vadd.xlane.f32.xlu0 %v7933
    %v7935 = vpop.xlane.xlu0 %7934
    %v7936 = vrcp.pop %v7935
    %v7937 = vmul.f32 %v7932, %v7936
    %v7939 = vsel %vm4362, %v7937, 0
    %7941 = vmatprep.subr.mxu0 0.0
    %7942 = vmatpush1.msra.mxu0 %v7842
    %7943 = vmatprep.subr.mxu0 0.0
    %7944 = vmatpush1.msra.mxu0 0.0
    %7945 = vmatprep.subr.mxu0 0.0
    %7946 = vmatpush1.msra.mxu0 0.0
    %7947 = vmatprep.subr.mxu0 0.0
    %7948 = vmatpush1.msra.mxu0 0.0
    %7949 = vmatprep.subr.mxu0 0.0
    %7950 = vmatpush1.msra.mxu0 0.0
    %7951 = vmatprep.subr.mxu0 0.0
    %7952 = vmatpush1.msra.mxu0 0.0
    %7953 = vmatprep.subr.mxu0 0.0
    %7954 = vmatpush1.msra.mxu0 0.0
    %7955 = vmatprep.subr.mxu0 0.0
    %7956 = vmatpush1.msra.mxu0 0.0
    %7957 = vmatprep.subr.mxu0 0.0
    %7958 = vmatpush1.msra.mxu0 0.0
    %7959 = vmatprep.subr.mxu0 0.0
    %7960 = vmatpush1.msra.mxu0 0.0
    %7961 = vmatprep.subr.mxu0 0.0
    %7962 = vmatpush1.msra.mxu0 0.0
    %7963 = vmatprep.subr.mxu0 0.0
    %7964 = vmatpush1.msra.mxu0 0.0
    %7965 = vmatprep.subr.mxu0 0.0
    %7966 = vmatpush1.msra.mxu0 0.0
    %7967 = vmatprep.subr.mxu0 0.0
    %7968 = vmatpush1.msra.mxu0 0.0
    %7969 = vmatprep.subr.mxu0 0.0
    %7970 = vmatpush1.msra.mxu0 0.0
    %7971 = vmatprep.subr.mxu0 0.0
    %7972 = vmatpush1.msra.mxu0 0.0
    %7973 = vmatprep.subr.mxu0 0.0
    %7974 = vmatpush1.msra.mxu0 0.0
    %7975 = vmatprep.subr.mxu0 0.0
    %7976 = vmatpush1.msra.mxu0 0.0
    %7977 = vmatprep.subr.mxu0 0.0
    %7978 = vmatpush1.msra.mxu0 0.0
    %7979 = vmatprep.subr.mxu0 0.0
    %7980 = vmatpush1.msra.mxu0 0.0
    %7981 = vmatprep.subr.mxu0 0.0
    %7982 = vmatpush1.msra.mxu0 0.0
    %7983 = vmatprep.subr.mxu0 0.0
    %7984 = vmatpush1.msra.mxu0 0.0
    %7985 = vmatprep.subr.mxu0 0.0
    %7986 = vmatpush1.msra.mxu0 0.0
    %7987 = vmatprep.subr.mxu0 0.0
    %7988 = vmatpush1.msra.mxu0 0.0
    %7989 = vmatprep.subr.mxu0 0.0
    %7990 = vmatpush1.msra.mxu0 0.0
    %7991 = vmatprep.subr.mxu0 0.0
    %7992 = vmatpush1.msra.mxu0 0.0
    %7993 = vmatprep.subr.mxu0 0.0
    %7994 = vmatpush1.msra.mxu0 0.0
    %7995 = vmatprep.subr.mxu0 0.0
    %7996 = vmatpush1.msra.mxu0 0.0
    %7997 = vmatprep.subr.mxu0 0.0
    %7998 = vmatpush1.msra.mxu0 0.0
    %7999 = vmatprep.subr.mxu0 0.0
    %8000 = vmatpush1.msra.mxu0 0.0
    %8001 = vmatprep.subr.mxu0 0.0
    %8002 = vmatpush1.msra.mxu0 0.0
    %8003 = vmatprep.subr.mxu0 0.0
    %8004 = vmatpush1.msra.mxu0 0.0
    %8005 = vmatprep.mubr.f32.mxu0 0.0
    %8006 = vmatmul.mubr.f32.gmra.mrb[0].mxu0 %v7939
    %v8007 = vpop.f32.mrb[0].mxu0
    %v8008 = vadd.f32 0.0, %v8007
    %v8009 = vpop.f32.mrb[0].mxu0
    %8010 = vdwg.mxu0
    %v8012 = vsel %vm473, %v7687, 0
    %v8015 = vsel %vm473, %v7767, 0
    %8017 = vmatprep.subr.mxu0 0.0
    %8018 = vmatpush1.xpose.msra.mxu0 %v8015
    %8019 = vmatprep.subr.mxu0 0.0
    %8020 = vmatpush1.xpose.msra.mxu0 0.0
    %8021 = vmatprep.subr.mxu0 0.0
    %8022 = vmatpush1.xpose.msra.mxu0 0.0
    %8023 = vmatprep.subr.mxu0 0.0
    %8024 = vmatpush1.xpose.msra.mxu0 0.0
    %8025 = vmatprep.subr.mxu0 0.0
    %8026 = vmatpush1.xpose.msra.mxu0 0.0
    %8027 = vmatprep.subr.mxu0 0.0
    %8028 = vmatpush1.xpose.msra.mxu0 0.0
    %8029 = vmatprep.subr.mxu0 0.0
    %8030 = vmatpush1.xpose.msra.mxu0 0.0
    %8031 = vmatprep.subr.mxu0 0.0
    %8032 = vmatpush1.xpose.msra.mxu0 0.0
    %8033 = vmatprep.subr.mxu0 0.0
    %8034 = vmatpush1.xpose.msra.mxu0 0.0
    %8035 = vmatprep.subr.mxu0 0.0
    %8036 = vmatpush1.xpose.msra.mxu0 0.0
    %8037 = vmatprep.subr.mxu0 0.0
    %8038 = vmatpush1.xpose.msra.mxu0 0.0
    %8039 = vmatprep.subr.mxu0 0.0
    %8040 = vmatpush1.xpose.msra.mxu0 0.0
    %8041 = vmatprep.subr.mxu0 0.0
    %8042 = vmatpush1.xpose.msra.mxu0 0.0
    %8043 = vmatprep.subr.mxu0 0.0
    %8044 = vmatpush1.xpose.msra.mxu0 0.0
    %8045 = vmatprep.subr.mxu0 0.0
    %8046 = vmatpush1.xpose.msra.mxu0 0.0
    %8047 = vmatprep.subr.mxu0 0.0
    %8048 = vmatpush1.xpose.msra.mxu0 0.0
    %8049 = vmatprep.subr.mxu0 0.0
    %8050 = vmatpush1.xpose.msra.mxu0 0.0
    %8051 = vmatprep.subr.mxu0 0.0
    %8052 = vmatpush1.xpose.msra.mxu0 0.0
    %8053 = vmatprep.subr.mxu0 0.0
    %8054 = vmatpush1.xpose.msra.mxu0 0.0
    %8055 = vmatprep.subr.mxu0 0.0
    %8056 = vmatpush1.xpose.msra.mxu0 0.0
    %8057 = vmatprep.subr.mxu0 0.0
    %8058 = vmatpush1.xpose.msra.mxu0 0.0
    %8059 = vmatprep.subr.mxu0 0.0
    %8060 = vmatpush1.xpose.msra.mxu0 0.0
    %8061 = vmatprep.subr.mxu0 0.0
    %8062 = vmatpush1.xpose.msra.mxu0 0.0
    %8063 = vmatprep.subr.mxu0 0.0
    %8064 = vmatpush1.xpose.msra.mxu0 0.0
    %8065 = vmatprep.subr.mxu0 0.0
    %8066 = vmatpush1.xpose.msra.mxu0 0.0
    %8067 = vmatprep.subr.mxu0 0.0
    %8068 = vmatpush1.xpose.msra.mxu0 0.0
    %8069 = vmatprep.subr.mxu0 0.0
    %8070 = vmatpush1.xpose.msra.mxu0 0.0
    %8071 = vmatprep.subr.mxu0 0.0
    %8072 = vmatpush1.xpose.msra.mxu0 0.0
    %8073 = vmatprep.subr.mxu0 0.0
    %8074 = vmatpush1.xpose.msra.mxu0 0.0
    %8075 = vmatprep.subr.mxu0 0.0
    %8076 = vmatpush1.xpose.msra.mxu0 0.0
    %8077 = vmatprep.subr.mxu0 0.0
    %8078 = vmatpush1.xpose.msra.mxu0 0.0
    %8079 = vmatprep.subr.mxu0 0.0
    %8080 = vmatpush1.xpose.msra.mxu0 0.0
    %8081 = vmatprep.mubr.f32.mxu0 0.0
    %8082 = vmatmul.mubr.f32.gmra.mrb[0].mxu0 %v8012
    %v8083 = vpop.f32.mrb[0].mxu0
    %v8084 = vadd.f32 0.0, %v8083
    %v8085 = vpop.f32.mrb[0].mxu0
    %8086 = vdwg.mxu0
    %v8087 = vmul.f32 %v8084, 0.25
    %v8088 = vsel %vm4362, %v8087, -inf
    %8089 = vmax.xlane.f32.xlu0 %v8088
    %v8090 = vpop.xlane.xlu0 %8089
    %v8091 = vsub.f32 %v8087, %v8090
    %v8092 = vmul.f32 %v8091, 1.442695
    %v8093 = vpow.pop %v8092
    %v8094 = vsel %vm4362, %v8093, 0.0
    %8095 = vadd.xlane.f32.xlu0 %v8094
    %v8096 = vpop.xlane.xlu0 %8095
    %v8097 = vrcp.pop %v8096
    %v8098 = vmul.f32 %v8093, %v8097
    %v8100 = vsel %vm4362, %v8098, 0
    %8102 = vmatprep.subr.mxu0 0.0
    %8103 = vmatpush1.msra.mxu0 %v7847
    %8104 = vmatprep.subr.mxu0 0.0
    %8105 = vmatpush1.msra.mxu0 0.0
    %8106 = vmatprep.subr.mxu0 0.0
    %8107 = vmatpush1.msra.mxu0 0.0
    %8108 = vmatprep.subr.mxu0 0.0
    %8109 = vmatpush1.msra.mxu0 0.0
    %8110 = vmatprep.subr.mxu0 0.0
    %8111 = vmatpush1.msra.mxu0 0.0
    %8112 = vmatprep.subr.mxu0 0.0
    %8113 = vmatpush1.msra.mxu0 0.0
    %8114 = vmatprep.subr.mxu0 0.0
    %8115 = vmatpush1.msra.mxu0 0.0
    %8116 = vmatprep.subr.mxu0 0.0
    %8117 = vmatpush1.msra.mxu0 0.0
    %8118 = vmatprep.subr.mxu0 0.0
    %8119 = vmatpush1.msra.mxu0 0.0
    %8120 = vmatprep.subr.mxu0 0.0
    %8121 = vmatpush1.msra.mxu0 0.0
    %8122 = vmatprep.subr.mxu0 0.0
    %8123 = vmatpush1.msra.mxu0 0.0
    %8124 = vmatprep.subr.mxu0 0.0
    %8125 = vmatpush1.msra.mxu0 0.0
    %8126 = vmatprep.subr.mxu0 0.0
    %8127 = vmatpush1.msra.mxu0 0.0
    %8128 = vmatprep.subr.mxu0 0.0
    %8129 = vmatpush1.msra.mxu0 0.0
    %8130 = vmatprep.subr.mxu0 0.0
    %8131 = vmatpush1.msra.mxu0 0.0
    %8132 = vmatprep.subr.mxu0 0.0
    %8133 = vmatpush1.msra.mxu0 0.0
    %8134 = vmatprep.subr.mxu0 0.0
    %8135 = vmatpush1.msra.mxu0 0.0
    %8136 = vmatprep.subr.mxu0 0.0
    %8137 = vmatpush1.msra.mxu0 0.0
    %8138 = vmatprep.subr.mxu0 0.0
    %8139 = vmatpush1.msra.mxu0 0.0
    %8140 = vmatprep.subr.mxu0 0.0
    %8141 = vmatpush1.msra.mxu0 0.0
    %8142 = vmatprep.subr.mxu0 0.0
    %8143 = vmatpush1.msra.mxu0 0.0
    %8144 = vmatprep.subr.mxu0 0.0
    %8145 = vmatpush1.msra.mxu0 0.0
    %8146 = vmatprep.subr.mxu0 0.0
    %8147 = vmatpush1.msra.mxu0 0.0
    %8148 = vmatprep.subr.mxu0 0.0
    %8149 = vmatpush1.msra.mxu0 0.0
    %8150 = vmatprep.subr.mxu0 0.0
    %8151 = vmatpush1.msra.mxu0 0.0
    %8152 = vmatprep.subr.mxu0 0.0
    %8153 = vmatpush1.msra.mxu0 0.0
    %8154 = vmatprep.subr.mxu0 0.0
    %8155 = vmatpush1.msra.mxu0 0.0
    %8156 = vmatprep.subr.mxu0 0.0
    %8157 = vmatpush1.msra.mxu0 0.0
    %8158 = vmatprep.subr.mxu0 0.0
    %8159 = vmatpush1.msra.mxu0 0.0
    %8160 = vmatprep.subr.mxu0 0.0
    %8161 = vmatpush1.msra.mxu0 0.0
    %8162 = vmatprep.subr.mxu0 0.0
    %8163 = vmatpush1.msra.mxu0 0.0
    %8164 = vmatprep.subr.mxu0 0.0
    %8165 = vmatpush1.msra.mxu0 0.0
    %8166 = vmatprep.mubr.f32.mxu0 0.0
    %8167 = vmatmul.mubr.f32.gmra.mrb[0].mxu0 %v8100
    %v8168 = vpop.f32.mrb[0].mxu0
    %v8169 = vadd.f32 0.0, %v8168
    %v8170 = vpop.f32.mrb[0].mxu0
    %8171 = vdwg.mxu0
    %s8172 = scalar_lea.vmem %s35, 96
    %v8173 = vld [vmem:[%s8172] sm:$0xff]
    %v8174 = vld [vmem:[%s8172 + $0x8] sm:$0xff]
    %v8175 = vld [vmem:[%s8172 + $0x10] sm:$0xff]
    %v8176 = vld [vmem:[%s8172 + $0x18] sm:$0xff]
    %v8178 = vsel %vm197, %v8008, 0
    %v8181 = vsel %vm197, %v8169, 0
    %8183 = vmatprep.subr.mxu0 0.0
    %8184 = vmatpush1.msra.mxu0 %v8173
    %8185 = vmatprep.subr.mxu0 0.0
    %8186 = vmatpush1.msra.mxu0 %v8174
    %8187 = vmatprep.subr.mxu0 0.0
    %8188 = vmatpush1.msra.mxu0 %v8175
    %8189 = vmatprep.subr.mxu0 0.0
    %8190 = vmatpush1.msra.mxu0 %v8176
    %8191 = vmatprep.subr.mxu0 0.0
    %8192 = vmatpush1.msra.mxu0 0.0
    %8193 = vmatprep.subr.mxu0 0.0
    %8194 = vmatpush1.msra.mxu0 0.0
    %8195 = vmatprep.subr.mxu0 0.0
    %8196 = vmatpush1.msra.mxu0 0.0
    %8197 = vmatprep.subr.mxu0 0.0
    %8198 = vmatpush1.msra.mxu0 0.0
    %8199 = vmatprep.subr.mxu0 0.0
    %8200 = vmatpush1.msra.mxu0 0.0
    %8201 = vmatprep.subr.mxu0 0.0
    %8202 = vmatpush1.msra.mxu0 0.0
    %8203 = vmatprep.subr.mxu0 0.0
    %8204 = vmatpush1.msra.mxu0 0.0
    %8205 = vmatprep.subr.mxu0 0.0
    %8206 = vmatpush1.msra.mxu0 0.0
    %8207 = vmatprep.subr.mxu0 0.0
    %8208 = vmatpush1.msra.mxu0 0.0
    %8209 = vmatprep.subr.mxu0 0.0
    %8210 = vmatpush1.msra.mxu0 0.0
    %8211 = vmatprep.subr.mxu0 0.0
    %8212 = vmatpush1.msra.mxu0 0.0
    %8213 = vmatprep.subr.mxu0 0.0
    %8214 = vmatpush1.msra.mxu0 0.0
    %8215 = vmatprep.subr.mxu0 0.0
    %8216 = vmatpush1.msra.mxu0 0.0
    %8217 = vmatprep.subr.mxu0 0.0
    %8218 = vmatpush1.msra.mxu0 0.0
    %8219 = vmatprep.subr.mxu0 0.0
    %8220 = vmatpush1.msra.mxu0 0.0
    %8221 = vmatprep.subr.mxu0 0.0
    %8222 = vmatpush1.msra.mxu0 0.0
    %8223 = vmatprep.subr.mxu0 0.0
    %8224 = vmatpush1.msra.mxu0 0.0
    %8225 = vmatprep.subr.mxu0 0.0
    %8226 = vmatpush1.msra.mxu0 0.0
    %8227 = vmatprep.subr.mxu0 0.0
    %8228 = vmatpush1.msra.mxu0 0.0
    %8229 = vmatprep.subr.mxu0 0.0
    %8230 = vmatpush1.msra.mxu0 0.0
    %8231 = vmatprep.subr.mxu0 0.0
    %8232 = vmatpush1.msra.mxu0 0.0
    %8233 = vmatprep.subr.mxu0 0.0
    %8234 = vmatpush1.msra.mxu0 0.0
    %8235 = vmatprep.subr.mxu0 0.0
    %8236 = vmatpush1.msra.mxu0 0.0
    %8237 = vmatprep.subr.mxu0 0.0
    %8238 = vmatpush1.msra.mxu0 0.0
    %8239 = vmatprep.subr.mxu0 0.0
    %8240 = vmatpush1.msra.mxu0 0.0
    %8241 = vmatprep.subr.mxu0 0.0
    %8242 = vmatpush1.msra.mxu0 0.0
    %8243 = vmatprep.subr.mxu0 0.0
    %8244 = vmatpush1.msra.mxu0 0.0
    %8245 = vmatprep.subr.mxu0 0.0
    %8246 = vmatpush1.msra.mxu0 0.0
    %8247 = vmatprep.mubr.f32.mxu0 0.0
    %8248 = vmatmul.mubr.f32.gmra.mrb[0].mxu0 %v8178
    %v8249 = vpop.f32.mrb[0].mxu0
    %v8250 = vadd.f32 0.0, %v8249
    %v8251 = vpop.f32.mrb[0].mxu0
    %8252 = vmatprep.mubr.f32.mxu0 0.0
    %8253 = vmatmul.mubr.f32.gmra.mrb[0].mxu0 %v8181
    %v8254 = vpop.f32.mrb[0].mxu0
    %v8255 = vadd.f32 0.0, %v8254
    %v8256 = vpop.f32.mrb[0].mxu0
    %8257 = vdwg.mxu0
    %v8259 = vsel %vm197, %v7441, 0
    %v8262 = vsel %vm197, %v7602, 0
    %8264 = vmatprep.subr.mxu0 0.0
    %8265 = vmatpush1.msra.mxu0 %v7606
    %8266 = vmatprep.subr.mxu0 0.0
    %8267 = vmatpush1.msra.mxu0 %v7607
    %8268 = vmatprep.subr.mxu0 0.0
    %8269 = vmatpush1.msra.mxu0 %v7608
    %8270 = vmatprep.subr.mxu0 0.0
    %8271 = vmatpush1.msra.mxu0 %v7609
    %8272 = vmatprep.subr.mxu0 0.0
    %8273 = vmatpush1.msra.mxu0 0.0
    %8274 = vmatprep.subr.mxu0 0.0
    %8275 = vmatpush1.msra.mxu0 0.0
    %8276 = vmatprep.subr.mxu0 0.0
    %8277 = vmatpush1.msra.mxu0 0.0
    %8278 = vmatprep.subr.mxu0 0.0
    %8279 = vmatpush1.msra.mxu0 0.0
    %8280 = vmatprep.subr.mxu0 0.0
    %8281 = vmatpush1.msra.mxu0 0.0
    %8282 = vmatprep.subr.mxu0 0.0
    %8283 = vmatpush1.msra.mxu0 0.0
    %8284 = vmatprep.subr.mxu0 0.0
    %8285 = vmatpush1.msra.mxu0 0.0
    %8286 = vmatprep.subr.mxu0 0.0
    %8287 = vmatpush1.msra.mxu0 0.0
    %8288 = vmatprep.subr.mxu0 0.0
    %8289 = vmatpush1.msra.mxu0 0.0
    %8290 = vmatprep.subr.mxu0 0.0
    %8291 = vmatpush1.msra.mxu0 0.0
    %8292 = vmatprep.subr.mxu0 0.0
    %8293 = vmatpush1.msra.mxu0 0.0
    %8294 = vmatprep.subr.mxu0 0.0
    %8295 = vmatpush1.msra.mxu0 0.0
    %8296 = vmatprep.subr.mxu0 0.0
    %8297 = vmatpush1.msra.mxu0 0.0
    %8298 = vmatprep.subr.mxu0 0.0
    %8299 = vmatpush1.msra.mxu0 0.0
    %8300 = vmatprep.subr.mxu0 0.0
    %8301 = vmatpush1.msra.mxu0 0.0
    %8302 = vmatprep.subr.mxu0 0.0
    %8303 = vmatpush1.msra.mxu0 0.0
    %8304 = vmatprep.subr.mxu0 0.0
    %8305 = vmatpush1.msra.mxu0 0.0
    %8306 = vmatprep.subr.mxu0 0.0
    %8307 = vmatpush1.msra.mxu0 0.0
    %8308 = vmatprep.subr.mxu0 0.0
    %8309 = vmatpush1.msra.mxu0 0.0
    %8310 = vmatprep.subr.mxu0 0.0
    %8311 = vmatpush1.msra.mxu0 0.0
    %8312 = vmatprep.subr.mxu0 0.0
    %8313 = vmatpush1.msra.mxu0 0.0
    %8314 = vmatprep.subr.mxu0 0.0
    %8315 = vmatpush1.msra.mxu0 0.0
    %8316 = vmatprep.subr.mxu0 0.0
    %8317 = vmatpush1.msra.mxu0 0.0
    %8318 = vmatprep.subr.mxu0 0.0
    %8319 = vmatpush1.msra.mxu0 0.0
    %8320 = vmatprep.subr.mxu0 0.0
    %8321 = vmatpush1.msra.mxu0 0.0
    %8322 = vmatprep.subr.mxu0 0.0
    %8323 = vmatpush1.msra.mxu0 0.0
    %8324 = vmatprep.subr.mxu0 0.0
    %8325 = vmatpush1.msra.mxu0 0.0
    %8326 = vmatprep.subr.mxu0 0.0
    %8327 = vmatpush1.msra.mxu0 0.0
    %8328 = vmatprep.mubr.f32.mxu0 0.0
    %8329 = vmatmul.mubr.f32.gmra.mrb[0].mxu0 %v8259
    %v8330 = vpop.f32.mrb[0].mxu0
    %v8331 = vadd.f32 %v8250, %v8330
    %v8332 = vpop.f32.mrb[0].mxu0
    %8333 = vmatprep.mubr.f32.mxu0 0.0
    %8334 = vmatmul.mubr.f32.gmra.mrb[0].mxu0 %v8262
    %v8335 = vpop.f32.mrb[0].mxu0
    %v8336 = vadd.f32 %v8255, %v8335
    %v8337 = vpop.f32.mrb[0].mxu0
    %8338 = vdwg.mxu0
    %v8339 = vadd.f32 %v8331, %v7035
    %v8340 = vadd.f32 %v8336, %v7036
    %s8341 = scalar_lea.vmem %s53, 1
    %v8342 = vld [vmem:[%s8341] sm:$0x1]
    %s8343 = scalar_lea.vmem %s55, 1
    %v8344 = vld [vmem:[%s8343] sm:$0x1]
    %v8345 = vsel %vm197, %v8339, 0.0
    %8346 = vadd.xlane.f32.xlu0 %v8345
    %v8347 = vpop.xlane.xlu0 %8346
    %v8348 = vsel %vm197, %v8340, 0.0
    %8349 = vadd.xlane.f32.xlu0 %v8348
    %v8350 = vpop.xlane.xlu0 %8349
    %v8351 = vmul.f32 %v8347, %v1733
    %v8352 = vmul.f32 %v8350, %v1733
    %v8353 = vsub.f32 %v8339, %v8351
    %v8354 = vsub.f32 %v8340, %v8352
    %v8355 = vmul.f32 %v8353, %v8353
    %v8356 = vmul.f32 %v8354, %v8354
    %v8357 = vsel %vm197, %v8355, 0.0
    %8358 = vadd.xlane.f32.xlu0 %v8357
    %v8359 = vpop.xlane.xlu0 %8358
    %v8360 = vsel %vm197, %v8356, 0.0
    %8361 = vadd.xlane.f32.xlu0 %v8360
    %v8362 = vpop.xlane.xlu0 %8361
    %v8363 = vmul.f32 %v8359, %v1733
    %v8364 = vmul.f32 %v8362, %v1733
    %v8365 = vadd.f32 %v8363, 1e-05
    %v8366 = vadd.f32 %v8364, 1e-05
    %v8367 = vrsqrt.pop %v8365
    %v8368 = vrsqrt.pop %v8366
    %v8369 = vmul.f32 %v8353, %v8367
    %v8370 = vmul.f32 %v8354, %v8368
    %v8372 = vlaneseq
    %v8373 = vshrl.u32 %v8372, 7
    %v8374 = vsub.s32 0, %v8373
    %v8375 = vrot.slane %v8342, %v8374
    %v8377 = vmul.f32 %v8369, %v8375
    %v8378 = vmul.f32 %v8370, %v8375
    %v8380 = vlaneseq
    %v8381 = vshrl.u32 %v8380, 7
    %v8382 = vsub.s32 0, %v8381
    %v8383 = vrot.slane %v8344, %v8382
    %v8385 = vadd.f32 %v8377, %v8383
    %v8386 = vadd.f32 %v8378, %v8383
    %s8387 = scalar_lea.vmem %s37, 64
    %v8388 = vld [vmem:[%s8387] sm:$0xff]
    %v8389 = vld [vmem:[%s8387 + $0x8] sm:$0xff]
    %v8390 = vld [vmem:[%s8387 + $0x10] sm:$0xff]
    %v8391 = vld [vmem:[%s8387 + $0x18] sm:$0xff]
    %v8393 = vsel %vm197, %v8385, 0
    %v8396 = vsel %vm197, %v8386, 0
    %8398 = vmatprep.subr.mxu0 0.0
    %8399 = vmatpush1.msra.mxu0 %v8388
    %8400 = vmatprep.subr.mxu0 0.0
    %8401 = vmatpush1.msra.mxu0 %v8389
    %8402 = vmatprep.subr.mxu0 0.0
    %8403 = vmatpush1.msra.mxu0 %v8390
    %8404 = vmatprep.subr.mxu0 0.0
    %8405 = vmatpush1.msra.mxu0 %v8391
    %8406 = vmatprep.subr.mxu0 0.0
    %8407 = vmatpush1.msra.mxu0 0.0
    %8408 = vmatprep.subr.mxu0 0.0
    %8409 = vmatpush1.msra.mxu0 0.0
    %8410 = vmatprep.subr.mxu0 0.0
    %8411 = vmatpush1.msra.mxu0 0.0
    %8412 = vmatprep.subr.mxu0 0.0
    %8413 = vmatpush1.msra.mxu0 0.0
    %8414 = vmatprep.subr.mxu0 0.0
    %8415 = vmatpush1.msra.mxu0 0.0
    %8416 = vmatprep.subr.mxu0 0.0
    %8417 = vmatpush1.msra.mxu0 0.0
    %8418 = vmatprep.subr.mxu0 0.0
    %8419 = vmatpush1.msra.mxu0 0.0
    %8420 = vmatprep.subr.mxu0 0.0
    %8421 = vmatpush1.msra.mxu0 0.0
    %8422 = vmatprep.subr.mxu0 0.0
    %8423 = vmatpush1.msra.mxu0 0.0
    %8424 = vmatprep.subr.mxu0 0.0
    %8425 = vmatpush1.msra.mxu0 0.0
    %8426 = vmatprep.subr.mxu0 0.0
    %8427 = vmatpush1.msra.mxu0 0.0
    %8428 = vmatprep.subr.mxu0 0.0
    %8429 = vmatpush1.msra.mxu0 0.0
    %8430 = vmatprep.subr.mxu0 0.0
    %8431 = vmatpush1.msra.mxu0 0.0
    %8432 = vmatprep.subr.mxu0 0.0
    %8433 = vmatpush1.msra.mxu0 0.0
    %8434 = vmatprep.subr.mxu0 0.0
    %8435 = vmatpush1.msra.mxu0 0.0
    %8436 = vmatprep.subr.mxu0 0.0
    %8437 = vmatpush1.msra.mxu0 0.0
    %8438 = vmatprep.subr.mxu0 0.0
    %8439 = vmatpush1.msra.mxu0 0.0
    %8440 = vmatprep.subr.mxu0 0.0
    %8441 = vmatpush1.msra.mxu0 0.0
    %8442 = vmatprep.subr.mxu0 0.0
    %8443 = vmatpush1.msra.mxu0 0.0
    %8444 = vmatprep.subr.mxu0 0.0
    %8445 = vmatpush1.msra.mxu0 0.0
    %8446 = vmatprep.subr.mxu0 0.0
    %8447 = vmatpush1.msra.mxu0 0.0
    %8448 = vmatprep.subr.mxu0 0.0
    %8449 = vmatpush1.msra.mxu0 0.0
    %8450 = vmatprep.subr.mxu0 0.0
    %8451 = vmatpush1.msra.mxu0 0.0
    %8452 = vmatprep.subr.mxu0 0.0
    %8453 = vmatpush1.msra.mxu0 0.0
    %8454 = vmatprep.subr.mxu0 0.0
    %8455 = vmatpush1.msra.mxu0 0.0
    %8456 = vmatprep.subr.mxu0 0.0
    %8457 = vmatpush1.msra.mxu0 0.0
    %8458 = vmatprep.subr.mxu0 0.0
    %8459 = vmatpush1.msra.mxu0 0.0
    %8460 = vmatprep.subr.mxu0 0.0
    %8461 = vmatpush1.msra.mxu0 0.0
    %8462 = vmatprep.mubr.f32.mxu0 0.0
    %8463 = vmatmul.mubr.f32.gmra.mrb[0].mxu0 %v8393
    %v8464 = vpop.f32.mrb[0].mxu0
    %v8465 = vadd.f32 0.0, %v8464
    %v8466 = vpop.f32.mrb[0].mxu0
    %8467 = vmatprep.mubr.f32.mxu0 0.0
    %8468 = vmatmul.mubr.f32.gmra.mrb[0].mxu0 %v8396
    %v8469 = vpop.f32.mrb[0].mxu0
    %v8470 = vadd.f32 0.0, %v8469
    %v8471 = vpop.f32.mrb[0].mxu0
    %8472 = vdwg.mxu0
    %s8473 = scalar_lea.vmem %s39, 64
    %v8474 = vld [vmem:[%s8473] sm:$0xff]
    %v8475 = vld [vmem:[%s8473 + $0x8] sm:$0xff]
    %v8476 = vld [vmem:[%s8473 + $0x10] sm:$0xff]
    %v8477 = vld [vmem:[%s8473 + $0x18] sm:$0xff]
    %8478 = vmatprep.subr.mxu0 0.0
    %8479 = vmatpush1.msra.mxu0 %v8474
    %8480 = vmatprep.subr.mxu0 0.0
    %8481 = vmatpush1.msra.mxu0 %v8475
    %8482 = vmatprep.subr.mxu0 0.0
    %8483 = vmatpush1.msra.mxu0 %v8476
    %8484 = vmatprep.subr.mxu0 0.0
    %8485 = vmatpush1.msra.mxu0 %v8477
    %8486 = vmatprep.subr.mxu0 0.0
    %8487 = vmatpush1.msra.mxu0 0.0
    %8488 = vmatprep.subr.mxu0 0.0
    %8489 = vmatpush1.msra.mxu0 0.0
    %8490 = vmatprep.subr.mxu0 0.0
    %8491 = vmatpush1.msra.mxu0 0.0
    %8492 = vmatprep.subr.mxu0 0.0
    %8493 = vmatpush1.msra.mxu0 0.0
    %8494 = vmatprep.subr.mxu0 0.0
    %8495 = vmatpush1.msra.mxu0 0.0
    %8496 = vmatprep.subr.mxu0 0.0
    %8497 = vmatpush1.msra.mxu0 0.0
    %8498 = vmatprep.subr.mxu0 0.0
    %8499 = vmatpush1.msra.mxu0 0.0
    %8500 = vmatprep.subr.mxu0 0.0
    %8501 = vmatpush1.msra.mxu0 0.0
    %8502 = vmatprep.subr.mxu0 0.0
    %8503 = vmatpush1.msra.mxu0 0.0
    %8504 = vmatprep.subr.mxu0 0.0
    %8505 = vmatpush1.msra.mxu0 0.0
    %8506 = vmatprep.subr.mxu0 0.0
    %8507 = vmatpush1.msra.mxu0 0.0
    %8508 = vmatprep.subr.mxu0 0.0
    %8509 = vmatpush1.msra.mxu0 0.0
    %8510 = vmatprep.subr.mxu0 0.0
    %8511 = vmatpush1.msra.mxu0 0.0
    %8512 = vmatprep.subr.mxu0 0.0
    %8513 = vmatpush1.msra.mxu0 0.0
    %8514 = vmatprep.subr.mxu0 0.0
    %8515 = vmatpush1.msra.mxu0 0.0
    %8516 = vmatprep.subr.mxu0 0.0
    %8517 = vmatpush1.msra.mxu0 0.0
    %8518 = vmatprep.subr.mxu0 0.0
    %8519 = vmatpush1.msra.mxu0 0.0
    %8520 = vmatprep.subr.mxu0 0.0
    %8521 = vmatpush1.msra.mxu0 0.0
    %8522 = vmatprep.subr.mxu0 0.0
    %8523 = vmatpush1.msra.mxu0 0.0
    %8524 = vmatprep.subr.mxu0 0.0
    %8525 = vmatpush1.msra.mxu0 0.0
    %8526 = vmatprep.subr.mxu0 0.0
    %8527 = vmatpush1.msra.mxu0 0.0
    %8528 = vmatprep.subr.mxu0 0.0
    %8529 = vmatpush1.msra.mxu0 0.0
    %8530 = vmatprep.subr.mxu0 0.0
    %8531 = vmatpush1.msra.mxu0 0.0
    %8532 = vmatprep.subr.mxu0 0.0
    %8533 = vmatpush1.msra.mxu0 0.0
    %8534 = vmatprep.subr.mxu0 0.0
    %8535 = vmatpush1.msra.mxu0 0.0
    %8536 = vmatprep.subr.mxu0 0.0
    %8537 = vmatpush1.msra.mxu0 0.0
    %8538 = vmatprep.subr.mxu0 0.0
    %8539 = vmatpush1.msra.mxu0 0.0
    %8540 = vmatprep.subr.mxu0 0.0
    %8541 = vmatpush1.msra.mxu0 0.0
    %8542 = vmatprep.mubr.f32.mxu0 0.0
    %8543 = vmatmul.mubr.f32.gmra.mrb[0].mxu0 %v5477
    %v8544 = vpop.f32.mrb[0].mxu0
    %v8545 = vadd.f32 0.0, %v8544
    %v8546 = vpop.f32.mrb[0].mxu0
    %8547 = vmatprep.mubr.f32.mxu0 0.0
    %8548 = vmatmul.mubr.f32.gmra.mrb[0].mxu0 %v5480
    %v8549 = vpop.f32.mrb[0].mxu0
    %v8550 = vadd.f32 0.0, %v8549
    %v8551 = vpop.f32.mrb[0].mxu0
    %8552 = vmatprep.mubr.f32.mxu0 0.0
    %8553 = vmatmul.mubr.f32.gmra.mrb[0].mxu0 %v5483
    %v8554 = vpop.f32.mrb[0].mxu0
    %v8555 = vadd.f32 0.0, %v8554
    %v8556 = vpop.f32.mrb[0].mxu0
    %8557 = vmatprep.mubr.f32.mxu0 0.0
    %8558 = vmatmul.mubr.f32.gmra.mrb[0].mxu0 %v5486
    %v8559 = vpop.f32.mrb[0].mxu0
    %v8560 = vadd.f32 0.0, %v8559
    %v8561 = vpop.f32.mrb[0].mxu0
    %8562 = vdwg.mxu0
    %s8563 = scalar_lea.vmem %s41, 64
    %v8564 = vld [vmem:[%s8563] sm:$0xff]
    %v8565 = vld [vmem:[%s8563 + $0x8] sm:$0xff]
    %v8566 = vld [vmem:[%s8563 + $0x10] sm:$0xff]
    %v8567 = vld [vmem:[%s8563 + $0x18] sm:$0xff]
    %8568 = vmatprep.subr.mxu0 0.0
    %8569 = vmatpush1.msra.mxu0 %v8564
    %8570 = vmatprep.subr.mxu0 0.0
    %8571 = vmatpush1.msra.mxu0 %v8565
    %8572 = vmatprep.subr.mxu0 0.0
    %8573 = vmatpush1.msra.mxu0 %v8566
    %8574 = vmatprep.subr.mxu0 0.0
    %8575 = vmatpush1.msra.mxu0 %v8567
    %8576 = vmatprep.subr.mxu0 0.0
    %8577 = vmatpush1.msra.mxu0 0.0
    %8578 = vmatprep.subr.mxu0 0.0
    %8579 = vmatpush1.msra.mxu0 0.0
    %8580 = vmatprep.subr.mxu0 0.0
    %8581 = vmatpush1.msra.mxu0 0.0
    %8582 = vmatprep.subr.mxu0 0.0
    %8583 = vmatpush1.msra.mxu0 0.0
    %8584 = vmatprep.subr.mxu0 0.0
    %8585 = vmatpush1.msra.mxu0 0.0
    %8586 = vmatprep.subr.mxu0 0.0
    %8587 = vmatpush1.msra.mxu0 0.0
    %8588 = vmatprep.subr.mxu0 0.0
    %8589 = vmatpush1.msra.mxu0 0.0
    %8590 = vmatprep.subr.mxu0 0.0
    %8591 = vmatpush1.msra.mxu0 0.0
    %8592 = vmatprep.subr.mxu0 0.0
    %8593 = vmatpush1.msra.mxu0 0.0
    %8594 = vmatprep.subr.mxu0 0.0
    %8595 = vmatpush1.msra.mxu0 0.0
    %8596 = vmatprep.subr.mxu0 0.0
    %8597 = vmatpush1.msra.mxu0 0.0
    %8598 = vmatprep.subr.mxu0 0.0
    %8599 = vmatpush1.msra.mxu0 0.0
    %8600 = vmatprep.subr.mxu0 0.0
    %8601 = vmatpush1.msra.mxu0 0.0
    %8602 = vmatprep.subr.mxu0 0.0
    %8603 = vmatpush1.msra.mxu0 0.0
    %8604 = vmatprep.subr.mxu0 0.0
    %8605 = vmatpush1.msra.mxu0 0.0
    %8606 = vmatprep.subr.mxu0 0.0
    %8607 = vmatpush1.msra.mxu0 0.0
    %8608 = vmatprep.subr.mxu0 0.0
    %8609 = vmatpush1.msra.mxu0 0.0
    %8610 = vmatprep.subr.mxu0 0.0
    %8611 = vmatpush1.msra.mxu0 0.0
    %8612 = vmatprep.subr.mxu0 0.0
    %8613 = vmatpush1.msra.mxu0 0.0
    %8614 = vmatprep.subr.mxu0 0.0
    %8615 = vmatpush1.msra.mxu0 0.0
    %8616 = vmatprep.subr.mxu0 0.0
    %8617 = vmatpush1.msra.mxu0 0.0
    %8618 = vmatprep.subr.mxu0 0.0
    %8619 = vmatpush1.msra.mxu0 0.0
    %8620 = vmatprep.subr.mxu0 0.0
    %8621 = vmatpush1.msra.mxu0 0.0
    %8622 = vmatprep.subr.mxu0 0.0
    %8623 = vmatpush1.msra.mxu0 0.0
    %8624 = vmatprep.subr.mxu0 0.0
    %8625 = vmatpush1.msra.mxu0 0.0
    %8626 = vmatprep.subr.mxu0 0.0
    %8627 = vmatpush1.msra.mxu0 0.0
    %8628 = vmatprep.subr.mxu0 0.0
    %8629 = vmatpush1.msra.mxu0 0.0
    %8630 = vmatprep.subr.mxu0 0.0
    %8631 = vmatpush1.msra.mxu0 0.0
    %8632 = vmatprep.mubr.f32.mxu0 0.0
    %8633 = vmatmul.mubr.f32.gmra.mrb[0].mxu0 %v5477
    %v8634 = vpop.f32.mrb[0].mxu0
    %v8635 = vadd.f32 0.0, %v8634
    %v8636 = vpop.f32.mrb[0].mxu0
    %8637 = vmatprep.mubr.f32.mxu0 0.0
    %8638 = vmatmul.mubr.f32.gmra.mrb[0].mxu0 %v5480
    %v8639 = vpop.f32.mrb[0].mxu0
    %v8640 = vadd.f32 0.0, %v8639
    %v8641 = vpop.f32.mrb[0].mxu0
    %8642 = vmatprep.mubr.f32.mxu0 0.0
    %8643 = vmatmul.mubr.f32.gmra.mrb[0].mxu0 %v5483
    %v8644 = vpop.f32.mrb[0].mxu0
    %v8645 = vadd.f32 0.0, %v8644
    %v8646 = vpop.f32.mrb[0].mxu0
    %8647 = vmatprep.mubr.f32.mxu0 0.0
    %8648 = vmatmul.mubr.f32.gmra.mrb[0].mxu0 %v5486
    %v8649 = vpop.f32.mrb[0].mxu0
    %v8650 = vadd.f32 0.0, %v8649
    %v8651 = vpop.f32.mrb[0].mxu0
    %8652 = vdwg.mxu0
    %v8654 = vsel %vm473, %v8465, 0
    %v8657 = vsel %vm473, %v8545, 0
    %v8660 = vsel %vm473, %v8550, 0
    %8662 = vmatprep.subr.mxu0 0.0
    %8663 = vmatpush1.xpose.msra.mxu0 %v8657
    %8664 = vmatprep.subr.mxu0 0.0
    %8665 = vmatpush1.xpose.msra.mxu0 %v8660
    %8666 = vmatprep.subr.mxu0 0.0
    %8667 = vmatpush1.xpose.msra.mxu0 0.0
    %8668 = vmatprep.subr.mxu0 0.0
    %8669 = vmatpush1.xpose.msra.mxu0 0.0
    %8670 = vmatprep.subr.mxu0 0.0
    %8671 = vmatpush1.xpose.msra.mxu0 0.0
    %8672 = vmatprep.subr.mxu0 0.0
    %8673 = vmatpush1.xpose.msra.mxu0 0.0
    %8674 = vmatprep.subr.mxu0 0.0
    %8675 = vmatpush1.xpose.msra.mxu0 0.0
    %8676 = vmatprep.subr.mxu0 0.0
    %8677 = vmatpush1.xpose.msra.mxu0 0.0
    %8678 = vmatprep.subr.mxu0 0.0
    %8679 = vmatpush1.xpose.msra.mxu0 0.0
    %8680 = vmatprep.subr.mxu0 0.0
    %8681 = vmatpush1.xpose.msra.mxu0 0.0
    %8682 = vmatprep.subr.mxu0 0.0
    %8683 = vmatpush1.xpose.msra.mxu0 0.0
    %8684 = vmatprep.subr.mxu0 0.0
    %8685 = vmatpush1.xpose.msra.mxu0 0.0
    %8686 = vmatprep.subr.mxu0 0.0
    %8687 = vmatpush1.xpose.msra.mxu0 0.0
    %8688 = vmatprep.subr.mxu0 0.0
    %8689 = vmatpush1.xpose.msra.mxu0 0.0
    %8690 = vmatprep.subr.mxu0 0.0
    %8691 = vmatpush1.xpose.msra.mxu0 0.0
    %8692 = vmatprep.subr.mxu0 0.0
    %8693 = vmatpush1.xpose.msra.mxu0 0.0
    %8694 = vmatprep.subr.mxu0 0.0
    %8695 = vmatpush1.xpose.msra.mxu0 0.0
    %8696 = vmatprep.subr.mxu0 0.0
    %8697 = vmatpush1.xpose.msra.mxu0 0.0
    %8698 = vmatprep.subr.mxu0 0.0
    %8699 = vmatpush1.xpose.msra.mxu0 0.0
    %8700 = vmatprep.subr.mxu0 0.0
    %8701 = vmatpush1.xpose.msra.mxu0 0.0
    %8702 = vmatprep.subr.mxu0 0.0
    %8703 = vmatpush1.xpose.msra.mxu0 0.0
    %8704 = vmatprep.subr.mxu0 0.0
    %8705 = vmatpush1.xpose.msra.mxu0 0.0
    %8706 = vmatprep.subr.mxu0 0.0
    %8707 = vmatpush1.xpose.msra.mxu0 0.0
    %8708 = vmatprep.subr.mxu0 0.0
    %8709 = vmatpush1.xpose.msra.mxu0 0.0
    %8710 = vmatprep.subr.mxu0 0.0
    %8711 = vmatpush1.xpose.msra.mxu0 0.0
    %8712 = vmatprep.subr.mxu0 0.0
    %8713 = vmatpush1.xpose.msra.mxu0 0.0
    %8714 = vmatprep.subr.mxu0 0.0
    %8715 = vmatpush1.xpose.msra.mxu0 0.0
    %8716 = vmatprep.subr.mxu0 0.0
    %8717 = vmatpush1.xpose.msra.mxu0 0.0
    %8718 = vmatprep.subr.mxu0 0.0
    %8719 = vmatpush1.xpose.msra.mxu0 0.0
    %8720 = vmatprep.subr.mxu0 0.0
    %8721 = vmatpush1.xpose.msra.mxu0 0.0
    %8722 = vmatprep.subr.mxu0 0.0
    %8723 = vmatpush1.xpose.msra.mxu0 0.0
    %8724 = vmatprep.subr.mxu0 0.0
    %8725 = vmatpush1.xpose.msra.mxu0 0.0
    %8726 = vmatprep.mubr.f32.mxu0 0.0
    %8727 = vmatmul.mubr.f32.gmra.mrb[0].mxu0 %v8654
    %v8728 = vpop.f32.mrb[0].mxu0
    %v8729 = vadd.f32 0.0, %v8728
    %v8730 = vpop.f32.mrb[0].mxu0
    %8731 = vdwg.mxu0
    %v8732 = vmul.f32 %v8729, 0.25
    %v8733 = vsel %vm473, %v8732, -inf
    %8734 = vmax.xlane.f32.xlu0 %v8733
    %v8735 = vpop.xlane.xlu0 %8734
    %v8736 = vsub.f32 %v8732, %v8735
    %v8737 = vmul.f32 %v8736, 1.442695
    %v8738 = vpow.pop %v8737
    %v8739 = vsel %vm473, %v8738, 0.0
    %8740 = vadd.xlane.f32.xlu0 %v8739
    %v8741 = vpop.xlane.xlu0 %8740
    %v8742 = vrcp.pop %v8741
    %v8743 = vmul.f32 %v8738, %v8742
    %v8745 = vsel %vm473, %v8743, 0
    %8747 = vmatprep.subr.mxu0 0.0
    %8748 = vmatpush1.msra.mxu0 %v8635
    %8749 = vmatprep.subr.mxu0 0.0
    %8750 = vmatpush1.msra.mxu0 %v8640
    %8751 = vmatprep.subr.mxu0 0.0
    %8752 = vmatpush1.msra.mxu0 0.0
    %8753 = vmatprep.subr.mxu0 0.0
    %8754 = vmatpush1.msra.mxu0 0.0
    %8755 = vmatprep.subr.mxu0 0.0
    %8756 = vmatpush1.msra.mxu0 0.0
    %8757 = vmatprep.subr.mxu0 0.0
    %8758 = vmatpush1.msra.mxu0 0.0
    %8759 = vmatprep.subr.mxu0 0.0
    %8760 = vmatpush1.msra.mxu0 0.0
    %8761 = vmatprep.subr.mxu0 0.0
    %8762 = vmatpush1.msra.mxu0 0.0
    %8763 = vmatprep.subr.mxu0 0.0
    %8764 = vmatpush1.msra.mxu0 0.0
    %8765 = vmatprep.subr.mxu0 0.0
    %8766 = vmatpush1.msra.mxu0 0.0
    %8767 = vmatprep.subr.mxu0 0.0
    %8768 = vmatpush1.msra.mxu0 0.0
    %8769 = vmatprep.subr.mxu0 0.0
    %8770 = vmatpush1.msra.mxu0 0.0
    %8771 = vmatprep.subr.mxu0 0.0
    %8772 = vmatpush1.msra.mxu0 0.0
    %8773 = vmatprep.subr.mxu0 0.0
    %8774 = vmatpush1.msra.mxu0 0.0
    %8775 = vmatprep.subr.mxu0 0.0
    %8776 = vmatpush1.msra.mxu0 0.0
    %8777 = vmatprep.subr.mxu0 0.0
    %8778 = vmatpush1.msra.mxu0 0.0
    %8779 = vmatprep.subr.mxu0 0.0
    %8780 = vmatpush1.msra.mxu0 0.0
    %8781 = vmatprep.subr.mxu0 0.0
    %8782 = vmatpush1.msra.mxu0 0.0
    %8783 = vmatprep.subr.mxu0 0.0
    %8784 = vmatpush1.msra.mxu0 0.0
    %8785 = vmatprep.subr.mxu0 0.0
    %8786 = vmatpush1.msra.mxu0 0.0
    %8787 = vmatprep.subr.mxu0 0.0
    %8788 = vmatpush1.msra.mxu0 0.0
    %8789 = vmatprep.subr.mxu0 0.0
    %8790 = vmatpush1.msra.mxu0 0.0
    %8791 = vmatprep.subr.mxu0 0.0
    %8792 = vmatpush1.msra.mxu0 0.0
    %8793 = vmatprep.subr.mxu0 0.0
    %8794 = vmatpush1.msra.mxu0 0.0
    %8795 = vmatprep.subr.mxu0 0.0
    %8796 = vmatpush1.msra.mxu0 0.0
    %8797 = vmatprep.subr.mxu0 0.0
    %8798 = vmatpush1.msra.mxu0 0.0
    %8799 = vmatprep.subr.mxu0 0.0
    %8800 = vmatpush1.msra.mxu0 0.0
    %8801 = vmatprep.subr.mxu0 0.0
    %8802 = vmatpush1.msra.mxu0 0.0
    %8803 = vmatprep.subr.mxu0 0.0
    %8804 = vmatpush1.msra.mxu0 0.0
    %8805 = vmatprep.subr.mxu0 0.0
    %8806 = vmatpush1.msra.mxu0 0.0
    %8807 = vmatprep.subr.mxu0 0.0
    %8808 = vmatpush1.msra.mxu0 0.0
    %8809 = vmatprep.subr.mxu0 0.0
    %8810 = vmatpush1.msra.mxu0 0.0
    %8811 = vmatprep.mubr.f32.mxu0 0.0
    %8812 = vmatmul.mubr.f32.gmra.mrb[0].mxu0 %v8745
    %v8813 = vpop.f32.mrb[0].mxu0
    %v8814 = vadd.f32 0.0, %v8813
    %v8815 = vpop.f32.mrb[0].mxu0
    %8816 = vdwg.mxu0
    %v8818 = vsel %vm473, %v8470, 0
    %v8821 = vsel %vm473, %v8555, 0
    %v8824 = vsel %vm473, %v8560, 0
    %8826 = vmatprep.subr.mxu0 0.0
    %8827 = vmatpush1.xpose.msra.mxu0 %v8821
    %8828 = vmatprep.subr.mxu0 0.0
    %8829 = vmatpush1.xpose.msra.mxu0 %v8824
    %8830 = vmatprep.subr.mxu0 0.0
    %8831 = vmatpush1.xpose.msra.mxu0 0.0
    %8832 = vmatprep.subr.mxu0 0.0
    %8833 = vmatpush1.xpose.msra.mxu0 0.0
    %8834 = vmatprep.subr.mxu0 0.0
    %8835 = vmatpush1.xpose.msra.mxu0 0.0
    %8836 = vmatprep.subr.mxu0 0.0
    %8837 = vmatpush1.xpose.msra.mxu0 0.0
    %8838 = vmatprep.subr.mxu0 0.0
    %8839 = vmatpush1.xpose.msra.mxu0 0.0
    %8840 = vmatprep.subr.mxu0 0.0
    %8841 = vmatpush1.xpose.msra.mxu0 0.0
    %8842 = vmatprep.subr.mxu0 0.0
    %8843 = vmatpush1.xpose.msra.mxu0 0.0
    %8844 = vmatprep.subr.mxu0 0.0
    %8845 = vmatpush1.xpose.msra.mxu0 0.0
    %8846 = vmatprep.subr.mxu0 0.0
    %8847 = vmatpush1.xpose.msra.mxu0 0.0
    %8848 = vmatprep.subr.mxu0 0.0
    %8849 = vmatpush1.xpose.msra.mxu0 0.0
    %8850 = vmatprep.subr.mxu0 0.0
    %8851 = vmatpush1.xpose.msra.mxu0 0.0
    %8852 = vmatprep.subr.mxu0 0.0
    %8853 = vmatpush1.xpose.msra.mxu0 0.0
    %8854 = vmatprep.subr.mxu0 0.0
    %8855 = vmatpush1.xpose.msra.mxu0 0.0
    %8856 = vmatprep.subr.mxu0 0.0
    %8857 = vmatpush1.xpose.msra.mxu0 0.0
    %8858 = vmatprep.subr.mxu0 0.0
    %8859 = vmatpush1.xpose.msra.mxu0 0.0
    %8860 = vmatprep.subr.mxu0 0.0
    %8861 = vmatpush1.xpose.msra.mxu0 0.0
    %8862 = vmatprep.subr.mxu0 0.0
    %8863 = vmatpush1.xpose.msra.mxu0 0.0
    %8864 = vmatprep.subr.mxu0 0.0
    %8865 = vmatpush1.xpose.msra.mxu0 0.0
    %8866 = vmatprep.subr.mxu0 0.0
    %8867 = vmatpush1.xpose.msra.mxu0 0.0
    %8868 = vmatprep.subr.mxu0 0.0
    %8869 = vmatpush1.xpose.msra.mxu0 0.0
    %8870 = vmatprep.subr.mxu0 0.0
    %8871 = vmatpush1.xpose.msra.mxu0 0.0
    %8872 = vmatprep.subr.mxu0 0.0
    %8873 = vmatpush1.xpose.msra.mxu0 0.0
    %8874 = vmatprep.subr.mxu0 0.0
    %8875 = vmatpush1.xpose.msra.mxu0 0.0
    %8876 = vmatprep.subr.mxu0 0.0
    %8877 = vmatpush1.xpose.msra.mxu0 0.0
    %8878 = vmatprep.subr.mxu0 0.0
    %8879 = vmatpush1.xpose.msra.mxu0 0.0
    %8880 = vmatprep.subr.mxu0 0.0
    %8881 = vmatpush1.xpose.msra.mxu0 0.0
    %8882 = vmatprep.subr.mxu0 0.0
    %8883 = vmatpush1.xpose.msra.mxu0 0.0
    %8884 = vmatprep.subr.mxu0 0.0
    %8885 = vmatpush1.xpose.msra.mxu0 0.0
    %8886 = vmatprep.subr.mxu0 0.0
    %8887 = vmatpush1.xpose.msra.mxu0 0.0
    %8888 = vmatprep.subr.mxu0 0.0
    %8889 = vmatpush1.xpose.msra.mxu0 0.0
    %8890 = vmatprep.mubr.f32.mxu0 0.0
    %8891 = vmatmul.mubr.f32.gmra.mrb[0].mxu0 %v8818
    %v8892 = vpop.f32.mrb[0].mxu0
    %v8893 = vadd.f32 0.0, %v8892
    %v8894 = vpop.f32.mrb[0].mxu0
    %8895 = vdwg.mxu0
    %v8896 = vmul.f32 %v8893, 0.25
    %v8897 = vsel %vm473, %v8896, -inf
    %8898 = vmax.xlane.f32.xlu0 %v8897
    %v8899 = vpop.xlane.xlu0 %8898
    %v8900 = vsub.f32 %v8896, %v8899
    %v8901 = vmul.f32 %v8900, 1.442695
    %v8902 = vpow.pop %v8901
    %v8903 = vsel %vm473, %v8902, 0.0
    %8904 = vadd.xlane.f32.xlu0 %v8903
    %v8905 = vpop.xlane.xlu0 %8904
    %v8906 = vrcp.pop %v8905
    %v8907 = vmul.f32 %v8902, %v8906
    %v8909 = vsel %vm473, %v8907, 0
    %8911 = vmatprep.subr.mxu0 0.0
    %8912 = vmatpush1.msra.mxu0 %v8645
    %8913 = vmatprep.subr.mxu0 0.0
    %8914 = vmatpush1.msra.mxu0 %v8650
    %8915 = vmatprep.subr.mxu0 0.0
    %8916 = vmatpush1.msra.mxu0 0.0
    %8917 = vmatprep.subr.mxu0 0.0
    %8918 = vmatpush1.msra.mxu0 0.0
    %8919 = vmatprep.subr.mxu0 0.0
    %8920 = vmatpush1.msra.mxu0 0.0
    %8921 = vmatprep.subr.mxu0 0.0
    %8922 = vmatpush1.msra.mxu0 0.0
    %8923 = vmatprep.subr.mxu0 0.0
    %8924 = vmatpush1.msra.mxu0 0.0
    %8925 = vmatprep.subr.mxu0 0.0
    %8926 = vmatpush1.msra.mxu0 0.0
    %8927 = vmatprep.subr.mxu0 0.0
    %8928 = vmatpush1.msra.mxu0 0.0
    %8929 = vmatprep.subr.mxu0 0.0
    %8930 = vmatpush1.msra.mxu0 0.0
    %8931 = vmatprep.subr.mxu0 0.0
    %8932 = vmatpush1.msra.mxu0 0.0
    %8933 = vmatprep.subr.mxu0 0.0
    %8934 = vmatpush1.msra.mxu0 0.0
    %8935 = vmatprep.subr.mxu0 0.0
    %8936 = vmatpush1.msra.mxu0 0.0
    %8937 = vmatprep.subr.mxu0 0.0
    %8938 = vmatpush1.msra.mxu0 0.0
    %8939 = vmatprep.subr.mxu0 0.0
    %8940 = vmatpush1.msra.mxu0 0.0
    %8941 = vmatprep.subr.mxu0 0.0
    %8942 = vmatpush1.msra.mxu0 0.0
    %8943 = vmatprep.subr.mxu0 0.0
    %8944 = vmatpush1.msra.mxu0 0.0
    %8945 = vmatprep.subr.mxu0 0.0
    %8946 = vmatpush1.msra.mxu0 0.0
    %8947 = vmatprep.subr.mxu0 0.0
    %8948 = vmatpush1.msra.mxu0 0.0
    %8949 = vmatprep.subr.mxu0 0.0
    %8950 = vmatpush1.msra.mxu0 0.0
    %8951 = vmatprep.subr.mxu0 0.0
    %8952 = vmatpush1.msra.mxu0 0.0
    %8953 = vmatprep.subr.mxu0 0.0
    %8954 = vmatpush1.msra.mxu0 0.0
    %8955 = vmatprep.subr.mxu0 0.0
    %8956 = vmatpush1.msra.mxu0 0.0
    %8957 = vmatprep.subr.mxu0 0.0
    %8958 = vmatpush1.msra.mxu0 0.0
    %8959 = vmatprep.subr.mxu0 0.0
    %8960 = vmatpush1.msra.mxu0 0.0
    %8961 = vmatprep.subr.mxu0 0.0
    %8962 = vmatpush1.msra.mxu0 0.0
    %8963 = vmatprep.subr.mxu0 0.0
    %8964 = vmatpush1.msra.mxu0 0.0
    %8965 = vmatprep.subr.mxu0 0.0
    %8966 = vmatpush1.msra.mxu0 0.0
    %8967 = vmatprep.subr.mxu0 0.0
    %8968 = vmatpush1.msra.mxu0 0.0
    %8969 = vmatprep.subr.mxu0 0.0
    %8970 = vmatpush1.msra.mxu0 0.0
    %8971 = vmatprep.subr.mxu0 0.0
    %8972 = vmatpush1.msra.mxu0 0.0
    %8973 = vmatprep.subr.mxu0 0.0
    %8974 = vmatpush1.msra.mxu0 0.0
    %8975 = vmatprep.mubr.f32.mxu0 0.0
    %8976 = vmatmul.mubr.f32.gmra.mrb[0].mxu0 %v8909
    %v8977 = vpop.f32.mrb[0].mxu0
    %v8978 = vadd.f32 0.0, %v8977
    %v8979 = vpop.f32.mrb[0].mxu0
    %8980 = vdwg.mxu0
    %s8981 = scalar_lea.vmem %s43, 64
    %v8982 = vld [vmem:[%s8981] sm:$0xff]
    %v8983 = vld [vmem:[%s8981 + $0x8] sm:$0xff]
    %v8984 = vld [vmem:[%s8981 + $0x10] sm:$0xff]
    %v8985 = vld [vmem:[%s8981 + $0x18] sm:$0xff]
    %s8986 = scalar_lea.vmem %s37, 96
    %v8987 = vld [vmem:[%s8986] sm:$0xff]
    %v8988 = vld [vmem:[%s8986 + $0x8] sm:$0xff]
    %v8989 = vld [vmem:[%s8986 + $0x10] sm:$0xff]
    %v8990 = vld [vmem:[%s8986 + $0x18] sm:$0xff]
    %8991 = vmatprep.subr.mxu0 0.0
    %8992 = vmatpush1.msra.mxu0 %v8987
    %8993 = vmatprep.subr.mxu0 0.0
    %8994 = vmatpush1.msra.mxu0 %v8988
    %8995 = vmatprep.subr.mxu0 0.0
    %8996 = vmatpush1.msra.mxu0 %v8989
    %8997 = vmatprep.subr.mxu0 0.0
    %8998 = vmatpush1.msra.mxu0 %v8990
    %8999 = vmatprep.subr.mxu0 0.0
    %9000 = vmatpush1.msra.mxu0 0.0
    %9001 = vmatprep.subr.mxu0 0.0
    %9002 = vmatpush1.msra.mxu0 0.0
    %9003 = vmatprep.subr.mxu0 0.0
    %9004 = vmatpush1.msra.mxu0 0.0
    %9005 = vmatprep.subr.mxu0 0.0
    %9006 = vmatpush1.msra.mxu0 0.0
    %9007 = vmatprep.subr.mxu0 0.0
    %9008 = vmatpush1.msra.mxu0 0.0
    %9009 = vmatprep.subr.mxu0 0.0
    %9010 = vmatpush1.msra.mxu0 0.0
    %9011 = vmatprep.subr.mxu0 0.0
    %9012 = vmatpush1.msra.mxu0 0.0
    %9013 = vmatprep.subr.mxu0 0.0
    %9014 = vmatpush1.msra.mxu0 0.0
    %9015 = vmatprep.subr.mxu0 0.0
    %9016 = vmatpush1.msra.mxu0 0.0
    %9017 = vmatprep.subr.mxu0 0.0
    %9018 = vmatpush1.msra.mxu0 0.0
    %9019 = vmatprep.subr.mxu0 0.0
    %9020 = vmatpush1.msra.mxu0 0.0
    %9021 = vmatprep.subr.mxu0 0.0
    %9022 = vmatpush1.msra.mxu0 0.0
    %9023 = vmatprep.subr.mxu0 0.0
    %9024 = vmatpush1.msra.mxu0 0.0
    %9025 = vmatprep.subr.mxu0 0.0
    %9026 = vmatpush1.msra.mxu0 0.0
    %9027 = vmatprep.subr.mxu0 0.0
    %9028 = vmatpush1.msra.mxu0 0.0
    %9029 = vmatprep.subr.mxu0 0.0
    %9030 = vmatpush1.msra.mxu0 0.0
    %9031 = vmatprep.subr.mxu0 0.0
    %9032 = vmatpush1.msra.mxu0 0.0
    %9033 = vmatprep.subr.mxu0 0.0
    %9034 = vmatpush1.msra.mxu0 0.0
    %9035 = vmatprep.subr.mxu0 0.0
    %9036 = vmatpush1.msra.mxu0 0.0
    %9037 = vmatprep.subr.mxu0 0.0
    %9038 = vmatpush1.msra.mxu0 0.0
    %9039 = vmatprep.subr.mxu0 0.0
    %9040 = vmatpush1.msra.mxu0 0.0
    %9041 = vmatprep.subr.mxu0 0.0
    %9042 = vmatpush1.msra.mxu0 0.0
    %9043 = vmatprep.subr.mxu0 0.0
    %9044 = vmatpush1.msra.mxu0 0.0
    %9045 = vmatprep.subr.mxu0 0.0
    %9046 = vmatpush1.msra.mxu0 0.0
    %9047 = vmatprep.subr.mxu0 0.0
    %9048 = vmatpush1.msra.mxu0 0.0
    %9049 = vmatprep.subr.mxu0 0.0
    %9050 = vmatpush1.msra.mxu0 0.0
    %9051 = vmatprep.subr.mxu0 0.0
    %9052 = vmatpush1.msra.mxu0 0.0
    %9053 = vmatprep.subr.mxu0 0.0
    %9054 = vmatpush1.msra.mxu0 0.0
    %9055 = vmatprep.mubr.f32.mxu0 0.0
    %9056 = vmatmul.mubr.f32.gmra.mrb[0].mxu0 %v8393
    %v9057 = vpop.f32.mrb[0].mxu0
    %v9058 = vadd.f32 0.0, %v9057
    %v9059 = vpop.f32.mrb[0].mxu0
    %9060 = vmatprep.mubr.f32.mxu0 0.0
    %9061 = vmatmul.mubr.f32.gmra.mrb[0].mxu0 %v8396
    %v9062 = vpop.f32.mrb[0].mxu0
    %v9063 = vadd.f32 0.0, %v9062
    %v9064 = vpop.f32.mrb[0].mxu0
    %9065 = vdwg.mxu0
    %s9066 = scalar_lea.vmem %s39, 96
    %v9067 = vld [vmem:[%s9066] sm:$0xff]
    %v9068 = vld [vmem:[%s9066 + $0x8] sm:$0xff]
    %v9069 = vld [vmem:[%s9066 + $0x10] sm:$0xff]
    %v9070 = vld [vmem:[%s9066 + $0x18] sm:$0xff]
    %9071 = vmatprep.subr.mxu0 0.0
    %9072 = vmatpush1.msra.mxu0 %v9067
    %9073 = vmatprep.subr.mxu0 0.0
    %9074 = vmatpush1.msra.mxu0 %v9068
    %9075 = vmatprep.subr.mxu0 0.0
    %9076 = vmatpush1.msra.mxu0 %v9069
    %9077 = vmatprep.subr.mxu0 0.0
    %9078 = vmatpush1.msra.mxu0 %v9070
    %9079 = vmatprep.subr.mxu0 0.0
    %9080 = vmatpush1.msra.mxu0 0.0
    %9081 = vmatprep.subr.mxu0 0.0
    %9082 = vmatpush1.msra.mxu0 0.0
    %9083 = vmatprep.subr.mxu0 0.0
    %9084 = vmatpush1.msra.mxu0 0.0
    %9085 = vmatprep.subr.mxu0 0.0
    %9086 = vmatpush1.msra.mxu0 0.0
    %9087 = vmatprep.subr.mxu0 0.0
    %9088 = vmatpush1.msra.mxu0 0.0
    %9089 = vmatprep.subr.mxu0 0.0
    %9090 = vmatpush1.msra.mxu0 0.0
    %9091 = vmatprep.subr.mxu0 0.0
    %9092 = vmatpush1.msra.mxu0 0.0
    %9093 = vmatprep.subr.mxu0 0.0
    %9094 = vmatpush1.msra.mxu0 0.0
    %9095 = vmatprep.subr.mxu0 0.0
    %9096 = vmatpush1.msra.mxu0 0.0
    %9097 = vmatprep.subr.mxu0 0.0
    %9098 = vmatpush1.msra.mxu0 0.0
    %9099 = vmatprep.subr.mxu0 0.0
    %9100 = vmatpush1.msra.mxu0 0.0
    %9101 = vmatprep.subr.mxu0 0.0
    %9102 = vmatpush1.msra.mxu0 0.0
    %9103 = vmatprep.subr.mxu0 0.0
    %9104 = vmatpush1.msra.mxu0 0.0
    %9105 = vmatprep.subr.mxu0 0.0
    %9106 = vmatpush1.msra.mxu0 0.0
    %9107 = vmatprep.subr.mxu0 0.0
    %9108 = vmatpush1.msra.mxu0 0.0
    %9109 = vmatprep.subr.mxu0 0.0
    %9110 = vmatpush1.msra.mxu0 0.0
    %9111 = vmatprep.subr.mxu0 0.0
    %9112 = vmatpush1.msra.mxu0 0.0
    %9113 = vmatprep.subr.mxu0 0.0
    %9114 = vmatpush1.msra.mxu0 0.0
    %9115 = vmatprep.subr.mxu0 0.0
    %9116 = vmatpush1.msra.mxu0 0.0
    %9117 = vmatprep.subr.mxu0 0.0
    %9118 = vmatpush1.msra.mxu0 0.0
    %9119 = vmatprep.subr.mxu0 0.0
    %9120 = vmatpush1.msra.mxu0 0.0
    %9121 = vmatprep.subr.mxu0 0.0
    %9122 = vmatpush1.msra.mxu0 0.0
    %9123 = vmatprep.subr.mxu0 0.0
    %9124 = vmatpush1.msra.mxu0 0.0
    %9125 = vmatprep.subr.mxu0 0.0
    %9126 = vmatpush1.msra.mxu0 0.0
    %9127 = vmatprep.subr.mxu0 0.0
    %9128 = vmatpush1.msra.mxu0 0.0
    %9129 = vmatprep.subr.mxu0 0.0
    %9130 = vmatpush1.msra.mxu0 0.0
    %9131 = vmatprep.subr.mxu0 0.0
    %9132 = vmatpush1.msra.mxu0 0.0
    %9133 = vmatprep.subr.mxu0 0.0
    %9134 = vmatpush1.msra.mxu0 0.0
    %9135 = vmatprep.mubr.f32.mxu0 0.0
    %9136 = vmatmul.mubr.f32.gmra.mrb[0].mxu0 %v5477
    %v9137 = vpop.f32.mrb[0].mxu0
    %v9138 = vadd.f32 0.0, %v9137
    %v9139 = vpop.f32.mrb[0].mxu0
    %9140 = vmatprep.mubr.f32.mxu0 0.0
    %9141 = vmatmul.mubr.f32.gmra.mrb[0].mxu0 %v5480
    %v9142 = vpop.f32.mrb[0].mxu0
    %v9143 = vadd.f32 0.0, %v9142
    %v9144 = vpop.f32.mrb[0].mxu0
    %9145 = vmatprep.mubr.f32.mxu0 0.0
    %9146 = vmatmul.mubr.f32.gmra.mrb[0].mxu0 %v5483
    %v9147 = vpop.f32.mrb[0].mxu0
    %v9148 = vadd.f32 0.0, %v9147
    %v9149 = vpop.f32.mrb[0].mxu0
    %9150 = vmatprep.mubr.f32.mxu0 0.0
    %9151 = vmatmul.mubr.f32.gmra.mrb[0].mxu0 %v5486
    %v9152 = vpop.f32.mrb[0].mxu0
    %v9153 = vadd.f32 0.0, %v9152
    %v9154 = vpop.f32.mrb[0].mxu0
    %9155 = vdwg.mxu0
    %s9156 = scalar_lea.vmem %s41, 96
    %v9157 = vld [vmem:[%s9156] sm:$0xff]
    %v9158 = vld [vmem:[%s9156 + $0x8] sm:$0xff]
    %v9159 = vld [vmem:[%s9156 + $0x10] sm:$0xff]
    %v9160 = vld [vmem:[%s9156 + $0x18] sm:$0xff]
    %9161 = vmatprep.subr.mxu0 0.0
    %9162 = vmatpush1.msra.mxu0 %v9157
    %9163 = vmatprep.subr.mxu0 0.0
    %9164 = vmatpush1.msra.mxu0 %v9158
    %9165 = vmatprep.subr.mxu0 0.0
    %9166 = vmatpush1.msra.mxu0 %v9159
    %9167 = vmatprep.subr.mxu0 0.0
    %9168 = vmatpush1.msra.mxu0 %v9160
    %9169 = vmatprep.subr.mxu0 0.0
    %9170 = vmatpush1.msra.mxu0 0.0
    %9171 = vmatprep.subr.mxu0 0.0
    %9172 = vmatpush1.msra.mxu0 0.0
    %9173 = vmatprep.subr.mxu0 0.0
    %9174 = vmatpush1.msra.mxu0 0.0
    %9175 = vmatprep.subr.mxu0 0.0
    %9176 = vmatpush1.msra.mxu0 0.0
    %9177 = vmatprep.subr.mxu0 0.0
    %9178 = vmatpush1.msra.mxu0 0.0
    %9179 = vmatprep.subr.mxu0 0.0
    %9180 = vmatpush1.msra.mxu0 0.0
    %9181 = vmatprep.subr.mxu0 0.0
    %9182 = vmatpush1.msra.mxu0 0.0
    %9183 = vmatprep.subr.mxu0 0.0
    %9184 = vmatpush1.msra.mxu0 0.0
    %9185 = vmatprep.subr.mxu0 0.0
    %9186 = vmatpush1.msra.mxu0 0.0
    %9187 = vmatprep.subr.mxu0 0.0
    %9188 = vmatpush1.msra.mxu0 0.0
    %9189 = vmatprep.subr.mxu0 0.0
    %9190 = vmatpush1.msra.mxu0 0.0
    %9191 = vmatprep.subr.mxu0 0.0
    %9192 = vmatpush1.msra.mxu0 0.0
    %9193 = vmatprep.subr.mxu0 0.0
    %9194 = vmatpush1.msra.mxu0 0.0
    %9195 = vmatprep.subr.mxu0 0.0
    %9196 = vmatpush1.msra.mxu0 0.0
    %9197 = vmatprep.subr.mxu0 0.0
    %9198 = vmatpush1.msra.mxu0 0.0
    %9199 = vmatprep.subr.mxu0 0.0
    %9200 = vmatpush1.msra.mxu0 0.0
    %9201 = vmatprep.subr.mxu0 0.0
    %9202 = vmatpush1.msra.mxu0 0.0
    %9203 = vmatprep.subr.mxu0 0.0
    %9204 = vmatpush1.msra.mxu0 0.0
    %9205 = vmatprep.subr.mxu0 0.0
    %9206 = vmatpush1.msra.mxu0 0.0
    %9207 = vmatprep.subr.mxu0 0.0
    %9208 = vmatpush1.msra.mxu0 0.0
    %9209 = vmatprep.subr.mxu0 0.0
    %9210 = vmatpush1.msra.mxu0 0.0
    %9211 = vmatprep.subr.mxu0 0.0
    %9212 = vmatpush1.msra.mxu0 0.0
    %9213 = vmatprep.subr.mxu0 0.0
    %9214 = vmatpush1.msra.mxu0 0.0
    %9215 = vmatprep.subr.mxu0 0.0
    %9216 = vmatpush1.msra.mxu0 0.0
    %9217 = vmatprep.subr.mxu0 0.0
    %9218 = vmatpush1.msra.mxu0 0.0
    %9219 = vmatprep.subr.mxu0 0.0
    %9220 = vmatpush1.msra.mxu0 0.0
    %9221 = vmatprep.subr.mxu0 0.0
    %9222 = vmatpush1.msra.mxu0 0.0
    %9223 = vmatprep.subr.mxu0 0.0
    %9224 = vmatpush1.msra.mxu0 0.0
    %9225 = vmatprep.mubr.f32.mxu0 0.0
    %9226 = vmatmul.mubr.f32.gmra.mrb[0].mxu0 %v5477
    %v9227 = vpop.f32.mrb[0].mxu0
    %v9228 = vadd.f32 0.0, %v9227
    %v9229 = vpop.f32.mrb[0].mxu0
    %9230 = vmatprep.mubr.f32.mxu0 0.0
    %9231 = vmatmul.mubr.f32.gmra.mrb[0].mxu0 %v5480
    %v9232 = vpop.f32.mrb[0].mxu0
    %v9233 = vadd.f32 0.0, %v9232
    %v9234 = vpop.f32.mrb[0].mxu0
    %9235 = vmatprep.mubr.f32.mxu0 0.0
    %9236 = vmatmul.mubr.f32.gmra.mrb[0].mxu0 %v5483
    %v9237 = vpop.f32.mrb[0].mxu0
    %v9238 = vadd.f32 0.0, %v9237
    %v9239 = vpop.f32.mrb[0].mxu0
    %9240 = vmatprep.mubr.f32.mxu0 0.0
    %9241 = vmatmul.mubr.f32.gmra.mrb[0].mxu0 %v5486
    %v9242 = vpop.f32.mrb[0].mxu0
    %v9243 = vadd.f32 0.0, %v9242
    %v9244 = vpop.f32.mrb[0].mxu0
    %9245 = vdwg.mxu0
    %v9247 = vsel %vm473, %v9058, 0
    %v9250 = vsel %vm473, %v9138, 0
    %v9253 = vsel %vm473, %v9143, 0
    %9255 = vmatprep.subr.mxu0 0.0
    %9256 = vmatpush1.xpose.msra.mxu0 %v9250
    %9257 = vmatprep.subr.mxu0 0.0
    %9258 = vmatpush1.xpose.msra.mxu0 %v9253
    %9259 = vmatprep.subr.mxu0 0.0
    %9260 = vmatpush1.xpose.msra.mxu0 0.0
    %9261 = vmatprep.subr.mxu0 0.0
    %9262 = vmatpush1.xpose.msra.mxu0 0.0
    %9263 = vmatprep.subr.mxu0 0.0
    %9264 = vmatpush1.xpose.msra.mxu0 0.0
    %9265 = vmatprep.subr.mxu0 0.0
    %9266 = vmatpush1.xpose.msra.mxu0 0.0
    %9267 = vmatprep.subr.mxu0 0.0
    %9268 = vmatpush1.xpose.msra.mxu0 0.0
    %9269 = vmatprep.subr.mxu0 0.0
    %9270 = vmatpush1.xpose.msra.mxu0 0.0
    %9271 = vmatprep.subr.mxu0 0.0
    %9272 = vmatpush1.xpose.msra.mxu0 0.0
    %9273 = vmatprep.subr.mxu0 0.0
    %9274 = vmatpush1.xpose.msra.mxu0 0.0
    %9275 = vmatprep.subr.mxu0 0.0
    %9276 = vmatpush1.xpose.msra.mxu0 0.0
    %9277 = vmatprep.subr.mxu0 0.0
    %9278 = vmatpush1.xpose.msra.mxu0 0.0
    %9279 = vmatprep.subr.mxu0 0.0
    %9280 = vmatpush1.xpose.msra.mxu0 0.0
    %9281 = vmatprep.subr.mxu0 0.0
    %9282 = vmatpush1.xpose.msra.mxu0 0.0
    %9283 = vmatprep.subr.mxu0 0.0
    %9284 = vmatpush1.xpose.msra.mxu0 0.0
    %9285 = vmatprep.subr.mxu0 0.0
    %9286 = vmatpush1.xpose.msra.mxu0 0.0
    %9287 = vmatprep.subr.mxu0 0.0
    %9288 = vmatpush1.xpose.msra.mxu0 0.0
    %9289 = vmatprep.subr.mxu0 0.0
    %9290 = vmatpush1.xpose.msra.mxu0 0.0
    %9291 = vmatprep.subr.mxu0 0.0
    %9292 = vmatpush1.xpose.msra.mxu0 0.0
    %9293 = vmatprep.subr.mxu0 0.0
    %9294 = vmatpush1.xpose.msra.mxu0 0.0
    %9295 = vmatprep.subr.mxu0 0.0
    %9296 = vmatpush1.xpose.msra.mxu0 0.0
    %9297 = vmatprep.subr.mxu0 0.0
    %9298 = vmatpush1.xpose.msra.mxu0 0.0
    %9299 = vmatprep.subr.mxu0 0.0
    %9300 = vmatpush1.xpose.msra.mxu0 0.0
    %9301 = vmatprep.subr.mxu0 0.0
    %9302 = vmatpush1.xpose.msra.mxu0 0.0
    %9303 = vmatprep.subr.mxu0 0.0
    %9304 = vmatpush1.xpose.msra.mxu0 0.0
    %9305 = vmatprep.subr.mxu0 0.0
    %9306 = vmatpush1.xpose.msra.mxu0 0.0
    %9307 = vmatprep.subr.mxu0 0.0
    %9308 = vmatpush1.xpose.msra.mxu0 0.0
    %9309 = vmatprep.subr.mxu0 0.0
    %9310 = vmatpush1.xpose.msra.mxu0 0.0
    %9311 = vmatprep.subr.mxu0 0.0
    %9312 = vmatpush1.xpose.msra.mxu0 0.0
    %9313 = vmatprep.subr.mxu0 0.0
    %9314 = vmatpush1.xpose.msra.mxu0 0.0
    %9315 = vmatprep.subr.mxu0 0.0
    %9316 = vmatpush1.xpose.msra.mxu0 0.0
    %9317 = vmatprep.subr.mxu0 0.0
    %9318 = vmatpush1.xpose.msra.mxu0 0.0
    %9319 = vmatprep.mubr.f32.mxu0 0.0
    %9320 = vmatmul.mubr.f32.gmra.mrb[0].mxu0 %v9247
    %v9321 = vpop.f32.mrb[0].mxu0
    %v9322 = vadd.f32 0.0, %v9321
    %v9323 = vpop.f32.mrb[0].mxu0
    %9324 = vdwg.mxu0
    %v9325 = vmul.f32 %v9322, 0.25
    %v9326 = vsel %vm473, %v9325, -inf
    %9327 = vmax.xlane.f32.xlu0 %v9326
    %v9328 = vpop.xlane.xlu0 %9327
    %v9329 = vsub.f32 %v9325, %v9328
    %v9330 = vmul.f32 %v9329, 1.442695
    %v9331 = vpow.pop %v9330
    %v9332 = vsel %vm473, %v9331, 0.0
    %9333 = vadd.xlane.f32.xlu0 %v9332
    %v9334 = vpop.xlane.xlu0 %9333
    %v9335 = vrcp.pop %v9334
    %v9336 = vmul.f32 %v9331, %v9335
    %v9338 = vsel %vm473, %v9336, 0
    %9340 = vmatprep.subr.mxu0 0.0
    %9341 = vmatpush1.msra.mxu0 %v9228
    %9342 = vmatprep.subr.mxu0 0.0
    %9343 = vmatpush1.msra.mxu0 %v9233
    %9344 = vmatprep.subr.mxu0 0.0
    %9345 = vmatpush1.msra.mxu0 0.0
    %9346 = vmatprep.subr.mxu0 0.0
    %9347 = vmatpush1.msra.mxu0 0.0
    %9348 = vmatprep.subr.mxu0 0.0
    %9349 = vmatpush1.msra.mxu0 0.0
    %9350 = vmatprep.subr.mxu0 0.0
    %9351 = vmatpush1.msra.mxu0 0.0
    %9352 = vmatprep.subr.mxu0 0.0
    %9353 = vmatpush1.msra.mxu0 0.0
    %9354 = vmatprep.subr.mxu0 0.0
    %9355 = vmatpush1.msra.mxu0 0.0
    %9356 = vmatprep.subr.mxu0 0.0
    %9357 = vmatpush1.msra.mxu0 0.0
    %9358 = vmatprep.subr.mxu0 0.0
    %9359 = vmatpush1.msra.mxu0 0.0
    %9360 = vmatprep.subr.mxu0 0.0
    %9361 = vmatpush1.msra.mxu0 0.0
    %9362 = vmatprep.subr.mxu0 0.0
    %9363 = vmatpush1.msra.mxu0 0.0
    %9364 = vmatprep.subr.mxu0 0.0
    %9365 = vmatpush1.msra.mxu0 0.0
    %9366 = vmatprep.subr.mxu0 0.0
    %9367 = vmatpush1.msra.mxu0 0.0
    %9368 = vmatprep.subr.mxu0 0.0
    %9369 = vmatpush1.msra.mxu0 0.0
    %9370 = vmatprep.subr.mxu0 0.0
    %9371 = vmatpush1.msra.mxu0 0.0
    %9372 = vmatprep.subr.mxu0 0.0
    %9373 = vmatpush1.msra.mxu0 0.0
    %9374 = vmatprep.subr.mxu0 0.0
    %9375 = vmatpush1.msra.mxu0 0.0
    %9376 = vmatprep.subr.mxu0 0.0
    %9377 = vmatpush1.msra.mxu0 0.0
    %9378 = vmatprep.subr.mxu0 0.0
    %9379 = vmatpush1.msra.mxu0 0.0
    %9380 = vmatprep.subr.mxu0 0.0
    %9381 = vmatpush1.msra.mxu0 0.0
    %9382 = vmatprep.subr.mxu0 0.0
    %9383 = vmatpush1.msra.mxu0 0.0
    %9384 = vmatprep.subr.mxu0 0.0
    %9385 = vmatpush1.msra.mxu0 0.0
    %9386 = vmatprep.subr.mxu0 0.0
    %9387 = vmatpush1.msra.mxu0 0.0
    %9388 = vmatprep.subr.mxu0 0.0
    %9389 = vmatpush1.msra.mxu0 0.0
    %9390 = vmatprep.subr.mxu0 0.0
    %9391 = vmatpush1.msra.mxu0 0.0
    %9392 = vmatprep.subr.mxu0 0.0
    %9393 = vmatpush1.msra.mxu0 0.0
    %9394 = vmatprep.subr.mxu0 0.0
    %9395 = vmatpush1.msra.mxu0 0.0
    %9396 = vmatprep.subr.mxu0 0.0
    %9397 = vmatpush1.msra.mxu0 0.0
    %9398 = vmatprep.subr.mxu0 0.0
    %9399 = vmatpush1.msra.mxu0 0.0
    %9400 = vmatprep.subr.mxu0 0.0
    %9401 = vmatpush1.msra.mxu0 0.0
    %9402 = vmatprep.subr.mxu0 0.0
    %9403 = vmatpush1.msra.mxu0 0.0
    %9404 = vmatprep.mubr.f32.mxu0 0.0
    %9405 = vmatmul.mubr.f32.gmra.mrb[0].mxu0 %v9338
    %v9406 = vpop.f32.mrb[0].mxu0
    %v9407 = vadd.f32 0.0, %v9406
    %v9408 = vpop.f32.mrb[0].mxu0
    %9409 = vdwg.mxu0
    %v9411 = vsel %vm473, %v9063, 0
    %v9414 = vsel %vm473, %v9148, 0
    %v9417 = vsel %vm473, %v9153, 0
    %9419 = vmatprep.subr.mxu0 0.0
    %9420 = vmatpush1.xpose.msra.mxu0 %v9414
    %9421 = vmatprep.subr.mxu0 0.0
    %9422 = vmatpush1.xpose.msra.mxu0 %v9417
    %9423 = vmatprep.subr.mxu0 0.0
    %9424 = vmatpush1.xpose.msra.mxu0 0.0
    %9425 = vmatprep.subr.mxu0 0.0
    %9426 = vmatpush1.xpose.msra.mxu0 0.0
    %9427 = vmatprep.subr.mxu0 0.0
    %9428 = vmatpush1.xpose.msra.mxu0 0.0
    %9429 = vmatprep.subr.mxu0 0.0
    %9430 = vmatpush1.xpose.msra.mxu0 0.0
    %9431 = vmatprep.subr.mxu0 0.0
    %9432 = vmatpush1.xpose.msra.mxu0 0.0
    %9433 = vmatprep.subr.mxu0 0.0
    %9434 = vmatpush1.xpose.msra.mxu0 0.0
    %9435 = vmatprep.subr.mxu0 0.0
    %9436 = vmatpush1.xpose.msra.mxu0 0.0
    %9437 = vmatprep.subr.mxu0 0.0
    %9438 = vmatpush1.xpose.msra.mxu0 0.0
    %9439 = vmatprep.subr.mxu0 0.0
    %9440 = vmatpush1.xpose.msra.mxu0 0.0
    %9441 = vmatprep.subr.mxu0 0.0
    %9442 = vmatpush1.xpose.msra.mxu0 0.0
    %9443 = vmatprep.subr.mxu0 0.0
    %9444 = vmatpush1.xpose.msra.mxu0 0.0
    %9445 = vmatprep.subr.mxu0 0.0
    %9446 = vmatpush1.xpose.msra.mxu0 0.0
    %9447 = vmatprep.subr.mxu0 0.0
    %9448 = vmatpush1.xpose.msra.mxu0 0.0
    %9449 = vmatprep.subr.mxu0 0.0
    %9450 = vmatpush1.xpose.msra.mxu0 0.0
    %9451 = vmatprep.subr.mxu0 0.0
    %9452 = vmatpush1.xpose.msra.mxu0 0.0
    %9453 = vmatprep.subr.mxu0 0.0
    %9454 = vmatpush1.xpose.msra.mxu0 0.0
    %9455 = vmatprep.subr.mxu0 0.0
    %9456 = vmatpush1.xpose.msra.mxu0 0.0
    %9457 = vmatprep.subr.mxu0 0.0
    %9458 = vmatpush1.xpose.msra.mxu0 0.0
    %9459 = vmatprep.subr.mxu0 0.0
    %9460 = vmatpush1.xpose.msra.mxu0 0.0
    %9461 = vmatprep.subr.mxu0 0.0
    %9462 = vmatpush1.xpose.msra.mxu0 0.0
    %9463 = vmatprep.subr.mxu0 0.0
    %9464 = vmatpush1.xpose.msra.mxu0 0.0
    %9465 = vmatprep.subr.mxu0 0.0
    %9466 = vmatpush1.xpose.msra.mxu0 0.0
    %9467 = vmatprep.subr.mxu0 0.0
    %9468 = vmatpush1.xpose.msra.mxu0 0.0
    %9469 = vmatprep.subr.mxu0 0.0
    %9470 = vmatpush1.xpose.msra.mxu0 0.0
    %9471 = vmatprep.subr.mxu0 0.0
    %9472 = vmatpush1.xpose.msra.mxu0 0.0
    %9473 = vmatprep.subr.mxu0 0.0
    %9474 = vmatpush1.xpose.msra.mxu0 0.0
    %9475 = vmatprep.subr.mxu0 0.0
    %9476 = vmatpush1.xpose.msra.mxu0 0.0
    %9477 = vmatprep.subr.mxu0 0.0
    %9478 = vmatpush1.xpose.msra.mxu0 0.0
    %9479 = vmatprep.subr.mxu0 0.0
    %9480 = vmatpush1.xpose.msra.mxu0 0.0
    %9481 = vmatprep.subr.mxu0 0.0
    %9482 = vmatpush1.xpose.msra.mxu0 0.0
    %9483 = vmatprep.mubr.f32.mxu0 0.0
    %9484 = vmatmul.mubr.f32.gmra.mrb[0].mxu0 %v9411
    %v9485 = vpop.f32.mrb[0].mxu0
    %v9486 = vadd.f32 0.0, %v9485
    %v9487 = vpop.f32.mrb[0].mxu0
    %9488 = vdwg.mxu0
    %v9489 = vmul.f32 %v9486, 0.25
    %v9490 = vsel %vm473, %v9489, -inf
    %9491 = vmax.xlane.f32.xlu0 %v9490
    %v9492 = vpop.xlane.xlu0 %9491
    %v9493 = vsub.f32 %v9489, %v9492
    %v9494 = vmul.f32 %v9493, 1.442695
    %v9495 = vpow.pop %v9494
    %v9496 = vsel %vm473, %v9495, 0.0
    %9497 = vadd.xlane.f32.xlu0 %v9496
    %v9498 = vpop.xlane.xlu0 %9497
    %v9499 = vrcp.pop %v9498
    %v9500 = vmul.f32 %v9495, %v9499
    %v9502 = vsel %vm473, %v9500, 0
    %9504 = vmatprep.subr.mxu0 0.0
    %9505 = vmatpush1.msra.mxu0 %v9238
    %9506 = vmatprep.subr.mxu0 0.0
    %9507 = vmatpush1.msra.mxu0 %v9243
    %9508 = vmatprep.subr.mxu0 0.0
    %9509 = vmatpush1.msra.mxu0 0.0
    %9510 = vmatprep.subr.mxu0 0.0
    %9511 = vmatpush1.msra.mxu0 0.0
    %9512 = vmatprep.subr.mxu0 0.0
    %9513 = vmatpush1.msra.mxu0 0.0
    %9514 = vmatprep.subr.mxu0 0.0
    %9515 = vmatpush1.msra.mxu0 0.0
    %9516 = vmatprep.subr.mxu0 0.0
    %9517 = vmatpush1.msra.mxu0 0.0
    %9518 = vmatprep.subr.mxu0 0.0
    %9519 = vmatpush1.msra.mxu0 0.0
    %9520 = vmatprep.subr.mxu0 0.0
    %9521 = vmatpush1.msra.mxu0 0.0
    %9522 = vmatprep.subr.mxu0 0.0
    %9523 = vmatpush1.msra.mxu0 0.0
    %9524 = vmatprep.subr.mxu0 0.0
    %9525 = vmatpush1.msra.mxu0 0.0
    %9526 = vmatprep.subr.mxu0 0.0
    %9527 = vmatpush1.msra.mxu0 0.0
    %9528 = vmatprep.subr.mxu0 0.0
    %9529 = vmatpush1.msra.mxu0 0.0
    %9530 = vmatprep.subr.mxu0 0.0
    %9531 = vmatpush1.msra.mxu0 0.0
    %9532 = vmatprep.subr.mxu0 0.0
    %9533 = vmatpush1.msra.mxu0 0.0
    %9534 = vmatprep.subr.mxu0 0.0
    %9535 = vmatpush1.msra.mxu0 0.0
    %9536 = vmatprep.subr.mxu0 0.0
    %9537 = vmatpush1.msra.mxu0 0.0
    %9538 = vmatprep.subr.mxu0 0.0
    %9539 = vmatpush1.msra.mxu0 0.0
    %9540 = vmatprep.subr.mxu0 0.0
    %9541 = vmatpush1.msra.mxu0 0.0
    %9542 = vmatprep.subr.mxu0 0.0
    %9543 = vmatpush1.msra.mxu0 0.0
    %9544 = vmatprep.subr.mxu0 0.0
    %9545 = vmatpush1.msra.mxu0 0.0
    %9546 = vmatprep.subr.mxu0 0.0
    %9547 = vmatpush1.msra.mxu0 0.0
    %9548 = vmatprep.subr.mxu0 0.0
    %9549 = vmatpush1.msra.mxu0 0.0
    %9550 = vmatprep.subr.mxu0 0.0
    %9551 = vmatpush1.msra.mxu0 0.0
    %9552 = vmatprep.subr.mxu0 0.0
    %9553 = vmatpush1.msra.mxu0 0.0
    %9554 = vmatprep.subr.mxu0 0.0
    %9555 = vmatpush1.msra.mxu0 0.0
    %9556 = vmatprep.subr.mxu0 0.0
    %9557 = vmatpush1.msra.mxu0 0.0
    %9558 = vmatprep.subr.mxu0 0.0
    %9559 = vmatpush1.msra.mxu0 0.0
    %9560 = vmatprep.subr.mxu0 0.0
    %9561 = vmatpush1.msra.mxu0 0.0
    %9562 = vmatprep.subr.mxu0 0.0
    %9563 = vmatpush1.msra.mxu0 0.0
    %9564 = vmatprep.subr.mxu0 0.0
    %9565 = vmatpush1.msra.mxu0 0.0
    %9566 = vmatprep.subr.mxu0 0.0
    %9567 = vmatpush1.msra.mxu0 0.0
    %9568 = vmatprep.mubr.f32.mxu0 0.0
    %9569 = vmatmul.mubr.f32.gmra.mrb[0].mxu0 %v9502
    %v9570 = vpop.f32.mrb[0].mxu0
    %v9571 = vadd.f32 0.0, %v9570
    %v9572 = vpop.f32.mrb[0].mxu0
    %9573 = vdwg.mxu0
    %s9574 = scalar_lea.vmem %s43, 96
    %v9575 = vld [vmem:[%s9574] sm:$0xff]
    %v9576 = vld [vmem:[%s9574 + $0x8] sm:$0xff]
    %v9577 = vld [vmem:[%s9574 + $0x10] sm:$0xff]
    %v9578 = vld [vmem:[%s9574 + $0x18] sm:$0xff]
    %v9580 = vsel %vm197, %v9407, 0
    %v9583 = vsel %vm197, %v9571, 0
    %9585 = vmatprep.subr.mxu0 0.0
    %9586 = vmatpush1.msra.mxu0 %v9575
    %9587 = vmatprep.subr.mxu0 0.0
    %9588 = vmatpush1.msra.mxu0 %v9576
    %9589 = vmatprep.subr.mxu0 0.0
    %9590 = vmatpush1.msra.mxu0 %v9577
    %9591 = vmatprep.subr.mxu0 0.0
    %9592 = vmatpush1.msra.mxu0 %v9578
    %9593 = vmatprep.subr.mxu0 0.0
    %9594 = vmatpush1.msra.mxu0 0.0
    %9595 = vmatprep.subr.mxu0 0.0
    %9596 = vmatpush1.msra.mxu0 0.0
    %9597 = vmatprep.subr.mxu0 0.0
    %9598 = vmatpush1.msra.mxu0 0.0
    %9599 = vmatprep.subr.mxu0 0.0
    %9600 = vmatpush1.msra.mxu0 0.0
    %9601 = vmatprep.subr.mxu0 0.0
    %9602 = vmatpush1.msra.mxu0 0.0
    %9603 = vmatprep.subr.mxu0 0.0
    %9604 = vmatpush1.msra.mxu0 0.0
    %9605 = vmatprep.subr.mxu0 0.0
    %9606 = vmatpush1.msra.mxu0 0.0
    %9607 = vmatprep.subr.mxu0 0.0
    %9608 = vmatpush1.msra.mxu0 0.0
    %9609 = vmatprep.subr.mxu0 0.0
    %9610 = vmatpush1.msra.mxu0 0.0
    %9611 = vmatprep.subr.mxu0 0.0
    %9612 = vmatpush1.msra.mxu0 0.0
    %9613 = vmatprep.subr.mxu0 0.0
    %9614 = vmatpush1.msra.mxu0 0.0
    %9615 = vmatprep.subr.mxu0 0.0
    %9616 = vmatpush1.msra.mxu0 0.0
    %9617 = vmatprep.subr.mxu0 0.0
    %9618 = vmatpush1.msra.mxu0 0.0
    %9619 = vmatprep.subr.mxu0 0.0
    %9620 = vmatpush1.msra.mxu0 0.0
    %9621 = vmatprep.subr.mxu0 0.0
    %9622 = vmatpush1.msra.mxu0 0.0
    %9623 = vmatprep.subr.mxu0 0.0
    %9624 = vmatpush1.msra.mxu0 0.0
    %9625 = vmatprep.subr.mxu0 0.0
    %9626 = vmatpush1.msra.mxu0 0.0
    %9627 = vmatprep.subr.mxu0 0.0
    %9628 = vmatpush1.msra.mxu0 0.0
    %9629 = vmatprep.subr.mxu0 0.0
    %9630 = vmatpush1.msra.mxu0 0.0
    %9631 = vmatprep.subr.mxu0 0.0
    %9632 = vmatpush1.msra.mxu0 0.0
    %9633 = vmatprep.subr.mxu0 0.0
    %9634 = vmatpush1.msra.mxu0 0.0
    %9635 = vmatprep.subr.mxu0 0.0
    %9636 = vmatpush1.msra.mxu0 0.0
    %9637 = vmatprep.subr.mxu0 0.0
    %9638 = vmatpush1.msra.mxu0 0.0
    %9639 = vmatprep.subr.mxu0 0.0
    %9640 = vmatpush1.msra.mxu0 0.0
    %9641 = vmatprep.subr.mxu0 0.0
    %9642 = vmatpush1.msra.mxu0 0.0
    %9643 = vmatprep.subr.mxu0 0.0
    %9644 = vmatpush1.msra.mxu0 0.0
    %9645 = vmatprep.subr.mxu0 0.0
    %9646 = vmatpush1.msra.mxu0 0.0
    %9647 = vmatprep.subr.mxu0 0.0
    %9648 = vmatpush1.msra.mxu0 0.0
    %9649 = vmatprep.mubr.f32.mxu0 0.0
    %9650 = vmatmul.mubr.f32.gmra.mrb[0].mxu0 %v9580
    %v9651 = vpop.f32.mrb[0].mxu0
    %v9652 = vadd.f32 0.0, %v9651
    %v9653 = vpop.f32.mrb[0].mxu0
    %9654 = vmatprep.mubr.f32.mxu0 0.0
    %9655 = vmatmul.mubr.f32.gmra.mrb[0].mxu0 %v9583
    %v9656 = vpop.f32.mrb[0].mxu0
    %v9657 = vadd.f32 0.0, %v9656
    %v9658 = vpop.f32.mrb[0].mxu0
    %9659 = vdwg.mxu0
    %v9661 = vsel %vm197, %v8814, 0
    %v9664 = vsel %vm197, %v8978, 0
    %9666 = vmatprep.subr.mxu0 0.0
    %9667 = vmatpush1.msra.mxu0 %v8982
    %9668 = vmatprep.subr.mxu0 0.0
    %9669 = vmatpush1.msra.mxu0 %v8983
    %9670 = vmatprep.subr.mxu0 0.0
    %9671 = vmatpush1.msra.mxu0 %v8984
    %9672 = vmatprep.subr.mxu0 0.0
    %9673 = vmatpush1.msra.mxu0 %v8985
    %9674 = vmatprep.subr.mxu0 0.0
    %9675 = vmatpush1.msra.mxu0 0.0
    %9676 = vmatprep.subr.mxu0 0.0
    %9677 = vmatpush1.msra.mxu0 0.0
    %9678 = vmatprep.subr.mxu0 0.0
    %9679 = vmatpush1.msra.mxu0 0.0
    %9680 = vmatprep.subr.mxu0 0.0
    %9681 = vmatpush1.msra.mxu0 0.0
    %9682 = vmatprep.subr.mxu0 0.0
    %9683 = vmatpush1.msra.mxu0 0.0
    %9684 = vmatprep.subr.mxu0 0.0
    %9685 = vmatpush1.msra.mxu0 0.0
    %9686 = vmatprep.subr.mxu0 0.0
    %9687 = vmatpush1.msra.mxu0 0.0
    %9688 = vmatprep.subr.mxu0 0.0
    %9689 = vmatpush1.msra.mxu0 0.0
    %9690 = vmatprep.subr.mxu0 0.0
    %9691 = vmatpush1.msra.mxu0 0.0
    %9692 = vmatprep.subr.mxu0 0.0
    %9693 = vmatpush1.msra.mxu0 0.0
    %9694 = vmatprep.subr.mxu0 0.0
    %9695 = vmatpush1.msra.mxu0 0.0
    %9696 = vmatprep.subr.mxu0 0.0
    %9697 = vmatpush1.msra.mxu0 0.0
    %9698 = vmatprep.subr.mxu0 0.0
    %9699 = vmatpush1.msra.mxu0 0.0
    %9700 = vmatprep.subr.mxu0 0.0
    %9701 = vmatpush1.msra.mxu0 0.0
    %9702 = vmatprep.subr.mxu0 0.0
    %9703 = vmatpush1.msra.mxu0 0.0
    %9704 = vmatprep.subr.mxu0 0.0
    %9705 = vmatpush1.msra.mxu0 0.0
    %9706 = vmatprep.subr.mxu0 0.0
    %9707 = vmatpush1.msra.mxu0 0.0
    %9708 = vmatprep.subr.mxu0 0.0
    %9709 = vmatpush1.msra.mxu0 0.0
    %9710 = vmatprep.subr.mxu0 0.0
    %9711 = vmatpush1.msra.mxu0 0.0
    %9712 = vmatprep.subr.mxu0 0.0
    %9713 = vmatpush1.msra.mxu0 0.0
    %9714 = vmatprep.subr.mxu0 0.0
    %9715 = vmatpush1.msra.mxu0 0.0
    %9716 = vmatprep.subr.mxu0 0.0
    %9717 = vmatpush1.msra.mxu0 0.0
    %9718 = vmatprep.subr.mxu0 0.0
    %9719 = vmatpush1.msra.mxu0 0.0
    %9720 = vmatprep.subr.mxu0 0.0
    %9721 = vmatpush1.msra.mxu0 0.0
    %9722 = vmatprep.subr.mxu0 0.0
    %9723 = vmatpush1.msra.mxu0 0.0
    %9724 = vmatprep.subr.mxu0 0.0
    %9725 = vmatpush1.msra.mxu0 0.0
    %9726 = vmatprep.subr.mxu0 0.0
    %9727 = vmatpush1.msra.mxu0 0.0
    %9728 = vmatprep.subr.mxu0 0.0
    %9729 = vmatpush1.msra.mxu0 0.0
    %9730 = vmatprep.mubr.f32.mxu0 0.0
    %9731 = vmatmul.mubr.f32.gmra.mrb[0].mxu0 %v9661
    %v9732 = vpop.f32.mrb[0].mxu0
    %v9733 = vadd.f32 %v9652, %v9732
    %v9734 = vpop.f32.mrb[0].mxu0
    %9735 = vmatprep.mubr.f32.mxu0 0.0
    %9736 = vmatmul.mubr.f32.gmra.mrb[0].mxu0 %v9664
    %v9737 = vpop.f32.mrb[0].mxu0
    %v9738 = vadd.f32 %v9657, %v9737
    %v9739 = vpop.f32.mrb[0].mxu0
    %9740 = vdwg.mxu0
    %v9741 = vadd.f32 %v9733, %v8385
    %v9742 = vadd.f32 %v9738, %v8386
    %s9743 = scalar_lea.vmem %s57, 1
    %v9744 = vld [vmem:[%s9743] sm:$0x1]
    %s9745 = scalar_lea.vmem [#allocation4], 1
    %v9746 = vld [vmem:[%s9745] sm:$0x1]
    %v9747 = vsel %vm197, %v9741, 0.0
    %9748 = vadd.xlane.f32.xlu0 %v9747
    %v9749 = vpop.xlane.xlu0 %9748
    %v9750 = vsel %vm197, %v9742, 0.0
    %9751 = vadd.xlane.f32.xlu0 %v9750
    %v9752 = vpop.xlane.xlu0 %9751
    %v9753 = vmul.f32 %v9749, %v1733
    %v9754 = vmul.f32 %v9752, %v1733
    %v9755 = vsub.f32 %v9741, %v9753
    %v9756 = vsub.f32 %v9742, %v9754
    %v9757 = vmul.f32 %v9755, %v9755
    %v9758 = vmul.f32 %v9756, %v9756
    %v9759 = vsel %vm197, %v9757, 0.0
    %9760 = vadd.xlane.f32.xlu0 %v9759
    %v9761 = vpop.xlane.xlu0 %9760
    %v9762 = vsel %vm197, %v9758, 0.0
    %9763 = vadd.xlane.f32.xlu0 %v9762
    %v9764 = vpop.xlane.xlu0 %9763
    %v9765 = vmul.f32 %v9761, %v1733
    %v9766 = vmul.f32 %v9764, %v1733
    %v9767 = vadd.f32 %v9765, 1e-05
    %v9768 = vadd.f32 %v9766, 1e-05
    %v9769 = vrsqrt.pop %v9767
    %v9770 = vrsqrt.pop %v9768
    %v9771 = vmul.f32 %v9755, %v9769
    %v9772 = vmul.f32 %v9756, %v9770
    %v9774 = vlaneseq
    %v9775 = vshrl.u32 %v9774, 7
    %v9776 = vsub.s32 0, %v9775
    %v9777 = vrot.slane %v9744, %v9776
    %v9779 = vmul.f32 %v9771, %v9777
    %v9780 = vmul.f32 %v9772, %v9777
    %v9782 = vlaneseq
    %v9783 = vshrl.u32 %v9782, 7
    %v9784 = vsub.s32 0, %v9783
    %v9785 = vrot.slane %v9746, %v9784
    %v9787 = vadd.f32 %v9779, %v9785
    %v9788 = vadd.f32 %v9780, %v9785
    %s9789 = scalar_lea.vmem [#allocation2], 32
    %v9790 = vld [vmem:[%s9789] sm:$0xff]
    %v9791 = vld [vmem:[%s9789 + $0x8] sm:$0xff]
    %v9792 = vld [vmem:[%s9789 + $0x10] sm:$0xff]
    %v9793 = vld [vmem:[%s9789 + $0x18] sm:$0xff]
    %s9794 = scalar_lea.vmem %s51, 1
    %v9795 = vld [vmem:[%s9794] sm:$0x1]
    %s9796 = scalar_lea.vmem %s45, 32
    %v9797 = vld [vmem:[%s9796] sm:$0xff]
    %v9798 = vld [vmem:[%s9796 + $0x8] sm:$0xff]
    %v9799 = vld [vmem:[%s9796 + $0x10] sm:$0xff]
    %v9800 = vld [vmem:[%s9796 + $0x18] sm:$0xff]
    %s9801 = scalar_lea.vmem %s47, 1
    %v9802 = vld [vmem:[%s9801] sm:$0x1]
    %v9804 = vlaneseq
    %v9805 = vshrl.u32 %v9804, 7
    %v9806 = vsub.s32 0, %v9805
    %v9807 = vrot.slane %v9795, %v9806
    %v9810 = vsel %vm197, %v9787, 0
    %v9813 = vsel %vm197, %v9788, 0
    %9815 = vmatprep.subr.mxu0 0.0
    %9816 = vmatpush1.msra.mxu0 %v9790
    %9817 = vmatprep.subr.mxu0 0.0
    %9818 = vmatpush1.msra.mxu0 %v9791
    %9819 = vmatprep.subr.mxu0 0.0
    %9820 = vmatpush1.msra.mxu0 %v9792
    %9821 = vmatprep.subr.mxu0 0.0
    %9822 = vmatpush1.msra.mxu0 %v9793
    %9823 = vmatprep.subr.mxu0 0.0
    %9824 = vmatpush1.msra.mxu0 0.0
    %9825 = vmatprep.subr.mxu0 0.0
    %9826 = vmatpush1.msra.mxu0 0.0
    %9827 = vmatprep.subr.mxu0 0.0
    %9828 = vmatpush1.msra.mxu0 0.0
    %9829 = vmatprep.subr.mxu0 0.0
    %9830 = vmatpush1.msra.mxu0 0.0
    %9831 = vmatprep.subr.mxu0 0.0
    %9832 = vmatpush1.msra.mxu0 0.0
    %9833 = vmatprep.subr.mxu0 0.0
    %9834 = vmatpush1.msra.mxu0 0.0
    %9835 = vmatprep.subr.mxu0 0.0
    %9836 = vmatpush1.msra.mxu0 0.0
    %9837 = vmatprep.subr.mxu0 0.0
    %9838 = vmatpush1.msra.mxu0 0.0
    %9839 = vmatprep.subr.mxu0 0.0
    %9840 = vmatpush1.msra.mxu0 0.0
    %9841 = vmatprep.subr.mxu0 0.0
    %9842 = vmatpush1.msra.mxu0 0.0
    %9843 = vmatprep.subr.mxu0 0.0
    %9844 = vmatpush1.msra.mxu0 0.0
    %9845 = vmatprep.subr.mxu0 0.0
    %9846 = vmatpush1.msra.mxu0 0.0
    %9847 = vmatprep.subr.mxu0 0.0
    %9848 = vmatpush1.msra.mxu0 0.0
    %9849 = vmatprep.subr.mxu0 0.0
    %9850 = vmatpush1.msra.mxu0 0.0
    %9851 = vmatprep.subr.mxu0 0.0
    %9852 = vmatpush1.msra.mxu0 0.0
    %9853 = vmatprep.subr.mxu0 0.0
    %9854 = vmatpush1.msra.mxu0 0.0
    %9855 = vmatprep.subr.mxu0 0.0
    %9856 = vmatpush1.msra.mxu0 0.0
    %9857 = vmatprep.subr.mxu0 0.0
    %9858 = vmatpush1.msra.mxu0 0.0
    %9859 = vmatprep.subr.mxu0 0.0
    %9860 = vmatpush1.msra.mxu0 0.0
    %9861 = vmatprep.subr.mxu0 0.0
    %9862 = vmatpush1.msra.mxu0 0.0
    %9863 = vmatprep.subr.mxu0 0.0
    %9864 = vmatpush1.msra.mxu0 0.0
    %9865 = vmatprep.subr.mxu0 0.0
    %9866 = vmatpush1.msra.mxu0 0.0
    %9867 = vmatprep.subr.mxu0 0.0
    %9868 = vmatpush1.msra.mxu0 0.0
    %9869 = vmatprep.subr.mxu0 0.0
    %9870 = vmatpush1.msra.mxu0 0.0
    %9871 = vmatprep.subr.mxu0 0.0
    %9872 = vmatpush1.msra.mxu0 0.0
    %9873 = vmatprep.subr.mxu0 0.0
    %9874 = vmatpush1.msra.mxu0 0.0
    %9875 = vmatprep.subr.mxu0 0.0
    %9876 = vmatpush1.msra.mxu0 0.0
    %9877 = vmatprep.subr.mxu0 0.0
    %9878 = vmatpush1.msra.mxu0 0.0
    %9879 = vmatprep.mubr.f32.mxu0 0.0
    %9880 = vmatmul.mubr.f32.gmra.mrb[0].mxu0 %v9810
    %v9881 = vpop.f32.mrb[0].mxu0
    %v9882 = vadd.f32 %v9807, %v9881
    %v9883 = vpop.f32.mrb[0].mxu0
    %9884 = vmatprep.mubr.f32.mxu0 0.0
    %9885 = vmatmul.mubr.f32.gmra.mrb[0].mxu0 %v9813
    %v9886 = vpop.f32.mrb[0].mxu0
    %v9887 = vadd.f32 %v9807, %v9886
    %v9888 = vpop.f32.mrb[0].mxu0
    %9889 = vdwg.mxu0
    %vm9890 = vcmp.gt.f32.partialorder %v9882, 0.0
    %vm9891 = vcmp.gt.f32.partialorder %v9887, 0.0
    %v9892 = vmin.f32 %v9882, 0.0
    %v9893 = vmin.f32 %v9887, 0.0
    %v9894 = vmul.f32 %v9892, 1.442695
    %v9895 = vpow.pop %v9894
    %v9896 = vmul.f32 %v9893, 1.442695
    %v9897 = vpow.pop %v9896
    %v9898 = vsub.f32 %v9895, 1.0
    %v9899 = vsub.f32 %v9897, 1.0
    %v9900 = vsel %vm9890, %v9882, %v9898
    %v9901 = vsel %vm9891, %v9887, %v9899
    %v9903 = vlaneseq
    %v9904 = vshrl.u32 %v9903, 7
    %v9905 = vsub.s32 0, %v9904
    %v9906 = vrot.slane %v9802, %v9905
    %v9909 = vsel %vm197, %v9900, 0
    %v9912 = vsel %vm197, %v9901, 0
    %9914 = vmatprep.subr.mxu0 0.0
    %9915 = vmatpush1.msra.mxu0 %v9797
    %9916 = vmatprep.subr.mxu0 0.0
    %9917 = vmatpush1.msra.mxu0 %v9798
    %9918 = vmatprep.subr.mxu0 0.0
    %9919 = vmatpush1.msra.mxu0 %v9799
    %9920 = vmatprep.subr.mxu0 0.0
    %9921 = vmatpush1.msra.mxu0 %v9800
    %9922 = vmatprep.subr.mxu0 0.0
    %9923 = vmatpush1.msra.mxu0 0.0
    %9924 = vmatprep.subr.mxu0 0.0
    %9925 = vmatpush1.msra.mxu0 0.0
    %9926 = vmatprep.subr.mxu0 0.0
    %9927 = vmatpush1.msra.mxu0 0.0
    %9928 = vmatprep.subr.mxu0 0.0
    %9929 = vmatpush1.msra.mxu0 0.0
    %9930 = vmatprep.subr.mxu0 0.0
    %9931 = vmatpush1.msra.mxu0 0.0
    %9932 = vmatprep.subr.mxu0 0.0
    %9933 = vmatpush1.msra.mxu0 0.0
    %9934 = vmatprep.subr.mxu0 0.0
    %9935 = vmatpush1.msra.mxu0 0.0
    %9936 = vmatprep.subr.mxu0 0.0
    %9937 = vmatpush1.msra.mxu0 0.0
    %9938 = vmatprep.subr.mxu0 0.0
    %9939 = vmatpush1.msra.mxu0 0.0
    %9940 = vmatprep.subr.mxu0 0.0
    %9941 = vmatpush1.msra.mxu0 0.0
    %9942 = vmatprep.subr.mxu0 0.0
    %9943 = vmatpush1.msra.mxu0 0.0
    %9944 = vmatprep.subr.mxu0 0.0
    %9945 = vmatpush1.msra.mxu0 0.0
    %9946 = vmatprep.subr.mxu0 0.0
    %9947 = vmatpush1.msra.mxu0 0.0
    %9948 = vmatprep.subr.mxu0 0.0
    %9949 = vmatpush1.msra.mxu0 0.0
    %9950 = vmatprep.subr.mxu0 0.0
    %9951 = vmatpush1.msra.mxu0 0.0
    %9952 = vmatprep.subr.mxu0 0.0
    %9953 = vmatpush1.msra.mxu0 0.0
    %9954 = vmatprep.subr.mxu0 0.0
    %9955 = vmatpush1.msra.mxu0 0.0
    %9956 = vmatprep.subr.mxu0 0.0
    %9957 = vmatpush1.msra.mxu0 0.0
    %9958 = vmatprep.subr.mxu0 0.0
    %9959 = vmatpush1.msra.mxu0 0.0
    %9960 = vmatprep.subr.mxu0 0.0
    %9961 = vmatpush1.msra.mxu0 0.0
    %9962 = vmatprep.subr.mxu0 0.0
    %9963 = vmatpush1.msra.mxu0 0.0
    %9964 = vmatprep.subr.mxu0 0.0
    %9965 = vmatpush1.msra.mxu0 0.0
    %9966 = vmatprep.subr.mxu0 0.0
    %9967 = vmatpush1.msra.mxu0 0.0
    %9968 = vmatprep.subr.mxu0 0.0
    %9969 = vmatpush1.msra.mxu0 0.0
    %9970 = vmatprep.subr.mxu0 0.0
    %9971 = vmatpush1.msra.mxu0 0.0
    %9972 = vmatprep.subr.mxu0 0.0
    %9973 = vmatpush1.msra.mxu0 0.0
    %9974 = vmatprep.subr.mxu0 0.0
    %9975 = vmatpush1.msra.mxu0 0.0
    %9976 = vmatprep.subr.mxu0 0.0
    %9977 = vmatpush1.msra.mxu0 0.0
    %9978 = vmatprep.mubr.f32.mxu0 0.0
    %9979 = vmatmul.mubr.f32.gmra.mrb[0].mxu0 %v9909
    %v9980 = vpop.f32.mrb[0].mxu0
    %v9981 = vadd.f32 %v9906, %v9980
    %v9982 = vpop.f32.mrb[0].mxu0
    %9983 = vmatprep.mubr.f32.mxu0 0.0
    %9984 = vmatmul.mubr.f32.gmra.mrb[0].mxu0 %v9912
    %v9985 = vpop.f32.mrb[0].mxu0
    %v9986 = vadd.f32 %v9906, %v9985
    %v9987 = vpop.f32.mrb[0].mxu0
    %9988 = vdwg.mxu0
    %v9989 = vadd.f32 %v9787, %v9981
    %v9990 = vadd.f32 %v9788, %v9986
    %s9991 = scalar_lea.vmem [#allocation6], 1
    %v9992 = vld [vmem:[%s9991] sm:$0x1]
    %s9993 = scalar_lea.vmem [#allocation7], 1
    %v9994 = vld [vmem:[%s9993] sm:$0x1]
    %v9995 = vsel %vm197, %v9989, 0.0
    %9996 = vadd.xlane.f32.xlu0 %v9995
    %v9997 = vpop.xlane.xlu0 %9996
    %v9998 = vsel %vm197, %v9990, 0.0
    %9999 = vadd.xlane.f32.xlu0 %v9998
    %v10000 = vpop.xlane.xlu0 %9999
    %v10001 = vmul.f32 %v9997, %v1733
    %v10002 = vmul.f32 %v10000, %v1733
    %v10003 = vsub.f32 %v9989, %v10001
    %v10004 = vsub.f32 %v9990, %v10002
    %v10005 = vmul.f32 %v10003, %v10003
    %v10006 = vmul.f32 %v10004, %v10004
    %v10007 = vsel %vm197, %v10005, 0.0
    %10008 = vadd.xlane.f32.xlu0 %v10007
    %v10009 = vpop.xlane.xlu0 %10008
    %v10010 = vsel %vm197, %v10006, 0.0
    %10011 = vadd.xlane.f32.xlu0 %v10010
    %v10012 = vpop.xlane.xlu0 %10011
    %v10013 = vmul.f32 %v10009, %v1733
    %v10014 = vmul.f32 %v10012, %v1733
    %v10015 = vadd.f32 %v10013, 1e-05
    %v10016 = vadd.f32 %v10014, 1e-05
    %v10017 = vrsqrt.pop %v10015
    %v10018 = vrsqrt.pop %v10016
    %v10019 = vmul.f32 %v10003, %v10017
    %v10020 = vmul.f32 %v10004, %v10018
    %v10022 = vlaneseq
    %v10023 = vshrl.u32 %v10022, 7
    %v10024 = vsub.s32 0, %v10023
    %v10025 = vrot.slane %v9992, %v10024
    %v10027 = vmul.f32 %v10019, %v10025
    %v10028 = vmul.f32 %v10020, %v10025
    %v10030 = vlaneseq
    %v10031 = vshrl.u32 %v10030, 7
    %v10032 = vsub.s32 0, %v10031
    %v10033 = vrot.slane %v9994, %v10032
    %v10035 = vadd.f32 %v10027, %v10033
    %v10036 = vadd.f32 %v10028, %v10033
    %10037 = vst.msk [vmem:[%s65] sm:$0xff] %vm197, %v10035
    %10038 = vst.msk [vmem:[%s65 + $0x8] sm:$0xff] %vm197, %v10036
    // Predicated region
    $region146: #{transformer_forward.1} parent=1 // pred_check
      _
    $region147: #{transformer_forward.1} parent=1 // pred_check_branch
      %10040 = sbr.rel (0) target = $region149
    $region148: #{transformer_forward.1} parent=1 // pred_region
      _
    $region149: #{transformer_forward.1} parent=1 // pred_fallthru
      _
    // Predicated region
    $region150: #{transformer_forward.1} parent=1 // pred_check
      _
    $region151: #{transformer_forward.1} parent=1 // pred_check_branch
      %10042 = sbr.rel (0) target = $region153
    $region152: #{transformer_forward.1} parent=1 // pred_region
      _
    $region153: #{transformer_forward.1} parent=1 // pred_fallthru
      _
    %10043 = vsyncpa [#allocation3], 1
    %10044 = vsyncpa [#allocation5], 1
    %10045 = vsyncpa [#allocation8], 1

</llo_original>
